<compile_context>
chip_gen: v7x
topology: tpu7x:2x2x1
jax: 0.10.0
libtpu: 0.0.40
codegen_flags: <defaults>
</compile_context>

<pallas_src>
import functools
import math

import jax
import jax.numpy as jnp
from jax.experimental import pallas as pl
from jax.experimental.pallas import tpu as pltpu


def _round_up(x, m):
    return ((x + m - 1) // m) * m


# ---------------------------------------------------------------------------
# Fused kernel: 6 x (Linear + ReLU) in one invocation.
#   args = (c_ref, u_ref, w1_c, w1_u, b1, w2, b2, ..., w6, b6, o_ref)
#   weights are (in_features, out_features) = transposed PyTorch layout.
# ---------------------------------------------------------------------------
def _fused_mlp_kernel(c_ref, u_ref, *refs):
    o_ref = refs[-1]
    wb = refs[:-1]

    # Layer 1: the torch.cat is folded into two dots against the pre-split
    # halves of W1 (no concatenate, no in-kernel row slicing of W1).
    acc = (
        jnp.dot(c_ref[...], wb[0][...], preferred_element_type=jnp.float32)
        + jnp.dot(u_ref[...], wb[1][...], preferred_element_type=jnp.float32)
        + wb[2][...]
    )
    x = jnp.maximum(acc, 0.0)

    # Layers 2..6 (statically unrolled): relu(x @ W + b), bf16 MXU, f32 acc.
    for i in range(3, len(wb), 2):
        w, b = wb[i], wb[i + 1]
        acc = (
            jnp.dot(x.astype(w.dtype), w[...], preferred_element_type=jnp.float32)
            + b[...]
        )
        x = jnp.maximum(acc, 0.0)

    o_ref[...] = x.astype(o_ref.dtype)


def _fused_response_call(params, c_pad, u_pad):
    m_pad = c_pad.shape[0]
    n_out_pad = params[-2].shape[1]  # last (padded) weight's out_features

    vmem_spec = pl.BlockSpec(memory_space=pltpu.MemorySpace.VMEM)
    n_inputs = 2 + len(params)

    return pl.pallas_call(
        _fused_mlp_kernel,
        out_shape=jax.ShapeDtypeStruct((m_pad, n_out_pad), jnp.float32),
        in_specs=[vmem_spec] * n_inputs,
        out_specs=vmem_spec,
        compiler_params=pltpu.CompilerParams(
            vmem_limit_bytes=16 * 1024 * 1024,
        ),
    )(c_pad, u_pad, *params)


# ---------------------------------------------------------------------------
# Parameter construction (shapes match the PyTorch __init__).
# Weights stored (in_features, out_features) in bf16; W1 is pre-split into
# its conscious / unconscious row blocks; the final layer's output features
# are zero-padded to a multiple of 128 lanes.  Biases stay f32, shape (1, N).
# Returned flat tuple order: (w1_c, w1_u, b1, w2, b2, ..., w6, b6).
# ---------------------------------------------------------------------------
def init_response_params(
    key,
    conscious_out_features,
    unconscious_out_features,
    response_out_features,
    hidden_features1=1024,
    hidden_features2=512,
    hidden_features3=1024,
    hidden_features4=512,
    hidden_features5=1024,
    weight_dtype=jnp.bfloat16,
):
    fc = conscious_out_features
    dims = [
        conscious_out_features + unconscious_out_features,
        hidden_features1,
        hidden_features2,
        hidden_features3,
        hidden_features4,
        hidden_features5,
        response_out_features,
    ]
    params = []
    for i in range(6):
        key, wk, bk = jax.random.split(key, 3)
        fan_in, fan_out = dims[i], dims[i + 1]
        bound = 1.0 / math.sqrt(fan_in)
        w = jax.random.uniform(wk, (fan_in, fan_out), jnp.float32, -bound, bound)
        b = jax.random.uniform(bk, (1, fan_out), jnp.float32, -bound, bound)
        if i == 5:  # pad final output features to a lane-dense multiple of 128
            n_pad = _round_up(fan_out, 128)
            w = jnp.pad(w, ((0, 0), (0, n_pad - fan_out)))
            b = jnp.pad(b, ((0, 0), (0, n_pad - fan_out)))
        w = w.astype(weight_dtype)
        if i == 0:
            params.extend([w[:fc, :], w[fc:, :], b])
        else:
            params.extend([w, b])
    return tuple(params)


# ---------------------------------------------------------------------------
# Forward pass: pad batch to 8 sublanes (in bf16), run the fused kernel, slice.
# ---------------------------------------------------------------------------
@functools.partial(jax.jit, static_argnames=("out_features",))
def response_forward(params, conscious_out_vector, unconscious_out_vector, *, out_features):
    batch = conscious_out_vector.shape[0]
    m_pad = max(8, _round_up(batch, 8))

    c_pad = jnp.pad(
        conscious_out_vector.astype(jnp.bfloat16), ((0, m_pad - batch), (0, 0))
    )
    u_pad = jnp.pad(
        unconscious_out_vector.astype(jnp.bfloat16), ((0, m_pad - batch), (0, 0))
    )

    out = _fused_response_call(params, c_pad, u_pad)
    return out[:batch, :out_features]


# ---------------------------------------------------------------------------
# Pure-JAX reference (same bf16 weights / casting scheme) for a sanity check.
# ---------------------------------------------------------------------------
def response_forward_ref(params, c, u, out_features):
    w1_c, w1_u, b1 = params[0], params[1], params[2]
    x = jnp.maximum(
        jnp.dot(c.astype(w1_c.dtype), w1_c, preferred_element_type=jnp.float32)
        + jnp.dot(u.astype(w1_u.dtype), w1_u, preferred_element_type=jnp.float32)
        + b1,
        0.0,
    )
    rest = params[3:]
    for i in range(0, len(rest), 2):
        w, b = rest[i], rest[i + 1]
        x = jnp.maximum(
            jnp.dot(x.astype(w.dtype), w, preferred_element_type=jnp.float32) + b,
            0.0,
        )
    return x[:, :out_features]


if __name__ == "__main__":
    batch = 2
    conscious_out_features = 16
    unconscious_out_features = 16
    response_out_features = 32

    key = jax.random.PRNGKey(0)
    key, kc, ku, kp = jax.random.split(key, 4)

    conscious = jax.random.normal(kc, (batch, conscious_out_features), jnp.float32)
    unconscious = jax.random.normal(ku, (batch, unconscious_out_features), jnp.float32)

    params = init_response_params(
        kp, conscious_out_features, unconscious_out_features, response_out_features
    )

    out = response_forward(
        params, conscious, unconscious, out_features=response_out_features
    )
    out = jax.block_until_ready(out)

    ref = response_forward_ref(params, conscious, unconscious, response_out_features)
    assert out.shape == (batch, response_out_features), out.shape
    assert jnp.allclose(out, ref, atol=1e-2, rtol=1e-2), "mismatch vs reference"

    print("KERNEL_OK")
</pallas_src>

<mosaic_0001>
module attributes {stable_mosaic.version = 11 : i64} {
  func.func @_fused_mlp_kernel(%arg0: memref<8x16xbf16, #tpu.memory_space<vmem>>, %arg1: memref<8x16xbf16, #tpu.memory_space<vmem>>, %arg2: memref<16x1024xbf16, #tpu.memory_space<vmem>>, %arg3: memref<16x1024xbf16, #tpu.memory_space<vmem>>, %arg4: memref<1x1024xf32, #tpu.memory_space<vmem>>, %arg5: memref<1024x512xbf16, #tpu.memory_space<vmem>>, %arg6: memref<1x512xf32, #tpu.memory_space<vmem>>, %arg7: memref<512x1024xbf16, #tpu.memory_space<vmem>>, %arg8: memref<1x1024xf32, #tpu.memory_space<vmem>>, %arg9: memref<1024x512xbf16, #tpu.memory_space<vmem>>, %arg10: memref<1x512xf32, #tpu.memory_space<vmem>>, %arg11: memref<512x1024xbf16, #tpu.memory_space<vmem>>, %arg12: memref<1x1024xf32, #tpu.memory_space<vmem>>, %arg13: memref<1024x128xbf16, #tpu.memory_space<vmem>>, %arg14: memref<1x128xf32, #tpu.memory_space<vmem>>, %arg15: memref<8x128xf32, #tpu.memory_space<vmem>>) attributes {dimension_semantics = [], scalar_prefetch = 0 : i64, scratch_operands = 0 : i64, tpu.core_type = #tpu.core_type<tc>} {
    %c0 = arith.constant 0 : index
    %c0_0 = arith.constant 0 : index
    %0 = vector.load %arg0[%c0, %c0_0] : memref<8x16xbf16, #tpu.memory_space<vmem>>, vector<8x16xbf16>
    %c0_1 = arith.constant 0 : index
    %c0_2 = arith.constant 0 : index
    %1 = vector.load %arg2[%c0_1, %c0_2] : memref<16x1024xbf16, #tpu.memory_space<vmem>>, vector<16x1024xbf16>
    %cst = arith.constant dense<0.000000e+00> : vector<8x1024xf32>
    %2 = tpu.matmul %0, %1, %cst {dimension_numbers = #tpu.dot_dimension_numbers<[1], [0], [0], [1], [0, 0, 1, 1], [], []>} : vector<8x16xbf16>, vector<16x1024xbf16>, vector<8x1024xf32> -> vector<8x1024xf32>
    %c0_3 = arith.constant 0 : index
    %c0_4 = arith.constant 0 : index
    %3 = vector.load %arg1[%c0_3, %c0_4] : memref<8x16xbf16, #tpu.memory_space<vmem>>, vector<8x16xbf16>
    %c0_5 = arith.constant 0 : index
    %c0_6 = arith.constant 0 : index
    %4 = vector.load %arg3[%c0_5, %c0_6] : memref<16x1024xbf16, #tpu.memory_space<vmem>>, vector<16x1024xbf16>
    %cst_7 = arith.constant dense<0.000000e+00> : vector<8x1024xf32>
    %5 = tpu.matmul %3, %4, %cst_7 {dimension_numbers = #tpu.dot_dimension_numbers<[1], [0], [0], [1], [0, 0, 1, 1], [], []>} : vector<8x16xbf16>, vector<16x1024xbf16>, vector<8x1024xf32> -> vector<8x1024xf32>
    %6 = arith.addf %2, %5 : vector<8x1024xf32>
    %c0_8 = arith.constant 0 : index
    %c0_9 = arith.constant 0 : index
    %7 = vector.load %arg4[%c0_8, %c0_9] : memref<1x1024xf32, #tpu.memory_space<vmem>>, vector<1x1024xf32>
    %8 = vector.broadcast %7 : vector<1x1024xf32> to vector<8x1024xf32>
    %9 = arith.addf %6, %8 : vector<8x1024xf32>
    %cst_10 = arith.constant 0.000000e+00 : f32
    %10 = vector.broadcast %cst_10 : f32 to vector<8x1024xf32>
    %11 = arith.maximumf %9, %10 : vector<8x1024xf32>
    %12 = arith.truncf %11 : vector<8x1024xf32> to vector<8x1024xbf16>
    %c0_11 = arith.constant 0 : index
    %c0_12 = arith.constant 0 : index
    %13 = vector.load %arg5[%c0_11, %c0_12] : memref<1024x512xbf16, #tpu.memory_space<vmem>>, vector<1024x512xbf16>
    %cst_13 = arith.constant dense<0.000000e+00> : vector<8x512xf32>
    %14 = tpu.matmul %12, %13, %cst_13 {dimension_numbers = #tpu.dot_dimension_numbers<[1], [0], [0], [1], [0, 0, 1, 1], [], []>} : vector<8x1024xbf16>, vector<1024x512xbf16>, vector<8x512xf32> -> vector<8x512xf32>
    %c0_14 = arith.constant 0 : index
    %c0_15 = arith.constant 0 : index
    %15 = vector.load %arg6[%c0_14, %c0_15] : memref<1x512xf32, #tpu.memory_space<vmem>>, vector<1x512xf32>
    %16 = vector.broadcast %15 : vector<1x512xf32> to vector<8x512xf32>
    %17 = arith.addf %14, %16 : vector<8x512xf32>
    %cst_16 = arith.constant 0.000000e+00 : f32
    %18 = vector.broadcast %cst_16 : f32 to vector<8x512xf32>
    %19 = arith.maximumf %17, %18 : vector<8x512xf32>
    %20 = arith.truncf %19 : vector<8x512xf32> to vector<8x512xbf16>
    %c0_17 = arith.constant 0 : index
    %c0_18 = arith.constant 0 : index
    %21 = vector.load %arg7[%c0_17, %c0_18] : memref<512x1024xbf16, #tpu.memory_space<vmem>>, vector<512x1024xbf16>
    %cst_19 = arith.constant dense<0.000000e+00> : vector<8x1024xf32>
    %22 = tpu.matmul %20, %21, %cst_19 {dimension_numbers = #tpu.dot_dimension_numbers<[1], [0], [0], [1], [0, 0, 1, 1], [], []>} : vector<8x512xbf16>, vector<512x1024xbf16>, vector<8x1024xf32> -> vector<8x1024xf32>
    %c0_20 = arith.constant 0 : index
    %c0_21 = arith.constant 0 : index
    %23 = vector.load %arg8[%c0_20, %c0_21] : memref<1x1024xf32, #tpu.memory_space<vmem>>, vector<1x1024xf32>
    %24 = vector.broadcast %23 : vector<1x1024xf32> to vector<8x1024xf32>
    %25 = arith.addf %22, %24 : vector<8x1024xf32>
    %cst_22 = arith.constant 0.000000e+00 : f32
    %26 = vector.broadcast %cst_22 : f32 to vector<8x1024xf32>
    %27 = arith.maximumf %25, %26 : vector<8x1024xf32>
    %28 = arith.truncf %27 : vector<8x1024xf32> to vector<8x1024xbf16>
    %c0_23 = arith.constant 0 : index
    %c0_24 = arith.constant 0 : index
    %29 = vector.load %arg9[%c0_23, %c0_24] : memref<1024x512xbf16, #tpu.memory_space<vmem>>, vector<1024x512xbf16>
    %cst_25 = arith.constant dense<0.000000e+00> : vector<8x512xf32>
    %30 = tpu.matmul %28, %29, %cst_25 {dimension_numbers = #tpu.dot_dimension_numbers<[1], [0], [0], [1], [0, 0, 1, 1], [], []>} : vector<8x1024xbf16>, vector<1024x512xbf16>, vector<8x512xf32> -> vector<8x512xf32>
    %c0_26 = arith.constant 0 : index
    %c0_27 = arith.constant 0 : index
    %31 = vector.load %arg10[%c0_26, %c0_27] : memref<1x512xf32, #tpu.memory_space<vmem>>, vector<1x512xf32>
    %32 = vector.broadcast %31 : vector<1x512xf32> to vector<8x512xf32>
    %33 = arith.addf %30, %32 : vector<8x512xf32>
    %cst_28 = arith.constant 0.000000e+00 : f32
    %34 = vector.broadcast %cst_28 : f32 to vector<8x512xf32>
    %35 = arith.maximumf %33, %34 : vector<8x512xf32>
    %36 = arith.truncf %35 : vector<8x512xf32> to vector<8x512xbf16>
    %c0_29 = arith.constant 0 : index
    %c0_30 = arith.constant 0 : index
    %37 = vector.load %arg11[%c0_29, %c0_30] : memref<512x1024xbf16, #tpu.memory_space<vmem>>, vector<512x1024xbf16>
    %cst_31 = arith.constant dense<0.000000e+00> : vector<8x1024xf32>
    %38 = tpu.matmul %36, %37, %cst_31 {dimension_numbers = #tpu.dot_dimension_numbers<[1], [0], [0], [1], [0, 0, 1, 1], [], []>} : vector<8x512xbf16>, vector<512x1024xbf16>, vector<8x1024xf32> -> vector<8x1024xf32>
    %c0_32 = arith.constant 0 : index
    %c0_33 = arith.constant 0 : index
    %39 = vector.load %arg12[%c0_32, %c0_33] : memref<1x1024xf32, #tpu.memory_space<vmem>>, vector<1x1024xf32>
    %40 = vector.broadcast %39 : vector<1x1024xf32> to vector<8x1024xf32>
    %41 = arith.addf %38, %40 : vector<8x1024xf32>
    %cst_34 = arith.constant 0.000000e+00 : f32
    %42 = vector.broadcast %cst_34 : f32 to vector<8x1024xf32>
    %43 = arith.maximumf %41, %42 : vector<8x1024xf32>
    %44 = arith.truncf %43 : vector<8x1024xf32> to vector<8x1024xbf16>
    %c0_35 = arith.constant 0 : index
    %c0_36 = arith.constant 0 : index
    %45 = vector.load %arg13[%c0_35, %c0_36] : memref<1024x128xbf16, #tpu.memory_space<vmem>>, vector<1024x128xbf16>
    %cst_37 = arith.constant dense<0.000000e+00> : vector<8x128xf32>
    %46 = tpu.matmul %44, %45, %cst_37 {dimension_numbers = #tpu.dot_dimension_numbers<[1], [0], [0], [1], [0, 0, 1, 1], [], []>} : vector<8x1024xbf16>, vector<1024x128xbf16>, vector<8x128xf32> -> vector<8x128xf32>
    %c0_38 = arith.constant 0 : index
    %c0_39 = arith.constant 0 : index
    %47 = vector.load %arg14[%c0_38, %c0_39] : memref<1x128xf32, #tpu.memory_space<vmem>>, vector<1x128xf32>
    %48 = vector.broadcast %47 : vector<1x128xf32> to vector<8x128xf32>
    %49 = arith.addf %46, %48 : vector<8x128xf32>
    %cst_40 = arith.constant 0.000000e+00 : f32
    %50 = vector.broadcast %cst_40 : f32 to vector<8x128xf32>
    %51 = arith.maximumf %49, %50 : vector<8x128xf32>
    %c0_41 = arith.constant 0 : index
    %c0_42 = arith.constant 0 : index
    %52 = vector.load %arg15[%c0_41, %c0_42] : memref<8x128xf32, #tpu.memory_space<vmem>>, vector<8x128xf32>
    tpu.vector_store %arg15[%c0_41, %c0_42], %51 {strides = array<i32>} : memref<8x128xf32, #tpu.memory_space<vmem>>, vector<8x128xf32>,
    return
  }
}

</mosaic_0001>

<llo_original>
// kernel: response_forward.1
$region0: #{response_forward.1}
  #allocation0 [shape = 'u32[]', space=smem, size = 0x4, offset = 0x4, fixed_abs, tag = 'smem constant byte address 0x4 - core index']
  #allocation1 [shape = 'u32[144,128]{1,0:T(1,128)}', space=vmem, size = 0x12000, scoped, tag = 'internal scratch']
  %s0 = inlined_call_operand.vmem [shape: bf16[8,16], index: 0, kind: input, shape index: {}]
  %s1 = inlined_call_operand.vmem [shape: bf16[8,16], index: 1, kind: input, shape index: {}]
  %s2 = inlined_call_operand.hbm [shape: bf16[16,1024], index: 2, kind: input, shape index: {}]
  %s3 = inlined_call_operand.hbm [shape: bf16[16,1024], index: 3, kind: input, shape index: {}]
  %s4 = inlined_call_operand.vmem [shape: f32[1,1024], index: 4, kind: input, shape index: {}]
  %s5 = inlined_call_operand.hbm [shape: bf16[1024,512], index: 5, kind: input, shape index: {}]
  %s6 = inlined_call_operand.vmem [shape: f32[1,512], index: 6, kind: input, shape index: {}]
  %s7 = inlined_call_operand.hbm [shape: bf16[512,1024], index: 7, kind: input, shape index: {}]
  %s8 = inlined_call_operand.vmem [shape: f32[1,1024], index: 8, kind: input, shape index: {}]
  %s9 = inlined_call_operand.hbm [shape: bf16[1024,512], index: 9, kind: input, shape index: {}]
  %s10 = inlined_call_operand.vmem [shape: f32[1,512], index: 10, kind: input, shape index: {}]
  %s11 = inlined_call_operand.hbm [shape: bf16[512,1024], index: 11, kind: input, shape index: {}]
  %s12 = inlined_call_operand.vmem [shape: f32[1,1024], index: 12, kind: input, shape index: {}]
  %s13 = inlined_call_operand.hbm [shape: bf16[1024,128], index: 13, kind: input, shape index: {}]
  %s14 = inlined_call_operand.vmem [shape: f32[1,128], index: 14, kind: input, shape index: {}]
  %s15 = inlined_call_operand.vmem [shape: f32[8,128], index: 15, kind: output, shape index: {}]
  %s16 = sld [smem:[#allocation0]]
  $region98: #{response_forward.1} parent=0
    _
  %s18 = ssub.s32 1, %s16
  %s19 = scalar_select 0, %s18, %s16
  $region1: #{response_forward.1} parent=0
    #allocation2 [shape = 'u8[32768]{0}', space=vmem, size = 0x8000, scoped, tag = 'input window, operand 2, single buffered']
    #allocation3 [shape = 's32[1]{0}', space=sflag, size = 0x4, scoped, tag = 'scoped memory for response_forward.1']
    #allocation4 [shape = 'u8[32768]{0}', space=vmem, size = 0x8000, scoped, tag = 'input window, operand 3, single buffered']
    #allocation5 [shape = 's32[1]{0}', space=sflag, size = 0x4, scoped, tag = 'scoped memory for response_forward.1']
    #allocation6 [shape = 'u8[1048576]{0}', space=vmem, size = 0x100000, scoped, tag = 'input window, operand 5, single buffered']
    #allocation7 [shape = 'u8[1048576]{0}', space=vmem, size = 0x100000, scoped, tag = 'input window, operand 7, single buffered']
    #allocation8 [shape = 's32[1]{0}', space=sflag, size = 0x4, scoped, tag = 'scoped memory for response_forward.1']
    #allocation9 [shape = 'u8[1048576]{0}', space=vmem, size = 0x100000, scoped, tag = 'input window, operand 9, single buffered']
    #allocation10 [shape = 'u8[1048576]{0}', space=vmem, size = 0x100000, scoped, tag = 'input window, operand 11, single buffered']
    #allocation11 [shape = 's32[1]{0}', space=sflag, size = 0x4, scoped, tag = 'scoped memory for response_forward.1']
    #allocation12 [shape = 'u8[262144]{0}', space=vmem, size = 0x40000, scoped, tag = 'input window, operand 13, single buffered']
    %20 = vsyncpa [#allocation3], 0
    %21 = vsyncpa [#allocation5], 0
    %22 = vsyncpa [#allocation8], 0
    %23 = vsyncpa [#allocation11], 0
    // Predicated region
    $region2: #{response_forward.1} parent=1 // pred_check
      _
    $region3: #{response_forward.1} parent=1 // pred_check_branch
      %25 = sbr.rel (0) target = $region5
    $region4: #{response_forward.1} parent=1 // pred_region
      _
    $region5: #{response_forward.1} parent=1 // pred_fallthru
      _
    // Predicated region
    $region6: #{response_forward.1} parent=1 // pred_check
      _
    $region7: #{response_forward.1} parent=1 // pred_check_branch
      %27 = sbr.rel (0) target = $region9
    $region8: #{response_forward.1} parent=1 // pred_region
      _
    $region9: #{response_forward.1} parent=1 // pred_fallthru
      _
    // Predicated region
    $region10: #{response_forward.1} parent=1 // pred_check
      _
    $region11: #{response_forward.1} parent=1 // pred_check_branch
      %29 = sbr.rel (0) target = $region13
    $region12: #{response_forward.1} parent=1 // pred_region
      %s31 = ssub.s32 1024, 1024
      %32 = vsyncadd [#allocation3], %s31
      %s33 = sshll.u32 [#allocation2], 4
      %s34 = int_to_ptr.vmem [resolvable:$true] %s33
      %39 = dma.hbm_to_vmem [thread:$0]  %s2, 1024, %s34, [#allocation3], 512, 512, 32
    $region13: #{response_forward.1} parent=1 // pred_fallthru
      _
    // Predicated region
    $region14: #{response_forward.1} parent=1 // pred_check
      _
    $region15: #{response_forward.1} parent=1 // pred_check_branch
      %41 = sbr.rel (0) target = $region17
    $region16: #{response_forward.1} parent=1 // pred_region
      %s43 = ssub.s32 1024, 1024
      %44 = vsyncadd [#allocation5], %s43
      %s45 = sshll.u32 [#allocation4], 4
      %s46 = int_to_ptr.vmem [resolvable:$true] %s45
      %51 = dma.hbm_to_vmem [thread:$0]  %s3, 1024, %s46, [#allocation5], 512, 512, 32
    $region17: #{response_forward.1} parent=1 // pred_fallthru
      _
    // Predicated region
    $region18: #{response_forward.1} parent=1 // pred_check
      _
    $region19: #{response_forward.1} parent=1 // pred_check_branch
      %53 = sbr.rel (0) target = $region21
    $region20: #{response_forward.1} parent=1 // pred_region
      _
    $region21: #{response_forward.1} parent=1 // pred_fallthru
      _
    // Predicated region
    $region22: #{response_forward.1} parent=1 // pred_check
      _
    $region23: #{response_forward.1} parent=1 // pred_check_branch
      %55 = sbr.rel (0) target = $region25
    $region24: #{response_forward.1} parent=1 // pred_region
      %s57 = ssub.s32 32768, 32768
      %58 = vsyncadd [#allocation5], %s57
      %s59 = sshll.u32 [#allocation6], 4
      %s60 = int_to_ptr.vmem [resolvable:$true] %s59
      %65 = dma.hbm_to_vmem [thread:$0]  %s5, 32768, %s60, [#allocation5], 256, 256, 16
    $region25: #{response_forward.1} parent=1 // pred_fallthru
      _
    // Predicated region
    $region26: #{response_forward.1} parent=1 // pred_check
      _
    $region27: #{response_forward.1} parent=1 // pred_check_branch
      %67 = sbr.rel (0) target = $region29
    $region28: #{response_forward.1} parent=1 // pred_region
      _
    $region29: #{response_forward.1} parent=1 // pred_fallthru
      _
    // Predicated region
    $region30: #{response_forward.1} parent=1 // pred_check
      _
    $region31: #{response_forward.1} parent=1 // pred_check_branch
      %69 = sbr.rel (0) target = $region33
    $region32: #{response_forward.1} parent=1 // pred_region
      %s71 = ssub.s32 32768, 32768
      %72 = vsyncadd [#allocation8], %s71
      %s73 = sshll.u32 [#allocation7], 4
      %s74 = int_to_ptr.vmem [resolvable:$true] %s73
      %79 = dma.hbm_to_vmem [thread:$0]  %s7, 32768, %s74, [#allocation8], 512, 512, 32
    $region33: #{response_forward.1} parent=1 // pred_fallthru
      _
    // Predicated region
    $region34: #{response_forward.1} parent=1 // pred_check
      _
    $region35: #{response_forward.1} parent=1 // pred_check_branch
      %81 = sbr.rel (0) target = $region37
    $region36: #{response_forward.1} parent=1 // pred_region
      _
    $region37: #{response_forward.1} parent=1 // pred_fallthru
      _
    // Predicated region
    $region38: #{response_forward.1} parent=1 // pred_check
      _
    $region39: #{response_forward.1} parent=1 // pred_check_branch
      %83 = sbr.rel (0) target = $region41
    $region40: #{response_forward.1} parent=1 // pred_region
      %s85 = ssub.s32 32768, 32768
      %86 = vsyncadd [#allocation8], %s85
      %s87 = sshll.u32 [#allocation9], 4
      %s88 = int_to_ptr.vmem [resolvable:$true] %s87
      %93 = dma.hbm_to_vmem [thread:$0]  %s9, 32768, %s88, [#allocation8], 256, 256, 16
    $region41: #{response_forward.1} parent=1 // pred_fallthru
      _
    // Predicated region
    $region42: #{response_forward.1} parent=1 // pred_check
      _
    $region43: #{response_forward.1} parent=1 // pred_check_branch
      %95 = sbr.rel (0) target = $region45
    $region44: #{response_forward.1} parent=1 // pred_region
      _
    $region45: #{response_forward.1} parent=1 // pred_fallthru
      _
    // Predicated region
    $region46: #{response_forward.1} parent=1 // pred_check
      _
    $region47: #{response_forward.1} parent=1 // pred_check_branch
      %97 = sbr.rel (0) target = $region49
    $region48: #{response_forward.1} parent=1 // pred_region
      %s99 = ssub.s32 32768, 32768
      %100 = vsyncadd [#allocation11], %s99
      %s101 = sshll.u32 [#allocation10], 4
      %s102 = int_to_ptr.vmem [resolvable:$true] %s101
      %107 = dma.hbm_to_vmem [thread:$0]  %s11, 32768, %s102, [#allocation11], 512, 512, 32
    $region49: #{response_forward.1} parent=1 // pred_fallthru
      _
    // Predicated region
    $region50: #{response_forward.1} parent=1 // pred_check
      _
    $region51: #{response_forward.1} parent=1 // pred_check_branch
      %109 = sbr.rel (0) target = $region53
    $region52: #{response_forward.1} parent=1 // pred_region
      _
    $region53: #{response_forward.1} parent=1 // pred_fallthru
      _
    // Predicated region
    $region54: #{response_forward.1} parent=1 // pred_check
      _
    $region55: #{response_forward.1} parent=1 // pred_check_branch
      %111 = sbr.rel (0) target = $region57
    $region56: #{response_forward.1} parent=1 // pred_region
      %s113 = ssub.s32 8192, 8192
      %114 = vsyncadd [#allocation11], %s113
      %s115 = sshll.u32 [#allocation12], 4
      %s116 = int_to_ptr.vmem [resolvable:$true] %s115
      %121 = dma.hbm_to_vmem [thread:$0]  %s13, 8192, %s116, [#allocation11], 64, 64, 4
    $region57: #{response_forward.1} parent=1 // pred_fallthru
      _
    // Predicated region
    $region58: #{response_forward.1} parent=1 // pred_check
      _
    $region59: #{response_forward.1} parent=1 // pred_check_branch
      %123 = sbr.rel (0) target = $region61
    $region60: #{response_forward.1} parent=1 // pred_region
      _
    $region61: #{response_forward.1} parent=1 // pred_fallthru
      _
    // Predicated region
    $region62: #{response_forward.1} parent=1 // pred_check
      _
    $region63: #{response_forward.1} parent=1 // pred_check_branch
      %125 = sbr.rel (0) target = $region65
    $region64: #{response_forward.1} parent=1 // pred_region
      %126 = dma.done [#allocation3], 1024
    $region65: #{response_forward.1} parent=1 // pred_fallthru
      _
    // Predicated region
    $region66: #{response_forward.1} parent=1 // pred_check
      _
    $region67: #{response_forward.1} parent=1 // pred_check_branch
      %128 = sbr.rel (0) target = $region69
    $region68: #{response_forward.1} parent=1 // pred_region
      %129 = dma.done [#allocation5], 1024
    $region69: #{response_forward.1} parent=1 // pred_fallthru
      _
    // Predicated region
    $region70: #{response_forward.1} parent=1 // pred_check
      _
    $region71: #{response_forward.1} parent=1 // pred_check_branch
      %131 = sbr.rel (0) target = $region73
    $region72: #{response_forward.1} parent=1 // pred_region
      %132 = dma.done [#allocation5], 32768
    $region73: #{response_forward.1} parent=1 // pred_fallthru
      _
    // Predicated region
    $region74: #{response_forward.1} parent=1 // pred_check
      _
    $region75: #{response_forward.1} parent=1 // pred_check_branch
      %134 = sbr.rel (0) target = $region77
    $region76: #{response_forward.1} parent=1 // pred_region
      %135 = dma.done [#allocation8], 32768
    $region77: #{response_forward.1} parent=1 // pred_fallthru
      _
    // Predicated region
    $region78: #{response_forward.1} parent=1 // pred_check
      _
    $region79: #{response_forward.1} parent=1 // pred_check_branch
      %137 = sbr.rel (0) target = $region81
    $region80: #{response_forward.1} parent=1 // pred_region
      %138 = dma.done [#allocation8], 32768
    $region81: #{response_forward.1} parent=1 // pred_fallthru
      _
    // Predicated region
    $region82: #{response_forward.1} parent=1 // pred_check
      _
    $region83: #{response_forward.1} parent=1 // pred_check_branch
      %140 = sbr.rel (0) target = $region85
    $region84: #{response_forward.1} parent=1 // pred_region
      %141 = dma.done [#allocation11], 32768
    $region85: #{response_forward.1} parent=1 // pred_fallthru
      _
    // Predicated region
    $region86: #{response_forward.1} parent=1 // pred_check
      _
    $region87: #{response_forward.1} parent=1 // pred_check_branch
      %143 = sbr.rel (0) target = $region89
    $region88: #{response_forward.1} parent=1 // pred_region
      %144 = dma.done [#allocation11], 8192
    $region89: #{response_forward.1} parent=1 // pred_fallthru
      _
    %v146 = vld [vmem:[%s0] sm:$0xf]
    %v147 = vld [vmem:[#allocation2] sm:$0xff]
    %v148 = vld [vmem:[#allocation2 + $0x8] sm:$0xff]
    %v149 = vld [vmem:[#allocation2 + $0x10] sm:$0xff]
    %v150 = vld [vmem:[#allocation2 + $0x18] sm:$0xff]
    %v151 = vld [vmem:[#allocation2 + $0x20] sm:$0xff]
    %v152 = vld [vmem:[#allocation2 + $0x28] sm:$0xff]
    %v153 = vld [vmem:[#allocation2 + $0x30] sm:$0xff]
    %v154 = vld [vmem:[#allocation2 + $0x38] sm:$0xff]
    %v155 = vld [vmem:[%s1] sm:$0xf]
    %v156 = vld [vmem:[#allocation4] sm:$0xff]
    %v157 = vld [vmem:[#allocation4 + $0x8] sm:$0xff]
    %v158 = vld [vmem:[#allocation4 + $0x10] sm:$0xff]
    %v159 = vld [vmem:[#allocation4 + $0x18] sm:$0xff]
    %v160 = vld [vmem:[#allocation4 + $0x20] sm:$0xff]
    %v161 = vld [vmem:[#allocation4 + $0x28] sm:$0xff]
    %v162 = vld [vmem:[#allocation4 + $0x30] sm:$0xff]
    %v163 = vld [vmem:[#allocation4 + $0x38] sm:$0xff]
    %v172 = vunpack.c.l.b16 %v156
    %v173 = vunpack.c.h.b16 %v156
    %v174 = vunpack.c.l.b16 %v157
    %v175 = vunpack.c.h.b16 %v157
    %v176 = vunpack.c.l.b16 %v158
    %v177 = vunpack.c.h.b16 %v158
    %v178 = vunpack.c.l.b16 %v159
    %v179 = vunpack.c.h.b16 %v159
    %v180 = vunpack.c.l.b16 %v160
    %v181 = vunpack.c.h.b16 %v160
    %v182 = vunpack.c.l.b16 %v161
    %v183 = vunpack.c.h.b16 %v161
    %v184 = vunpack.c.l.b16 %v162
    %v185 = vunpack.c.h.b16 %v162
    %v186 = vunpack.c.l.b16 %v163
    %v187 = vunpack.c.h.b16 %v163
    %v188 = vpack.c.b16 %v180, %v172
    %v189 = vpack.c.b16 %v181, %v173
    %v190 = vpack.c.b16 %v182, %v174
    %v191 = vpack.c.b16 %v183, %v175
    %v192 = vpack.c.b16 %v184, %v176
    %v193 = vpack.c.b16 %v185, %v177
    %v194 = vpack.c.b16 %v186, %v178
    %v195 = vpack.c.b16 %v187, %v179
    %vm204 = vcmask 130048
    %v206 = vsel %vm204, %v155, 0
    %208 = vmatprep.subr.bf16.mxu0 %v189
    %209 = vmatpush1.bf16.msra.mxu0 %v188
    %210 = vmatprep.subr.bf16.mxu0 0
    %211 = vmatpush1.bf16.msra.mxu0 0
    %212 = vmatprep.subr.bf16.mxu0 0
    %213 = vmatpush1.bf16.msra.mxu0 0
    %214 = vmatprep.subr.bf16.mxu0 0
    %215 = vmatpush1.bf16.msra.mxu0 0
    %216 = vmatprep.subr.bf16.mxu0 0
    %217 = vmatpush1.bf16.msra.mxu0 0
    %218 = vmatprep.subr.bf16.mxu0 0
    %219 = vmatpush1.bf16.msra.mxu0 0
    %220 = vmatprep.subr.bf16.mxu0 0
    %221 = vmatpush1.bf16.msra.mxu0 0
    %222 = vmatprep.subr.bf16.mxu0 0
    %223 = vmatpush1.bf16.msra.mxu0 0
    %224 = vmatprep.subr.bf16.mxu0 0
    %225 = vmatpush1.bf16.msra.mxu0 0
    %226 = vmatprep.subr.bf16.mxu0 0
    %227 = vmatpush1.bf16.msra.mxu0 0
    %228 = vmatprep.subr.bf16.mxu0 0
    %229 = vmatpush1.bf16.msra.mxu0 0
    %230 = vmatprep.subr.bf16.mxu0 0
    %231 = vmatpush1.bf16.msra.mxu0 0
    %232 = vmatprep.subr.bf16.mxu0 0
    %233 = vmatpush1.bf16.msra.mxu0 0
    %234 = vmatprep.subr.bf16.mxu0 0
    %235 = vmatpush1.bf16.msra.mxu0 0
    %236 = vmatprep.subr.bf16.mxu0 0
    %237 = vmatpush1.bf16.msra.mxu0 0
    %238 = vmatprep.subr.bf16.mxu0 0
    %239 = vmatpush1.bf16.msra.mxu0 0
    %240 = vmatprep.mubr.bf16.mxu0 0
    %241 = vmatmul.mubr.bf16.gmra.mrb[0].mxu0 %v206
    %v242 = vpop.f32.mrb[0].mxu0
    %v243 = vadd.f32 0.0, %v242
    %v244 = vpop.f32.mrb[0].mxu0
    %v245 = vadd.f32 0.0, %v244
    %v246 = vpop.f32.mrb[0].mxu0
    %v247 = vpop.f32.mrb[0].mxu0
    %248 = vdwg.mxu0
    %249 = vmatprep.subr.bf16.mxu0 %v191
    %250 = vmatpush1.bf16.msra.mxu0 %v190
    %251 = vmatprep.subr.bf16.mxu0 0
    %252 = vmatpush1.bf16.msra.mxu0 0
    %253 = vmatprep.subr.bf16.mxu0 0
    %254 = vmatpush1.bf16.msra.mxu0 0
    %255 = vmatprep.subr.bf16.mxu0 0
    %256 = vmatpush1.bf16.msra.mxu0 0
    %257 = vmatprep.subr.bf16.mxu0 0
    %258 = vmatpush1.bf16.msra.mxu0 0
    %259 = vmatprep.subr.bf16.mxu0 0
    %260 = vmatpush1.bf16.msra.mxu0 0
    %261 = vmatprep.subr.bf16.mxu0 0
    %262 = vmatpush1.bf16.msra.mxu0 0
    %263 = vmatprep.subr.bf16.mxu0 0
    %264 = vmatpush1.bf16.msra.mxu0 0
    %265 = vmatprep.subr.bf16.mxu0 0
    %266 = vmatpush1.bf16.msra.mxu0 0
    %267 = vmatprep.subr.bf16.mxu0 0
    %268 = vmatpush1.bf16.msra.mxu0 0
    %269 = vmatprep.subr.bf16.mxu0 0
    %270 = vmatpush1.bf16.msra.mxu0 0
    %271 = vmatprep.subr.bf16.mxu0 0
    %272 = vmatpush1.bf16.msra.mxu0 0
    %273 = vmatprep.subr.bf16.mxu0 0
    %274 = vmatpush1.bf16.msra.mxu0 0
    %275 = vmatprep.subr.bf16.mxu0 0
    %276 = vmatpush1.bf16.msra.mxu0 0
    %277 = vmatprep.subr.bf16.mxu0 0
    %278 = vmatpush1.bf16.msra.mxu0 0
    %279 = vmatprep.subr.bf16.mxu0 0
    %280 = vmatpush1.bf16.msra.mxu0 0
    %281 = vmatprep.mubr.bf16.mxu0 0
    %282 = vmatmul.mubr.bf16.gmra.mrb[0].mxu0 %v206
    %v283 = vpop.f32.mrb[0].mxu0
    %v284 = vadd.f32 0.0, %v283
    %v285 = vpop.f32.mrb[0].mxu0
    %v286 = vadd.f32 0.0, %v285
    %v287 = vpop.f32.mrb[0].mxu0
    %v288 = vpop.f32.mrb[0].mxu0
    %289 = vdwg.mxu0
    %290 = vmatprep.subr.bf16.mxu0 %v193
    %291 = vmatpush1.bf16.msra.mxu0 %v192
    %292 = vmatprep.subr.bf16.mxu0 0
    %293 = vmatpush1.bf16.msra.mxu0 0
    %294 = vmatprep.subr.bf16.mxu0 0
    %295 = vmatpush1.bf16.msra.mxu0 0
    %296 = vmatprep.subr.bf16.mxu0 0
    %297 = vmatpush1.bf16.msra.mxu0 0
    %298 = vmatprep.subr.bf16.mxu0 0
    %299 = vmatpush1.bf16.msra.mxu0 0
    %300 = vmatprep.subr.bf16.mxu0 0
    %301 = vmatpush1.bf16.msra.mxu0 0
    %302 = vmatprep.subr.bf16.mxu0 0
    %303 = vmatpush1.bf16.msra.mxu0 0
    %304 = vmatprep.subr.bf16.mxu0 0
    %305 = vmatpush1.bf16.msra.mxu0 0
    %306 = vmatprep.subr.bf16.mxu0 0
    %307 = vmatpush1.bf16.msra.mxu0 0
    %308 = vmatprep.subr.bf16.mxu0 0
    %309 = vmatpush1.bf16.msra.mxu0 0
    %310 = vmatprep.subr.bf16.mxu0 0
    %311 = vmatpush1.bf16.msra.mxu0 0
    %312 = vmatprep.subr.bf16.mxu0 0
    %313 = vmatpush1.bf16.msra.mxu0 0
    %314 = vmatprep.subr.bf16.mxu0 0
    %315 = vmatpush1.bf16.msra.mxu0 0
    %316 = vmatprep.subr.bf16.mxu0 0
    %317 = vmatpush1.bf16.msra.mxu0 0
    %318 = vmatprep.subr.bf16.mxu0 0
    %319 = vmatpush1.bf16.msra.mxu0 0
    %320 = vmatprep.subr.bf16.mxu0 0
    %321 = vmatpush1.bf16.msra.mxu0 0
    %322 = vmatprep.mubr.bf16.mxu0 0
    %323 = vmatmul.mubr.bf16.gmra.mrb[0].mxu0 %v206
    %v324 = vpop.f32.mrb[0].mxu0
    %v325 = vadd.f32 0.0, %v324
    %v326 = vpop.f32.mrb[0].mxu0
    %v327 = vadd.f32 0.0, %v326
    %v328 = vpop.f32.mrb[0].mxu0
    %v329 = vpop.f32.mrb[0].mxu0
    %330 = vdwg.mxu0
    %331 = vmatprep.subr.bf16.mxu0 %v195
    %332 = vmatpush1.bf16.msra.mxu0 %v194
    %333 = vmatprep.subr.bf16.mxu0 0
    %334 = vmatpush1.bf16.msra.mxu0 0
    %335 = vmatprep.subr.bf16.mxu0 0
    %336 = vmatpush1.bf16.msra.mxu0 0
    %337 = vmatprep.subr.bf16.mxu0 0
    %338 = vmatpush1.bf16.msra.mxu0 0
    %339 = vmatprep.subr.bf16.mxu0 0
    %340 = vmatpush1.bf16.msra.mxu0 0
    %341 = vmatprep.subr.bf16.mxu0 0
    %342 = vmatpush1.bf16.msra.mxu0 0
    %343 = vmatprep.subr.bf16.mxu0 0
    %344 = vmatpush1.bf16.msra.mxu0 0
    %345 = vmatprep.subr.bf16.mxu0 0
    %346 = vmatpush1.bf16.msra.mxu0 0
    %347 = vmatprep.subr.bf16.mxu0 0
    %348 = vmatpush1.bf16.msra.mxu0 0
    %349 = vmatprep.subr.bf16.mxu0 0
    %350 = vmatpush1.bf16.msra.mxu0 0
    %351 = vmatprep.subr.bf16.mxu0 0
    %352 = vmatpush1.bf16.msra.mxu0 0
    %353 = vmatprep.subr.bf16.mxu0 0
    %354 = vmatpush1.bf16.msra.mxu0 0
    %355 = vmatprep.subr.bf16.mxu0 0
    %356 = vmatpush1.bf16.msra.mxu0 0
    %357 = vmatprep.subr.bf16.mxu0 0
    %358 = vmatpush1.bf16.msra.mxu0 0
    %359 = vmatprep.subr.bf16.mxu0 0
    %360 = vmatpush1.bf16.msra.mxu0 0
    %361 = vmatprep.subr.bf16.mxu0 0
    %362 = vmatpush1.bf16.msra.mxu0 0
    %363 = vmatprep.mubr.bf16.mxu0 0
    %364 = vmatmul.mubr.bf16.gmra.mrb[0].mxu0 %v206
    %v365 = vpop.f32.mrb[0].mxu0
    %v366 = vadd.f32 0.0, %v365
    %v367 = vpop.f32.mrb[0].mxu0
    %v368 = vadd.f32 0.0, %v367
    %v369 = vpop.f32.mrb[0].mxu0
    %v370 = vpop.f32.mrb[0].mxu0
    %371 = vdwg.mxu0
    %v380 = vunpack.c.l.b16 %v147
    %v381 = vunpack.c.h.b16 %v147
    %v382 = vunpack.c.l.b16 %v148
    %v383 = vunpack.c.h.b16 %v148
    %v384 = vunpack.c.l.b16 %v149
    %v385 = vunpack.c.h.b16 %v149
    %v386 = vunpack.c.l.b16 %v150
    %v387 = vunpack.c.h.b16 %v150
    %v388 = vunpack.c.l.b16 %v151
    %v389 = vunpack.c.h.b16 %v151
    %v390 = vunpack.c.l.b16 %v152
    %v391 = vunpack.c.h.b16 %v152
    %v392 = vunpack.c.l.b16 %v153
    %v393 = vunpack.c.h.b16 %v153
    %v394 = vunpack.c.l.b16 %v154
    %v395 = vunpack.c.h.b16 %v154
    %v396 = vpack.c.b16 %v388, %v380
    %v397 = vpack.c.b16 %v389, %v381
    %v398 = vpack.c.b16 %v390, %v382
    %v399 = vpack.c.b16 %v391, %v383
    %v400 = vpack.c.b16 %v392, %v384
    %v401 = vpack.c.b16 %v393, %v385
    %v402 = vpack.c.b16 %v394, %v386
    %v403 = vpack.c.b16 %v395, %v387
    %v413 = vsel %vm204, %v146, 0
    %415 = vmatprep.subr.bf16.mxu0 %v397
    %416 = vmatpush1.bf16.msra.mxu0 %v396
    %417 = vmatprep.subr.bf16.mxu0 0
    %418 = vmatpush1.bf16.msra.mxu0 0
    %419 = vmatprep.subr.bf16.mxu0 0
    %420 = vmatpush1.bf16.msra.mxu0 0
    %421 = vmatprep.subr.bf16.mxu0 0
    %422 = vmatpush1.bf16.msra.mxu0 0
    %423 = vmatprep.subr.bf16.mxu0 0
    %424 = vmatpush1.bf16.msra.mxu0 0
    %425 = vmatprep.subr.bf16.mxu0 0
    %426 = vmatpush1.bf16.msra.mxu0 0
    %427 = vmatprep.subr.bf16.mxu0 0
    %428 = vmatpush1.bf16.msra.mxu0 0
    %429 = vmatprep.subr.bf16.mxu0 0
    %430 = vmatpush1.bf16.msra.mxu0 0
    %431 = vmatprep.subr.bf16.mxu0 0
    %432 = vmatpush1.bf16.msra.mxu0 0
    %433 = vmatprep.subr.bf16.mxu0 0
    %434 = vmatpush1.bf16.msra.mxu0 0
    %435 = vmatprep.subr.bf16.mxu0 0
    %436 = vmatpush1.bf16.msra.mxu0 0
    %437 = vmatprep.subr.bf16.mxu0 0
    %438 = vmatpush1.bf16.msra.mxu0 0
    %439 = vmatprep.subr.bf16.mxu0 0
    %440 = vmatpush1.bf16.msra.mxu0 0
    %441 = vmatprep.subr.bf16.mxu0 0
    %442 = vmatpush1.bf16.msra.mxu0 0
    %443 = vmatprep.subr.bf16.mxu0 0
    %444 = vmatpush1.bf16.msra.mxu0 0
    %445 = vmatprep.subr.bf16.mxu0 0
    %446 = vmatpush1.bf16.msra.mxu0 0
    %447 = vmatprep.mubr.bf16.mxu0 0
    %448 = vmatmul.mubr.bf16.gmra.mrb[0].mxu0 %v413
    %v449 = vpop.f32.mrb[0].mxu0
    %v450 = vadd.f32 %v243, %v449
    %v451 = vpop.f32.mrb[0].mxu0
    %v452 = vadd.f32 %v245, %v451
    %v453 = vpop.f32.mrb[0].mxu0
    %v454 = vpop.f32.mrb[0].mxu0
    %455 = vdwg.mxu0
    %456 = vmatprep.subr.bf16.mxu0 %v399
    %457 = vmatpush1.bf16.msra.mxu0 %v398
    %458 = vmatprep.subr.bf16.mxu0 0
    %459 = vmatpush1.bf16.msra.mxu0 0
    %460 = vmatprep.subr.bf16.mxu0 0
    %461 = vmatpush1.bf16.msra.mxu0 0
    %462 = vmatprep.subr.bf16.mxu0 0
    %463 = vmatpush1.bf16.msra.mxu0 0
    %464 = vmatprep.subr.bf16.mxu0 0
    %465 = vmatpush1.bf16.msra.mxu0 0
    %466 = vmatprep.subr.bf16.mxu0 0
    %467 = vmatpush1.bf16.msra.mxu0 0
    %468 = vmatprep.subr.bf16.mxu0 0
    %469 = vmatpush1.bf16.msra.mxu0 0
    %470 = vmatprep.subr.bf16.mxu0 0
    %471 = vmatpush1.bf16.msra.mxu0 0
    %472 = vmatprep.subr.bf16.mxu0 0
    %473 = vmatpush1.bf16.msra.mxu0 0
    %474 = vmatprep.subr.bf16.mxu0 0
    %475 = vmatpush1.bf16.msra.mxu0 0
    %476 = vmatprep.subr.bf16.mxu0 0
    %477 = vmatpush1.bf16.msra.mxu0 0
    %478 = vmatprep.subr.bf16.mxu0 0
    %479 = vmatpush1.bf16.msra.mxu0 0
    %480 = vmatprep.subr.bf16.mxu0 0
    %481 = vmatpush1.bf16.msra.mxu0 0
    %482 = vmatprep.subr.bf16.mxu0 0
    %483 = vmatpush1.bf16.msra.mxu0 0
    %484 = vmatprep.subr.bf16.mxu0 0
    %485 = vmatpush1.bf16.msra.mxu0 0
    %486 = vmatprep.subr.bf16.mxu0 0
    %487 = vmatpush1.bf16.msra.mxu0 0
    %488 = vmatprep.mubr.bf16.mxu0 0
    %489 = vmatmul.mubr.bf16.gmra.mrb[0].mxu0 %v413
    %v490 = vpop.f32.mrb[0].mxu0
    %v491 = vadd.f32 %v284, %v490
    %v492 = vpop.f32.mrb[0].mxu0
    %v493 = vadd.f32 %v286, %v492
    %v494 = vpop.f32.mrb[0].mxu0
    %v495 = vpop.f32.mrb[0].mxu0
    %496 = vdwg.mxu0
    %497 = vmatprep.subr.bf16.mxu0 %v401
    %498 = vmatpush1.bf16.msra.mxu0 %v400
    %499 = vmatprep.subr.bf16.mxu0 0
    %500 = vmatpush1.bf16.msra.mxu0 0
    %501 = vmatprep.subr.bf16.mxu0 0
    %502 = vmatpush1.bf16.msra.mxu0 0
    %503 = vmatprep.subr.bf16.mxu0 0
    %504 = vmatpush1.bf16.msra.mxu0 0
    %505 = vmatprep.subr.bf16.mxu0 0
    %506 = vmatpush1.bf16.msra.mxu0 0
    %507 = vmatprep.subr.bf16.mxu0 0
    %508 = vmatpush1.bf16.msra.mxu0 0
    %509 = vmatprep.subr.bf16.mxu0 0
    %510 = vmatpush1.bf16.msra.mxu0 0
    %511 = vmatprep.subr.bf16.mxu0 0
    %512 = vmatpush1.bf16.msra.mxu0 0
    %513 = vmatprep.subr.bf16.mxu0 0
    %514 = vmatpush1.bf16.msra.mxu0 0
    %515 = vmatprep.subr.bf16.mxu0 0
    %516 = vmatpush1.bf16.msra.mxu0 0
    %517 = vmatprep.subr.bf16.mxu0 0
    %518 = vmatpush1.bf16.msra.mxu0 0
    %519 = vmatprep.subr.bf16.mxu0 0
    %520 = vmatpush1.bf16.msra.mxu0 0
    %521 = vmatprep.subr.bf16.mxu0 0
    %522 = vmatpush1.bf16.msra.mxu0 0
    %523 = vmatprep.subr.bf16.mxu0 0
    %524 = vmatpush1.bf16.msra.mxu0 0
    %525 = vmatprep.subr.bf16.mxu0 0
    %526 = vmatpush1.bf16.msra.mxu0 0
    %527 = vmatprep.subr.bf16.mxu0 0
    %528 = vmatpush1.bf16.msra.mxu0 0
    %529 = vmatprep.mubr.bf16.mxu0 0
    %530 = vmatmul.mubr.bf16.gmra.mrb[0].mxu0 %v413
    %v531 = vpop.f32.mrb[0].mxu0
    %v532 = vadd.f32 %v325, %v531
    %v533 = vpop.f32.mrb[0].mxu0
    %v534 = vadd.f32 %v327, %v533
    %v535 = vpop.f32.mrb[0].mxu0
    %v536 = vpop.f32.mrb[0].mxu0
    %537 = vdwg.mxu0
    %538 = vmatprep.subr.bf16.mxu0 %v403
    %539 = vmatpush1.bf16.msra.mxu0 %v402
    %540 = vmatprep.subr.bf16.mxu0 0
    %541 = vmatpush1.bf16.msra.mxu0 0
    %542 = vmatprep.subr.bf16.mxu0 0
    %543 = vmatpush1.bf16.msra.mxu0 0
    %544 = vmatprep.subr.bf16.mxu0 0
    %545 = vmatpush1.bf16.msra.mxu0 0
    %546 = vmatprep.subr.bf16.mxu0 0
    %547 = vmatpush1.bf16.msra.mxu0 0
    %548 = vmatprep.subr.bf16.mxu0 0
    %549 = vmatpush1.bf16.msra.mxu0 0
    %550 = vmatprep.subr.bf16.mxu0 0
    %551 = vmatpush1.bf16.msra.mxu0 0
    %552 = vmatprep.subr.bf16.mxu0 0
    %553 = vmatpush1.bf16.msra.mxu0 0
    %554 = vmatprep.subr.bf16.mxu0 0
    %555 = vmatpush1.bf16.msra.mxu0 0
    %556 = vmatprep.subr.bf16.mxu0 0
    %557 = vmatpush1.bf16.msra.mxu0 0
    %558 = vmatprep.subr.bf16.mxu0 0
    %559 = vmatpush1.bf16.msra.mxu0 0
    %560 = vmatprep.subr.bf16.mxu0 0
    %561 = vmatpush1.bf16.msra.mxu0 0
    %562 = vmatprep.subr.bf16.mxu0 0
    %563 = vmatpush1.bf16.msra.mxu0 0
    %564 = vmatprep.subr.bf16.mxu0 0
    %565 = vmatpush1.bf16.msra.mxu0 0
    %566 = vmatprep.subr.bf16.mxu0 0
    %567 = vmatpush1.bf16.msra.mxu0 0
    %568 = vmatprep.subr.bf16.mxu0 0
    %569 = vmatpush1.bf16.msra.mxu0 0
    %570 = vmatprep.mubr.bf16.mxu0 0
    %571 = vmatmul.mubr.bf16.gmra.mrb[0].mxu0 %v413
    %v572 = vpop.f32.mrb[0].mxu0
    %v573 = vadd.f32 %v366, %v572
    %v574 = vpop.f32.mrb[0].mxu0
    %v575 = vadd.f32 %v368, %v574
    %v576 = vpop.f32.mrb[0].mxu0
    %v577 = vpop.f32.mrb[0].mxu0
    %578 = vdwg.mxu0
    %v579 = vld [vmem:[%s4] sm:$0xff]
    %v581 = vlaneseq
    %v582 = vshrl.u32 %v581, 7
    %v583 = vsub.s32 0, %v582
    %v584 = vrot.slane %v579, %v583
    %v585 = vlaneseq
    %v586 = vshrl.u32 %v585, 7
    %v587 = vsub.s32 1, %v586
    %v588 = vrot.slane %v579, %v587
    %v589 = vlaneseq
    %v590 = vshrl.u32 %v589, 7
    %v591 = vsub.s32 2, %v590
    %v592 = vrot.slane %v579, %v591
    %v593 = vlaneseq
    %v594 = vshrl.u32 %v593, 7
    %v595 = vsub.s32 3, %v594
    %v596 = vrot.slane %v579, %v595
    %v597 = vlaneseq
    %v598 = vshrl.u32 %v597, 7
    %v599 = vsub.s32 4, %v598
    %v600 = vrot.slane %v579, %v599
    %v601 = vlaneseq
    %v602 = vshrl.u32 %v601, 7
    %v603 = vsub.s32 5, %v602
    %v604 = vrot.slane %v579, %v603
    %v605 = vlaneseq
    %v606 = vshrl.u32 %v605, 7
    %v607 = vsub.s32 6, %v606
    %v608 = vrot.slane %v579, %v607
    %v609 = vlaneseq
    %v610 = vshrl.u32 %v609, 7
    %v611 = vsub.s32 7, %v610
    %v612 = vrot.slane %v579, %v611
    %v621 = vadd.f32 %v450, %v584
    %v622 = vadd.f32 %v452, %v588
    %v623 = vadd.f32 %v491, %v592
    %v624 = vadd.f32 %v493, %v596
    %v625 = vadd.f32 %v532, %v600
    %v626 = vadd.f32 %v534, %v604
    %v627 = vadd.f32 %v573, %v608
    %v628 = vadd.f32 %v575, %v612
    %v629 = vmax.f32 %v621, 0.0
    %v630 = vmax.f32 %v622, 0.0
    %v631 = vmax.f32 %v623, 0.0
    %v632 = vmax.f32 %v624, 0.0
    %v633 = vmax.f32 %v625, 0.0
    %v634 = vmax.f32 %v626, 0.0
    %v635 = vmax.f32 %v627, 0.0
    %v636 = vmax.f32 %v628, 0.0
    %v637 = vpack.c.bf16 %v629, %v629
    %v638 = vpack.c.bf16 %v630, %v630
    %v639 = vpack.c.bf16 %v631, %v631
    %v640 = vpack.c.bf16 %v632, %v632
    %v641 = vpack.c.bf16 %v633, %v633
    %v642 = vpack.c.bf16 %v634, %v634
    %v643 = vpack.c.bf16 %v635, %v635
    %v644 = vpack.c.bf16 %v636, %v636
    %v645 = vld [vmem:[#allocation6] sm:$0xff]
    %v646 = vld [vmem:[#allocation6 + $0x8] sm:$0xff]
    %v647 = vld [vmem:[#allocation6 + $0x10] sm:$0xff]
    %v648 = vld [vmem:[#allocation6 + $0x18] sm:$0xff]
    %v649 = vld [vmem:[#allocation6 + $0x20] sm:$0xff]
    %v650 = vld [vmem:[#allocation6 + $0x28] sm:$0xff]
    %v651 = vld [vmem:[#allocation6 + $0x30] sm:$0xff]
    %v652 = vld [vmem:[#allocation6 + $0x38] sm:$0xff]
    %v653 = vld [vmem:[#allocation6 + $0x40] sm:$0xff]
    %v654 = vld [vmem:[#allocation6 + $0x48] sm:$0xff]
    %v655 = vld [vmem:[#allocation6 + $0x50] sm:$0xff]
    %v656 = vld [vmem:[#allocation6 + $0x58] sm:$0xff]
    %v657 = vld [vmem:[#allocation6 + $0x60] sm:$0xff]
    %v658 = vld [vmem:[#allocation6 + $0x68] sm:$0xff]
    %v659 = vld [vmem:[#allocation6 + $0x70] sm:$0xff]
    %v660 = vld [vmem:[#allocation6 + $0x78] sm:$0xff]
    %v661 = vld [vmem:[#allocation6 + $0x80] sm:$0xff]
    %v662 = vld [vmem:[#allocation6 + $0x88] sm:$0xff]
    %v663 = vld [vmem:[#allocation6 + $0x90] sm:$0xff]
    %v664 = vld [vmem:[#allocation6 + $0x98] sm:$0xff]
    %v665 = vld [vmem:[#allocation6 + $0xa0] sm:$0xff]
    %v666 = vld [vmem:[#allocation6 + $0xa8] sm:$0xff]
    %v667 = vld [vmem:[#allocation6 + $0xb0] sm:$0xff]
    %v668 = vld [vmem:[#allocation6 + $0xb8] sm:$0xff]
    %v669 = vld [vmem:[#allocation6 + $0xc0] sm:$0xff]
    %v670 = vld [vmem:[#allocation6 + $0xc8] sm:$0xff]
    %v671 = vld [vmem:[#allocation6 + $0xd0] sm:$0xff]
    %v672 = vld [vmem:[#allocation6 + $0xd8] sm:$0xff]
    %v673 = vld [vmem:[#allocation6 + $0xe0] sm:$0xff]
    %v674 = vld [vmem:[#allocation6 + $0xe8] sm:$0xff]
    %v675 = vld [vmem:[#allocation6 + $0xf0] sm:$0xff]
    %v676 = vld [vmem:[#allocation6 + $0xf8] sm:$0xff]
    %v677 = vld [vmem:[#allocation6 + $0x100] sm:$0xff]
    %v678 = vld [vmem:[#allocation6 + $0x108] sm:$0xff]
    %v679 = vld [vmem:[#allocation6 + $0x110] sm:$0xff]
    %v680 = vld [vmem:[#allocation6 + $0x118] sm:$0xff]
    %v681 = vld [vmem:[#allocation6 + $0x120] sm:$0xff]
    %v682 = vld [vmem:[#allocation6 + $0x128] sm:$0xff]
    %v683 = vld [vmem:[#allocation6 + $0x130] sm:$0xff]
    %v684 = vld [vmem:[#allocation6 + $0x138] sm:$0xff]
    %v685 = vld [vmem:[#allocation6 + $0x140] sm:$0xff]
    %v686 = vld [vmem:[#allocation6 + $0x148] sm:$0xff]
    %v687 = vld [vmem:[#allocation6 + $0x150] sm:$0xff]
    %v688 = vld [vmem:[#allocation6 + $0x158] sm:$0xff]
    %v689 = vld [vmem:[#allocation6 + $0x160] sm:$0xff]
    %v690 = vld [vmem:[#allocation6 + $0x168] sm:$0xff]
    %v691 = vld [vmem:[#allocation6 + $0x170] sm:$0xff]
    %v692 = vld [vmem:[#allocation6 + $0x178] sm:$0xff]
    %v693 = vld [vmem:[#allocation6 + $0x180] sm:$0xff]
    %v694 = vld [vmem:[#allocation6 + $0x188] sm:$0xff]
    %v695 = vld [vmem:[#allocation6 + $0x190] sm:$0xff]
    %v696 = vld [vmem:[#allocation6 + $0x198] sm:$0xff]
    %v697 = vld [vmem:[#allocation6 + $0x1a0] sm:$0xff]
    %v698 = vld [vmem:[#allocation6 + $0x1a8] sm:$0xff]
    %v699 = vld [vmem:[#allocation6 + $0x1b0] sm:$0xff]
    %v700 = vld [vmem:[#allocation6 + $0x1b8] sm:$0xff]
    %v701 = vld [vmem:[#allocation6 + $0x1c0] sm:$0xff]
    %v702 = vld [vmem:[#allocation6 + $0x1c8] sm:$0xff]
    %v703 = vld [vmem:[#allocation6 + $0x1d0] sm:$0xff]
    %v704 = vld [vmem:[#allocation6 + $0x1d8] sm:$0xff]
    %v705 = vld [vmem:[#allocation6 + $0x1e0] sm:$0xff]
    %v706 = vld [vmem:[#allocation6 + $0x1e8] sm:$0xff]
    %v707 = vld [vmem:[#allocation6 + $0x1f0] sm:$0xff]
    %v708 = vld [vmem:[#allocation6 + $0x1f8] sm:$0xff]
    %v709 = vld [vmem:[#allocation6 + $0x200] sm:$0xff]
    %v710 = vld [vmem:[#allocation6 + $0x208] sm:$0xff]
    %v711 = vld [vmem:[#allocation6 + $0x210] sm:$0xff]
    %v712 = vld [vmem:[#allocation6 + $0x218] sm:$0xff]
    %v713 = vld [vmem:[#allocation6 + $0x220] sm:$0xff]
    %v714 = vld [vmem:[#allocation6 + $0x228] sm:$0xff]
    %v715 = vld [vmem:[#allocation6 + $0x230] sm:$0xff]
    %v716 = vld [vmem:[#allocation6 + $0x238] sm:$0xff]
    %v717 = vld [vmem:[#allocation6 + $0x240] sm:$0xff]
    %v718 = vld [vmem:[#allocation6 + $0x248] sm:$0xff]
    %v719 = vld [vmem:[#allocation6 + $0x250] sm:$0xff]
    %v720 = vld [vmem:[#allocation6 + $0x258] sm:$0xff]
    %v721 = vld [vmem:[#allocation6 + $0x260] sm:$0xff]
    %v722 = vld [vmem:[#allocation6 + $0x268] sm:$0xff]
    %v723 = vld [vmem:[#allocation6 + $0x270] sm:$0xff]
    %v724 = vld [vmem:[#allocation6 + $0x278] sm:$0xff]
    %v725 = vld [vmem:[#allocation6 + $0x280] sm:$0xff]
    %v726 = vld [vmem:[#allocation6 + $0x288] sm:$0xff]
    %v727 = vld [vmem:[#allocation6 + $0x290] sm:$0xff]
    %v728 = vld [vmem:[#allocation6 + $0x298] sm:$0xff]
    %v729 = vld [vmem:[#allocation6 + $0x2a0] sm:$0xff]
    %v730 = vld [vmem:[#allocation6 + $0x2a8] sm:$0xff]
    %v731 = vld [vmem:[#allocation6 + $0x2b0] sm:$0xff]
    %v732 = vld [vmem:[#allocation6 + $0x2b8] sm:$0xff]
    %v733 = vld [vmem:[#allocation6 + $0x2c0] sm:$0xff]
    %v734 = vld [vmem:[#allocation6 + $0x2c8] sm:$0xff]
    %v735 = vld [vmem:[#allocation6 + $0x2d0] sm:$0xff]
    %v736 = vld [vmem:[#allocation6 + $0x2d8] sm:$0xff]
    %v737 = vld [vmem:[#allocation6 + $0x2e0] sm:$0xff]
    %v738 = vld [vmem:[#allocation6 + $0x2e8] sm:$0xff]
    %v739 = vld [vmem:[#allocation6 + $0x2f0] sm:$0xff]
    %v740 = vld [vmem:[#allocation6 + $0x2f8] sm:$0xff]
    %v741 = vld [vmem:[#allocation6 + $0x300] sm:$0xff]
    %v742 = vld [vmem:[#allocation6 + $0x308] sm:$0xff]
    %v743 = vld [vmem:[#allocation6 + $0x310] sm:$0xff]
    %v744 = vld [vmem:[#allocation6 + $0x318] sm:$0xff]
    %v745 = vld [vmem:[#allocation6 + $0x320] sm:$0xff]
    %v746 = vld [vmem:[#allocation6 + $0x328] sm:$0xff]
    %v747 = vld [vmem:[#allocation6 + $0x330] sm:$0xff]
    %v748 = vld [vmem:[#allocation6 + $0x338] sm:$0xff]
    %v749 = vld [vmem:[#allocation6 + $0x340] sm:$0xff]
    %v750 = vld [vmem:[#allocation6 + $0x348] sm:$0xff]
    %v751 = vld [vmem:[#allocation6 + $0x350] sm:$0xff]
    %v752 = vld [vmem:[#allocation6 + $0x358] sm:$0xff]
    %v753 = vld [vmem:[#allocation6 + $0x360] sm:$0xff]
    %v754 = vld [vmem:[#allocation6 + $0x368] sm:$0xff]
    %v755 = vld [vmem:[#allocation6 + $0x370] sm:$0xff]
    %v756 = vld [vmem:[#allocation6 + $0x378] sm:$0xff]
    %v757 = vld [vmem:[#allocation6 + $0x380] sm:$0xff]
    %v758 = vld [vmem:[#allocation6 + $0x388] sm:$0xff]
    %v759 = vld [vmem:[#allocation6 + $0x390] sm:$0xff]
    %v760 = vld [vmem:[#allocation6 + $0x398] sm:$0xff]
    %v761 = vld [vmem:[#allocation6 + $0x3a0] sm:$0xff]
    %v762 = vld [vmem:[#allocation6 + $0x3a8] sm:$0xff]
    %v763 = vld [vmem:[#allocation6 + $0x3b0] sm:$0xff]
    %v764 = vld [vmem:[#allocation6 + $0x3b8] sm:$0xff]
    %v765 = vld [vmem:[#allocation6 + $0x3c0] sm:$0xff]
    %v766 = vld [vmem:[#allocation6 + $0x3c8] sm:$0xff]
    %v767 = vld [vmem:[#allocation6 + $0x3d0] sm:$0xff]
    %v768 = vld [vmem:[#allocation6 + $0x3d8] sm:$0xff]
    %v769 = vld [vmem:[#allocation6 + $0x3e0] sm:$0xff]
    %v770 = vld [vmem:[#allocation6 + $0x3e8] sm:$0xff]
    %v771 = vld [vmem:[#allocation6 + $0x3f0] sm:$0xff]
    %v772 = vld [vmem:[#allocation6 + $0x3f8] sm:$0xff]
    %v773 = vld [vmem:[#allocation6 + $0x400] sm:$0xff]
    %v774 = vld [vmem:[#allocation6 + $0x408] sm:$0xff]
    %v775 = vld [vmem:[#allocation6 + $0x410] sm:$0xff]
    %v776 = vld [vmem:[#allocation6 + $0x418] sm:$0xff]
    %v777 = vld [vmem:[#allocation6 + $0x420] sm:$0xff]
    %v778 = vld [vmem:[#allocation6 + $0x428] sm:$0xff]
    %v779 = vld [vmem:[#allocation6 + $0x430] sm:$0xff]
    %v780 = vld [vmem:[#allocation6 + $0x438] sm:$0xff]
    %v781 = vld [vmem:[#allocation6 + $0x440] sm:$0xff]
    %v782 = vld [vmem:[#allocation6 + $0x448] sm:$0xff]
    %v783 = vld [vmem:[#allocation6 + $0x450] sm:$0xff]
    %v784 = vld [vmem:[#allocation6 + $0x458] sm:$0xff]
    %v785 = vld [vmem:[#allocation6 + $0x460] sm:$0xff]
    %v786 = vld [vmem:[#allocation6 + $0x468] sm:$0xff]
    %v787 = vld [vmem:[#allocation6 + $0x470] sm:$0xff]
    %v788 = vld [vmem:[#allocation6 + $0x478] sm:$0xff]
    %v789 = vld [vmem:[#allocation6 + $0x480] sm:$0xff]
    %v790 = vld [vmem:[#allocation6 + $0x488] sm:$0xff]
    %v791 = vld [vmem:[#allocation6 + $0x490] sm:$0xff]
    %v792 = vld [vmem:[#allocation6 + $0x498] sm:$0xff]
    %v793 = vld [vmem:[#allocation6 + $0x4a0] sm:$0xff]
    %v794 = vld [vmem:[#allocation6 + $0x4a8] sm:$0xff]
    %v795 = vld [vmem:[#allocation6 + $0x4b0] sm:$0xff]
    %v796 = vld [vmem:[#allocation6 + $0x4b8] sm:$0xff]
    %v797 = vld [vmem:[#allocation6 + $0x4c0] sm:$0xff]
    %v798 = vld [vmem:[#allocation6 + $0x4c8] sm:$0xff]
    %v799 = vld [vmem:[#allocation6 + $0x4d0] sm:$0xff]
    %v800 = vld [vmem:[#allocation6 + $0x4d8] sm:$0xff]
    %v801 = vld [vmem:[#allocation6 + $0x4e0] sm:$0xff]
    %v802 = vld [vmem:[#allocation6 + $0x4e8] sm:$0xff]
    %v803 = vld [vmem:[#allocation6 + $0x4f0] sm:$0xff]
    %v804 = vld [vmem:[#allocation6 + $0x4f8] sm:$0xff]
    %v805 = vld [vmem:[#allocation6 + $0x500] sm:$0xff]
    %v806 = vld [vmem:[#allocation6 + $0x508] sm:$0xff]
    %v807 = vld [vmem:[#allocation6 + $0x510] sm:$0xff]
    %v808 = vld [vmem:[#allocation6 + $0x518] sm:$0xff]
    %v809 = vld [vmem:[#allocation6 + $0x520] sm:$0xff]
    %v810 = vld [vmem:[#allocation6 + $0x528] sm:$0xff]
    %v811 = vld [vmem:[#allocation6 + $0x530] sm:$0xff]
    %v812 = vld [vmem:[#allocation6 + $0x538] sm:$0xff]
    %v813 = vld [vmem:[#allocation6 + $0x540] sm:$0xff]
    %v814 = vld [vmem:[#allocation6 + $0x548] sm:$0xff]
    %v815 = vld [vmem:[#allocation6 + $0x550] sm:$0xff]
    %v816 = vld [vmem:[#allocation6 + $0x558] sm:$0xff]
    %v817 = vld [vmem:[#allocation6 + $0x560] sm:$0xff]
    %v818 = vld [vmem:[#allocation6 + $0x568] sm:$0xff]
    %v819 = vld [vmem:[#allocation6 + $0x570] sm:$0xff]
    %v820 = vld [vmem:[#allocation6 + $0x578] sm:$0xff]
    %v821 = vld [vmem:[#allocation6 + $0x580] sm:$0xff]
    %v822 = vld [vmem:[#allocation6 + $0x588] sm:$0xff]
    %v823 = vld [vmem:[#allocation6 + $0x590] sm:$0xff]
    %v824 = vld [vmem:[#allocation6 + $0x598] sm:$0xff]
    %v825 = vld [vmem:[#allocation6 + $0x5a0] sm:$0xff]
    %v826 = vld [vmem:[#allocation6 + $0x5a8] sm:$0xff]
    %v827 = vld [vmem:[#allocation6 + $0x5b0] sm:$0xff]
    %v828 = vld [vmem:[#allocation6 + $0x5b8] sm:$0xff]
    %v829 = vld [vmem:[#allocation6 + $0x5c0] sm:$0xff]
    %v830 = vld [vmem:[#allocation6 + $0x5c8] sm:$0xff]
    %v831 = vld [vmem:[#allocation6 + $0x5d0] sm:$0xff]
    %v832 = vld [vmem:[#allocation6 + $0x5d8] sm:$0xff]
    %v833 = vld [vmem:[#allocation6 + $0x5e0] sm:$0xff]
    %v834 = vld [vmem:[#allocation6 + $0x5e8] sm:$0xff]
    %v835 = vld [vmem:[#allocation6 + $0x5f0] sm:$0xff]
    %v836 = vld [vmem:[#allocation6 + $0x5f8] sm:$0xff]
    %v837 = vld [vmem:[#allocation6 + $0x600] sm:$0xff]
    %v838 = vld [vmem:[#allocation6 + $0x608] sm:$0xff]
    %v839 = vld [vmem:[#allocation6 + $0x610] sm:$0xff]
    %v840 = vld [vmem:[#allocation6 + $0x618] sm:$0xff]
    %v841 = vld [vmem:[#allocation6 + $0x620] sm:$0xff]
    %v842 = vld [vmem:[#allocation6 + $0x628] sm:$0xff]
    %v843 = vld [vmem:[#allocation6 + $0x630] sm:$0xff]
    %v844 = vld [vmem:[#allocation6 + $0x638] sm:$0xff]
    %v845 = vld [vmem:[#allocation6 + $0x640] sm:$0xff]
    %v846 = vld [vmem:[#allocation6 + $0x648] sm:$0xff]
    %v847 = vld [vmem:[#allocation6 + $0x650] sm:$0xff]
    %v848 = vld [vmem:[#allocation6 + $0x658] sm:$0xff]
    %v849 = vld [vmem:[#allocation6 + $0x660] sm:$0xff]
    %v850 = vld [vmem:[#allocation6 + $0x668] sm:$0xff]
    %v851 = vld [vmem:[#allocation6 + $0x670] sm:$0xff]
    %v852 = vld [vmem:[#allocation6 + $0x678] sm:$0xff]
    %v853 = vld [vmem:[#allocation6 + $0x680] sm:$0xff]
    %v854 = vld [vmem:[#allocation6 + $0x688] sm:$0xff]
    %v855 = vld [vmem:[#allocation6 + $0x690] sm:$0xff]
    %v856 = vld [vmem:[#allocation6 + $0x698] sm:$0xff]
    %v857 = vld [vmem:[#allocation6 + $0x6a0] sm:$0xff]
    %v858 = vld [vmem:[#allocation6 + $0x6a8] sm:$0xff]
    %v859 = vld [vmem:[#allocation6 + $0x6b0] sm:$0xff]
    %v860 = vld [vmem:[#allocation6 + $0x6b8] sm:$0xff]
    %v861 = vld [vmem:[#allocation6 + $0x6c0] sm:$0xff]
    %v862 = vld [vmem:[#allocation6 + $0x6c8] sm:$0xff]
    %v863 = vld [vmem:[#allocation6 + $0x6d0] sm:$0xff]
    %v864 = vld [vmem:[#allocation6 + $0x6d8] sm:$0xff]
    %v865 = vld [vmem:[#allocation6 + $0x6e0] sm:$0xff]
    %v866 = vld [vmem:[#allocation6 + $0x6e8] sm:$0xff]
    %v867 = vld [vmem:[#allocation6 + $0x6f0] sm:$0xff]
    %v868 = vld [vmem:[#allocation6 + $0x6f8] sm:$0xff]
    %v869 = vld [vmem:[#allocation6 + $0x700] sm:$0xff]
    %v870 = vld [vmem:[#allocation6 + $0x708] sm:$0xff]
    %v871 = vld [vmem:[#allocation6 + $0x710] sm:$0xff]
    %v872 = vld [vmem:[#allocation6 + $0x718] sm:$0xff]
    %v873 = vld [vmem:[#allocation6 + $0x720] sm:$0xff]
    %v874 = vld [vmem:[#allocation6 + $0x728] sm:$0xff]
    %v875 = vld [vmem:[#allocation6 + $0x730] sm:$0xff]
    %v876 = vld [vmem:[#allocation6 + $0x738] sm:$0xff]
    %v877 = vld [vmem:[#allocation6 + $0x740] sm:$0xff]
    %v878 = vld [vmem:[#allocation6 + $0x748] sm:$0xff]
    %v879 = vld [vmem:[#allocation6 + $0x750] sm:$0xff]
    %v880 = vld [vmem:[#allocation6 + $0x758] sm:$0xff]
    %v881 = vld [vmem:[#allocation6 + $0x760] sm:$0xff]
    %v882 = vld [vmem:[#allocation6 + $0x768] sm:$0xff]
    %v883 = vld [vmem:[#allocation6 + $0x770] sm:$0xff]
    %v884 = vld [vmem:[#allocation6 + $0x778] sm:$0xff]
    %v885 = vld [vmem:[#allocation6 + $0x780] sm:$0xff]
    %v886 = vld [vmem:[#allocation6 + $0x788] sm:$0xff]
    %v887 = vld [vmem:[#allocation6 + $0x790] sm:$0xff]
    %v888 = vld [vmem:[#allocation6 + $0x798] sm:$0xff]
    %v889 = vld [vmem:[#allocation6 + $0x7a0] sm:$0xff]
    %v890 = vld [vmem:[#allocation6 + $0x7a8] sm:$0xff]
    %v891 = vld [vmem:[#allocation6 + $0x7b0] sm:$0xff]
    %v892 = vld [vmem:[#allocation6 + $0x7b8] sm:$0xff]
    %v893 = vld [vmem:[#allocation6 + $0x7c0] sm:$0xff]
    %v894 = vld [vmem:[#allocation6 + $0x7c8] sm:$0xff]
    %v895 = vld [vmem:[#allocation6 + $0x7d0] sm:$0xff]
    %v896 = vld [vmem:[#allocation6 + $0x7d8] sm:$0xff]
    %v897 = vld [vmem:[#allocation6 + $0x7e0] sm:$0xff]
    %v898 = vld [vmem:[#allocation6 + $0x7e8] sm:$0xff]
    %v899 = vld [vmem:[#allocation6 + $0x7f0] sm:$0xff]
    %v900 = vld [vmem:[#allocation6 + $0x7f8] sm:$0xff]
    %v901 = vld [vmem:[%s6] sm:$0xf]
    %v903 = vlaneseq
    %v904 = vshrl.u32 %v903, 7
    %v905 = vsub.s32 0, %v904
    %v906 = vrot.slane %v901, %v905
    %v907 = vlaneseq
    %v908 = vshrl.u32 %v907, 7
    %v909 = vsub.s32 1, %v908
    %v910 = vrot.slane %v901, %v909
    %v911 = vlaneseq
    %v912 = vshrl.u32 %v911, 7
    %v913 = vsub.s32 2, %v912
    %v914 = vrot.slane %v901, %v913
    %v915 = vlaneseq
    %v916 = vshrl.u32 %v915, 7
    %v917 = vsub.s32 3, %v916
    %v918 = vrot.slane %v901, %v917
    %v1179 = vunpack.c.l.b16 %v645
    %v1180 = vunpack.c.h.b16 %v645
    %v1181 = vunpack.c.l.b16 %v646
    %v1182 = vunpack.c.h.b16 %v646
    %v1183 = vunpack.c.l.b16 %v647
    %v1184 = vunpack.c.h.b16 %v647
    %v1185 = vunpack.c.l.b16 %v648
    %v1186 = vunpack.c.h.b16 %v648
    %v1187 = vunpack.c.l.b16 %v649
    %v1188 = vunpack.c.h.b16 %v649
    %v1189 = vunpack.c.l.b16 %v650
    %v1190 = vunpack.c.h.b16 %v650
    %v1191 = vunpack.c.l.b16 %v651
    %v1192 = vunpack.c.h.b16 %v651
    %v1193 = vunpack.c.l.b16 %v652
    %v1194 = vunpack.c.h.b16 %v652
    %v1195 = vunpack.c.l.b16 %v653
    %v1196 = vunpack.c.h.b16 %v653
    %v1197 = vunpack.c.l.b16 %v654
    %v1198 = vunpack.c.h.b16 %v654
    %v1199 = vunpack.c.l.b16 %v655
    %v1200 = vunpack.c.h.b16 %v655
    %v1201 = vunpack.c.l.b16 %v656
    %v1202 = vunpack.c.h.b16 %v656
    %v1203 = vunpack.c.l.b16 %v657
    %v1204 = vunpack.c.h.b16 %v657
    %v1205 = vunpack.c.l.b16 %v658
    %v1206 = vunpack.c.h.b16 %v658
    %v1207 = vunpack.c.l.b16 %v659
    %v1208 = vunpack.c.h.b16 %v659
    %v1209 = vunpack.c.l.b16 %v660
    %v1210 = vunpack.c.h.b16 %v660
    %v1211 = vunpack.c.l.b16 %v661
    %v1212 = vunpack.c.h.b16 %v661
    %v1213 = vunpack.c.l.b16 %v662
    %v1214 = vunpack.c.h.b16 %v662
    %v1215 = vunpack.c.l.b16 %v663
    %v1216 = vunpack.c.h.b16 %v663
    %v1217 = vunpack.c.l.b16 %v664
    %v1218 = vunpack.c.h.b16 %v664
    %v1219 = vunpack.c.l.b16 %v665
    %v1220 = vunpack.c.h.b16 %v665
    %v1221 = vunpack.c.l.b16 %v666
    %v1222 = vunpack.c.h.b16 %v666
    %v1223 = vunpack.c.l.b16 %v667
    %v1224 = vunpack.c.h.b16 %v667
    %v1225 = vunpack.c.l.b16 %v668
    %v1226 = vunpack.c.h.b16 %v668
    %v1227 = vunpack.c.l.b16 %v669
    %v1228 = vunpack.c.h.b16 %v669
    %v1229 = vunpack.c.l.b16 %v670
    %v1230 = vunpack.c.h.b16 %v670
    %v1231 = vunpack.c.l.b16 %v671
    %v1232 = vunpack.c.h.b16 %v671
    %v1233 = vunpack.c.l.b16 %v672
    %v1234 = vunpack.c.h.b16 %v672
    %v1235 = vunpack.c.l.b16 %v673
    %v1236 = vunpack.c.h.b16 %v673
    %v1237 = vunpack.c.l.b16 %v674
    %v1238 = vunpack.c.h.b16 %v674
    %v1239 = vunpack.c.l.b16 %v675
    %v1240 = vunpack.c.h.b16 %v675
    %v1241 = vunpack.c.l.b16 %v676
    %v1242 = vunpack.c.h.b16 %v676
    %v1243 = vunpack.c.l.b16 %v677
    %v1244 = vunpack.c.h.b16 %v677
    %v1245 = vunpack.c.l.b16 %v678
    %v1246 = vunpack.c.h.b16 %v678
    %v1247 = vunpack.c.l.b16 %v679
    %v1248 = vunpack.c.h.b16 %v679
    %v1249 = vunpack.c.l.b16 %v680
    %v1250 = vunpack.c.h.b16 %v680
    %v1251 = vunpack.c.l.b16 %v681
    %v1252 = vunpack.c.h.b16 %v681
    %v1253 = vunpack.c.l.b16 %v682
    %v1254 = vunpack.c.h.b16 %v682
    %v1255 = vunpack.c.l.b16 %v683
    %v1256 = vunpack.c.h.b16 %v683
    %v1257 = vunpack.c.l.b16 %v684
    %v1258 = vunpack.c.h.b16 %v684
    %v1259 = vunpack.c.l.b16 %v685
    %v1260 = vunpack.c.h.b16 %v685
    %v1261 = vunpack.c.l.b16 %v686
    %v1262 = vunpack.c.h.b16 %v686
    %v1263 = vunpack.c.l.b16 %v687
    %v1264 = vunpack.c.h.b16 %v687
    %v1265 = vunpack.c.l.b16 %v688
    %v1266 = vunpack.c.h.b16 %v688
    %v1267 = vunpack.c.l.b16 %v689
    %v1268 = vunpack.c.h.b16 %v689
    %v1269 = vunpack.c.l.b16 %v690
    %v1270 = vunpack.c.h.b16 %v690
    %v1271 = vunpack.c.l.b16 %v691
    %v1272 = vunpack.c.h.b16 %v691
    %v1273 = vunpack.c.l.b16 %v692
    %v1274 = vunpack.c.h.b16 %v692
    %v1275 = vunpack.c.l.b16 %v693
    %v1276 = vunpack.c.h.b16 %v693
    %v1277 = vunpack.c.l.b16 %v694
    %v1278 = vunpack.c.h.b16 %v694
    %v1279 = vunpack.c.l.b16 %v695
    %v1280 = vunpack.c.h.b16 %v695
    %v1281 = vunpack.c.l.b16 %v696
    %v1282 = vunpack.c.h.b16 %v696
    %v1283 = vunpack.c.l.b16 %v697
    %v1284 = vunpack.c.h.b16 %v697
    %v1285 = vunpack.c.l.b16 %v698
    %v1286 = vunpack.c.h.b16 %v698
    %v1287 = vunpack.c.l.b16 %v699
    %v1288 = vunpack.c.h.b16 %v699
    %v1289 = vunpack.c.l.b16 %v700
    %v1290 = vunpack.c.h.b16 %v700
    %v1291 = vunpack.c.l.b16 %v701
    %v1292 = vunpack.c.h.b16 %v701
    %v1293 = vunpack.c.l.b16 %v702
    %v1294 = vunpack.c.h.b16 %v702
    %v1295 = vunpack.c.l.b16 %v703
    %v1296 = vunpack.c.h.b16 %v703
    %v1297 = vunpack.c.l.b16 %v704
    %v1298 = vunpack.c.h.b16 %v704
    %v1299 = vunpack.c.l.b16 %v705
    %v1300 = vunpack.c.h.b16 %v705
    %v1301 = vunpack.c.l.b16 %v706
    %v1302 = vunpack.c.h.b16 %v706
    %v1303 = vunpack.c.l.b16 %v707
    %v1304 = vunpack.c.h.b16 %v707
    %v1305 = vunpack.c.l.b16 %v708
    %v1306 = vunpack.c.h.b16 %v708
    %v1307 = vunpack.c.l.b16 %v709
    %v1308 = vunpack.c.h.b16 %v709
    %v1309 = vunpack.c.l.b16 %v710
    %v1310 = vunpack.c.h.b16 %v710
    %v1311 = vunpack.c.l.b16 %v711
    %v1312 = vunpack.c.h.b16 %v711
    %v1313 = vunpack.c.l.b16 %v712
    %v1314 = vunpack.c.h.b16 %v712
    %v1315 = vunpack.c.l.b16 %v713
    %v1316 = vunpack.c.h.b16 %v713
    %v1317 = vunpack.c.l.b16 %v714
    %v1318 = vunpack.c.h.b16 %v714
    %v1319 = vunpack.c.l.b16 %v715
    %v1320 = vunpack.c.h.b16 %v715
    %v1321 = vunpack.c.l.b16 %v716
    %v1322 = vunpack.c.h.b16 %v716
    %v1323 = vunpack.c.l.b16 %v717
    %v1324 = vunpack.c.h.b16 %v717
    %v1325 = vunpack.c.l.b16 %v718
    %v1326 = vunpack.c.h.b16 %v718
    %v1327 = vunpack.c.l.b16 %v719
    %v1328 = vunpack.c.h.b16 %v719
    %v1329 = vunpack.c.l.b16 %v720
    %v1330 = vunpack.c.h.b16 %v720
    %v1331 = vunpack.c.l.b16 %v721
    %v1332 = vunpack.c.h.b16 %v721
    %v1333 = vunpack.c.l.b16 %v722
    %v1334 = vunpack.c.h.b16 %v722
    %v1335 = vunpack.c.l.b16 %v723
    %v1336 = vunpack.c.h.b16 %v723
    %v1337 = vunpack.c.l.b16 %v724
    %v1338 = vunpack.c.h.b16 %v724
    %v1339 = vunpack.c.l.b16 %v725
    %v1340 = vunpack.c.h.b16 %v725
    %v1341 = vunpack.c.l.b16 %v726
    %v1342 = vunpack.c.h.b16 %v726
    %v1343 = vunpack.c.l.b16 %v727
    %v1344 = vunpack.c.h.b16 %v727
    %v1345 = vunpack.c.l.b16 %v728
    %v1346 = vunpack.c.h.b16 %v728
    %v1347 = vunpack.c.l.b16 %v729
    %v1348 = vunpack.c.h.b16 %v729
    %v1349 = vunpack.c.l.b16 %v730
    %v1350 = vunpack.c.h.b16 %v730
    %v1351 = vunpack.c.l.b16 %v731
    %v1352 = vunpack.c.h.b16 %v731
    %v1353 = vunpack.c.l.b16 %v732
    %v1354 = vunpack.c.h.b16 %v732
    %v1355 = vunpack.c.l.b16 %v733
    %v1356 = vunpack.c.h.b16 %v733
    %v1357 = vunpack.c.l.b16 %v734
    %v1358 = vunpack.c.h.b16 %v734
    %v1359 = vunpack.c.l.b16 %v735
    %v1360 = vunpack.c.h.b16 %v735
    %v1361 = vunpack.c.l.b16 %v736
    %v1362 = vunpack.c.h.b16 %v736
    %v1363 = vunpack.c.l.b16 %v737
    %v1364 = vunpack.c.h.b16 %v737
    %v1365 = vunpack.c.l.b16 %v738
    %v1366 = vunpack.c.h.b16 %v738
    %v1367 = vunpack.c.l.b16 %v739
    %v1368 = vunpack.c.h.b16 %v739
    %v1369 = vunpack.c.l.b16 %v740
    %v1370 = vunpack.c.h.b16 %v740
    %v1371 = vunpack.c.l.b16 %v741
    %v1372 = vunpack.c.h.b16 %v741
    %v1373 = vunpack.c.l.b16 %v742
    %v1374 = vunpack.c.h.b16 %v742
    %v1375 = vunpack.c.l.b16 %v743
    %v1376 = vunpack.c.h.b16 %v743
    %v1377 = vunpack.c.l.b16 %v744
    %v1378 = vunpack.c.h.b16 %v744
    %v1379 = vunpack.c.l.b16 %v745
    %v1380 = vunpack.c.h.b16 %v745
    %v1381 = vunpack.c.l.b16 %v746
    %v1382 = vunpack.c.h.b16 %v746
    %v1383 = vunpack.c.l.b16 %v747
    %v1384 = vunpack.c.h.b16 %v747
    %v1385 = vunpack.c.l.b16 %v748
    %v1386 = vunpack.c.h.b16 %v748
    %v1387 = vunpack.c.l.b16 %v749
    %v1388 = vunpack.c.h.b16 %v749
    %v1389 = vunpack.c.l.b16 %v750
    %v1390 = vunpack.c.h.b16 %v750
    %v1391 = vunpack.c.l.b16 %v751
    %v1392 = vunpack.c.h.b16 %v751
    %v1393 = vunpack.c.l.b16 %v752
    %v1394 = vunpack.c.h.b16 %v752
    %v1395 = vunpack.c.l.b16 %v753
    %v1396 = vunpack.c.h.b16 %v753
    %v1397 = vunpack.c.l.b16 %v754
    %v1398 = vunpack.c.h.b16 %v754
    %v1399 = vunpack.c.l.b16 %v755
    %v1400 = vunpack.c.h.b16 %v755
    %v1401 = vunpack.c.l.b16 %v756
    %v1402 = vunpack.c.h.b16 %v756
    %v1403 = vunpack.c.l.b16 %v757
    %v1404 = vunpack.c.h.b16 %v757
    %v1405 = vunpack.c.l.b16 %v758
    %v1406 = vunpack.c.h.b16 %v758
    %v1407 = vunpack.c.l.b16 %v759
    %v1408 = vunpack.c.h.b16 %v759
    %v1409 = vunpack.c.l.b16 %v760
    %v1410 = vunpack.c.h.b16 %v760
    %v1411 = vunpack.c.l.b16 %v761
    %v1412 = vunpack.c.h.b16 %v761
    %v1413 = vunpack.c.l.b16 %v762
    %v1414 = vunpack.c.h.b16 %v762
    %v1415 = vunpack.c.l.b16 %v763
    %v1416 = vunpack.c.h.b16 %v763
    %v1417 = vunpack.c.l.b16 %v764
    %v1418 = vunpack.c.h.b16 %v764
    %v1419 = vunpack.c.l.b16 %v765
    %v1420 = vunpack.c.h.b16 %v765
    %v1421 = vunpack.c.l.b16 %v766
    %v1422 = vunpack.c.h.b16 %v766
    %v1423 = vunpack.c.l.b16 %v767
    %v1424 = vunpack.c.h.b16 %v767
    %v1425 = vunpack.c.l.b16 %v768
    %v1426 = vunpack.c.h.b16 %v768
    %v1427 = vunpack.c.l.b16 %v769
    %v1428 = vunpack.c.h.b16 %v769
    %v1429 = vunpack.c.l.b16 %v770
    %v1430 = vunpack.c.h.b16 %v770
    %v1431 = vunpack.c.l.b16 %v771
    %v1432 = vunpack.c.h.b16 %v771
    %v1433 = vunpack.c.l.b16 %v772
    %v1434 = vunpack.c.h.b16 %v772
    %v1435 = vunpack.c.l.b16 %v773
    %v1436 = vunpack.c.h.b16 %v773
    %v1437 = vunpack.c.l.b16 %v774
    %v1438 = vunpack.c.h.b16 %v774
    %v1439 = vunpack.c.l.b16 %v775
    %v1440 = vunpack.c.h.b16 %v775
    %v1441 = vunpack.c.l.b16 %v776
    %v1442 = vunpack.c.h.b16 %v776
    %v1443 = vunpack.c.l.b16 %v777
    %v1444 = vunpack.c.h.b16 %v777
    %v1445 = vunpack.c.l.b16 %v778
    %v1446 = vunpack.c.h.b16 %v778
    %v1447 = vunpack.c.l.b16 %v779
    %v1448 = vunpack.c.h.b16 %v779
    %v1449 = vunpack.c.l.b16 %v780
    %v1450 = vunpack.c.h.b16 %v780
    %v1451 = vunpack.c.l.b16 %v781
    %v1452 = vunpack.c.h.b16 %v781
    %v1453 = vunpack.c.l.b16 %v782
    %v1454 = vunpack.c.h.b16 %v782
    %v1455 = vunpack.c.l.b16 %v783
    %v1456 = vunpack.c.h.b16 %v783
    %v1457 = vunpack.c.l.b16 %v784
    %v1458 = vunpack.c.h.b16 %v784
    %v1459 = vunpack.c.l.b16 %v785
    %v1460 = vunpack.c.h.b16 %v785
    %v1461 = vunpack.c.l.b16 %v786
    %v1462 = vunpack.c.h.b16 %v786
    %v1463 = vunpack.c.l.b16 %v787
    %v1464 = vunpack.c.h.b16 %v787
    %v1465 = vunpack.c.l.b16 %v788
    %v1466 = vunpack.c.h.b16 %v788
    %v1467 = vunpack.c.l.b16 %v789
    %v1468 = vunpack.c.h.b16 %v789
    %v1469 = vunpack.c.l.b16 %v790
    %v1470 = vunpack.c.h.b16 %v790
    %v1471 = vunpack.c.l.b16 %v791
    %v1472 = vunpack.c.h.b16 %v791
    %v1473 = vunpack.c.l.b16 %v792
    %v1474 = vunpack.c.h.b16 %v792
    %v1475 = vunpack.c.l.b16 %v793
    %v1476 = vunpack.c.h.b16 %v793
    %v1477 = vunpack.c.l.b16 %v794
    %v1478 = vunpack.c.h.b16 %v794
    %v1479 = vunpack.c.l.b16 %v795
    %v1480 = vunpack.c.h.b16 %v795
    %v1481 = vunpack.c.l.b16 %v796
    %v1482 = vunpack.c.h.b16 %v796
    %v1483 = vunpack.c.l.b16 %v797
    %v1484 = vunpack.c.h.b16 %v797
    %v1485 = vunpack.c.l.b16 %v798
    %v1486 = vunpack.c.h.b16 %v798
    %v1487 = vunpack.c.l.b16 %v799
    %v1488 = vunpack.c.h.b16 %v799
    %v1489 = vunpack.c.l.b16 %v800
    %v1490 = vunpack.c.h.b16 %v800
    %v1491 = vunpack.c.l.b16 %v801
    %v1492 = vunpack.c.h.b16 %v801
    %v1493 = vunpack.c.l.b16 %v802
    %v1494 = vunpack.c.h.b16 %v802
    %v1495 = vunpack.c.l.b16 %v803
    %v1496 = vunpack.c.h.b16 %v803
    %v1497 = vunpack.c.l.b16 %v804
    %v1498 = vunpack.c.h.b16 %v804
    %v1499 = vunpack.c.l.b16 %v805
    %v1500 = vunpack.c.h.b16 %v805
    %v1501 = vunpack.c.l.b16 %v806
    %v1502 = vunpack.c.h.b16 %v806
    %v1503 = vunpack.c.l.b16 %v807
    %v1504 = vunpack.c.h.b16 %v807
    %v1505 = vunpack.c.l.b16 %v808
    %v1506 = vunpack.c.h.b16 %v808
    %v1507 = vunpack.c.l.b16 %v809
    %v1508 = vunpack.c.h.b16 %v809
    %v1509 = vunpack.c.l.b16 %v810
    %v1510 = vunpack.c.h.b16 %v810
    %v1511 = vunpack.c.l.b16 %v811
    %v1512 = vunpack.c.h.b16 %v811
    %v1513 = vunpack.c.l.b16 %v812
    %v1514 = vunpack.c.h.b16 %v812
    %v1515 = vunpack.c.l.b16 %v813
    %v1516 = vunpack.c.h.b16 %v813
    %v1517 = vunpack.c.l.b16 %v814
    %v1518 = vunpack.c.h.b16 %v814
    %v1519 = vunpack.c.l.b16 %v815
    %v1520 = vunpack.c.h.b16 %v815
    %v1521 = vunpack.c.l.b16 %v816
    %v1522 = vunpack.c.h.b16 %v816
    %v1523 = vunpack.c.l.b16 %v817
    %v1524 = vunpack.c.h.b16 %v817
    %v1525 = vunpack.c.l.b16 %v818
    %v1526 = vunpack.c.h.b16 %v818
    %v1527 = vunpack.c.l.b16 %v819
    %v1528 = vunpack.c.h.b16 %v819
    %v1529 = vunpack.c.l.b16 %v820
    %v1530 = vunpack.c.h.b16 %v820
    %v1531 = vunpack.c.l.b16 %v821
    %v1532 = vunpack.c.h.b16 %v821
    %v1533 = vunpack.c.l.b16 %v822
    %v1534 = vunpack.c.h.b16 %v822
    %v1535 = vunpack.c.l.b16 %v823
    %v1536 = vunpack.c.h.b16 %v823
    %v1537 = vunpack.c.l.b16 %v824
    %v1538 = vunpack.c.h.b16 %v824
    %v1539 = vunpack.c.l.b16 %v825
    %v1540 = vunpack.c.h.b16 %v825
    %v1541 = vunpack.c.l.b16 %v826
    %v1542 = vunpack.c.h.b16 %v826
    %v1543 = vunpack.c.l.b16 %v827
    %v1544 = vunpack.c.h.b16 %v827
    %v1545 = vunpack.c.l.b16 %v828
    %v1546 = vunpack.c.h.b16 %v828
    %v1547 = vunpack.c.l.b16 %v829
    %v1548 = vunpack.c.h.b16 %v829
    %v1549 = vunpack.c.l.b16 %v830
    %v1550 = vunpack.c.h.b16 %v830
    %v1551 = vunpack.c.l.b16 %v831
    %v1552 = vunpack.c.h.b16 %v831
    %v1553 = vunpack.c.l.b16 %v832
    %v1554 = vunpack.c.h.b16 %v832
    %v1555 = vunpack.c.l.b16 %v833
    %v1556 = vunpack.c.h.b16 %v833
    %v1557 = vunpack.c.l.b16 %v834
    %v1558 = vunpack.c.h.b16 %v834
    %v1559 = vunpack.c.l.b16 %v835
    %v1560 = vunpack.c.h.b16 %v835
    %v1561 = vunpack.c.l.b16 %v836
    %v1562 = vunpack.c.h.b16 %v836
    %v1563 = vunpack.c.l.b16 %v837
    %v1564 = vunpack.c.h.b16 %v837
    %v1565 = vunpack.c.l.b16 %v838
    %v1566 = vunpack.c.h.b16 %v838
    %v1567 = vunpack.c.l.b16 %v839
    %v1568 = vunpack.c.h.b16 %v839
    %v1569 = vunpack.c.l.b16 %v840
    %v1570 = vunpack.c.h.b16 %v840
    %v1571 = vunpack.c.l.b16 %v841
    %v1572 = vunpack.c.h.b16 %v841
    %v1573 = vunpack.c.l.b16 %v842
    %v1574 = vunpack.c.h.b16 %v842
    %v1575 = vunpack.c.l.b16 %v843
    %v1576 = vunpack.c.h.b16 %v843
    %v1577 = vunpack.c.l.b16 %v844
    %v1578 = vunpack.c.h.b16 %v844
    %v1579 = vunpack.c.l.b16 %v845
    %v1580 = vunpack.c.h.b16 %v845
    %v1581 = vunpack.c.l.b16 %v846
    %v1582 = vunpack.c.h.b16 %v846
    %v1583 = vunpack.c.l.b16 %v847
    %v1584 = vunpack.c.h.b16 %v847
    %v1585 = vunpack.c.l.b16 %v848
    %v1586 = vunpack.c.h.b16 %v848
    %v1587 = vunpack.c.l.b16 %v849
    %v1588 = vunpack.c.h.b16 %v849
    %v1589 = vunpack.c.l.b16 %v850
    %v1590 = vunpack.c.h.b16 %v850
    %v1591 = vunpack.c.l.b16 %v851
    %v1592 = vunpack.c.h.b16 %v851
    %v1593 = vunpack.c.l.b16 %v852
    %v1594 = vunpack.c.h.b16 %v852
    %v1595 = vunpack.c.l.b16 %v853
    %v1596 = vunpack.c.h.b16 %v853
    %v1597 = vunpack.c.l.b16 %v854
    %v1598 = vunpack.c.h.b16 %v854
    %v1599 = vunpack.c.l.b16 %v855
    %v1600 = vunpack.c.h.b16 %v855
    %v1601 = vunpack.c.l.b16 %v856
    %v1602 = vunpack.c.h.b16 %v856
    %v1603 = vunpack.c.l.b16 %v857
    %v1604 = vunpack.c.h.b16 %v857
    %v1605 = vunpack.c.l.b16 %v858
    %v1606 = vunpack.c.h.b16 %v858
    %v1607 = vunpack.c.l.b16 %v859
    %v1608 = vunpack.c.h.b16 %v859
    %v1609 = vunpack.c.l.b16 %v860
    %v1610 = vunpack.c.h.b16 %v860
    %v1611 = vunpack.c.l.b16 %v861
    %v1612 = vunpack.c.h.b16 %v861
    %v1613 = vunpack.c.l.b16 %v862
    %v1614 = vunpack.c.h.b16 %v862
    %v1615 = vunpack.c.l.b16 %v863
    %v1616 = vunpack.c.h.b16 %v863
    %v1617 = vunpack.c.l.b16 %v864
    %v1618 = vunpack.c.h.b16 %v864
    %v1619 = vunpack.c.l.b16 %v865
    %v1620 = vunpack.c.h.b16 %v865
    %v1621 = vunpack.c.l.b16 %v866
    %v1622 = vunpack.c.h.b16 %v866
    %v1623 = vunpack.c.l.b16 %v867
    %v1624 = vunpack.c.h.b16 %v867
    %v1625 = vunpack.c.l.b16 %v868
    %v1626 = vunpack.c.h.b16 %v868
    %v1627 = vunpack.c.l.b16 %v869
    %v1628 = vunpack.c.h.b16 %v869
    %v1629 = vunpack.c.l.b16 %v870
    %v1630 = vunpack.c.h.b16 %v870
    %v1631 = vunpack.c.l.b16 %v871
    %v1632 = vunpack.c.h.b16 %v871
    %v1633 = vunpack.c.l.b16 %v872
    %v1634 = vunpack.c.h.b16 %v872
    %v1635 = vunpack.c.l.b16 %v873
    %v1636 = vunpack.c.h.b16 %v873
    %v1637 = vunpack.c.l.b16 %v874
    %v1638 = vunpack.c.h.b16 %v874
    %v1639 = vunpack.c.l.b16 %v875
    %v1640 = vunpack.c.h.b16 %v875
    %v1641 = vunpack.c.l.b16 %v876
    %v1642 = vunpack.c.h.b16 %v876
    %v1643 = vunpack.c.l.b16 %v877
    %v1644 = vunpack.c.h.b16 %v877
    %v1645 = vunpack.c.l.b16 %v878
    %v1646 = vunpack.c.h.b16 %v878
    %v1647 = vunpack.c.l.b16 %v879
    %v1648 = vunpack.c.h.b16 %v879
    %v1649 = vunpack.c.l.b16 %v880
    %v1650 = vunpack.c.h.b16 %v880
    %v1651 = vunpack.c.l.b16 %v881
    %v1652 = vunpack.c.h.b16 %v881
    %v1653 = vunpack.c.l.b16 %v882
    %v1654 = vunpack.c.h.b16 %v882
    %v1655 = vunpack.c.l.b16 %v883
    %v1656 = vunpack.c.h.b16 %v883
    %v1657 = vunpack.c.l.b16 %v884
    %v1658 = vunpack.c.h.b16 %v884
    %v1659 = vunpack.c.l.b16 %v885
    %v1660 = vunpack.c.h.b16 %v885
    %v1661 = vunpack.c.l.b16 %v886
    %v1662 = vunpack.c.h.b16 %v886
    %v1663 = vunpack.c.l.b16 %v887
    %v1664 = vunpack.c.h.b16 %v887
    %v1665 = vunpack.c.l.b16 %v888
    %v1666 = vunpack.c.h.b16 %v888
    %v1667 = vunpack.c.l.b16 %v889
    %v1668 = vunpack.c.h.b16 %v889
    %v1669 = vunpack.c.l.b16 %v890
    %v1670 = vunpack.c.h.b16 %v890
    %v1671 = vunpack.c.l.b16 %v891
    %v1672 = vunpack.c.h.b16 %v891
    %v1673 = vunpack.c.l.b16 %v892
    %v1674 = vunpack.c.h.b16 %v892
    %v1675 = vunpack.c.l.b16 %v893
    %v1676 = vunpack.c.h.b16 %v893
    %v1677 = vunpack.c.l.b16 %v894
    %v1678 = vunpack.c.h.b16 %v894
    %v1679 = vunpack.c.l.b16 %v895
    %v1680 = vunpack.c.h.b16 %v895
    %v1681 = vunpack.c.l.b16 %v896
    %v1682 = vunpack.c.h.b16 %v896
    %v1683 = vunpack.c.l.b16 %v897
    %v1684 = vunpack.c.h.b16 %v897
    %v1685 = vunpack.c.l.b16 %v898
    %v1686 = vunpack.c.h.b16 %v898
    %v1687 = vunpack.c.l.b16 %v899
    %v1688 = vunpack.c.h.b16 %v899
    %v1689 = vunpack.c.l.b16 %v900
    %v1690 = vunpack.c.h.b16 %v900
    %v1691 = vpack.c.b16 %v1183, %v1179
    %v1692 = vpack.c.b16 %v1184, %v1180
    %v1693 = vpack.c.b16 %v1185, %v1181
    %v1694 = vpack.c.b16 %v1186, %v1182
    %v1695 = vpack.c.b16 %v1191, %v1187
    %v1696 = vpack.c.b16 %v1192, %v1188
    %v1697 = vpack.c.b16 %v1193, %v1189
    %v1698 = vpack.c.b16 %v1194, %v1190
    %v1699 = vpack.c.b16 %v1199, %v1195
    %v1700 = vpack.c.b16 %v1200, %v1196
    %v1701 = vpack.c.b16 %v1201, %v1197
    %v1702 = vpack.c.b16 %v1202, %v1198
    %v1703 = vpack.c.b16 %v1207, %v1203
    %v1704 = vpack.c.b16 %v1208, %v1204
    %v1705 = vpack.c.b16 %v1209, %v1205
    %v1706 = vpack.c.b16 %v1210, %v1206
    %v1707 = vpack.c.b16 %v1215, %v1211
    %v1708 = vpack.c.b16 %v1216, %v1212
    %v1709 = vpack.c.b16 %v1217, %v1213
    %v1710 = vpack.c.b16 %v1218, %v1214
    %v1711 = vpack.c.b16 %v1223, %v1219
    %v1712 = vpack.c.b16 %v1224, %v1220
    %v1713 = vpack.c.b16 %v1225, %v1221
    %v1714 = vpack.c.b16 %v1226, %v1222
    %v1715 = vpack.c.b16 %v1231, %v1227
    %v1716 = vpack.c.b16 %v1232, %v1228
    %v1717 = vpack.c.b16 %v1233, %v1229
    %v1718 = vpack.c.b16 %v1234, %v1230
    %v1719 = vpack.c.b16 %v1239, %v1235
    %v1720 = vpack.c.b16 %v1240, %v1236
    %v1721 = vpack.c.b16 %v1241, %v1237
    %v1722 = vpack.c.b16 %v1242, %v1238
    %v1723 = vpack.c.b16 %v1247, %v1243
    %v1724 = vpack.c.b16 %v1248, %v1244
    %v1725 = vpack.c.b16 %v1249, %v1245
    %v1726 = vpack.c.b16 %v1250, %v1246
    %v1727 = vpack.c.b16 %v1255, %v1251
    %v1728 = vpack.c.b16 %v1256, %v1252
    %v1729 = vpack.c.b16 %v1257, %v1253
    %v1730 = vpack.c.b16 %v1258, %v1254
    %v1731 = vpack.c.b16 %v1263, %v1259
    %v1732 = vpack.c.b16 %v1264, %v1260
    %v1733 = vpack.c.b16 %v1265, %v1261
    %v1734 = vpack.c.b16 %v1266, %v1262
    %v1735 = vpack.c.b16 %v1271, %v1267
    %v1736 = vpack.c.b16 %v1272, %v1268
    %v1737 = vpack.c.b16 %v1273, %v1269
    %v1738 = vpack.c.b16 %v1274, %v1270
    %v1739 = vpack.c.b16 %v1279, %v1275
    %v1740 = vpack.c.b16 %v1280, %v1276
    %v1741 = vpack.c.b16 %v1281, %v1277
    %v1742 = vpack.c.b16 %v1282, %v1278
    %v1743 = vpack.c.b16 %v1287, %v1283
    %v1744 = vpack.c.b16 %v1288, %v1284
    %v1745 = vpack.c.b16 %v1289, %v1285
    %v1746 = vpack.c.b16 %v1290, %v1286
    %v1747 = vpack.c.b16 %v1295, %v1291
    %v1748 = vpack.c.b16 %v1296, %v1292
    %v1749 = vpack.c.b16 %v1297, %v1293
    %v1750 = vpack.c.b16 %v1298, %v1294
    %v1751 = vpack.c.b16 %v1303, %v1299
    %v1752 = vpack.c.b16 %v1304, %v1300
    %v1753 = vpack.c.b16 %v1305, %v1301
    %v1754 = vpack.c.b16 %v1306, %v1302
    %v1755 = vpack.c.b16 %v1311, %v1307
    %v1756 = vpack.c.b16 %v1312, %v1308
    %v1757 = vpack.c.b16 %v1313, %v1309
    %v1758 = vpack.c.b16 %v1314, %v1310
    %v1759 = vpack.c.b16 %v1319, %v1315
    %v1760 = vpack.c.b16 %v1320, %v1316
    %v1761 = vpack.c.b16 %v1321, %v1317
    %v1762 = vpack.c.b16 %v1322, %v1318
    %v1763 = vpack.c.b16 %v1327, %v1323
    %v1764 = vpack.c.b16 %v1328, %v1324
    %v1765 = vpack.c.b16 %v1329, %v1325
    %v1766 = vpack.c.b16 %v1330, %v1326
    %v1767 = vpack.c.b16 %v1335, %v1331
    %v1768 = vpack.c.b16 %v1336, %v1332
    %v1769 = vpack.c.b16 %v1337, %v1333
    %v1770 = vpack.c.b16 %v1338, %v1334
    %v1771 = vpack.c.b16 %v1343, %v1339
    %v1772 = vpack.c.b16 %v1344, %v1340
    %v1773 = vpack.c.b16 %v1345, %v1341
    %v1774 = vpack.c.b16 %v1346, %v1342
    %v1775 = vpack.c.b16 %v1351, %v1347
    %v1776 = vpack.c.b16 %v1352, %v1348
    %v1777 = vpack.c.b16 %v1353, %v1349
    %v1778 = vpack.c.b16 %v1354, %v1350
    %v1779 = vpack.c.b16 %v1359, %v1355
    %v1780 = vpack.c.b16 %v1360, %v1356
    %v1781 = vpack.c.b16 %v1361, %v1357
    %v1782 = vpack.c.b16 %v1362, %v1358
    %v1783 = vpack.c.b16 %v1367, %v1363
    %v1784 = vpack.c.b16 %v1368, %v1364
    %v1785 = vpack.c.b16 %v1369, %v1365
    %v1786 = vpack.c.b16 %v1370, %v1366
    %v1787 = vpack.c.b16 %v1375, %v1371
    %v1788 = vpack.c.b16 %v1376, %v1372
    %v1789 = vpack.c.b16 %v1377, %v1373
    %v1790 = vpack.c.b16 %v1378, %v1374
    %v1791 = vpack.c.b16 %v1383, %v1379
    %v1792 = vpack.c.b16 %v1384, %v1380
    %v1793 = vpack.c.b16 %v1385, %v1381
    %v1794 = vpack.c.b16 %v1386, %v1382
    %v1795 = vpack.c.b16 %v1391, %v1387
    %v1796 = vpack.c.b16 %v1392, %v1388
    %v1797 = vpack.c.b16 %v1393, %v1389
    %v1798 = vpack.c.b16 %v1394, %v1390
    %v1799 = vpack.c.b16 %v1399, %v1395
    %v1800 = vpack.c.b16 %v1400, %v1396
    %v1801 = vpack.c.b16 %v1401, %v1397
    %v1802 = vpack.c.b16 %v1402, %v1398
    %v1803 = vpack.c.b16 %v1407, %v1403
    %v1804 = vpack.c.b16 %v1408, %v1404
    %v1805 = vpack.c.b16 %v1409, %v1405
    %v1806 = vpack.c.b16 %v1410, %v1406
    %v1807 = vpack.c.b16 %v1415, %v1411
    %v1808 = vpack.c.b16 %v1416, %v1412
    %v1809 = vpack.c.b16 %v1417, %v1413
    %v1810 = vpack.c.b16 %v1418, %v1414
    %v1811 = vpack.c.b16 %v1423, %v1419
    %v1812 = vpack.c.b16 %v1424, %v1420
    %v1813 = vpack.c.b16 %v1425, %v1421
    %v1814 = vpack.c.b16 %v1426, %v1422
    %v1815 = vpack.c.b16 %v1431, %v1427
    %v1816 = vpack.c.b16 %v1432, %v1428
    %v1817 = vpack.c.b16 %v1433, %v1429
    %v1818 = vpack.c.b16 %v1434, %v1430
    %v1819 = vpack.c.b16 %v1439, %v1435
    %v1820 = vpack.c.b16 %v1440, %v1436
    %v1821 = vpack.c.b16 %v1441, %v1437
    %v1822 = vpack.c.b16 %v1442, %v1438
    %v1823 = vpack.c.b16 %v1447, %v1443
    %v1824 = vpack.c.b16 %v1448, %v1444
    %v1825 = vpack.c.b16 %v1449, %v1445
    %v1826 = vpack.c.b16 %v1450, %v1446
    %v1827 = vpack.c.b16 %v1455, %v1451
    %v1828 = vpack.c.b16 %v1456, %v1452
    %v1829 = vpack.c.b16 %v1457, %v1453
    %v1830 = vpack.c.b16 %v1458, %v1454
    %v1831 = vpack.c.b16 %v1463, %v1459
    %v1832 = vpack.c.b16 %v1464, %v1460
    %v1833 = vpack.c.b16 %v1465, %v1461
    %v1834 = vpack.c.b16 %v1466, %v1462
    %v1835 = vpack.c.b16 %v1471, %v1467
    %v1836 = vpack.c.b16 %v1472, %v1468
    %v1837 = vpack.c.b16 %v1473, %v1469
    %v1838 = vpack.c.b16 %v1474, %v1470
    %v1839 = vpack.c.b16 %v1479, %v1475
    %v1840 = vpack.c.b16 %v1480, %v1476
    %v1841 = vpack.c.b16 %v1481, %v1477
    %v1842 = vpack.c.b16 %v1482, %v1478
    %v1843 = vpack.c.b16 %v1487, %v1483
    %v1844 = vpack.c.b16 %v1488, %v1484
    %v1845 = vpack.c.b16 %v1489, %v1485
    %v1846 = vpack.c.b16 %v1490, %v1486
    %v1847 = vpack.c.b16 %v1495, %v1491
    %v1848 = vpack.c.b16 %v1496, %v1492
    %v1849 = vpack.c.b16 %v1497, %v1493
    %v1850 = vpack.c.b16 %v1498, %v1494
    %v1851 = vpack.c.b16 %v1503, %v1499
    %v1852 = vpack.c.b16 %v1504, %v1500
    %v1853 = vpack.c.b16 %v1505, %v1501
    %v1854 = vpack.c.b16 %v1506, %v1502
    %v1855 = vpack.c.b16 %v1511, %v1507
    %v1856 = vpack.c.b16 %v1512, %v1508
    %v1857 = vpack.c.b16 %v1513, %v1509
    %v1858 = vpack.c.b16 %v1514, %v1510
    %v1859 = vpack.c.b16 %v1519, %v1515
    %v1860 = vpack.c.b16 %v1520, %v1516
    %v1861 = vpack.c.b16 %v1521, %v1517
    %v1862 = vpack.c.b16 %v1522, %v1518
    %v1863 = vpack.c.b16 %v1527, %v1523
    %v1864 = vpack.c.b16 %v1528, %v1524
    %v1865 = vpack.c.b16 %v1529, %v1525
    %v1866 = vpack.c.b16 %v1530, %v1526
    %v1867 = vpack.c.b16 %v1535, %v1531
    %v1868 = vpack.c.b16 %v1536, %v1532
    %v1869 = vpack.c.b16 %v1537, %v1533
    %v1870 = vpack.c.b16 %v1538, %v1534
    %v1871 = vpack.c.b16 %v1543, %v1539
    %v1872 = vpack.c.b16 %v1544, %v1540
    %v1873 = vpack.c.b16 %v1545, %v1541
    %v1874 = vpack.c.b16 %v1546, %v1542
    %v1875 = vpack.c.b16 %v1551, %v1547
    %v1876 = vpack.c.b16 %v1552, %v1548
    %v1877 = vpack.c.b16 %v1553, %v1549
    %v1878 = vpack.c.b16 %v1554, %v1550
    %v1879 = vpack.c.b16 %v1559, %v1555
    %v1880 = vpack.c.b16 %v1560, %v1556
    %v1881 = vpack.c.b16 %v1561, %v1557
    %v1882 = vpack.c.b16 %v1562, %v1558
    %v1883 = vpack.c.b16 %v1567, %v1563
    %v1884 = vpack.c.b16 %v1568, %v1564
    %v1885 = vpack.c.b16 %v1569, %v1565
    %v1886 = vpack.c.b16 %v1570, %v1566
    %v1887 = vpack.c.b16 %v1575, %v1571
    %v1888 = vpack.c.b16 %v1576, %v1572
    %v1889 = vpack.c.b16 %v1577, %v1573
    %v1890 = vpack.c.b16 %v1578, %v1574
    %v1891 = vpack.c.b16 %v1583, %v1579
    %v1892 = vpack.c.b16 %v1584, %v1580
    %v1893 = vpack.c.b16 %v1585, %v1581
    %v1894 = vpack.c.b16 %v1586, %v1582
    %v1895 = vpack.c.b16 %v1591, %v1587
    %v1896 = vpack.c.b16 %v1592, %v1588
    %v1897 = vpack.c.b16 %v1593, %v1589
    %v1898 = vpack.c.b16 %v1594, %v1590
    %v1899 = vpack.c.b16 %v1599, %v1595
    %v1900 = vpack.c.b16 %v1600, %v1596
    %v1901 = vpack.c.b16 %v1601, %v1597
    %v1902 = vpack.c.b16 %v1602, %v1598
    %v1903 = vpack.c.b16 %v1607, %v1603
    %v1904 = vpack.c.b16 %v1608, %v1604
    %v1905 = vpack.c.b16 %v1609, %v1605
    %v1906 = vpack.c.b16 %v1610, %v1606
    %v1907 = vpack.c.b16 %v1615, %v1611
    %v1908 = vpack.c.b16 %v1616, %v1612
    %v1909 = vpack.c.b16 %v1617, %v1613
    %v1910 = vpack.c.b16 %v1618, %v1614
    %v1911 = vpack.c.b16 %v1623, %v1619
    %v1912 = vpack.c.b16 %v1624, %v1620
    %v1913 = vpack.c.b16 %v1625, %v1621
    %v1914 = vpack.c.b16 %v1626, %v1622
    %v1915 = vpack.c.b16 %v1631, %v1627
    %v1916 = vpack.c.b16 %v1632, %v1628
    %v1917 = vpack.c.b16 %v1633, %v1629
    %v1918 = vpack.c.b16 %v1634, %v1630
    %v1919 = vpack.c.b16 %v1639, %v1635
    %v1920 = vpack.c.b16 %v1640, %v1636
    %v1921 = vpack.c.b16 %v1641, %v1637
    %v1922 = vpack.c.b16 %v1642, %v1638
    %v1923 = vpack.c.b16 %v1647, %v1643
    %v1924 = vpack.c.b16 %v1648, %v1644
    %v1925 = vpack.c.b16 %v1649, %v1645
    %v1926 = vpack.c.b16 %v1650, %v1646
    %v1927 = vpack.c.b16 %v1655, %v1651
    %v1928 = vpack.c.b16 %v1656, %v1652
    %v1929 = vpack.c.b16 %v1657, %v1653
    %v1930 = vpack.c.b16 %v1658, %v1654
    %v1931 = vpack.c.b16 %v1663, %v1659
    %v1932 = vpack.c.b16 %v1664, %v1660
    %v1933 = vpack.c.b16 %v1665, %v1661
    %v1934 = vpack.c.b16 %v1666, %v1662
    %v1935 = vpack.c.b16 %v1671, %v1667
    %v1936 = vpack.c.b16 %v1672, %v1668
    %v1937 = vpack.c.b16 %v1673, %v1669
    %v1938 = vpack.c.b16 %v1674, %v1670
    %v1939 = vpack.c.b16 %v1679, %v1675
    %v1940 = vpack.c.b16 %v1680, %v1676
    %v1941 = vpack.c.b16 %v1681, %v1677
    %v1942 = vpack.c.b16 %v1682, %v1678
    %v1943 = vpack.c.b16 %v1687, %v1683
    %v1944 = vpack.c.b16 %v1688, %v1684
    %v1945 = vpack.c.b16 %v1689, %v1685
    %v1946 = vpack.c.b16 %v1690, %v1686
    %2203 = vmatprep.subr.bf16.mxu0 %v1692
    %2204 = vmatpush1.bf16.msra.mxu0 %v1691
    %2205 = vmatprep.subr.bf16.mxu0 %v1696
    %2206 = vmatpush1.bf16.msra.mxu0 %v1695
    %2207 = vmatprep.subr.bf16.mxu0 %v1700
    %2208 = vmatpush1.bf16.msra.mxu0 %v1699
    %2209 = vmatprep.subr.bf16.mxu0 %v1704
    %2210 = vmatpush1.bf16.msra.mxu0 %v1703
    %2211 = vmatprep.subr.bf16.mxu0 %v1708
    %2212 = vmatpush1.bf16.msra.mxu0 %v1707
    %2213 = vmatprep.subr.bf16.mxu0 %v1712
    %2214 = vmatpush1.bf16.msra.mxu0 %v1711
    %2215 = vmatprep.subr.bf16.mxu0 %v1716
    %2216 = vmatpush1.bf16.msra.mxu0 %v1715
    %2217 = vmatprep.subr.bf16.mxu0 %v1720
    %2218 = vmatpush1.bf16.msra.mxu0 %v1719
    %2219 = vmatprep.subr.bf16.mxu0 %v1724
    %2220 = vmatpush1.bf16.msra.mxu0 %v1723
    %2221 = vmatprep.subr.bf16.mxu0 %v1728
    %2222 = vmatpush1.bf16.msra.mxu0 %v1727
    %2223 = vmatprep.subr.bf16.mxu0 %v1732
    %2224 = vmatpush1.bf16.msra.mxu0 %v1731
    %2225 = vmatprep.subr.bf16.mxu0 %v1736
    %2226 = vmatpush1.bf16.msra.mxu0 %v1735
    %2227 = vmatprep.subr.bf16.mxu0 %v1740
    %2228 = vmatpush1.bf16.msra.mxu0 %v1739
    %2229 = vmatprep.subr.bf16.mxu0 %v1744
    %2230 = vmatpush1.bf16.msra.mxu0 %v1743
    %2231 = vmatprep.subr.bf16.mxu0 %v1748
    %2232 = vmatpush1.bf16.msra.mxu0 %v1747
    %2233 = vmatprep.subr.bf16.mxu0 %v1752
    %2234 = vmatpush1.bf16.msra.mxu0 %v1751
    %2235 = vmatprep.mubr.bf16.mxu0 %v638
    %2236 = vmatmul.mubr.bf16.gmra.mrb[0].mxu0 %v637
    %v2237 = vpop.f32.mrb[0].mxu0
    %v2238 = vadd.f32 %v906, %v2237
    %v2239 = vpop.f32.mrb[0].mxu0
    %v2240 = vadd.f32 %v910, %v2239
    %v2241 = vpop.f32.mrb[0].mxu0
    %v2242 = vpop.f32.mrb[0].mxu0
    %2243 = vdwg.mxu0
    %2244 = vmatprep.subr.bf16.mxu0 %v1756
    %2245 = vmatpush1.bf16.msra.mxu0 %v1755
    %2246 = vmatprep.subr.bf16.mxu0 %v1760
    %2247 = vmatpush1.bf16.msra.mxu0 %v1759
    %2248 = vmatprep.subr.bf16.mxu0 %v1764
    %2249 = vmatpush1.bf16.msra.mxu0 %v1763
    %2250 = vmatprep.subr.bf16.mxu0 %v1768
    %2251 = vmatpush1.bf16.msra.mxu0 %v1767
    %2252 = vmatprep.subr.bf16.mxu0 %v1772
    %2253 = vmatpush1.bf16.msra.mxu0 %v1771
    %2254 = vmatprep.subr.bf16.mxu0 %v1776
    %2255 = vmatpush1.bf16.msra.mxu0 %v1775
    %2256 = vmatprep.subr.bf16.mxu0 %v1780
    %2257 = vmatpush1.bf16.msra.mxu0 %v1779
    %2258 = vmatprep.subr.bf16.mxu0 %v1784
    %2259 = vmatpush1.bf16.msra.mxu0 %v1783
    %2260 = vmatprep.subr.bf16.mxu0 %v1788
    %2261 = vmatpush1.bf16.msra.mxu0 %v1787
    %2262 = vmatprep.subr.bf16.mxu0 %v1792
    %2263 = vmatpush1.bf16.msra.mxu0 %v1791
    %2264 = vmatprep.subr.bf16.mxu0 %v1796
    %2265 = vmatpush1.bf16.msra.mxu0 %v1795
    %2266 = vmatprep.subr.bf16.mxu0 %v1800
    %2267 = vmatpush1.bf16.msra.mxu0 %v1799
    %2268 = vmatprep.subr.bf16.mxu0 %v1804
    %2269 = vmatpush1.bf16.msra.mxu0 %v1803
    %2270 = vmatprep.subr.bf16.mxu0 %v1808
    %2271 = vmatpush1.bf16.msra.mxu0 %v1807
    %2272 = vmatprep.subr.bf16.mxu0 %v1812
    %2273 = vmatpush1.bf16.msra.mxu0 %v1811
    %2274 = vmatprep.subr.bf16.mxu0 %v1816
    %2275 = vmatpush1.bf16.msra.mxu0 %v1815
    %2276 = vmatprep.mubr.bf16.mxu0 %v640
    %2277 = vmatmul.mubr.bf16.gmra.mrb[0].mxu0 %v639
    %v2278 = vpop.f32.mrb[0].mxu0
    %v2279 = vadd.f32 %v2238, %v2278
    %v2280 = vpop.f32.mrb[0].mxu0
    %v2281 = vadd.f32 %v2240, %v2280
    %v2282 = vpop.f32.mrb[0].mxu0
    %v2283 = vpop.f32.mrb[0].mxu0
    %2284 = vdwg.mxu0
    %2285 = vmatprep.subr.bf16.mxu0 %v1820
    %2286 = vmatpush1.bf16.msra.mxu0 %v1819
    %2287 = vmatprep.subr.bf16.mxu0 %v1824
    %2288 = vmatpush1.bf16.msra.mxu0 %v1823
    %2289 = vmatprep.subr.bf16.mxu0 %v1828
    %2290 = vmatpush1.bf16.msra.mxu0 %v1827
    %2291 = vmatprep.subr.bf16.mxu0 %v1832
    %2292 = vmatpush1.bf16.msra.mxu0 %v1831
    %2293 = vmatprep.subr.bf16.mxu0 %v1836
    %2294 = vmatpush1.bf16.msra.mxu0 %v1835
    %2295 = vmatprep.subr.bf16.mxu0 %v1840
    %2296 = vmatpush1.bf16.msra.mxu0 %v1839
    %2297 = vmatprep.subr.bf16.mxu0 %v1844
    %2298 = vmatpush1.bf16.msra.mxu0 %v1843
    %2299 = vmatprep.subr.bf16.mxu0 %v1848
    %2300 = vmatpush1.bf16.msra.mxu0 %v1847
    %2301 = vmatprep.subr.bf16.mxu0 %v1852
    %2302 = vmatpush1.bf16.msra.mxu0 %v1851
    %2303 = vmatprep.subr.bf16.mxu0 %v1856
    %2304 = vmatpush1.bf16.msra.mxu0 %v1855
    %2305 = vmatprep.subr.bf16.mxu0 %v1860
    %2306 = vmatpush1.bf16.msra.mxu0 %v1859
    %2307 = vmatprep.subr.bf16.mxu0 %v1864
    %2308 = vmatpush1.bf16.msra.mxu0 %v1863
    %2309 = vmatprep.subr.bf16.mxu0 %v1868
    %2310 = vmatpush1.bf16.msra.mxu0 %v1867
    %2311 = vmatprep.subr.bf16.mxu0 %v1872
    %2312 = vmatpush1.bf16.msra.mxu0 %v1871
    %2313 = vmatprep.subr.bf16.mxu0 %v1876
    %2314 = vmatpush1.bf16.msra.mxu0 %v1875
    %2315 = vmatprep.subr.bf16.mxu0 %v1880
    %2316 = vmatpush1.bf16.msra.mxu0 %v1879
    %2317 = vmatprep.mubr.bf16.mxu0 %v642
    %2318 = vmatmul.mubr.bf16.gmra.mrb[0].mxu0 %v641
    %v2319 = vpop.f32.mrb[0].mxu0
    %v2320 = vadd.f32 %v2279, %v2319
    %v2321 = vpop.f32.mrb[0].mxu0
    %v2322 = vadd.f32 %v2281, %v2321
    %v2323 = vpop.f32.mrb[0].mxu0
    %v2324 = vpop.f32.mrb[0].mxu0
    %2325 = vdwg.mxu0
    %2326 = vmatprep.subr.bf16.mxu0 %v1884
    %2327 = vmatpush1.bf16.msra.mxu0 %v1883
    %2328 = vmatprep.subr.bf16.mxu0 %v1888
    %2329 = vmatpush1.bf16.msra.mxu0 %v1887
    %2330 = vmatprep.subr.bf16.mxu0 %v1892
    %2331 = vmatpush1.bf16.msra.mxu0 %v1891
    %2332 = vmatprep.subr.bf16.mxu0 %v1896
    %2333 = vmatpush1.bf16.msra.mxu0 %v1895
    %2334 = vmatprep.subr.bf16.mxu0 %v1900
    %2335 = vmatpush1.bf16.msra.mxu0 %v1899
    %2336 = vmatprep.subr.bf16.mxu0 %v1904
    %2337 = vmatpush1.bf16.msra.mxu0 %v1903
    %2338 = vmatprep.subr.bf16.mxu0 %v1908
    %2339 = vmatpush1.bf16.msra.mxu0 %v1907
    %2340 = vmatprep.subr.bf16.mxu0 %v1912
    %2341 = vmatpush1.bf16.msra.mxu0 %v1911
    %2342 = vmatprep.subr.bf16.mxu0 %v1916
    %2343 = vmatpush1.bf16.msra.mxu0 %v1915
    %2344 = vmatprep.subr.bf16.mxu0 %v1920
    %2345 = vmatpush1.bf16.msra.mxu0 %v1919
    %2346 = vmatprep.subr.bf16.mxu0 %v1924
    %2347 = vmatpush1.bf16.msra.mxu0 %v1923
    %2348 = vmatprep.subr.bf16.mxu0 %v1928
    %2349 = vmatpush1.bf16.msra.mxu0 %v1927
    %2350 = vmatprep.subr.bf16.mxu0 %v1932
    %2351 = vmatpush1.bf16.msra.mxu0 %v1931
    %2352 = vmatprep.subr.bf16.mxu0 %v1936
    %2353 = vmatpush1.bf16.msra.mxu0 %v1935
    %2354 = vmatprep.subr.bf16.mxu0 %v1940
    %2355 = vmatpush1.bf16.msra.mxu0 %v1939
    %2356 = vmatprep.subr.bf16.mxu0 %v1944
    %2357 = vmatpush1.bf16.msra.mxu0 %v1943
    %2358 = vmatprep.mubr.bf16.mxu0 %v644
    %2359 = vmatmul.mubr.bf16.gmra.mrb[0].mxu0 %v643
    %v2360 = vpop.f32.mrb[0].mxu0
    %v2361 = vadd.f32 %v2320, %v2360
    %v2362 = vpop.f32.mrb[0].mxu0
    %v2363 = vadd.f32 %v2322, %v2362
    %v2364 = vpop.f32.mrb[0].mxu0
    %v2365 = vpop.f32.mrb[0].mxu0
    %2366 = vdwg.mxu0
    %2367 = vmatprep.subr.bf16.mxu0 %v1694
    %2368 = vmatpush1.bf16.msra.mxu0 %v1693
    %2369 = vmatprep.subr.bf16.mxu0 %v1698
    %2370 = vmatpush1.bf16.msra.mxu0 %v1697
    %2371 = vmatprep.subr.bf16.mxu0 %v1702
    %2372 = vmatpush1.bf16.msra.mxu0 %v1701
    %2373 = vmatprep.subr.bf16.mxu0 %v1706
    %2374 = vmatpush1.bf16.msra.mxu0 %v1705
    %2375 = vmatprep.subr.bf16.mxu0 %v1710
    %2376 = vmatpush1.bf16.msra.mxu0 %v1709
    %2377 = vmatprep.subr.bf16.mxu0 %v1714
    %2378 = vmatpush1.bf16.msra.mxu0 %v1713
    %2379 = vmatprep.subr.bf16.mxu0 %v1718
    %2380 = vmatpush1.bf16.msra.mxu0 %v1717
    %2381 = vmatprep.subr.bf16.mxu0 %v1722
    %2382 = vmatpush1.bf16.msra.mxu0 %v1721
    %2383 = vmatprep.subr.bf16.mxu0 %v1726
    %2384 = vmatpush1.bf16.msra.mxu0 %v1725
    %2385 = vmatprep.subr.bf16.mxu0 %v1730
    %2386 = vmatpush1.bf16.msra.mxu0 %v1729
    %2387 = vmatprep.subr.bf16.mxu0 %v1734
    %2388 = vmatpush1.bf16.msra.mxu0 %v1733
    %2389 = vmatprep.subr.bf16.mxu0 %v1738
    %2390 = vmatpush1.bf16.msra.mxu0 %v1737
    %2391 = vmatprep.subr.bf16.mxu0 %v1742
    %2392 = vmatpush1.bf16.msra.mxu0 %v1741
    %2393 = vmatprep.subr.bf16.mxu0 %v1746
    %2394 = vmatpush1.bf16.msra.mxu0 %v1745
    %2395 = vmatprep.subr.bf16.mxu0 %v1750
    %2396 = vmatpush1.bf16.msra.mxu0 %v1749
    %2397 = vmatprep.subr.bf16.mxu0 %v1754
    %2398 = vmatpush1.bf16.msra.mxu0 %v1753
    %2399 = vmatprep.mubr.bf16.mxu0 %v638
    %2400 = vmatmul.mubr.bf16.gmra.mrb[0].mxu0 %v637
    %v2401 = vpop.f32.mrb[0].mxu0
    %v2402 = vadd.f32 %v914, %v2401
    %v2403 = vpop.f32.mrb[0].mxu0
    %v2404 = vadd.f32 %v918, %v2403
    %v2405 = vpop.f32.mrb[0].mxu0
    %v2406 = vpop.f32.mrb[0].mxu0
    %2407 = vdwg.mxu0
    %2408 = vmatprep.subr.bf16.mxu0 %v1758
    %2409 = vmatpush1.bf16.msra.mxu0 %v1757
    %2410 = vmatprep.subr.bf16.mxu0 %v1762
    %2411 = vmatpush1.bf16.msra.mxu0 %v1761
    %2412 = vmatprep.subr.bf16.mxu0 %v1766
    %2413 = vmatpush1.bf16.msra.mxu0 %v1765
    %2414 = vmatprep.subr.bf16.mxu0 %v1770
    %2415 = vmatpush1.bf16.msra.mxu0 %v1769
    %2416 = vmatprep.subr.bf16.mxu0 %v1774
    %2417 = vmatpush1.bf16.msra.mxu0 %v1773
    %2418 = vmatprep.subr.bf16.mxu0 %v1778
    %2419 = vmatpush1.bf16.msra.mxu0 %v1777
    %2420 = vmatprep.subr.bf16.mxu0 %v1782
    %2421 = vmatpush1.bf16.msra.mxu0 %v1781
    %2422 = vmatprep.subr.bf16.mxu0 %v1786
    %2423 = vmatpush1.bf16.msra.mxu0 %v1785
    %2424 = vmatprep.subr.bf16.mxu0 %v1790
    %2425 = vmatpush1.bf16.msra.mxu0 %v1789
    %2426 = vmatprep.subr.bf16.mxu0 %v1794
    %2427 = vmatpush1.bf16.msra.mxu0 %v1793
    %2428 = vmatprep.subr.bf16.mxu0 %v1798
    %2429 = vmatpush1.bf16.msra.mxu0 %v1797
    %2430 = vmatprep.subr.bf16.mxu0 %v1802
    %2431 = vmatpush1.bf16.msra.mxu0 %v1801
    %2432 = vmatprep.subr.bf16.mxu0 %v1806
    %2433 = vmatpush1.bf16.msra.mxu0 %v1805
    %2434 = vmatprep.subr.bf16.mxu0 %v1810
    %2435 = vmatpush1.bf16.msra.mxu0 %v1809
    %2436 = vmatprep.subr.bf16.mxu0 %v1814
    %2437 = vmatpush1.bf16.msra.mxu0 %v1813
    %2438 = vmatprep.subr.bf16.mxu0 %v1818
    %2439 = vmatpush1.bf16.msra.mxu0 %v1817
    %2440 = vmatprep.mubr.bf16.mxu0 %v640
    %2441 = vmatmul.mubr.bf16.gmra.mrb[0].mxu0 %v639
    %v2442 = vpop.f32.mrb[0].mxu0
    %v2443 = vadd.f32 %v2402, %v2442
    %v2444 = vpop.f32.mrb[0].mxu0
    %v2445 = vadd.f32 %v2404, %v2444
    %v2446 = vpop.f32.mrb[0].mxu0
    %v2447 = vpop.f32.mrb[0].mxu0
    %2448 = vdwg.mxu0
    %2449 = vmatprep.subr.bf16.mxu0 %v1822
    %2450 = vmatpush1.bf16.msra.mxu0 %v1821
    %2451 = vmatprep.subr.bf16.mxu0 %v1826
    %2452 = vmatpush1.bf16.msra.mxu0 %v1825
    %2453 = vmatprep.subr.bf16.mxu0 %v1830
    %2454 = vmatpush1.bf16.msra.mxu0 %v1829
    %2455 = vmatprep.subr.bf16.mxu0 %v1834
    %2456 = vmatpush1.bf16.msra.mxu0 %v1833
    %2457 = vmatprep.subr.bf16.mxu0 %v1838
    %2458 = vmatpush1.bf16.msra.mxu0 %v1837
    %2459 = vmatprep.subr.bf16.mxu0 %v1842
    %2460 = vmatpush1.bf16.msra.mxu0 %v1841
    %2461 = vmatprep.subr.bf16.mxu0 %v1846
    %2462 = vmatpush1.bf16.msra.mxu0 %v1845
    %2463 = vmatprep.subr.bf16.mxu0 %v1850
    %2464 = vmatpush1.bf16.msra.mxu0 %v1849
    %2465 = vmatprep.subr.bf16.mxu0 %v1854
    %2466 = vmatpush1.bf16.msra.mxu0 %v1853
    %2467 = vmatprep.subr.bf16.mxu0 %v1858
    %2468 = vmatpush1.bf16.msra.mxu0 %v1857
    %2469 = vmatprep.subr.bf16.mxu0 %v1862
    %2470 = vmatpush1.bf16.msra.mxu0 %v1861
    %2471 = vmatprep.subr.bf16.mxu0 %v1866
    %2472 = vmatpush1.bf16.msra.mxu0 %v1865
    %2473 = vmatprep.subr.bf16.mxu0 %v1870
    %2474 = vmatpush1.bf16.msra.mxu0 %v1869
    %2475 = vmatprep.subr.bf16.mxu0 %v1874
    %2476 = vmatpush1.bf16.msra.mxu0 %v1873
    %2477 = vmatprep.subr.bf16.mxu0 %v1878
    %2478 = vmatpush1.bf16.msra.mxu0 %v1877
    %2479 = vmatprep.subr.bf16.mxu0 %v1882
    %2480 = vmatpush1.bf16.msra.mxu0 %v1881
    %2481 = vmatprep.mubr.bf16.mxu0 %v642
    %2482 = vmatmul.mubr.bf16.gmra.mrb[0].mxu0 %v641
    %v2483 = vpop.f32.mrb[0].mxu0
    %v2484 = vadd.f32 %v2443, %v2483
    %v2485 = vpop.f32.mrb[0].mxu0
    %v2486 = vadd.f32 %v2445, %v2485
    %v2487 = vpop.f32.mrb[0].mxu0
    %v2488 = vpop.f32.mrb[0].mxu0
    %2489 = vdwg.mxu0
    %2490 = vmatprep.subr.bf16.mxu0 %v1886
    %2491 = vmatpush1.bf16.msra.mxu0 %v1885
    %2492 = vmatprep.subr.bf16.mxu0 %v1890
    %2493 = vmatpush1.bf16.msra.mxu0 %v1889
    %2494 = vmatprep.subr.bf16.mxu0 %v1894
    %2495 = vmatpush1.bf16.msra.mxu0 %v1893
    %2496 = vmatprep.subr.bf16.mxu0 %v1898
    %2497 = vmatpush1.bf16.msra.mxu0 %v1897
    %2498 = vmatprep.subr.bf16.mxu0 %v1902
    %2499 = vmatpush1.bf16.msra.mxu0 %v1901
    %2500 = vmatprep.subr.bf16.mxu0 %v1906
    %2501 = vmatpush1.bf16.msra.mxu0 %v1905
    %2502 = vmatprep.subr.bf16.mxu0 %v1910
    %2503 = vmatpush1.bf16.msra.mxu0 %v1909
    %2504 = vmatprep.subr.bf16.mxu0 %v1914
    %2505 = vmatpush1.bf16.msra.mxu0 %v1913
    %2506 = vmatprep.subr.bf16.mxu0 %v1918
    %2507 = vmatpush1.bf16.msra.mxu0 %v1917
    %2508 = vmatprep.subr.bf16.mxu0 %v1922
    %2509 = vmatpush1.bf16.msra.mxu0 %v1921
    %2510 = vmatprep.subr.bf16.mxu0 %v1926
    %2511 = vmatpush1.bf16.msra.mxu0 %v1925
    %2512 = vmatprep.subr.bf16.mxu0 %v1930
    %2513 = vmatpush1.bf16.msra.mxu0 %v1929
    %2514 = vmatprep.subr.bf16.mxu0 %v1934
    %2515 = vmatpush1.bf16.msra.mxu0 %v1933
    %2516 = vmatprep.subr.bf16.mxu0 %v1938
    %2517 = vmatpush1.bf16.msra.mxu0 %v1937
    %2518 = vmatprep.subr.bf16.mxu0 %v1942
    %2519 = vmatpush1.bf16.msra.mxu0 %v1941
    %2520 = vmatprep.subr.bf16.mxu0 %v1946
    %2521 = vmatpush1.bf16.msra.mxu0 %v1945
    %2522 = vmatprep.mubr.bf16.mxu0 %v644
    %2523 = vmatmul.mubr.bf16.gmra.mrb[0].mxu0 %v643
    %v2524 = vpop.f32.mrb[0].mxu0
    %v2525 = vadd.f32 %v2484, %v2524
    %v2526 = vpop.f32.mrb[0].mxu0
    %v2527 = vadd.f32 %v2486, %v2526
    %v2528 = vpop.f32.mrb[0].mxu0
    %v2529 = vpop.f32.mrb[0].mxu0
    %2530 = vdwg.mxu0
    %v2531 = vmax.f32 %v2361, 0.0
    %v2532 = vmax.f32 %v2363, 0.0
    %v2533 = vmax.f32 %v2525, 0.0
    %v2534 = vmax.f32 %v2527, 0.0
    %v2535 = vpack.c.bf16 %v2531, %v2531
    %v2536 = vpack.c.bf16 %v2532, %v2532
    %v2537 = vpack.c.bf16 %v2533, %v2533
    %v2538 = vpack.c.bf16 %v2534, %v2534
    %v2539 = vld [vmem:[#allocation7] sm:$0xff]
    %v2540 = vld [vmem:[#allocation7 + $0x8] sm:$0xff]
    %v2541 = vld [vmem:[#allocation7 + $0x10] sm:$0xff]
    %v2542 = vld [vmem:[#allocation7 + $0x18] sm:$0xff]
    %v2543 = vld [vmem:[#allocation7 + $0x20] sm:$0xff]
    %v2544 = vld [vmem:[#allocation7 + $0x28] sm:$0xff]
    %v2545 = vld [vmem:[#allocation7 + $0x30] sm:$0xff]
    %v2546 = vld [vmem:[#allocation7 + $0x38] sm:$0xff]
    %v2547 = vld [vmem:[#allocation7 + $0x40] sm:$0xff]
    %v2548 = vld [vmem:[#allocation7 + $0x48] sm:$0xff]
    %v2549 = vld [vmem:[#allocation7 + $0x50] sm:$0xff]
    %v2550 = vld [vmem:[#allocation7 + $0x58] sm:$0xff]
    %v2551 = vld [vmem:[#allocation7 + $0x60] sm:$0xff]
    %v2552 = vld [vmem:[#allocation7 + $0x68] sm:$0xff]
    %v2553 = vld [vmem:[#allocation7 + $0x70] sm:$0xff]
    %v2554 = vld [vmem:[#allocation7 + $0x78] sm:$0xff]
    %v2555 = vld [vmem:[#allocation7 + $0x80] sm:$0xff]
    %v2556 = vld [vmem:[#allocation7 + $0x88] sm:$0xff]
    %v2557 = vld [vmem:[#allocation7 + $0x90] sm:$0xff]
    %v2558 = vld [vmem:[#allocation7 + $0x98] sm:$0xff]
    %v2559 = vld [vmem:[#allocation7 + $0xa0] sm:$0xff]
    %v2560 = vld [vmem:[#allocation7 + $0xa8] sm:$0xff]
    %v2561 = vld [vmem:[#allocation7 + $0xb0] sm:$0xff]
    %v2562 = vld [vmem:[#allocation7 + $0xb8] sm:$0xff]
    %v2563 = vld [vmem:[#allocation7 + $0xc0] sm:$0xff]
    %v2564 = vld [vmem:[#allocation7 + $0xc8] sm:$0xff]
    %v2565 = vld [vmem:[#allocation7 + $0xd0] sm:$0xff]
    %v2566 = vld [vmem:[#allocation7 + $0xd8] sm:$0xff]
    %v2567 = vld [vmem:[#allocation7 + $0xe0] sm:$0xff]
    %v2568 = vld [vmem:[#allocation7 + $0xe8] sm:$0xff]
    %v2569 = vld [vmem:[#allocation7 + $0xf0] sm:$0xff]
    %v2570 = vld [vmem:[#allocation7 + $0xf8] sm:$0xff]
    %v2571 = vld [vmem:[#allocation7 + $0x100] sm:$0xff]
    %v2572 = vld [vmem:[#allocation7 + $0x108] sm:$0xff]
    %v2573 = vld [vmem:[#allocation7 + $0x110] sm:$0xff]
    %v2574 = vld [vmem:[#allocation7 + $0x118] sm:$0xff]
    %v2575 = vld [vmem:[#allocation7 + $0x120] sm:$0xff]
    %v2576 = vld [vmem:[#allocation7 + $0x128] sm:$0xff]
    %v2577 = vld [vmem:[#allocation7 + $0x130] sm:$0xff]
    %v2578 = vld [vmem:[#allocation7 + $0x138] sm:$0xff]
    %v2579 = vld [vmem:[#allocation7 + $0x140] sm:$0xff]
    %v2580 = vld [vmem:[#allocation7 + $0x148] sm:$0xff]
    %v2581 = vld [vmem:[#allocation7 + $0x150] sm:$0xff]
    %v2582 = vld [vmem:[#allocation7 + $0x158] sm:$0xff]
    %v2583 = vld [vmem:[#allocation7 + $0x160] sm:$0xff]
    %v2584 = vld [vmem:[#allocation7 + $0x168] sm:$0xff]
    %v2585 = vld [vmem:[#allocation7 + $0x170] sm:$0xff]
    %v2586 = vld [vmem:[#allocation7 + $0x178] sm:$0xff]
    %v2587 = vld [vmem:[#allocation7 + $0x180] sm:$0xff]
    %v2588 = vld [vmem:[#allocation7 + $0x188] sm:$0xff]
    %v2589 = vld [vmem:[#allocation7 + $0x190] sm:$0xff]
    %v2590 = vld [vmem:[#allocation7 + $0x198] sm:$0xff]
    %v2591 = vld [vmem:[#allocation7 + $0x1a0] sm:$0xff]
    %v2592 = vld [vmem:[#allocation7 + $0x1a8] sm:$0xff]
    %v2593 = vld [vmem:[#allocation7 + $0x1b0] sm:$0xff]
    %v2594 = vld [vmem:[#allocation7 + $0x1b8] sm:$0xff]
    %v2595 = vld [vmem:[#allocation7 + $0x1c0] sm:$0xff]
    %v2596 = vld [vmem:[#allocation7 + $0x1c8] sm:$0xff]
    %v2597 = vld [vmem:[#allocation7 + $0x1d0] sm:$0xff]
    %v2598 = vld [vmem:[#allocation7 + $0x1d8] sm:$0xff]
    %v2599 = vld [vmem:[#allocation7 + $0x1e0] sm:$0xff]
    %v2600 = vld [vmem:[#allocation7 + $0x1e8] sm:$0xff]
    %v2601 = vld [vmem:[#allocation7 + $0x1f0] sm:$0xff]
    %v2602 = vld [vmem:[#allocation7 + $0x1f8] sm:$0xff]
    %v2603 = vld [vmem:[#allocation7 + $0x200] sm:$0xff]
    %v2604 = vld [vmem:[#allocation7 + $0x208] sm:$0xff]
    %v2605 = vld [vmem:[#allocation7 + $0x210] sm:$0xff]
    %v2606 = vld [vmem:[#allocation7 + $0x218] sm:$0xff]
    %v2607 = vld [vmem:[#allocation7 + $0x220] sm:$0xff]
    %v2608 = vld [vmem:[#allocation7 + $0x228] sm:$0xff]
    %v2609 = vld [vmem:[#allocation7 + $0x230] sm:$0xff]
    %v2610 = vld [vmem:[#allocation7 + $0x238] sm:$0xff]
    %v2611 = vld [vmem:[#allocation7 + $0x240] sm:$0xff]
    %v2612 = vld [vmem:[#allocation7 + $0x248] sm:$0xff]
    %v2613 = vld [vmem:[#allocation7 + $0x250] sm:$0xff]
    %v2614 = vld [vmem:[#allocation7 + $0x258] sm:$0xff]
    %v2615 = vld [vmem:[#allocation7 + $0x260] sm:$0xff]
    %v2616 = vld [vmem:[#allocation7 + $0x268] sm:$0xff]
    %v2617 = vld [vmem:[#allocation7 + $0x270] sm:$0xff]
    %v2618 = vld [vmem:[#allocation7 + $0x278] sm:$0xff]
    %v2619 = vld [vmem:[#allocation7 + $0x280] sm:$0xff]
    %v2620 = vld [vmem:[#allocation7 + $0x288] sm:$0xff]
    %v2621 = vld [vmem:[#allocation7 + $0x290] sm:$0xff]
    %v2622 = vld [vmem:[#allocation7 + $0x298] sm:$0xff]
    %v2623 = vld [vmem:[#allocation7 + $0x2a0] sm:$0xff]
    %v2624 = vld [vmem:[#allocation7 + $0x2a8] sm:$0xff]
    %v2625 = vld [vmem:[#allocation7 + $0x2b0] sm:$0xff]
    %v2626 = vld [vmem:[#allocation7 + $0x2b8] sm:$0xff]
    %v2627 = vld [vmem:[#allocation7 + $0x2c0] sm:$0xff]
    %v2628 = vld [vmem:[#allocation7 + $0x2c8] sm:$0xff]
    %v2629 = vld [vmem:[#allocation7 + $0x2d0] sm:$0xff]
    %v2630 = vld [vmem:[#allocation7 + $0x2d8] sm:$0xff]
    %v2631 = vld [vmem:[#allocation7 + $0x2e0] sm:$0xff]
    %v2632 = vld [vmem:[#allocation7 + $0x2e8] sm:$0xff]
    %v2633 = vld [vmem:[#allocation7 + $0x2f0] sm:$0xff]
    %v2634 = vld [vmem:[#allocation7 + $0x2f8] sm:$0xff]
    %v2635 = vld [vmem:[#allocation7 + $0x300] sm:$0xff]
    %v2636 = vld [vmem:[#allocation7 + $0x308] sm:$0xff]
    %v2637 = vld [vmem:[#allocation7 + $0x310] sm:$0xff]
    %v2638 = vld [vmem:[#allocation7 + $0x318] sm:$0xff]
    %v2639 = vld [vmem:[#allocation7 + $0x320] sm:$0xff]
    %v2640 = vld [vmem:[#allocation7 + $0x328] sm:$0xff]
    %v2641 = vld [vmem:[#allocation7 + $0x330] sm:$0xff]
    %v2642 = vld [vmem:[#allocation7 + $0x338] sm:$0xff]
    %v2643 = vld [vmem:[#allocation7 + $0x340] sm:$0xff]
    %v2644 = vld [vmem:[#allocation7 + $0x348] sm:$0xff]
    %v2645 = vld [vmem:[#allocation7 + $0x350] sm:$0xff]
    %v2646 = vld [vmem:[#allocation7 + $0x358] sm:$0xff]
    %v2647 = vld [vmem:[#allocation7 + $0x360] sm:$0xff]
    %v2648 = vld [vmem:[#allocation7 + $0x368] sm:$0xff]
    %v2649 = vld [vmem:[#allocation7 + $0x370] sm:$0xff]
    %v2650 = vld [vmem:[#allocation7 + $0x378] sm:$0xff]
    %v2651 = vld [vmem:[#allocation7 + $0x380] sm:$0xff]
    %v2652 = vld [vmem:[#allocation7 + $0x388] sm:$0xff]
    %v2653 = vld [vmem:[#allocation7 + $0x390] sm:$0xff]
    %v2654 = vld [vmem:[#allocation7 + $0x398] sm:$0xff]
    %v2655 = vld [vmem:[#allocation7 + $0x3a0] sm:$0xff]
    %v2656 = vld [vmem:[#allocation7 + $0x3a8] sm:$0xff]
    %v2657 = vld [vmem:[#allocation7 + $0x3b0] sm:$0xff]
    %v2658 = vld [vmem:[#allocation7 + $0x3b8] sm:$0xff]
    %v2659 = vld [vmem:[#allocation7 + $0x3c0] sm:$0xff]
    %v2660 = vld [vmem:[#allocation7 + $0x3c8] sm:$0xff]
    %v2661 = vld [vmem:[#allocation7 + $0x3d0] sm:$0xff]
    %v2662 = vld [vmem:[#allocation7 + $0x3d8] sm:$0xff]
    %v2663 = vld [vmem:[#allocation7 + $0x3e0] sm:$0xff]
    %v2664 = vld [vmem:[#allocation7 + $0x3e8] sm:$0xff]
    %v2665 = vld [vmem:[#allocation7 + $0x3f0] sm:$0xff]
    %v2666 = vld [vmem:[#allocation7 + $0x3f8] sm:$0xff]
    %v2667 = vld [vmem:[#allocation7 + $0x400] sm:$0xff]
    %v2668 = vld [vmem:[#allocation7 + $0x408] sm:$0xff]
    %v2669 = vld [vmem:[#allocation7 + $0x410] sm:$0xff]
    %v2670 = vld [vmem:[#allocation7 + $0x418] sm:$0xff]
    %v2671 = vld [vmem:[#allocation7 + $0x420] sm:$0xff]
    %v2672 = vld [vmem:[#allocation7 + $0x428] sm:$0xff]
    %v2673 = vld [vmem:[#allocation7 + $0x430] sm:$0xff]
    %v2674 = vld [vmem:[#allocation7 + $0x438] sm:$0xff]
    %v2675 = vld [vmem:[#allocation7 + $0x440] sm:$0xff]
    %v2676 = vld [vmem:[#allocation7 + $0x448] sm:$0xff]
    %v2677 = vld [vmem:[#allocation7 + $0x450] sm:$0xff]
    %v2678 = vld [vmem:[#allocation7 + $0x458] sm:$0xff]
    %v2679 = vld [vmem:[#allocation7 + $0x460] sm:$0xff]
    %v2680 = vld [vmem:[#allocation7 + $0x468] sm:$0xff]
    %v2681 = vld [vmem:[#allocation7 + $0x470] sm:$0xff]
    %v2682 = vld [vmem:[#allocation7 + $0x478] sm:$0xff]
    %v2683 = vld [vmem:[#allocation7 + $0x480] sm:$0xff]
    %v2684 = vld [vmem:[#allocation7 + $0x488] sm:$0xff]
    %v2685 = vld [vmem:[#allocation7 + $0x490] sm:$0xff]
    %v2686 = vld [vmem:[#allocation7 + $0x498] sm:$0xff]
    %v2687 = vld [vmem:[#allocation7 + $0x4a0] sm:$0xff]
    %v2688 = vld [vmem:[#allocation7 + $0x4a8] sm:$0xff]
    %v2689 = vld [vmem:[#allocation7 + $0x4b0] sm:$0xff]
    %v2690 = vld [vmem:[#allocation7 + $0x4b8] sm:$0xff]
    %v2691 = vld [vmem:[#allocation7 + $0x4c0] sm:$0xff]
    %v2692 = vld [vmem:[#allocation7 + $0x4c8] sm:$0xff]
    %v2693 = vld [vmem:[#allocation7 + $0x4d0] sm:$0xff]
    %v2694 = vld [vmem:[#allocation7 + $0x4d8] sm:$0xff]
    %v2695 = vld [vmem:[#allocation7 + $0x4e0] sm:$0xff]
    %v2696 = vld [vmem:[#allocation7 + $0x4e8] sm:$0xff]
    %v2697 = vld [vmem:[#allocation7 + $0x4f0] sm:$0xff]
    %v2698 = vld [vmem:[#allocation7 + $0x4f8] sm:$0xff]
    %v2699 = vld [vmem:[#allocation7 + $0x500] sm:$0xff]
    %v2700 = vld [vmem:[#allocation7 + $0x508] sm:$0xff]
    %v2701 = vld [vmem:[#allocation7 + $0x510] sm:$0xff]
    %v2702 = vld [vmem:[#allocation7 + $0x518] sm:$0xff]
    %v2703 = vld [vmem:[#allocation7 + $0x520] sm:$0xff]
    %v2704 = vld [vmem:[#allocation7 + $0x528] sm:$0xff]
    %v2705 = vld [vmem:[#allocation7 + $0x530] sm:$0xff]
    %v2706 = vld [vmem:[#allocation7 + $0x538] sm:$0xff]
    %v2707 = vld [vmem:[#allocation7 + $0x540] sm:$0xff]
    %v2708 = vld [vmem:[#allocation7 + $0x548] sm:$0xff]
    %v2709 = vld [vmem:[#allocation7 + $0x550] sm:$0xff]
    %v2710 = vld [vmem:[#allocation7 + $0x558] sm:$0xff]
    %v2711 = vld [vmem:[#allocation7 + $0x560] sm:$0xff]
    %v2712 = vld [vmem:[#allocation7 + $0x568] sm:$0xff]
    %v2713 = vld [vmem:[#allocation7 + $0x570] sm:$0xff]
    %v2714 = vld [vmem:[#allocation7 + $0x578] sm:$0xff]
    %v2715 = vld [vmem:[#allocation7 + $0x580] sm:$0xff]
    %v2716 = vld [vmem:[#allocation7 + $0x588] sm:$0xff]
    %v2717 = vld [vmem:[#allocation7 + $0x590] sm:$0xff]
    %v2718 = vld [vmem:[#allocation7 + $0x598] sm:$0xff]
    %v2719 = vld [vmem:[#allocation7 + $0x5a0] sm:$0xff]
    %v2720 = vld [vmem:[#allocation7 + $0x5a8] sm:$0xff]
    %v2721 = vld [vmem:[#allocation7 + $0x5b0] sm:$0xff]
    %v2722 = vld [vmem:[#allocation7 + $0x5b8] sm:$0xff]
    %v2723 = vld [vmem:[#allocation7 + $0x5c0] sm:$0xff]
    %v2724 = vld [vmem:[#allocation7 + $0x5c8] sm:$0xff]
    %v2725 = vld [vmem:[#allocation7 + $0x5d0] sm:$0xff]
    %v2726 = vld [vmem:[#allocation7 + $0x5d8] sm:$0xff]
    %v2727 = vld [vmem:[#allocation7 + $0x5e0] sm:$0xff]
    %v2728 = vld [vmem:[#allocation7 + $0x5e8] sm:$0xff]
    %v2729 = vld [vmem:[#allocation7 + $0x5f0] sm:$0xff]
    %v2730 = vld [vmem:[#allocation7 + $0x5f8] sm:$0xff]
    %v2731 = vld [vmem:[#allocation7 + $0x600] sm:$0xff]
    %v2732 = vld [vmem:[#allocation7 + $0x608] sm:$0xff]
    %v2733 = vld [vmem:[#allocation7 + $0x610] sm:$0xff]
    %v2734 = vld [vmem:[#allocation7 + $0x618] sm:$0xff]
    %v2735 = vld [vmem:[#allocation7 + $0x620] sm:$0xff]
    %v2736 = vld [vmem:[#allocation7 + $0x628] sm:$0xff]
    %v2737 = vld [vmem:[#allocation7 + $0x630] sm:$0xff]
    %v2738 = vld [vmem:[#allocation7 + $0x638] sm:$0xff]
    %v2739 = vld [vmem:[#allocation7 + $0x640] sm:$0xff]
    %v2740 = vld [vmem:[#allocation7 + $0x648] sm:$0xff]
    %v2741 = vld [vmem:[#allocation7 + $0x650] sm:$0xff]
    %v2742 = vld [vmem:[#allocation7 + $0x658] sm:$0xff]
    %v2743 = vld [vmem:[#allocation7 + $0x660] sm:$0xff]
    %v2744 = vld [vmem:[#allocation7 + $0x668] sm:$0xff]
    %v2745 = vld [vmem:[#allocation7 + $0x670] sm:$0xff]
    %v2746 = vld [vmem:[#allocation7 + $0x678] sm:$0xff]
    %v2747 = vld [vmem:[#allocation7 + $0x680] sm:$0xff]
    %v2748 = vld [vmem:[#allocation7 + $0x688] sm:$0xff]
    %v2749 = vld [vmem:[#allocation7 + $0x690] sm:$0xff]
    %v2750 = vld [vmem:[#allocation7 + $0x698] sm:$0xff]
    %v2751 = vld [vmem:[#allocation7 + $0x6a0] sm:$0xff]
    %v2752 = vld [vmem:[#allocation7 + $0x6a8] sm:$0xff]
    %v2753 = vld [vmem:[#allocation7 + $0x6b0] sm:$0xff]
    %v2754 = vld [vmem:[#allocation7 + $0x6b8] sm:$0xff]
    %v2755 = vld [vmem:[#allocation7 + $0x6c0] sm:$0xff]
    %v2756 = vld [vmem:[#allocation7 + $0x6c8] sm:$0xff]
    %v2757 = vld [vmem:[#allocation7 + $0x6d0] sm:$0xff]
    %v2758 = vld [vmem:[#allocation7 + $0x6d8] sm:$0xff]
    %v2759 = vld [vmem:[#allocation7 + $0x6e0] sm:$0xff]
    %v2760 = vld [vmem:[#allocation7 + $0x6e8] sm:$0xff]
    %v2761 = vld [vmem:[#allocation7 + $0x6f0] sm:$0xff]
    %v2762 = vld [vmem:[#allocation7 + $0x6f8] sm:$0xff]
    %v2763 = vld [vmem:[#allocation7 + $0x700] sm:$0xff]
    %v2764 = vld [vmem:[#allocation7 + $0x708] sm:$0xff]
    %v2765 = vld [vmem:[#allocation7 + $0x710] sm:$0xff]
    %v2766 = vld [vmem:[#allocation7 + $0x718] sm:$0xff]
    %v2767 = vld [vmem:[#allocation7 + $0x720] sm:$0xff]
    %v2768 = vld [vmem:[#allocation7 + $0x728] sm:$0xff]
    %v2769 = vld [vmem:[#allocation7 + $0x730] sm:$0xff]
    %v2770 = vld [vmem:[#allocation7 + $0x738] sm:$0xff]
    %v2771 = vld [vmem:[#allocation7 + $0x740] sm:$0xff]
    %v2772 = vld [vmem:[#allocation7 + $0x748] sm:$0xff]
    %v2773 = vld [vmem:[#allocation7 + $0x750] sm:$0xff]
    %v2774 = vld [vmem:[#allocation7 + $0x758] sm:$0xff]
    %v2775 = vld [vmem:[#allocation7 + $0x760] sm:$0xff]
    %v2776 = vld [vmem:[#allocation7 + $0x768] sm:$0xff]
    %v2777 = vld [vmem:[#allocation7 + $0x770] sm:$0xff]
    %v2778 = vld [vmem:[#allocation7 + $0x778] sm:$0xff]
    %v2779 = vld [vmem:[#allocation7 + $0x780] sm:$0xff]
    %v2780 = vld [vmem:[#allocation7 + $0x788] sm:$0xff]
    %v2781 = vld [vmem:[#allocation7 + $0x790] sm:$0xff]
    %v2782 = vld [vmem:[#allocation7 + $0x798] sm:$0xff]
    %v2783 = vld [vmem:[#allocation7 + $0x7a0] sm:$0xff]
    %v2784 = vld [vmem:[#allocation7 + $0x7a8] sm:$0xff]
    %v2785 = vld [vmem:[#allocation7 + $0x7b0] sm:$0xff]
    %v2786 = vld [vmem:[#allocation7 + $0x7b8] sm:$0xff]
    %v2787 = vld [vmem:[#allocation7 + $0x7c0] sm:$0xff]
    %v2788 = vld [vmem:[#allocation7 + $0x7c8] sm:$0xff]
    %v2789 = vld [vmem:[#allocation7 + $0x7d0] sm:$0xff]
    %v2790 = vld [vmem:[#allocation7 + $0x7d8] sm:$0xff]
    %v2791 = vld [vmem:[#allocation7 + $0x7e0] sm:$0xff]
    %v2792 = vld [vmem:[#allocation7 + $0x7e8] sm:$0xff]
    %v2793 = vld [vmem:[#allocation7 + $0x7f0] sm:$0xff]
    %v2794 = vld [vmem:[#allocation7 + $0x7f8] sm:$0xff]
    %v2795 = vld [vmem:[%s8] sm:$0xff]
    %v2797 = vlaneseq
    %v2798 = vshrl.u32 %v2797, 7
    %v2799 = vsub.s32 0, %v2798
    %v2800 = vrot.slane %v2795, %v2799
    %v2801 = vlaneseq
    %v2802 = vshrl.u32 %v2801, 7
    %v2803 = vsub.s32 1, %v2802
    %v2804 = vrot.slane %v2795, %v2803
    %v2805 = vlaneseq
    %v2806 = vshrl.u32 %v2805, 7
    %v2807 = vsub.s32 2, %v2806
    %v2808 = vrot.slane %v2795, %v2807
    %v2809 = vlaneseq
    %v2810 = vshrl.u32 %v2809, 7
    %v2811 = vsub.s32 3, %v2810
    %v2812 = vrot.slane %v2795, %v2811
    %v2813 = vlaneseq
    %v2814 = vshrl.u32 %v2813, 7
    %v2815 = vsub.s32 4, %v2814
    %v2816 = vrot.slane %v2795, %v2815
    %v2817 = vlaneseq
    %v2818 = vshrl.u32 %v2817, 7
    %v2819 = vsub.s32 5, %v2818
    %v2820 = vrot.slane %v2795, %v2819
    %v2821 = vlaneseq
    %v2822 = vshrl.u32 %v2821, 7
    %v2823 = vsub.s32 6, %v2822
    %v2824 = vrot.slane %v2795, %v2823
    %v2825 = vlaneseq
    %v2826 = vshrl.u32 %v2825, 7
    %v2827 = vsub.s32 7, %v2826
    %v2828 = vrot.slane %v2795, %v2827
    %v3093 = vunpack.c.l.b16 %v2539
    %v3094 = vunpack.c.h.b16 %v2539
    %v3095 = vunpack.c.l.b16 %v2540
    %v3096 = vunpack.c.h.b16 %v2540
    %v3097 = vunpack.c.l.b16 %v2541
    %v3098 = vunpack.c.h.b16 %v2541
    %v3099 = vunpack.c.l.b16 %v2542
    %v3100 = vunpack.c.h.b16 %v2542
    %v3101 = vunpack.c.l.b16 %v2543
    %v3102 = vunpack.c.h.b16 %v2543
    %v3103 = vunpack.c.l.b16 %v2544
    %v3104 = vunpack.c.h.b16 %v2544
    %v3105 = vunpack.c.l.b16 %v2545
    %v3106 = vunpack.c.h.b16 %v2545
    %v3107 = vunpack.c.l.b16 %v2546
    %v3108 = vunpack.c.h.b16 %v2546
    %v3109 = vunpack.c.l.b16 %v2547
    %v3110 = vunpack.c.h.b16 %v2547
    %v3111 = vunpack.c.l.b16 %v2548
    %v3112 = vunpack.c.h.b16 %v2548
    %v3113 = vunpack.c.l.b16 %v2549
    %v3114 = vunpack.c.h.b16 %v2549
    %v3115 = vunpack.c.l.b16 %v2550
    %v3116 = vunpack.c.h.b16 %v2550
    %v3117 = vunpack.c.l.b16 %v2551
    %v3118 = vunpack.c.h.b16 %v2551
    %v3119 = vunpack.c.l.b16 %v2552
    %v3120 = vunpack.c.h.b16 %v2552
    %v3121 = vunpack.c.l.b16 %v2553
    %v3122 = vunpack.c.h.b16 %v2553
    %v3123 = vunpack.c.l.b16 %v2554
    %v3124 = vunpack.c.h.b16 %v2554
    %v3125 = vunpack.c.l.b16 %v2555
    %v3126 = vunpack.c.h.b16 %v2555
    %v3127 = vunpack.c.l.b16 %v2556
    %v3128 = vunpack.c.h.b16 %v2556
    %v3129 = vunpack.c.l.b16 %v2557
    %v3130 = vunpack.c.h.b16 %v2557
    %v3131 = vunpack.c.l.b16 %v2558
    %v3132 = vunpack.c.h.b16 %v2558
    %v3133 = vunpack.c.l.b16 %v2559
    %v3134 = vunpack.c.h.b16 %v2559
    %v3135 = vunpack.c.l.b16 %v2560
    %v3136 = vunpack.c.h.b16 %v2560
    %v3137 = vunpack.c.l.b16 %v2561
    %v3138 = vunpack.c.h.b16 %v2561
    %v3139 = vunpack.c.l.b16 %v2562
    %v3140 = vunpack.c.h.b16 %v2562
    %v3141 = vunpack.c.l.b16 %v2563
    %v3142 = vunpack.c.h.b16 %v2563
    %v3143 = vunpack.c.l.b16 %v2564
    %v3144 = vunpack.c.h.b16 %v2564
    %v3145 = vunpack.c.l.b16 %v2565
    %v3146 = vunpack.c.h.b16 %v2565
    %v3147 = vunpack.c.l.b16 %v2566
    %v3148 = vunpack.c.h.b16 %v2566
    %v3149 = vunpack.c.l.b16 %v2567
    %v3150 = vunpack.c.h.b16 %v2567
    %v3151 = vunpack.c.l.b16 %v2568
    %v3152 = vunpack.c.h.b16 %v2568
    %v3153 = vunpack.c.l.b16 %v2569
    %v3154 = vunpack.c.h.b16 %v2569
    %v3155 = vunpack.c.l.b16 %v2570
    %v3156 = vunpack.c.h.b16 %v2570
    %v3157 = vunpack.c.l.b16 %v2571
    %v3158 = vunpack.c.h.b16 %v2571
    %v3159 = vunpack.c.l.b16 %v2572
    %v3160 = vunpack.c.h.b16 %v2572
    %v3161 = vunpack.c.l.b16 %v2573
    %v3162 = vunpack.c.h.b16 %v2573
    %v3163 = vunpack.c.l.b16 %v2574
    %v3164 = vunpack.c.h.b16 %v2574
    %v3165 = vunpack.c.l.b16 %v2575
    %v3166 = vunpack.c.h.b16 %v2575
    %v3167 = vunpack.c.l.b16 %v2576
    %v3168 = vunpack.c.h.b16 %v2576
    %v3169 = vunpack.c.l.b16 %v2577
    %v3170 = vunpack.c.h.b16 %v2577
    %v3171 = vunpack.c.l.b16 %v2578
    %v3172 = vunpack.c.h.b16 %v2578
    %v3173 = vunpack.c.l.b16 %v2579
    %v3174 = vunpack.c.h.b16 %v2579
    %v3175 = vunpack.c.l.b16 %v2580
    %v3176 = vunpack.c.h.b16 %v2580
    %v3177 = vunpack.c.l.b16 %v2581
    %v3178 = vunpack.c.h.b16 %v2581
    %v3179 = vunpack.c.l.b16 %v2582
    %v3180 = vunpack.c.h.b16 %v2582
    %v3181 = vunpack.c.l.b16 %v2583
    %v3182 = vunpack.c.h.b16 %v2583
    %v3183 = vunpack.c.l.b16 %v2584
    %v3184 = vunpack.c.h.b16 %v2584
    %v3185 = vunpack.c.l.b16 %v2585
    %v3186 = vunpack.c.h.b16 %v2585
    %v3187 = vunpack.c.l.b16 %v2586
    %v3188 = vunpack.c.h.b16 %v2586
    %v3189 = vunpack.c.l.b16 %v2587
    %v3190 = vunpack.c.h.b16 %v2587
    %v3191 = vunpack.c.l.b16 %v2588
    %v3192 = vunpack.c.h.b16 %v2588
    %v3193 = vunpack.c.l.b16 %v2589
    %v3194 = vunpack.c.h.b16 %v2589
    %v3195 = vunpack.c.l.b16 %v2590
    %v3196 = vunpack.c.h.b16 %v2590
    %v3197 = vunpack.c.l.b16 %v2591
    %v3198 = vunpack.c.h.b16 %v2591
    %v3199 = vunpack.c.l.b16 %v2592
    %v3200 = vunpack.c.h.b16 %v2592
    %v3201 = vunpack.c.l.b16 %v2593
    %v3202 = vunpack.c.h.b16 %v2593
    %v3203 = vunpack.c.l.b16 %v2594
    %v3204 = vunpack.c.h.b16 %v2594
    %v3205 = vunpack.c.l.b16 %v2595
    %v3206 = vunpack.c.h.b16 %v2595
    %v3207 = vunpack.c.l.b16 %v2596
    %v3208 = vunpack.c.h.b16 %v2596
    %v3209 = vunpack.c.l.b16 %v2597
    %v3210 = vunpack.c.h.b16 %v2597
    %v3211 = vunpack.c.l.b16 %v2598
    %v3212 = vunpack.c.h.b16 %v2598
    %v3213 = vunpack.c.l.b16 %v2599
    %v3214 = vunpack.c.h.b16 %v2599
    %v3215 = vunpack.c.l.b16 %v2600
    %v3216 = vunpack.c.h.b16 %v2600
    %v3217 = vunpack.c.l.b16 %v2601
    %v3218 = vunpack.c.h.b16 %v2601
    %v3219 = vunpack.c.l.b16 %v2602
    %v3220 = vunpack.c.h.b16 %v2602
    %v3221 = vunpack.c.l.b16 %v2603
    %v3222 = vunpack.c.h.b16 %v2603
    %v3223 = vunpack.c.l.b16 %v2604
    %v3224 = vunpack.c.h.b16 %v2604
    %v3225 = vunpack.c.l.b16 %v2605
    %v3226 = vunpack.c.h.b16 %v2605
    %v3227 = vunpack.c.l.b16 %v2606
    %v3228 = vunpack.c.h.b16 %v2606
    %v3229 = vunpack.c.l.b16 %v2607
    %v3230 = vunpack.c.h.b16 %v2607
    %v3231 = vunpack.c.l.b16 %v2608
    %v3232 = vunpack.c.h.b16 %v2608
    %v3233 = vunpack.c.l.b16 %v2609
    %v3234 = vunpack.c.h.b16 %v2609
    %v3235 = vunpack.c.l.b16 %v2610
    %v3236 = vunpack.c.h.b16 %v2610
    %v3237 = vunpack.c.l.b16 %v2611
    %v3238 = vunpack.c.h.b16 %v2611
    %v3239 = vunpack.c.l.b16 %v2612
    %v3240 = vunpack.c.h.b16 %v2612
    %v3241 = vunpack.c.l.b16 %v2613
    %v3242 = vunpack.c.h.b16 %v2613
    %v3243 = vunpack.c.l.b16 %v2614
    %v3244 = vunpack.c.h.b16 %v2614
    %v3245 = vunpack.c.l.b16 %v2615
    %v3246 = vunpack.c.h.b16 %v2615
    %v3247 = vunpack.c.l.b16 %v2616
    %v3248 = vunpack.c.h.b16 %v2616
    %v3249 = vunpack.c.l.b16 %v2617
    %v3250 = vunpack.c.h.b16 %v2617
    %v3251 = vunpack.c.l.b16 %v2618
    %v3252 = vunpack.c.h.b16 %v2618
    %v3253 = vunpack.c.l.b16 %v2619
    %v3254 = vunpack.c.h.b16 %v2619
    %v3255 = vunpack.c.l.b16 %v2620
    %v3256 = vunpack.c.h.b16 %v2620
    %v3257 = vunpack.c.l.b16 %v2621
    %v3258 = vunpack.c.h.b16 %v2621
    %v3259 = vunpack.c.l.b16 %v2622
    %v3260 = vunpack.c.h.b16 %v2622
    %v3261 = vunpack.c.l.b16 %v2623
    %v3262 = vunpack.c.h.b16 %v2623
    %v3263 = vunpack.c.l.b16 %v2624
    %v3264 = vunpack.c.h.b16 %v2624
    %v3265 = vunpack.c.l.b16 %v2625
    %v3266 = vunpack.c.h.b16 %v2625
    %v3267 = vunpack.c.l.b16 %v2626
    %v3268 = vunpack.c.h.b16 %v2626
    %v3269 = vunpack.c.l.b16 %v2627
    %v3270 = vunpack.c.h.b16 %v2627
    %v3271 = vunpack.c.l.b16 %v2628
    %v3272 = vunpack.c.h.b16 %v2628
    %v3273 = vunpack.c.l.b16 %v2629
    %v3274 = vunpack.c.h.b16 %v2629
    %v3275 = vunpack.c.l.b16 %v2630
    %v3276 = vunpack.c.h.b16 %v2630
    %v3277 = vunpack.c.l.b16 %v2631
    %v3278 = vunpack.c.h.b16 %v2631
    %v3279 = vunpack.c.l.b16 %v2632
    %v3280 = vunpack.c.h.b16 %v2632
    %v3281 = vunpack.c.l.b16 %v2633
    %v3282 = vunpack.c.h.b16 %v2633
    %v3283 = vunpack.c.l.b16 %v2634
    %v3284 = vunpack.c.h.b16 %v2634
    %v3285 = vunpack.c.l.b16 %v2635
    %v3286 = vunpack.c.h.b16 %v2635
    %v3287 = vunpack.c.l.b16 %v2636
    %v3288 = vunpack.c.h.b16 %v2636
    %v3289 = vunpack.c.l.b16 %v2637
    %v3290 = vunpack.c.h.b16 %v2637
    %v3291 = vunpack.c.l.b16 %v2638
    %v3292 = vunpack.c.h.b16 %v2638
    %v3293 = vunpack.c.l.b16 %v2639
    %v3294 = vunpack.c.h.b16 %v2639
    %v3295 = vunpack.c.l.b16 %v2640
    %v3296 = vunpack.c.h.b16 %v2640
    %v3297 = vunpack.c.l.b16 %v2641
    %v3298 = vunpack.c.h.b16 %v2641
    %v3299 = vunpack.c.l.b16 %v2642
    %v3300 = vunpack.c.h.b16 %v2642
    %v3301 = vunpack.c.l.b16 %v2643
    %v3302 = vunpack.c.h.b16 %v2643
    %v3303 = vunpack.c.l.b16 %v2644
    %v3304 = vunpack.c.h.b16 %v2644
    %v3305 = vunpack.c.l.b16 %v2645
    %v3306 = vunpack.c.h.b16 %v2645
    %v3307 = vunpack.c.l.b16 %v2646
    %v3308 = vunpack.c.h.b16 %v2646
    %v3309 = vunpack.c.l.b16 %v2647
    %v3310 = vunpack.c.h.b16 %v2647
    %v3311 = vunpack.c.l.b16 %v2648
    %v3312 = vunpack.c.h.b16 %v2648
    %v3313 = vunpack.c.l.b16 %v2649
    %v3314 = vunpack.c.h.b16 %v2649
    %v3315 = vunpack.c.l.b16 %v2650
    %v3316 = vunpack.c.h.b16 %v2650
    %v3317 = vunpack.c.l.b16 %v2651
    %v3318 = vunpack.c.h.b16 %v2651
    %v3319 = vunpack.c.l.b16 %v2652
    %v3320 = vunpack.c.h.b16 %v2652
    %v3321 = vunpack.c.l.b16 %v2653
    %v3322 = vunpack.c.h.b16 %v2653
    %v3323 = vunpack.c.l.b16 %v2654
    %v3324 = vunpack.c.h.b16 %v2654
    %v3325 = vunpack.c.l.b16 %v2655
    %v3326 = vunpack.c.h.b16 %v2655
    %v3327 = vunpack.c.l.b16 %v2656
    %v3328 = vunpack.c.h.b16 %v2656
    %v3329 = vunpack.c.l.b16 %v2657
    %v3330 = vunpack.c.h.b16 %v2657
    %v3331 = vunpack.c.l.b16 %v2658
    %v3332 = vunpack.c.h.b16 %v2658
    %v3333 = vunpack.c.l.b16 %v2659
    %v3334 = vunpack.c.h.b16 %v2659
    %v3335 = vunpack.c.l.b16 %v2660
    %v3336 = vunpack.c.h.b16 %v2660
    %v3337 = vunpack.c.l.b16 %v2661
    %v3338 = vunpack.c.h.b16 %v2661
    %v3339 = vunpack.c.l.b16 %v2662
    %v3340 = vunpack.c.h.b16 %v2662
    %v3341 = vunpack.c.l.b16 %v2663
    %v3342 = vunpack.c.h.b16 %v2663
    %v3343 = vunpack.c.l.b16 %v2664
    %v3344 = vunpack.c.h.b16 %v2664
    %v3345 = vunpack.c.l.b16 %v2665
    %v3346 = vunpack.c.h.b16 %v2665
    %v3347 = vunpack.c.l.b16 %v2666
    %v3348 = vunpack.c.h.b16 %v2666
    %v3349 = vunpack.c.l.b16 %v2667
    %v3350 = vunpack.c.h.b16 %v2667
    %v3351 = vunpack.c.l.b16 %v2668
    %v3352 = vunpack.c.h.b16 %v2668
    %v3353 = vunpack.c.l.b16 %v2669
    %v3354 = vunpack.c.h.b16 %v2669
    %v3355 = vunpack.c.l.b16 %v2670
    %v3356 = vunpack.c.h.b16 %v2670
    %v3357 = vunpack.c.l.b16 %v2671
    %v3358 = vunpack.c.h.b16 %v2671
    %v3359 = vunpack.c.l.b16 %v2672
    %v3360 = vunpack.c.h.b16 %v2672
    %v3361 = vunpack.c.l.b16 %v2673
    %v3362 = vunpack.c.h.b16 %v2673
    %v3363 = vunpack.c.l.b16 %v2674
    %v3364 = vunpack.c.h.b16 %v2674
    %v3365 = vunpack.c.l.b16 %v2675
    %v3366 = vunpack.c.h.b16 %v2675
    %v3367 = vunpack.c.l.b16 %v2676
    %v3368 = vunpack.c.h.b16 %v2676
    %v3369 = vunpack.c.l.b16 %v2677
    %v3370 = vunpack.c.h.b16 %v2677
    %v3371 = vunpack.c.l.b16 %v2678
    %v3372 = vunpack.c.h.b16 %v2678
    %v3373 = vunpack.c.l.b16 %v2679
    %v3374 = vunpack.c.h.b16 %v2679
    %v3375 = vunpack.c.l.b16 %v2680
    %v3376 = vunpack.c.h.b16 %v2680
    %v3377 = vunpack.c.l.b16 %v2681
    %v3378 = vunpack.c.h.b16 %v2681
    %v3379 = vunpack.c.l.b16 %v2682
    %v3380 = vunpack.c.h.b16 %v2682
    %v3381 = vunpack.c.l.b16 %v2683
    %v3382 = vunpack.c.h.b16 %v2683
    %v3383 = vunpack.c.l.b16 %v2684
    %v3384 = vunpack.c.h.b16 %v2684
    %v3385 = vunpack.c.l.b16 %v2685
    %v3386 = vunpack.c.h.b16 %v2685
    %v3387 = vunpack.c.l.b16 %v2686
    %v3388 = vunpack.c.h.b16 %v2686
    %v3389 = vunpack.c.l.b16 %v2687
    %v3390 = vunpack.c.h.b16 %v2687
    %v3391 = vunpack.c.l.b16 %v2688
    %v3392 = vunpack.c.h.b16 %v2688
    %v3393 = vunpack.c.l.b16 %v2689
    %v3394 = vunpack.c.h.b16 %v2689
    %v3395 = vunpack.c.l.b16 %v2690
    %v3396 = vunpack.c.h.b16 %v2690
    %v3397 = vunpack.c.l.b16 %v2691
    %v3398 = vunpack.c.h.b16 %v2691
    %v3399 = vunpack.c.l.b16 %v2692
    %v3400 = vunpack.c.h.b16 %v2692
    %v3401 = vunpack.c.l.b16 %v2693
    %v3402 = vunpack.c.h.b16 %v2693
    %v3403 = vunpack.c.l.b16 %v2694
    %v3404 = vunpack.c.h.b16 %v2694
    %v3405 = vunpack.c.l.b16 %v2695
    %v3406 = vunpack.c.h.b16 %v2695
    %v3407 = vunpack.c.l.b16 %v2696
    %v3408 = vunpack.c.h.b16 %v2696
    %v3409 = vunpack.c.l.b16 %v2697
    %v3410 = vunpack.c.h.b16 %v2697
    %v3411 = vunpack.c.l.b16 %v2698
    %v3412 = vunpack.c.h.b16 %v2698
    %v3413 = vunpack.c.l.b16 %v2699
    %v3414 = vunpack.c.h.b16 %v2699
    %v3415 = vunpack.c.l.b16 %v2700
    %v3416 = vunpack.c.h.b16 %v2700
    %v3417 = vunpack.c.l.b16 %v2701
    %v3418 = vunpack.c.h.b16 %v2701
    %v3419 = vunpack.c.l.b16 %v2702
    %v3420 = vunpack.c.h.b16 %v2702
    %v3421 = vunpack.c.l.b16 %v2703
    %v3422 = vunpack.c.h.b16 %v2703
    %v3423 = vunpack.c.l.b16 %v2704
    %v3424 = vunpack.c.h.b16 %v2704
    %v3425 = vunpack.c.l.b16 %v2705
    %v3426 = vunpack.c.h.b16 %v2705
    %v3427 = vunpack.c.l.b16 %v2706
    %v3428 = vunpack.c.h.b16 %v2706
    %v3429 = vunpack.c.l.b16 %v2707
    %v3430 = vunpack.c.h.b16 %v2707
    %v3431 = vunpack.c.l.b16 %v2708
    %v3432 = vunpack.c.h.b16 %v2708
    %v3433 = vunpack.c.l.b16 %v2709
    %v3434 = vunpack.c.h.b16 %v2709
    %v3435 = vunpack.c.l.b16 %v2710
    %v3436 = vunpack.c.h.b16 %v2710
    %v3437 = vunpack.c.l.b16 %v2711
    %v3438 = vunpack.c.h.b16 %v2711
    %v3439 = vunpack.c.l.b16 %v2712
    %v3440 = vunpack.c.h.b16 %v2712
    %v3441 = vunpack.c.l.b16 %v2713
    %v3442 = vunpack.c.h.b16 %v2713
    %v3443 = vunpack.c.l.b16 %v2714
    %v3444 = vunpack.c.h.b16 %v2714
    %v3445 = vunpack.c.l.b16 %v2715
    %v3446 = vunpack.c.h.b16 %v2715
    %v3447 = vunpack.c.l.b16 %v2716
    %v3448 = vunpack.c.h.b16 %v2716
    %v3449 = vunpack.c.l.b16 %v2717
    %v3450 = vunpack.c.h.b16 %v2717
    %v3451 = vunpack.c.l.b16 %v2718
    %v3452 = vunpack.c.h.b16 %v2718
    %v3453 = vunpack.c.l.b16 %v2719
    %v3454 = vunpack.c.h.b16 %v2719
    %v3455 = vunpack.c.l.b16 %v2720
    %v3456 = vunpack.c.h.b16 %v2720
    %v3457 = vunpack.c.l.b16 %v2721
    %v3458 = vunpack.c.h.b16 %v2721
    %v3459 = vunpack.c.l.b16 %v2722
    %v3460 = vunpack.c.h.b16 %v2722
    %v3461 = vunpack.c.l.b16 %v2723
    %v3462 = vunpack.c.h.b16 %v2723
    %v3463 = vunpack.c.l.b16 %v2724
    %v3464 = vunpack.c.h.b16 %v2724
    %v3465 = vunpack.c.l.b16 %v2725
    %v3466 = vunpack.c.h.b16 %v2725
    %v3467 = vunpack.c.l.b16 %v2726
    %v3468 = vunpack.c.h.b16 %v2726
    %v3469 = vunpack.c.l.b16 %v2727
    %v3470 = vunpack.c.h.b16 %v2727
    %v3471 = vunpack.c.l.b16 %v2728
    %v3472 = vunpack.c.h.b16 %v2728
    %v3473 = vunpack.c.l.b16 %v2729
    %v3474 = vunpack.c.h.b16 %v2729
    %v3475 = vunpack.c.l.b16 %v2730
    %v3476 = vunpack.c.h.b16 %v2730
    %v3477 = vunpack.c.l.b16 %v2731
    %v3478 = vunpack.c.h.b16 %v2731
    %v3479 = vunpack.c.l.b16 %v2732
    %v3480 = vunpack.c.h.b16 %v2732
    %v3481 = vunpack.c.l.b16 %v2733
    %v3482 = vunpack.c.h.b16 %v2733
    %v3483 = vunpack.c.l.b16 %v2734
    %v3484 = vunpack.c.h.b16 %v2734
    %v3485 = vunpack.c.l.b16 %v2735
    %v3486 = vunpack.c.h.b16 %v2735
    %v3487 = vunpack.c.l.b16 %v2736
    %v3488 = vunpack.c.h.b16 %v2736
    %v3489 = vunpack.c.l.b16 %v2737
    %v3490 = vunpack.c.h.b16 %v2737
    %v3491 = vunpack.c.l.b16 %v2738
    %v3492 = vunpack.c.h.b16 %v2738
    %v3493 = vunpack.c.l.b16 %v2739
    %v3494 = vunpack.c.h.b16 %v2739
    %v3495 = vunpack.c.l.b16 %v2740
    %v3496 = vunpack.c.h.b16 %v2740
    %v3497 = vunpack.c.l.b16 %v2741
    %v3498 = vunpack.c.h.b16 %v2741
    %v3499 = vunpack.c.l.b16 %v2742
    %v3500 = vunpack.c.h.b16 %v2742
    %v3501 = vunpack.c.l.b16 %v2743
    %v3502 = vunpack.c.h.b16 %v2743
    %v3503 = vunpack.c.l.b16 %v2744
    %v3504 = vunpack.c.h.b16 %v2744
    %v3505 = vunpack.c.l.b16 %v2745
    %v3506 = vunpack.c.h.b16 %v2745
    %v3507 = vunpack.c.l.b16 %v2746
    %v3508 = vunpack.c.h.b16 %v2746
    %v3509 = vunpack.c.l.b16 %v2747
    %v3510 = vunpack.c.h.b16 %v2747
    %v3511 = vunpack.c.l.b16 %v2748
    %v3512 = vunpack.c.h.b16 %v2748
    %v3513 = vunpack.c.l.b16 %v2749
    %v3514 = vunpack.c.h.b16 %v2749
    %v3515 = vunpack.c.l.b16 %v2750
    %v3516 = vunpack.c.h.b16 %v2750
    %v3517 = vunpack.c.l.b16 %v2751
    %v3518 = vunpack.c.h.b16 %v2751
    %v3519 = vunpack.c.l.b16 %v2752
    %v3520 = vunpack.c.h.b16 %v2752
    %v3521 = vunpack.c.l.b16 %v2753
    %v3522 = vunpack.c.h.b16 %v2753
    %v3523 = vunpack.c.l.b16 %v2754
    %v3524 = vunpack.c.h.b16 %v2754
    %v3525 = vunpack.c.l.b16 %v2755
    %v3526 = vunpack.c.h.b16 %v2755
    %v3527 = vunpack.c.l.b16 %v2756
    %v3528 = vunpack.c.h.b16 %v2756
    %v3529 = vunpack.c.l.b16 %v2757
    %v3530 = vunpack.c.h.b16 %v2757
    %v3531 = vunpack.c.l.b16 %v2758
    %v3532 = vunpack.c.h.b16 %v2758
    %v3533 = vunpack.c.l.b16 %v2759
    %v3534 = vunpack.c.h.b16 %v2759
    %v3535 = vunpack.c.l.b16 %v2760
    %v3536 = vunpack.c.h.b16 %v2760
    %v3537 = vunpack.c.l.b16 %v2761
    %v3538 = vunpack.c.h.b16 %v2761
    %v3539 = vunpack.c.l.b16 %v2762
    %v3540 = vunpack.c.h.b16 %v2762
    %v3541 = vunpack.c.l.b16 %v2763
    %v3542 = vunpack.c.h.b16 %v2763
    %v3543 = vunpack.c.l.b16 %v2764
    %v3544 = vunpack.c.h.b16 %v2764
    %v3545 = vunpack.c.l.b16 %v2765
    %v3546 = vunpack.c.h.b16 %v2765
    %v3547 = vunpack.c.l.b16 %v2766
    %v3548 = vunpack.c.h.b16 %v2766
    %v3549 = vunpack.c.l.b16 %v2767
    %v3550 = vunpack.c.h.b16 %v2767
    %v3551 = vunpack.c.l.b16 %v2768
    %v3552 = vunpack.c.h.b16 %v2768
    %v3553 = vunpack.c.l.b16 %v2769
    %v3554 = vunpack.c.h.b16 %v2769
    %v3555 = vunpack.c.l.b16 %v2770
    %v3556 = vunpack.c.h.b16 %v2770
    %v3557 = vunpack.c.l.b16 %v2771
    %v3558 = vunpack.c.h.b16 %v2771
    %v3559 = vunpack.c.l.b16 %v2772
    %v3560 = vunpack.c.h.b16 %v2772
    %v3561 = vunpack.c.l.b16 %v2773
    %v3562 = vunpack.c.h.b16 %v2773
    %v3563 = vunpack.c.l.b16 %v2774
    %v3564 = vunpack.c.h.b16 %v2774
    %v3565 = vunpack.c.l.b16 %v2775
    %v3566 = vunpack.c.h.b16 %v2775
    %v3567 = vunpack.c.l.b16 %v2776
    %v3568 = vunpack.c.h.b16 %v2776
    %v3569 = vunpack.c.l.b16 %v2777
    %v3570 = vunpack.c.h.b16 %v2777
    %v3571 = vunpack.c.l.b16 %v2778
    %v3572 = vunpack.c.h.b16 %v2778
    %v3573 = vunpack.c.l.b16 %v2779
    %v3574 = vunpack.c.h.b16 %v2779
    %v3575 = vunpack.c.l.b16 %v2780
    %v3576 = vunpack.c.h.b16 %v2780
    %v3577 = vunpack.c.l.b16 %v2781
    %v3578 = vunpack.c.h.b16 %v2781
    %v3579 = vunpack.c.l.b16 %v2782
    %v3580 = vunpack.c.h.b16 %v2782
    %v3581 = vunpack.c.l.b16 %v2783
    %v3582 = vunpack.c.h.b16 %v2783
    %v3583 = vunpack.c.l.b16 %v2784
    %v3584 = vunpack.c.h.b16 %v2784
    %v3585 = vunpack.c.l.b16 %v2785
    %v3586 = vunpack.c.h.b16 %v2785
    %v3587 = vunpack.c.l.b16 %v2786
    %v3588 = vunpack.c.h.b16 %v2786
    %v3589 = vunpack.c.l.b16 %v2787
    %v3590 = vunpack.c.h.b16 %v2787
    %v3591 = vunpack.c.l.b16 %v2788
    %v3592 = vunpack.c.h.b16 %v2788
    %v3593 = vunpack.c.l.b16 %v2789
    %v3594 = vunpack.c.h.b16 %v2789
    %v3595 = vunpack.c.l.b16 %v2790
    %v3596 = vunpack.c.h.b16 %v2790
    %v3597 = vunpack.c.l.b16 %v2791
    %v3598 = vunpack.c.h.b16 %v2791
    %v3599 = vunpack.c.l.b16 %v2792
    %v3600 = vunpack.c.h.b16 %v2792
    %v3601 = vunpack.c.l.b16 %v2793
    %v3602 = vunpack.c.h.b16 %v2793
    %v3603 = vunpack.c.l.b16 %v2794
    %v3604 = vunpack.c.h.b16 %v2794
    %v3605 = vpack.c.b16 %v3101, %v3093
    %v3606 = vpack.c.b16 %v3102, %v3094
    %v3607 = vpack.c.b16 %v3103, %v3095
    %v3608 = vpack.c.b16 %v3104, %v3096
    %v3609 = vpack.c.b16 %v3105, %v3097
    %v3610 = vpack.c.b16 %v3106, %v3098
    %v3611 = vpack.c.b16 %v3107, %v3099
    %v3612 = vpack.c.b16 %v3108, %v3100
    %v3613 = vpack.c.b16 %v3117, %v3109
    %v3614 = vpack.c.b16 %v3118, %v3110
    %v3615 = vpack.c.b16 %v3119, %v3111
    %v3616 = vpack.c.b16 %v3120, %v3112
    %v3617 = vpack.c.b16 %v3121, %v3113
    %v3618 = vpack.c.b16 %v3122, %v3114
    %v3619 = vpack.c.b16 %v3123, %v3115
    %v3620 = vpack.c.b16 %v3124, %v3116
    %v3621 = vpack.c.b16 %v3133, %v3125
    %v3622 = vpack.c.b16 %v3134, %v3126
    %v3623 = vpack.c.b16 %v3135, %v3127
    %v3624 = vpack.c.b16 %v3136, %v3128
    %v3625 = vpack.c.b16 %v3137, %v3129
    %v3626 = vpack.c.b16 %v3138, %v3130
    %v3627 = vpack.c.b16 %v3139, %v3131
    %v3628 = vpack.c.b16 %v3140, %v3132
    %v3629 = vpack.c.b16 %v3149, %v3141
    %v3630 = vpack.c.b16 %v3150, %v3142
    %v3631 = vpack.c.b16 %v3151, %v3143
    %v3632 = vpack.c.b16 %v3152, %v3144
    %v3633 = vpack.c.b16 %v3153, %v3145
    %v3634 = vpack.c.b16 %v3154, %v3146
    %v3635 = vpack.c.b16 %v3155, %v3147
    %v3636 = vpack.c.b16 %v3156, %v3148
    %v3637 = vpack.c.b16 %v3165, %v3157
    %v3638 = vpack.c.b16 %v3166, %v3158
    %v3639 = vpack.c.b16 %v3167, %v3159
    %v3640 = vpack.c.b16 %v3168, %v3160
    %v3641 = vpack.c.b16 %v3169, %v3161
    %v3642 = vpack.c.b16 %v3170, %v3162
    %v3643 = vpack.c.b16 %v3171, %v3163
    %v3644 = vpack.c.b16 %v3172, %v3164
    %v3645 = vpack.c.b16 %v3181, %v3173
    %v3646 = vpack.c.b16 %v3182, %v3174
    %v3647 = vpack.c.b16 %v3183, %v3175
    %v3648 = vpack.c.b16 %v3184, %v3176
    %v3649 = vpack.c.b16 %v3185, %v3177
    %v3650 = vpack.c.b16 %v3186, %v3178
    %v3651 = vpack.c.b16 %v3187, %v3179
    %v3652 = vpack.c.b16 %v3188, %v3180
    %v3653 = vpack.c.b16 %v3197, %v3189
    %v3654 = vpack.c.b16 %v3198, %v3190
    %v3655 = vpack.c.b16 %v3199, %v3191
    %v3656 = vpack.c.b16 %v3200, %v3192
    %v3657 = vpack.c.b16 %v3201, %v3193
    %v3658 = vpack.c.b16 %v3202, %v3194
    %v3659 = vpack.c.b16 %v3203, %v3195
    %v3660 = vpack.c.b16 %v3204, %v3196
    %v3661 = vpack.c.b16 %v3213, %v3205
    %v3662 = vpack.c.b16 %v3214, %v3206
    %v3663 = vpack.c.b16 %v3215, %v3207
    %v3664 = vpack.c.b16 %v3216, %v3208
    %v3665 = vpack.c.b16 %v3217, %v3209
    %v3666 = vpack.c.b16 %v3218, %v3210
    %v3667 = vpack.c.b16 %v3219, %v3211
    %v3668 = vpack.c.b16 %v3220, %v3212
    %v3669 = vpack.c.b16 %v3229, %v3221
    %v3670 = vpack.c.b16 %v3230, %v3222
    %v3671 = vpack.c.b16 %v3231, %v3223
    %v3672 = vpack.c.b16 %v3232, %v3224
    %v3673 = vpack.c.b16 %v3233, %v3225
    %v3674 = vpack.c.b16 %v3234, %v3226
    %v3675 = vpack.c.b16 %v3235, %v3227
    %v3676 = vpack.c.b16 %v3236, %v3228
    %v3677 = vpack.c.b16 %v3245, %v3237
    %v3678 = vpack.c.b16 %v3246, %v3238
    %v3679 = vpack.c.b16 %v3247, %v3239
    %v3680 = vpack.c.b16 %v3248, %v3240
    %v3681 = vpack.c.b16 %v3249, %v3241
    %v3682 = vpack.c.b16 %v3250, %v3242
    %v3683 = vpack.c.b16 %v3251, %v3243
    %v3684 = vpack.c.b16 %v3252, %v3244
    %v3685 = vpack.c.b16 %v3261, %v3253
    %v3686 = vpack.c.b16 %v3262, %v3254
    %v3687 = vpack.c.b16 %v3263, %v3255
    %v3688 = vpack.c.b16 %v3264, %v3256
    %v3689 = vpack.c.b16 %v3265, %v3257
    %v3690 = vpack.c.b16 %v3266, %v3258
    %v3691 = vpack.c.b16 %v3267, %v3259
    %v3692 = vpack.c.b16 %v3268, %v3260
    %v3693 = vpack.c.b16 %v3277, %v3269
    %v3694 = vpack.c.b16 %v3278, %v3270
    %v3695 = vpack.c.b16 %v3279, %v3271
    %v3696 = vpack.c.b16 %v3280, %v3272
    %v3697 = vpack.c.b16 %v3281, %v3273
    %v3698 = vpack.c.b16 %v3282, %v3274
    %v3699 = vpack.c.b16 %v3283, %v3275
    %v3700 = vpack.c.b16 %v3284, %v3276
    %v3701 = vpack.c.b16 %v3293, %v3285
    %v3702 = vpack.c.b16 %v3294, %v3286
    %v3703 = vpack.c.b16 %v3295, %v3287
    %v3704 = vpack.c.b16 %v3296, %v3288
    %v3705 = vpack.c.b16 %v3297, %v3289
    %v3706 = vpack.c.b16 %v3298, %v3290
    %v3707 = vpack.c.b16 %v3299, %v3291
    %v3708 = vpack.c.b16 %v3300, %v3292
    %v3709 = vpack.c.b16 %v3309, %v3301
    %v3710 = vpack.c.b16 %v3310, %v3302
    %v3711 = vpack.c.b16 %v3311, %v3303
    %v3712 = vpack.c.b16 %v3312, %v3304
    %v3713 = vpack.c.b16 %v3313, %v3305
    %v3714 = vpack.c.b16 %v3314, %v3306
    %v3715 = vpack.c.b16 %v3315, %v3307
    %v3716 = vpack.c.b16 %v3316, %v3308
    %v3717 = vpack.c.b16 %v3325, %v3317
    %v3718 = vpack.c.b16 %v3326, %v3318
    %v3719 = vpack.c.b16 %v3327, %v3319
    %v3720 = vpack.c.b16 %v3328, %v3320
    %v3721 = vpack.c.b16 %v3329, %v3321
    %v3722 = vpack.c.b16 %v3330, %v3322
    %v3723 = vpack.c.b16 %v3331, %v3323
    %v3724 = vpack.c.b16 %v3332, %v3324
    %v3725 = vpack.c.b16 %v3341, %v3333
    %v3726 = vpack.c.b16 %v3342, %v3334
    %v3727 = vpack.c.b16 %v3343, %v3335
    %v3728 = vpack.c.b16 %v3344, %v3336
    %v3729 = vpack.c.b16 %v3345, %v3337
    %v3730 = vpack.c.b16 %v3346, %v3338
    %v3731 = vpack.c.b16 %v3347, %v3339
    %v3732 = vpack.c.b16 %v3348, %v3340
    %v3733 = vpack.c.b16 %v3357, %v3349
    %v3734 = vpack.c.b16 %v3358, %v3350
    %v3735 = vpack.c.b16 %v3359, %v3351
    %v3736 = vpack.c.b16 %v3360, %v3352
    %v3737 = vpack.c.b16 %v3361, %v3353
    %v3738 = vpack.c.b16 %v3362, %v3354
    %v3739 = vpack.c.b16 %v3363, %v3355
    %v3740 = vpack.c.b16 %v3364, %v3356
    %v3741 = vpack.c.b16 %v3373, %v3365
    %v3742 = vpack.c.b16 %v3374, %v3366
    %v3743 = vpack.c.b16 %v3375, %v3367
    %v3744 = vpack.c.b16 %v3376, %v3368
    %v3745 = vpack.c.b16 %v3377, %v3369
    %v3746 = vpack.c.b16 %v3378, %v3370
    %v3747 = vpack.c.b16 %v3379, %v3371
    %v3748 = vpack.c.b16 %v3380, %v3372
    %v3749 = vpack.c.b16 %v3389, %v3381
    %v3750 = vpack.c.b16 %v3390, %v3382
    %v3751 = vpack.c.b16 %v3391, %v3383
    %v3752 = vpack.c.b16 %v3392, %v3384
    %v3753 = vpack.c.b16 %v3393, %v3385
    %v3754 = vpack.c.b16 %v3394, %v3386
    %v3755 = vpack.c.b16 %v3395, %v3387
    %v3756 = vpack.c.b16 %v3396, %v3388
    %v3757 = vpack.c.b16 %v3405, %v3397
    %v3758 = vpack.c.b16 %v3406, %v3398
    %v3759 = vpack.c.b16 %v3407, %v3399
    %v3760 = vpack.c.b16 %v3408, %v3400
    %v3761 = vpack.c.b16 %v3409, %v3401
    %v3762 = vpack.c.b16 %v3410, %v3402
    %v3763 = vpack.c.b16 %v3411, %v3403
    %v3764 = vpack.c.b16 %v3412, %v3404
    %v3765 = vpack.c.b16 %v3421, %v3413
    %v3766 = vpack.c.b16 %v3422, %v3414
    %v3767 = vpack.c.b16 %v3423, %v3415
    %v3768 = vpack.c.b16 %v3424, %v3416
    %v3769 = vpack.c.b16 %v3425, %v3417
    %v3770 = vpack.c.b16 %v3426, %v3418
    %v3771 = vpack.c.b16 %v3427, %v3419
    %v3772 = vpack.c.b16 %v3428, %v3420
    %v3773 = vpack.c.b16 %v3437, %v3429
    %v3774 = vpack.c.b16 %v3438, %v3430
    %v3775 = vpack.c.b16 %v3439, %v3431
    %v3776 = vpack.c.b16 %v3440, %v3432
    %v3777 = vpack.c.b16 %v3441, %v3433
    %v3778 = vpack.c.b16 %v3442, %v3434
    %v3779 = vpack.c.b16 %v3443, %v3435
    %v3780 = vpack.c.b16 %v3444, %v3436
    %v3781 = vpack.c.b16 %v3453, %v3445
    %v3782 = vpack.c.b16 %v3454, %v3446
    %v3783 = vpack.c.b16 %v3455, %v3447
    %v3784 = vpack.c.b16 %v3456, %v3448
    %v3785 = vpack.c.b16 %v3457, %v3449
    %v3786 = vpack.c.b16 %v3458, %v3450
    %v3787 = vpack.c.b16 %v3459, %v3451
    %v3788 = vpack.c.b16 %v3460, %v3452
    %v3789 = vpack.c.b16 %v3469, %v3461
    %v3790 = vpack.c.b16 %v3470, %v3462
    %v3791 = vpack.c.b16 %v3471, %v3463
    %v3792 = vpack.c.b16 %v3472, %v3464
    %v3793 = vpack.c.b16 %v3473, %v3465
    %v3794 = vpack.c.b16 %v3474, %v3466
    %v3795 = vpack.c.b16 %v3475, %v3467
    %v3796 = vpack.c.b16 %v3476, %v3468
    %v3797 = vpack.c.b16 %v3485, %v3477
    %v3798 = vpack.c.b16 %v3486, %v3478
    %v3799 = vpack.c.b16 %v3487, %v3479
    %v3800 = vpack.c.b16 %v3488, %v3480
    %v3801 = vpack.c.b16 %v3489, %v3481
    %v3802 = vpack.c.b16 %v3490, %v3482
    %v3803 = vpack.c.b16 %v3491, %v3483
    %v3804 = vpack.c.b16 %v3492, %v3484
    %v3805 = vpack.c.b16 %v3501, %v3493
    %v3806 = vpack.c.b16 %v3502, %v3494
    %v3807 = vpack.c.b16 %v3503, %v3495
    %v3808 = vpack.c.b16 %v3504, %v3496
    %v3809 = vpack.c.b16 %v3505, %v3497
    %v3810 = vpack.c.b16 %v3506, %v3498
    %v3811 = vpack.c.b16 %v3507, %v3499
    %v3812 = vpack.c.b16 %v3508, %v3500
    %v3813 = vpack.c.b16 %v3517, %v3509
    %v3814 = vpack.c.b16 %v3518, %v3510
    %v3815 = vpack.c.b16 %v3519, %v3511
    %v3816 = vpack.c.b16 %v3520, %v3512
    %v3817 = vpack.c.b16 %v3521, %v3513
    %v3818 = vpack.c.b16 %v3522, %v3514
    %v3819 = vpack.c.b16 %v3523, %v3515
    %v3820 = vpack.c.b16 %v3524, %v3516
    %v3821 = vpack.c.b16 %v3533, %v3525
    %v3822 = vpack.c.b16 %v3534, %v3526
    %v3823 = vpack.c.b16 %v3535, %v3527
    %v3824 = vpack.c.b16 %v3536, %v3528
    %v3825 = vpack.c.b16 %v3537, %v3529
    %v3826 = vpack.c.b16 %v3538, %v3530
    %v3827 = vpack.c.b16 %v3539, %v3531
    %v3828 = vpack.c.b16 %v3540, %v3532
    %v3829 = vpack.c.b16 %v3549, %v3541
    %v3830 = vpack.c.b16 %v3550, %v3542
    %v3831 = vpack.c.b16 %v3551, %v3543
    %v3832 = vpack.c.b16 %v3552, %v3544
    %v3833 = vpack.c.b16 %v3553, %v3545
    %v3834 = vpack.c.b16 %v3554, %v3546
    %v3835 = vpack.c.b16 %v3555, %v3547
    %v3836 = vpack.c.b16 %v3556, %v3548
    %v3837 = vpack.c.b16 %v3565, %v3557
    %v3838 = vpack.c.b16 %v3566, %v3558
    %v3839 = vpack.c.b16 %v3567, %v3559
    %v3840 = vpack.c.b16 %v3568, %v3560
    %v3841 = vpack.c.b16 %v3569, %v3561
    %v3842 = vpack.c.b16 %v3570, %v3562
    %v3843 = vpack.c.b16 %v3571, %v3563
    %v3844 = vpack.c.b16 %v3572, %v3564
    %v3845 = vpack.c.b16 %v3581, %v3573
    %v3846 = vpack.c.b16 %v3582, %v3574
    %v3847 = vpack.c.b16 %v3583, %v3575
    %v3848 = vpack.c.b16 %v3584, %v3576
    %v3849 = vpack.c.b16 %v3585, %v3577
    %v3850 = vpack.c.b16 %v3586, %v3578
    %v3851 = vpack.c.b16 %v3587, %v3579
    %v3852 = vpack.c.b16 %v3588, %v3580
    %v3853 = vpack.c.b16 %v3597, %v3589
    %v3854 = vpack.c.b16 %v3598, %v3590
    %v3855 = vpack.c.b16 %v3599, %v3591
    %v3856 = vpack.c.b16 %v3600, %v3592
    %v3857 = vpack.c.b16 %v3601, %v3593
    %v3858 = vpack.c.b16 %v3602, %v3594
    %v3859 = vpack.c.b16 %v3603, %v3595
    %v3860 = vpack.c.b16 %v3604, %v3596
    %4117 = vmatprep.subr.bf16.mxu0 %v3606
    %4118 = vmatpush1.bf16.msra.mxu0 %v3605
    %4119 = vmatprep.subr.bf16.mxu0 %v3614
    %4120 = vmatpush1.bf16.msra.mxu0 %v3613
    %4121 = vmatprep.subr.bf16.mxu0 %v3622
    %4122 = vmatpush1.bf16.msra.mxu0 %v3621
    %4123 = vmatprep.subr.bf16.mxu0 %v3630
    %4124 = vmatpush1.bf16.msra.mxu0 %v3629
    %4125 = vmatprep.subr.bf16.mxu0 %v3638
    %4126 = vmatpush1.bf16.msra.mxu0 %v3637
    %4127 = vmatprep.subr.bf16.mxu0 %v3646
    %4128 = vmatpush1.bf16.msra.mxu0 %v3645
    %4129 = vmatprep.subr.bf16.mxu0 %v3654
    %4130 = vmatpush1.bf16.msra.mxu0 %v3653
    %4131 = vmatprep.subr.bf16.mxu0 %v3662
    %4132 = vmatpush1.bf16.msra.mxu0 %v3661
    %4133 = vmatprep.subr.bf16.mxu0 %v3670
    %4134 = vmatpush1.bf16.msra.mxu0 %v3669
    %4135 = vmatprep.subr.bf16.mxu0 %v3678
    %4136 = vmatpush1.bf16.msra.mxu0 %v3677
    %4137 = vmatprep.subr.bf16.mxu0 %v3686
    %4138 = vmatpush1.bf16.msra.mxu0 %v3685
    %4139 = vmatprep.subr.bf16.mxu0 %v3694
    %4140 = vmatpush1.bf16.msra.mxu0 %v3693
    %4141 = vmatprep.subr.bf16.mxu0 %v3702
    %4142 = vmatpush1.bf16.msra.mxu0 %v3701
    %4143 = vmatprep.subr.bf16.mxu0 %v3710
    %4144 = vmatpush1.bf16.msra.mxu0 %v3709
    %4145 = vmatprep.subr.bf16.mxu0 %v3718
    %4146 = vmatpush1.bf16.msra.mxu0 %v3717
    %4147 = vmatprep.subr.bf16.mxu0 %v3726
    %4148 = vmatpush1.bf16.msra.mxu0 %v3725
    %4149 = vmatprep.mubr.bf16.mxu0 %v2536
    %4150 = vmatmul.mubr.bf16.gmra.mrb[0].mxu0 %v2535
    %v4151 = vpop.f32.mrb[0].mxu0
    %v4152 = vadd.f32 %v2800, %v4151
    %v4153 = vpop.f32.mrb[0].mxu0
    %v4154 = vadd.f32 %v2804, %v4153
    %v4155 = vpop.f32.mrb[0].mxu0
    %v4156 = vpop.f32.mrb[0].mxu0
    %4157 = vdwg.mxu0
    %4158 = vmatprep.subr.bf16.mxu0 %v3734
    %4159 = vmatpush1.bf16.msra.mxu0 %v3733
    %4160 = vmatprep.subr.bf16.mxu0 %v3742
    %4161 = vmatpush1.bf16.msra.mxu0 %v3741
    %4162 = vmatprep.subr.bf16.mxu0 %v3750
    %4163 = vmatpush1.bf16.msra.mxu0 %v3749
    %4164 = vmatprep.subr.bf16.mxu0 %v3758
    %4165 = vmatpush1.bf16.msra.mxu0 %v3757
    %4166 = vmatprep.subr.bf16.mxu0 %v3766
    %4167 = vmatpush1.bf16.msra.mxu0 %v3765
    %4168 = vmatprep.subr.bf16.mxu0 %v3774
    %4169 = vmatpush1.bf16.msra.mxu0 %v3773
    %4170 = vmatprep.subr.bf16.mxu0 %v3782
    %4171 = vmatpush1.bf16.msra.mxu0 %v3781
    %4172 = vmatprep.subr.bf16.mxu0 %v3790
    %4173 = vmatpush1.bf16.msra.mxu0 %v3789
    %4174 = vmatprep.subr.bf16.mxu0 %v3798
    %4175 = vmatpush1.bf16.msra.mxu0 %v3797
    %4176 = vmatprep.subr.bf16.mxu0 %v3806
    %4177 = vmatpush1.bf16.msra.mxu0 %v3805
    %4178 = vmatprep.subr.bf16.mxu0 %v3814
    %4179 = vmatpush1.bf16.msra.mxu0 %v3813
    %4180 = vmatprep.subr.bf16.mxu0 %v3822
    %4181 = vmatpush1.bf16.msra.mxu0 %v3821
    %4182 = vmatprep.subr.bf16.mxu0 %v3830
    %4183 = vmatpush1.bf16.msra.mxu0 %v3829
    %4184 = vmatprep.subr.bf16.mxu0 %v3838
    %4185 = vmatpush1.bf16.msra.mxu0 %v3837
    %4186 = vmatprep.subr.bf16.mxu0 %v3846
    %4187 = vmatpush1.bf16.msra.mxu0 %v3845
    %4188 = vmatprep.subr.bf16.mxu0 %v3854
    %4189 = vmatpush1.bf16.msra.mxu0 %v3853
    %4190 = vmatprep.mubr.bf16.mxu0 %v2538
    %4191 = vmatmul.mubr.bf16.gmra.mrb[0].mxu0 %v2537
    %v4192 = vpop.f32.mrb[0].mxu0
    %v4193 = vadd.f32 %v4152, %v4192
    %v4194 = vpop.f32.mrb[0].mxu0
    %v4195 = vadd.f32 %v4154, %v4194
    %v4196 = vpop.f32.mrb[0].mxu0
    %v4197 = vpop.f32.mrb[0].mxu0
    %4198 = vdwg.mxu0
    %4199 = vmatprep.subr.bf16.mxu0 %v3608
    %4200 = vmatpush1.bf16.msra.mxu0 %v3607
    %4201 = vmatprep.subr.bf16.mxu0 %v3616
    %4202 = vmatpush1.bf16.msra.mxu0 %v3615
    %4203 = vmatprep.subr.bf16.mxu0 %v3624
    %4204 = vmatpush1.bf16.msra.mxu0 %v3623
    %4205 = vmatprep.subr.bf16.mxu0 %v3632
    %4206 = vmatpush1.bf16.msra.mxu0 %v3631
    %4207 = vmatprep.subr.bf16.mxu0 %v3640
    %4208 = vmatpush1.bf16.msra.mxu0 %v3639
    %4209 = vmatprep.subr.bf16.mxu0 %v3648
    %4210 = vmatpush1.bf16.msra.mxu0 %v3647
    %4211 = vmatprep.subr.bf16.mxu0 %v3656
    %4212 = vmatpush1.bf16.msra.mxu0 %v3655
    %4213 = vmatprep.subr.bf16.mxu0 %v3664
    %4214 = vmatpush1.bf16.msra.mxu0 %v3663
    %4215 = vmatprep.subr.bf16.mxu0 %v3672
    %4216 = vmatpush1.bf16.msra.mxu0 %v3671
    %4217 = vmatprep.subr.bf16.mxu0 %v3680
    %4218 = vmatpush1.bf16.msra.mxu0 %v3679
    %4219 = vmatprep.subr.bf16.mxu0 %v3688
    %4220 = vmatpush1.bf16.msra.mxu0 %v3687
    %4221 = vmatprep.subr.bf16.mxu0 %v3696
    %4222 = vmatpush1.bf16.msra.mxu0 %v3695
    %4223 = vmatprep.subr.bf16.mxu0 %v3704
    %4224 = vmatpush1.bf16.msra.mxu0 %v3703
    %4225 = vmatprep.subr.bf16.mxu0 %v3712
    %4226 = vmatpush1.bf16.msra.mxu0 %v3711
    %4227 = vmatprep.subr.bf16.mxu0 %v3720
    %4228 = vmatpush1.bf16.msra.mxu0 %v3719
    %4229 = vmatprep.subr.bf16.mxu0 %v3728
    %4230 = vmatpush1.bf16.msra.mxu0 %v3727
    %4231 = vmatprep.mubr.bf16.mxu0 %v2536
    %4232 = vmatmul.mubr.bf16.gmra.mrb[0].mxu0 %v2535
    %v4233 = vpop.f32.mrb[0].mxu0
    %v4234 = vadd.f32 %v2808, %v4233
    %v4235 = vpop.f32.mrb[0].mxu0
    %v4236 = vadd.f32 %v2812, %v4235
    %v4237 = vpop.f32.mrb[0].mxu0
    %v4238 = vpop.f32.mrb[0].mxu0
    %4239 = vdwg.mxu0
    %4240 = vmatprep.subr.bf16.mxu0 %v3736
    %4241 = vmatpush1.bf16.msra.mxu0 %v3735
    %4242 = vmatprep.subr.bf16.mxu0 %v3744
    %4243 = vmatpush1.bf16.msra.mxu0 %v3743
    %4244 = vmatprep.subr.bf16.mxu0 %v3752
    %4245 = vmatpush1.bf16.msra.mxu0 %v3751
    %4246 = vmatprep.subr.bf16.mxu0 %v3760
    %4247 = vmatpush1.bf16.msra.mxu0 %v3759
    %4248 = vmatprep.subr.bf16.mxu0 %v3768
    %4249 = vmatpush1.bf16.msra.mxu0 %v3767
    %4250 = vmatprep.subr.bf16.mxu0 %v3776
    %4251 = vmatpush1.bf16.msra.mxu0 %v3775
    %4252 = vmatprep.subr.bf16.mxu0 %v3784
    %4253 = vmatpush1.bf16.msra.mxu0 %v3783
    %4254 = vmatprep.subr.bf16.mxu0 %v3792
    %4255 = vmatpush1.bf16.msra.mxu0 %v3791
    %4256 = vmatprep.subr.bf16.mxu0 %v3800
    %4257 = vmatpush1.bf16.msra.mxu0 %v3799
    %4258 = vmatprep.subr.bf16.mxu0 %v3808
    %4259 = vmatpush1.bf16.msra.mxu0 %v3807
    %4260 = vmatprep.subr.bf16.mxu0 %v3816
    %4261 = vmatpush1.bf16.msra.mxu0 %v3815
    %4262 = vmatprep.subr.bf16.mxu0 %v3824
    %4263 = vmatpush1.bf16.msra.mxu0 %v3823
    %4264 = vmatprep.subr.bf16.mxu0 %v3832
    %4265 = vmatpush1.bf16.msra.mxu0 %v3831
    %4266 = vmatprep.subr.bf16.mxu0 %v3840
    %4267 = vmatpush1.bf16.msra.mxu0 %v3839
    %4268 = vmatprep.subr.bf16.mxu0 %v3848
    %4269 = vmatpush1.bf16.msra.mxu0 %v3847
    %4270 = vmatprep.subr.bf16.mxu0 %v3856
    %4271 = vmatpush1.bf16.msra.mxu0 %v3855
    %4272 = vmatprep.mubr.bf16.mxu0 %v2538
    %4273 = vmatmul.mubr.bf16.gmra.mrb[0].mxu0 %v2537
    %v4274 = vpop.f32.mrb[0].mxu0
    %v4275 = vadd.f32 %v4234, %v4274
    %v4276 = vpop.f32.mrb[0].mxu0
    %v4277 = vadd.f32 %v4236, %v4276
    %v4278 = vpop.f32.mrb[0].mxu0
    %v4279 = vpop.f32.mrb[0].mxu0
    %4280 = vdwg.mxu0
    %4281 = vmatprep.subr.bf16.mxu0 %v3610
    %4282 = vmatpush1.bf16.msra.mxu0 %v3609
    %4283 = vmatprep.subr.bf16.mxu0 %v3618
    %4284 = vmatpush1.bf16.msra.mxu0 %v3617
    %4285 = vmatprep.subr.bf16.mxu0 %v3626
    %4286 = vmatpush1.bf16.msra.mxu0 %v3625
    %4287 = vmatprep.subr.bf16.mxu0 %v3634
    %4288 = vmatpush1.bf16.msra.mxu0 %v3633
    %4289 = vmatprep.subr.bf16.mxu0 %v3642
    %4290 = vmatpush1.bf16.msra.mxu0 %v3641
    %4291 = vmatprep.subr.bf16.mxu0 %v3650
    %4292 = vmatpush1.bf16.msra.mxu0 %v3649
    %4293 = vmatprep.subr.bf16.mxu0 %v3658
    %4294 = vmatpush1.bf16.msra.mxu0 %v3657
    %4295 = vmatprep.subr.bf16.mxu0 %v3666
    %4296 = vmatpush1.bf16.msra.mxu0 %v3665
    %4297 = vmatprep.subr.bf16.mxu0 %v3674
    %4298 = vmatpush1.bf16.msra.mxu0 %v3673
    %4299 = vmatprep.subr.bf16.mxu0 %v3682
    %4300 = vmatpush1.bf16.msra.mxu0 %v3681
    %4301 = vmatprep.subr.bf16.mxu0 %v3690
    %4302 = vmatpush1.bf16.msra.mxu0 %v3689
    %4303 = vmatprep.subr.bf16.mxu0 %v3698
    %4304 = vmatpush1.bf16.msra.mxu0 %v3697
    %4305 = vmatprep.subr.bf16.mxu0 %v3706
    %4306 = vmatpush1.bf16.msra.mxu0 %v3705
    %4307 = vmatprep.subr.bf16.mxu0 %v3714
    %4308 = vmatpush1.bf16.msra.mxu0 %v3713
    %4309 = vmatprep.subr.bf16.mxu0 %v3722
    %4310 = vmatpush1.bf16.msra.mxu0 %v3721
    %4311 = vmatprep.subr.bf16.mxu0 %v3730
    %4312 = vmatpush1.bf16.msra.mxu0 %v3729
    %4313 = vmatprep.mubr.bf16.mxu0 %v2536
    %4314 = vmatmul.mubr.bf16.gmra.mrb[0].mxu0 %v2535
    %v4315 = vpop.f32.mrb[0].mxu0
    %v4316 = vadd.f32 %v2816, %v4315
    %v4317 = vpop.f32.mrb[0].mxu0
    %v4318 = vadd.f32 %v2820, %v4317
    %v4319 = vpop.f32.mrb[0].mxu0
    %v4320 = vpop.f32.mrb[0].mxu0
    %4321 = vdwg.mxu0
    %4322 = vmatprep.subr.bf16.mxu0 %v3738
    %4323 = vmatpush1.bf16.msra.mxu0 %v3737
    %4324 = vmatprep.subr.bf16.mxu0 %v3746
    %4325 = vmatpush1.bf16.msra.mxu0 %v3745
    %4326 = vmatprep.subr.bf16.mxu0 %v3754
    %4327 = vmatpush1.bf16.msra.mxu0 %v3753
    %4328 = vmatprep.subr.bf16.mxu0 %v3762
    %4329 = vmatpush1.bf16.msra.mxu0 %v3761
    %4330 = vmatprep.subr.bf16.mxu0 %v3770
    %4331 = vmatpush1.bf16.msra.mxu0 %v3769
    %4332 = vmatprep.subr.bf16.mxu0 %v3778
    %4333 = vmatpush1.bf16.msra.mxu0 %v3777
    %4334 = vmatprep.subr.bf16.mxu0 %v3786
    %4335 = vmatpush1.bf16.msra.mxu0 %v3785
    %4336 = vmatprep.subr.bf16.mxu0 %v3794
    %4337 = vmatpush1.bf16.msra.mxu0 %v3793
    %4338 = vmatprep.subr.bf16.mxu0 %v3802
    %4339 = vmatpush1.bf16.msra.mxu0 %v3801
    %4340 = vmatprep.subr.bf16.mxu0 %v3810
    %4341 = vmatpush1.bf16.msra.mxu0 %v3809
    %4342 = vmatprep.subr.bf16.mxu0 %v3818
    %4343 = vmatpush1.bf16.msra.mxu0 %v3817
    %4344 = vmatprep.subr.bf16.mxu0 %v3826
    %4345 = vmatpush1.bf16.msra.mxu0 %v3825
    %4346 = vmatprep.subr.bf16.mxu0 %v3834
    %4347 = vmatpush1.bf16.msra.mxu0 %v3833
    %4348 = vmatprep.subr.bf16.mxu0 %v3842
    %4349 = vmatpush1.bf16.msra.mxu0 %v3841
    %4350 = vmatprep.subr.bf16.mxu0 %v3850
    %4351 = vmatpush1.bf16.msra.mxu0 %v3849
    %4352 = vmatprep.subr.bf16.mxu0 %v3858
    %4353 = vmatpush1.bf16.msra.mxu0 %v3857
    %4354 = vmatprep.mubr.bf16.mxu0 %v2538
    %4355 = vmatmul.mubr.bf16.gmra.mrb[0].mxu0 %v2537
    %v4356 = vpop.f32.mrb[0].mxu0
    %v4357 = vadd.f32 %v4316, %v4356
    %v4358 = vpop.f32.mrb[0].mxu0
    %v4359 = vadd.f32 %v4318, %v4358
    %v4360 = vpop.f32.mrb[0].mxu0
    %v4361 = vpop.f32.mrb[0].mxu0
    %4362 = vdwg.mxu0
    %4363 = vmatprep.subr.bf16.mxu0 %v3612
    %4364 = vmatpush1.bf16.msra.mxu0 %v3611
    %4365 = vmatprep.subr.bf16.mxu0 %v3620
    %4366 = vmatpush1.bf16.msra.mxu0 %v3619
    %4367 = vmatprep.subr.bf16.mxu0 %v3628
    %4368 = vmatpush1.bf16.msra.mxu0 %v3627
    %4369 = vmatprep.subr.bf16.mxu0 %v3636
    %4370 = vmatpush1.bf16.msra.mxu0 %v3635
    %4371 = vmatprep.subr.bf16.mxu0 %v3644
    %4372 = vmatpush1.bf16.msra.mxu0 %v3643
    %4373 = vmatprep.subr.bf16.mxu0 %v3652
    %4374 = vmatpush1.bf16.msra.mxu0 %v3651
    %4375 = vmatprep.subr.bf16.mxu0 %v3660
    %4376 = vmatpush1.bf16.msra.mxu0 %v3659
    %4377 = vmatprep.subr.bf16.mxu0 %v3668
    %4378 = vmatpush1.bf16.msra.mxu0 %v3667
    %4379 = vmatprep.subr.bf16.mxu0 %v3676
    %4380 = vmatpush1.bf16.msra.mxu0 %v3675
    %4381 = vmatprep.subr.bf16.mxu0 %v3684
    %4382 = vmatpush1.bf16.msra.mxu0 %v3683
    %4383 = vmatprep.subr.bf16.mxu0 %v3692
    %4384 = vmatpush1.bf16.msra.mxu0 %v3691
    %4385 = vmatprep.subr.bf16.mxu0 %v3700
    %4386 = vmatpush1.bf16.msra.mxu0 %v3699
    %4387 = vmatprep.subr.bf16.mxu0 %v3708
    %4388 = vmatpush1.bf16.msra.mxu0 %v3707
    %4389 = vmatprep.subr.bf16.mxu0 %v3716
    %4390 = vmatpush1.bf16.msra.mxu0 %v3715
    %4391 = vmatprep.subr.bf16.mxu0 %v3724
    %4392 = vmatpush1.bf16.msra.mxu0 %v3723
    %4393 = vmatprep.subr.bf16.mxu0 %v3732
    %4394 = vmatpush1.bf16.msra.mxu0 %v3731
    %4395 = vmatprep.mubr.bf16.mxu0 %v2536
    %4396 = vmatmul.mubr.bf16.gmra.mrb[0].mxu0 %v2535
    %v4397 = vpop.f32.mrb[0].mxu0
    %v4398 = vadd.f32 %v2824, %v4397
    %v4399 = vpop.f32.mrb[0].mxu0
    %v4400 = vadd.f32 %v2828, %v4399
    %v4401 = vpop.f32.mrb[0].mxu0
    %v4402 = vpop.f32.mrb[0].mxu0
    %4403 = vdwg.mxu0
    %4404 = vmatprep.subr.bf16.mxu0 %v3740
    %4405 = vmatpush1.bf16.msra.mxu0 %v3739
    %4406 = vmatprep.subr.bf16.mxu0 %v3748
    %4407 = vmatpush1.bf16.msra.mxu0 %v3747
    %4408 = vmatprep.subr.bf16.mxu0 %v3756
    %4409 = vmatpush1.bf16.msra.mxu0 %v3755
    %4410 = vmatprep.subr.bf16.mxu0 %v3764
    %4411 = vmatpush1.bf16.msra.mxu0 %v3763
    %4412 = vmatprep.subr.bf16.mxu0 %v3772
    %4413 = vmatpush1.bf16.msra.mxu0 %v3771
    %4414 = vmatprep.subr.bf16.mxu0 %v3780
    %4415 = vmatpush1.bf16.msra.mxu0 %v3779
    %4416 = vmatprep.subr.bf16.mxu0 %v3788
    %4417 = vmatpush1.bf16.msra.mxu0 %v3787
    %4418 = vmatprep.subr.bf16.mxu0 %v3796
    %4419 = vmatpush1.bf16.msra.mxu0 %v3795
    %4420 = vmatprep.subr.bf16.mxu0 %v3804
    %4421 = vmatpush1.bf16.msra.mxu0 %v3803
    %4422 = vmatprep.subr.bf16.mxu0 %v3812
    %4423 = vmatpush1.bf16.msra.mxu0 %v3811
    %4424 = vmatprep.subr.bf16.mxu0 %v3820
    %4425 = vmatpush1.bf16.msra.mxu0 %v3819
    %4426 = vmatprep.subr.bf16.mxu0 %v3828
    %4427 = vmatpush1.bf16.msra.mxu0 %v3827
    %4428 = vmatprep.subr.bf16.mxu0 %v3836
    %4429 = vmatpush1.bf16.msra.mxu0 %v3835
    %4430 = vmatprep.subr.bf16.mxu0 %v3844
    %4431 = vmatpush1.bf16.msra.mxu0 %v3843
    %4432 = vmatprep.subr.bf16.mxu0 %v3852
    %4433 = vmatpush1.bf16.msra.mxu0 %v3851
    %4434 = vmatprep.subr.bf16.mxu0 %v3860
    %4435 = vmatpush1.bf16.msra.mxu0 %v3859
    %4436 = vmatprep.mubr.bf16.mxu0 %v2538
    %4437 = vmatmul.mubr.bf16.gmra.mrb[0].mxu0 %v2537
    %v4438 = vpop.f32.mrb[0].mxu0
    %v4439 = vadd.f32 %v4398, %v4438
    %v4440 = vpop.f32.mrb[0].mxu0
    %v4441 = vadd.f32 %v4400, %v4440
    %v4442 = vpop.f32.mrb[0].mxu0
    %v4443 = vpop.f32.mrb[0].mxu0
    %4444 = vdwg.mxu0
    %v4445 = vmax.f32 %v4193, 0.0
    %v4446 = vmax.f32 %v4195, 0.0
    %v4447 = vmax.f32 %v4275, 0.0
    %v4448 = vmax.f32 %v4277, 0.0
    %v4449 = vmax.f32 %v4357, 0.0
    %v4450 = vmax.f32 %v4359, 0.0
    %v4451 = vmax.f32 %v4439, 0.0
    %v4452 = vmax.f32 %v4441, 0.0
    %v4453 = vpack.c.bf16 %v4445, %v4445
    %v4454 = vpack.c.bf16 %v4446, %v4446
    %v4455 = vpack.c.bf16 %v4447, %v4447
    %v4456 = vpack.c.bf16 %v4448, %v4448
    %v4457 = vpack.c.bf16 %v4449, %v4449
    %v4458 = vpack.c.bf16 %v4450, %v4450
    %v4459 = vpack.c.bf16 %v4451, %v4451
    %v4460 = vpack.c.bf16 %v4452, %v4452
    %v4461 = vld [vmem:[#allocation9] sm:$0xff]
    %v4462 = vld [vmem:[#allocation9 + $0x8] sm:$0xff]
    %v4463 = vld [vmem:[#allocation9 + $0x10] sm:$0xff]
    %v4464 = vld [vmem:[#allocation9 + $0x18] sm:$0xff]
    %v4465 = vld [vmem:[#allocation9 + $0x20] sm:$0xff]
    %v4466 = vld [vmem:[#allocation9 + $0x28] sm:$0xff]
    %v4467 = vld [vmem:[#allocation9 + $0x30] sm:$0xff]
    %v4468 = vld [vmem:[#allocation9 + $0x38] sm:$0xff]
    %v4469 = vld [vmem:[#allocation9 + $0x40] sm:$0xff]
    %v4470 = vld [vmem:[#allocation9 + $0x48] sm:$0xff]
    %v4471 = vld [vmem:[#allocation9 + $0x50] sm:$0xff]
    %v4472 = vld [vmem:[#allocation9 + $0x58] sm:$0xff]
    %v4473 = vld [vmem:[#allocation9 + $0x60] sm:$0xff]
    %v4474 = vld [vmem:[#allocation9 + $0x68] sm:$0xff]
    %v4475 = vld [vmem:[#allocation9 + $0x70] sm:$0xff]
    %v4476 = vld [vmem:[#allocation9 + $0x78] sm:$0xff]
    %v4477 = vld [vmem:[#allocation9 + $0x80] sm:$0xff]
    %v4478 = vld [vmem:[#allocation9 + $0x88] sm:$0xff]
    %v4479 = vld [vmem:[#allocation9 + $0x90] sm:$0xff]
    %v4480 = vld [vmem:[#allocation9 + $0x98] sm:$0xff]
    %v4481 = vld [vmem:[#allocation9 + $0xa0] sm:$0xff]
    %v4482 = vld [vmem:[#allocation9 + $0xa8] sm:$0xff]
    %v4483 = vld [vmem:[#allocation9 + $0xb0] sm:$0xff]
    %v4484 = vld [vmem:[#allocation9 + $0xb8] sm:$0xff]
    %v4485 = vld [vmem:[#allocation9 + $0xc0] sm:$0xff]
    %v4486 = vld [vmem:[#allocation9 + $0xc8] sm:$0xff]
    %v4487 = vld [vmem:[#allocation9 + $0xd0] sm:$0xff]
    %v4488 = vld [vmem:[#allocation9 + $0xd8] sm:$0xff]
    %v4489 = vld [vmem:[#allocation9 + $0xe0] sm:$0xff]
    %v4490 = vld [vmem:[#allocation9 + $0xe8] sm:$0xff]
    %v4491 = vld [vmem:[#allocation9 + $0xf0] sm:$0xff]
    %v4492 = vld [vmem:[#allocation9 + $0xf8] sm:$0xff]
    %v4493 = vld [vmem:[#allocation9 + $0x100] sm:$0xff]
    %v4494 = vld [vmem:[#allocation9 + $0x108] sm:$0xff]
    %v4495 = vld [vmem:[#allocation9 + $0x110] sm:$0xff]
    %v4496 = vld [vmem:[#allocation9 + $0x118] sm:$0xff]
    %v4497 = vld [vmem:[#allocation9 + $0x120] sm:$0xff]
    %v4498 = vld [vmem:[#allocation9 + $0x128] sm:$0xff]
    %v4499 = vld [vmem:[#allocation9 + $0x130] sm:$0xff]
    %v4500 = vld [vmem:[#allocation9 + $0x138] sm:$0xff]
    %v4501 = vld [vmem:[#allocation9 + $0x140] sm:$0xff]
    %v4502 = vld [vmem:[#allocation9 + $0x148] sm:$0xff]
    %v4503 = vld [vmem:[#allocation9 + $0x150] sm:$0xff]
    %v4504 = vld [vmem:[#allocation9 + $0x158] sm:$0xff]
    %v4505 = vld [vmem:[#allocation9 + $0x160] sm:$0xff]
    %v4506 = vld [vmem:[#allocation9 + $0x168] sm:$0xff]
    %v4507 = vld [vmem:[#allocation9 + $0x170] sm:$0xff]
    %v4508 = vld [vmem:[#allocation9 + $0x178] sm:$0xff]
    %v4509 = vld [vmem:[#allocation9 + $0x180] sm:$0xff]
    %v4510 = vld [vmem:[#allocation9 + $0x188] sm:$0xff]
    %v4511 = vld [vmem:[#allocation9 + $0x190] sm:$0xff]
    %v4512 = vld [vmem:[#allocation9 + $0x198] sm:$0xff]
    %v4513 = vld [vmem:[#allocation9 + $0x1a0] sm:$0xff]
    %v4514 = vld [vmem:[#allocation9 + $0x1a8] sm:$0xff]
    %v4515 = vld [vmem:[#allocation9 + $0x1b0] sm:$0xff]
    %v4516 = vld [vmem:[#allocation9 + $0x1b8] sm:$0xff]
    %v4517 = vld [vmem:[#allocation9 + $0x1c0] sm:$0xff]
    %v4518 = vld [vmem:[#allocation9 + $0x1c8] sm:$0xff]
    %v4519 = vld [vmem:[#allocation9 + $0x1d0] sm:$0xff]
    %v4520 = vld [vmem:[#allocation9 + $0x1d8] sm:$0xff]
    %v4521 = vld [vmem:[#allocation9 + $0x1e0] sm:$0xff]
    %v4522 = vld [vmem:[#allocation9 + $0x1e8] sm:$0xff]
    %v4523 = vld [vmem:[#allocation9 + $0x1f0] sm:$0xff]
    %v4524 = vld [vmem:[#allocation9 + $0x1f8] sm:$0xff]
    %v4525 = vld [vmem:[#allocation9 + $0x200] sm:$0xff]
    %v4526 = vld [vmem:[#allocation9 + $0x208] sm:$0xff]
    %v4527 = vld [vmem:[#allocation9 + $0x210] sm:$0xff]
    %v4528 = vld [vmem:[#allocation9 + $0x218] sm:$0xff]
    %v4529 = vld [vmem:[#allocation9 + $0x220] sm:$0xff]
    %v4530 = vld [vmem:[#allocation9 + $0x228] sm:$0xff]
    %v4531 = vld [vmem:[#allocation9 + $0x230] sm:$0xff]
    %v4532 = vld [vmem:[#allocation9 + $0x238] sm:$0xff]
    %v4533 = vld [vmem:[#allocation9 + $0x240] sm:$0xff]
    %v4534 = vld [vmem:[#allocation9 + $0x248] sm:$0xff]
    %v4535 = vld [vmem:[#allocation9 + $0x250] sm:$0xff]
    %v4536 = vld [vmem:[#allocation9 + $0x258] sm:$0xff]
    %v4537 = vld [vmem:[#allocation9 + $0x260] sm:$0xff]
    %v4538 = vld [vmem:[#allocation9 + $0x268] sm:$0xff]
    %v4539 = vld [vmem:[#allocation9 + $0x270] sm:$0xff]
    %v4540 = vld [vmem:[#allocation9 + $0x278] sm:$0xff]
    %v4541 = vld [vmem:[#allocation9 + $0x280] sm:$0xff]
    %v4542 = vld [vmem:[#allocation9 + $0x288] sm:$0xff]
    %v4543 = vld [vmem:[#allocation9 + $0x290] sm:$0xff]
    %v4544 = vld [vmem:[#allocation9 + $0x298] sm:$0xff]
    %v4545 = vld [vmem:[#allocation9 + $0x2a0] sm:$0xff]
    %v4546 = vld [vmem:[#allocation9 + $0x2a8] sm:$0xff]
    %v4547 = vld [vmem:[#allocation9 + $0x2b0] sm:$0xff]
    %v4548 = vld [vmem:[#allocation9 + $0x2b8] sm:$0xff]
    %v4549 = vld [vmem:[#allocation9 + $0x2c0] sm:$0xff]
    %v4550 = vld [vmem:[#allocation9 + $0x2c8] sm:$0xff]
    %v4551 = vld [vmem:[#allocation9 + $0x2d0] sm:$0xff]
    %v4552 = vld [vmem:[#allocation9 + $0x2d8] sm:$0xff]
    %v4553 = vld [vmem:[#allocation9 + $0x2e0] sm:$0xff]
    %v4554 = vld [vmem:[#allocation9 + $0x2e8] sm:$0xff]
    %v4555 = vld [vmem:[#allocation9 + $0x2f0] sm:$0xff]
    %v4556 = vld [vmem:[#allocation9 + $0x2f8] sm:$0xff]
    %v4557 = vld [vmem:[#allocation9 + $0x300] sm:$0xff]
    %v4558 = vld [vmem:[#allocation9 + $0x308] sm:$0xff]
    %v4559 = vld [vmem:[#allocation9 + $0x310] sm:$0xff]
    %v4560 = vld [vmem:[#allocation9 + $0x318] sm:$0xff]
    %v4561 = vld [vmem:[#allocation9 + $0x320] sm:$0xff]
    %v4562 = vld [vmem:[#allocation9 + $0x328] sm:$0xff]
    %v4563 = vld [vmem:[#allocation9 + $0x330] sm:$0xff]
    %v4564 = vld [vmem:[#allocation9 + $0x338] sm:$0xff]
    %v4565 = vld [vmem:[#allocation9 + $0x340] sm:$0xff]
    %v4566 = vld [vmem:[#allocation9 + $0x348] sm:$0xff]
    %v4567 = vld [vmem:[#allocation9 + $0x350] sm:$0xff]
    %v4568 = vld [vmem:[#allocation9 + $0x358] sm:$0xff]
    %v4569 = vld [vmem:[#allocation9 + $0x360] sm:$0xff]
    %v4570 = vld [vmem:[#allocation9 + $0x368] sm:$0xff]
    %v4571 = vld [vmem:[#allocation9 + $0x370] sm:$0xff]
    %v4572 = vld [vmem:[#allocation9 + $0x378] sm:$0xff]
    %v4573 = vld [vmem:[#allocation9 + $0x380] sm:$0xff]
    %v4574 = vld [vmem:[#allocation9 + $0x388] sm:$0xff]
    %v4575 = vld [vmem:[#allocation9 + $0x390] sm:$0xff]
    %v4576 = vld [vmem:[#allocation9 + $0x398] sm:$0xff]
    %v4577 = vld [vmem:[#allocation9 + $0x3a0] sm:$0xff]
    %v4578 = vld [vmem:[#allocation9 + $0x3a8] sm:$0xff]
    %v4579 = vld [vmem:[#allocation9 + $0x3b0] sm:$0xff]
    %v4580 = vld [vmem:[#allocation9 + $0x3b8] sm:$0xff]
    %v4581 = vld [vmem:[#allocation9 + $0x3c0] sm:$0xff]
    %v4582 = vld [vmem:[#allocation9 + $0x3c8] sm:$0xff]
    %v4583 = vld [vmem:[#allocation9 + $0x3d0] sm:$0xff]
    %v4584 = vld [vmem:[#allocation9 + $0x3d8] sm:$0xff]
    %v4585 = vld [vmem:[#allocation9 + $0x3e0] sm:$0xff]
    %v4586 = vld [vmem:[#allocation9 + $0x3e8] sm:$0xff]
    %v4587 = vld [vmem:[#allocation9 + $0x3f0] sm:$0xff]
    %v4588 = vld [vmem:[#allocation9 + $0x3f8] sm:$0xff]
    %v4589 = vld [vmem:[#allocation9 + $0x400] sm:$0xff]
    %v4590 = vld [vmem:[#allocation9 + $0x408] sm:$0xff]
    %v4591 = vld [vmem:[#allocation9 + $0x410] sm:$0xff]
    %v4592 = vld [vmem:[#allocation9 + $0x418] sm:$0xff]
    %v4593 = vld [vmem:[#allocation9 + $0x420] sm:$0xff]
    %v4594 = vld [vmem:[#allocation9 + $0x428] sm:$0xff]
    %v4595 = vld [vmem:[#allocation9 + $0x430] sm:$0xff]
    %v4596 = vld [vmem:[#allocation9 + $0x438] sm:$0xff]
    %v4597 = vld [vmem:[#allocation9 + $0x440] sm:$0xff]
    %v4598 = vld [vmem:[#allocation9 + $0x448] sm:$0xff]
    %v4599 = vld [vmem:[#allocation9 + $0x450] sm:$0xff]
    %v4600 = vld [vmem:[#allocation9 + $0x458] sm:$0xff]
    %v4601 = vld [vmem:[#allocation9 + $0x460] sm:$0xff]
    %v4602 = vld [vmem:[#allocation9 + $0x468] sm:$0xff]
    %v4603 = vld [vmem:[#allocation9 + $0x470] sm:$0xff]
    %v4604 = vld [vmem:[#allocation9 + $0x478] sm:$0xff]
    %v4605 = vld [vmem:[#allocation9 + $0x480] sm:$0xff]
    %v4606 = vld [vmem:[#allocation9 + $0x488] sm:$0xff]
    %v4607 = vld [vmem:[#allocation9 + $0x490] sm:$0xff]
    %v4608 = vld [vmem:[#allocation9 + $0x498] sm:$0xff]
    %v4609 = vld [vmem:[#allocation9 + $0x4a0] sm:$0xff]
    %v4610 = vld [vmem:[#allocation9 + $0x4a8] sm:$0xff]
    %v4611 = vld [vmem:[#allocation9 + $0x4b0] sm:$0xff]
    %v4612 = vld [vmem:[#allocation9 + $0x4b8] sm:$0xff]
    %v4613 = vld [vmem:[#allocation9 + $0x4c0] sm:$0xff]
    %v4614 = vld [vmem:[#allocation9 + $0x4c8] sm:$0xff]
    %v4615 = vld [vmem:[#allocation9 + $0x4d0] sm:$0xff]
    %v4616 = vld [vmem:[#allocation9 + $0x4d8] sm:$0xff]
    %v4617 = vld [vmem:[#allocation9 + $0x4e0] sm:$0xff]
    %v4618 = vld [vmem:[#allocation9 + $0x4e8] sm:$0xff]
    %v4619 = vld [vmem:[#allocation9 + $0x4f0] sm:$0xff]
    %v4620 = vld [vmem:[#allocation9 + $0x4f8] sm:$0xff]
    %v4621 = vld [vmem:[#allocation9 + $0x500] sm:$0xff]
    %v4622 = vld [vmem:[#allocation9 + $0x508] sm:$0xff]
    %v4623 = vld [vmem:[#allocation9 + $0x510] sm:$0xff]
    %v4624 = vld [vmem:[#allocation9 + $0x518] sm:$0xff]
    %v4625 = vld [vmem:[#allocation9 + $0x520] sm:$0xff]
    %v4626 = vld [vmem:[#allocation9 + $0x528] sm:$0xff]
    %v4627 = vld [vmem:[#allocation9 + $0x530] sm:$0xff]
    %v4628 = vld [vmem:[#allocation9 + $0x538] sm:$0xff]
    %v4629 = vld [vmem:[#allocation9 + $0x540] sm:$0xff]
    %v4630 = vld [vmem:[#allocation9 + $0x548] sm:$0xff]
    %v4631 = vld [vmem:[#allocation9 + $0x550] sm:$0xff]
    %v4632 = vld [vmem:[#allocation9 + $0x558] sm:$0xff]
    %v4633 = vld [vmem:[#allocation9 + $0x560] sm:$0xff]
    %v4634 = vld [vmem:[#allocation9 + $0x568] sm:$0xff]
    %v4635 = vld [vmem:[#allocation9 + $0x570] sm:$0xff]
    %v4636 = vld [vmem:[#allocation9 + $0x578] sm:$0xff]
    %v4637 = vld [vmem:[#allocation9 + $0x580] sm:$0xff]
    %v4638 = vld [vmem:[#allocation9 + $0x588] sm:$0xff]
    %v4639 = vld [vmem:[#allocation9 + $0x590] sm:$0xff]
    %v4640 = vld [vmem:[#allocation9 + $0x598] sm:$0xff]
    %v4641 = vld [vmem:[#allocation9 + $0x5a0] sm:$0xff]
    %v4642 = vld [vmem:[#allocation9 + $0x5a8] sm:$0xff]
    %v4643 = vld [vmem:[#allocation9 + $0x5b0] sm:$0xff]
    %v4644 = vld [vmem:[#allocation9 + $0x5b8] sm:$0xff]
    %v4645 = vld [vmem:[#allocation9 + $0x5c0] sm:$0xff]
    %v4646 = vld [vmem:[#allocation9 + $0x5c8] sm:$0xff]
    %v4647 = vld [vmem:[#allocation9 + $0x5d0] sm:$0xff]
    %v4648 = vld [vmem:[#allocation9 + $0x5d8] sm:$0xff]
    %v4649 = vld [vmem:[#allocation9 + $0x5e0] sm:$0xff]
    %v4650 = vld [vmem:[#allocation9 + $0x5e8] sm:$0xff]
    %v4651 = vld [vmem:[#allocation9 + $0x5f0] sm:$0xff]
    %v4652 = vld [vmem:[#allocation9 + $0x5f8] sm:$0xff]
    %v4653 = vld [vmem:[#allocation9 + $0x600] sm:$0xff]
    %v4654 = vld [vmem:[#allocation9 + $0x608] sm:$0xff]
    %v4655 = vld [vmem:[#allocation9 + $0x610] sm:$0xff]
    %v4656 = vld [vmem:[#allocation9 + $0x618] sm:$0xff]
    %v4657 = vld [vmem:[#allocation9 + $0x620] sm:$0xff]
    %v4658 = vld [vmem:[#allocation9 + $0x628] sm:$0xff]
    %v4659 = vld [vmem:[#allocation9 + $0x630] sm:$0xff]
    %v4660 = vld [vmem:[#allocation9 + $0x638] sm:$0xff]
    %v4661 = vld [vmem:[#allocation9 + $0x640] sm:$0xff]
    %v4662 = vld [vmem:[#allocation9 + $0x648] sm:$0xff]
    %v4663 = vld [vmem:[#allocation9 + $0x650] sm:$0xff]
    %v4664 = vld [vmem:[#allocation9 + $0x658] sm:$0xff]
    %v4665 = vld [vmem:[#allocation9 + $0x660] sm:$0xff]
    %v4666 = vld [vmem:[#allocation9 + $0x668] sm:$0xff]
    %v4667 = vld [vmem:[#allocation9 + $0x670] sm:$0xff]
    %v4668 = vld [vmem:[#allocation9 + $0x678] sm:$0xff]
    %v4669 = vld [vmem:[#allocation9 + $0x680] sm:$0xff]
    %v4670 = vld [vmem:[#allocation9 + $0x688] sm:$0xff]
    %v4671 = vld [vmem:[#allocation9 + $0x690] sm:$0xff]
    %v4672 = vld [vmem:[#allocation9 + $0x698] sm:$0xff]
    %v4673 = vld [vmem:[#allocation9 + $0x6a0] sm:$0xff]
    %v4674 = vld [vmem:[#allocation9 + $0x6a8] sm:$0xff]
    %v4675 = vld [vmem:[#allocation9 + $0x6b0] sm:$0xff]
    %v4676 = vld [vmem:[#allocation9 + $0x6b8] sm:$0xff]
    %v4677 = vld [vmem:[#allocation9 + $0x6c0] sm:$0xff]
    %v4678 = vld [vmem:[#allocation9 + $0x6c8] sm:$0xff]
    %v4679 = vld [vmem:[#allocation9 + $0x6d0] sm:$0xff]
    %v4680 = vld [vmem:[#allocation9 + $0x6d8] sm:$0xff]
    %v4681 = vld [vmem:[#allocation9 + $0x6e0] sm:$0xff]
    %v4682 = vld [vmem:[#allocation9 + $0x6e8] sm:$0xff]
    %v4683 = vld [vmem:[#allocation9 + $0x6f0] sm:$0xff]
    %v4684 = vld [vmem:[#allocation9 + $0x6f8] sm:$0xff]
    %v4685 = vld [vmem:[#allocation9 + $0x700] sm:$0xff]
    %v4686 = vld [vmem:[#allocation9 + $0x708] sm:$0xff]
    %v4687 = vld [vmem:[#allocation9 + $0x710] sm:$0xff]
    %v4688 = vld [vmem:[#allocation9 + $0x718] sm:$0xff]
    %v4689 = vld [vmem:[#allocation9 + $0x720] sm:$0xff]
    %v4690 = vld [vmem:[#allocation9 + $0x728] sm:$0xff]
    %v4691 = vld [vmem:[#allocation9 + $0x730] sm:$0xff]
    %v4692 = vld [vmem:[#allocation9 + $0x738] sm:$0xff]
    %v4693 = vld [vmem:[#allocation9 + $0x740] sm:$0xff]
    %v4694 = vld [vmem:[#allocation9 + $0x748] sm:$0xff]
    %v4695 = vld [vmem:[#allocation9 + $0x750] sm:$0xff]
    %v4696 = vld [vmem:[#allocation9 + $0x758] sm:$0xff]
    %v4697 = vld [vmem:[#allocation9 + $0x760] sm:$0xff]
    %v4698 = vld [vmem:[#allocation9 + $0x768] sm:$0xff]
    %v4699 = vld [vmem:[#allocation9 + $0x770] sm:$0xff]
    %v4700 = vld [vmem:[#allocation9 + $0x778] sm:$0xff]
    %v4701 = vld [vmem:[#allocation9 + $0x780] sm:$0xff]
    %v4702 = vld [vmem:[#allocation9 + $0x788] sm:$0xff]
    %v4703 = vld [vmem:[#allocation9 + $0x790] sm:$0xff]
    %v4704 = vld [vmem:[#allocation9 + $0x798] sm:$0xff]
    %v4705 = vld [vmem:[#allocation9 + $0x7a0] sm:$0xff]
    %v4706 = vld [vmem:[#allocation9 + $0x7a8] sm:$0xff]
    %v4707 = vld [vmem:[#allocation9 + $0x7b0] sm:$0xff]
    %v4708 = vld [vmem:[#allocation9 + $0x7b8] sm:$0xff]
    %v4709 = vld [vmem:[#allocation9 + $0x7c0] sm:$0xff]
    %v4710 = vld [vmem:[#allocation9 + $0x7c8] sm:$0xff]
    %v4711 = vld [vmem:[#allocation9 + $0x7d0] sm:$0xff]
    %v4712 = vld [vmem:[#allocation9 + $0x7d8] sm:$0xff]
    %v4713 = vld [vmem:[#allocation9 + $0x7e0] sm:$0xff]
    %v4714 = vld [vmem:[#allocation9 + $0x7e8] sm:$0xff]
    %v4715 = vld [vmem:[#allocation9 + $0x7f0] sm:$0xff]
    %v4716 = vld [vmem:[#allocation9 + $0x7f8] sm:$0xff]
    %v4717 = vld [vmem:[%s10] sm:$0xf]
    %v4719 = vlaneseq
    %v4720 = vshrl.u32 %v4719, 7
    %v4721 = vsub.s32 0, %v4720
    %v4722 = vrot.slane %v4717, %v4721
    %v4723 = vlaneseq
    %v4724 = vshrl.u32 %v4723, 7
    %v4725 = vsub.s32 1, %v4724
    %v4726 = vrot.slane %v4717, %v4725
    %v4727 = vlaneseq
    %v4728 = vshrl.u32 %v4727, 7
    %v4729 = vsub.s32 2, %v4728
    %v4730 = vrot.slane %v4717, %v4729
    %v4731 = vlaneseq
    %v4732 = vshrl.u32 %v4731, 7
    %v4733 = vsub.s32 3, %v4732
    %v4734 = vrot.slane %v4717, %v4733
    %v4995 = vunpack.c.l.b16 %v4461
    %v4996 = vunpack.c.h.b16 %v4461
    %v4997 = vunpack.c.l.b16 %v4462
    %v4998 = vunpack.c.h.b16 %v4462
    %v4999 = vunpack.c.l.b16 %v4463
    %v5000 = vunpack.c.h.b16 %v4463
    %v5001 = vunpack.c.l.b16 %v4464
    %v5002 = vunpack.c.h.b16 %v4464
    %v5003 = vunpack.c.l.b16 %v4465
    %v5004 = vunpack.c.h.b16 %v4465
    %v5005 = vunpack.c.l.b16 %v4466
    %v5006 = vunpack.c.h.b16 %v4466
    %v5007 = vunpack.c.l.b16 %v4467
    %v5008 = vunpack.c.h.b16 %v4467
    %v5009 = vunpack.c.l.b16 %v4468
    %v5010 = vunpack.c.h.b16 %v4468
    %v5011 = vunpack.c.l.b16 %v4469
    %v5012 = vunpack.c.h.b16 %v4469
    %v5013 = vunpack.c.l.b16 %v4470
    %v5014 = vunpack.c.h.b16 %v4470
    %v5015 = vunpack.c.l.b16 %v4471
    %v5016 = vunpack.c.h.b16 %v4471
    %v5017 = vunpack.c.l.b16 %v4472
    %v5018 = vunpack.c.h.b16 %v4472
    %v5019 = vunpack.c.l.b16 %v4473
    %v5020 = vunpack.c.h.b16 %v4473
    %v5021 = vunpack.c.l.b16 %v4474
    %v5022 = vunpack.c.h.b16 %v4474
    %v5023 = vunpack.c.l.b16 %v4475
    %v5024 = vunpack.c.h.b16 %v4475
    %v5025 = vunpack.c.l.b16 %v4476
    %v5026 = vunpack.c.h.b16 %v4476
    %v5027 = vunpack.c.l.b16 %v4477
    %v5028 = vunpack.c.h.b16 %v4477
    %v5029 = vunpack.c.l.b16 %v4478
    %v5030 = vunpack.c.h.b16 %v4478
    %v5031 = vunpack.c.l.b16 %v4479
    %v5032 = vunpack.c.h.b16 %v4479
    %v5033 = vunpack.c.l.b16 %v4480
    %v5034 = vunpack.c.h.b16 %v4480
    %v5035 = vunpack.c.l.b16 %v4481
    %v5036 = vunpack.c.h.b16 %v4481
    %v5037 = vunpack.c.l.b16 %v4482
    %v5038 = vunpack.c.h.b16 %v4482
    %v5039 = vunpack.c.l.b16 %v4483
    %v5040 = vunpack.c.h.b16 %v4483
    %v5041 = vunpack.c.l.b16 %v4484
    %v5042 = vunpack.c.h.b16 %v4484
    %v5043 = vunpack.c.l.b16 %v4485
    %v5044 = vunpack.c.h.b16 %v4485
    %v5045 = vunpack.c.l.b16 %v4486
    %v5046 = vunpack.c.h.b16 %v4486
    %v5047 = vunpack.c.l.b16 %v4487
    %v5048 = vunpack.c.h.b16 %v4487
    %v5049 = vunpack.c.l.b16 %v4488
    %v5050 = vunpack.c.h.b16 %v4488
    %v5051 = vunpack.c.l.b16 %v4489
    %v5052 = vunpack.c.h.b16 %v4489
    %v5053 = vunpack.c.l.b16 %v4490
    %v5054 = vunpack.c.h.b16 %v4490
    %v5055 = vunpack.c.l.b16 %v4491
    %v5056 = vunpack.c.h.b16 %v4491
    %v5057 = vunpack.c.l.b16 %v4492
    %v5058 = vunpack.c.h.b16 %v4492
    %v5059 = vunpack.c.l.b16 %v4493
    %v5060 = vunpack.c.h.b16 %v4493
    %v5061 = vunpack.c.l.b16 %v4494
    %v5062 = vunpack.c.h.b16 %v4494
    %v5063 = vunpack.c.l.b16 %v4495
    %v5064 = vunpack.c.h.b16 %v4495
    %v5065 = vunpack.c.l.b16 %v4496
    %v5066 = vunpack.c.h.b16 %v4496
    %v5067 = vunpack.c.l.b16 %v4497
    %v5068 = vunpack.c.h.b16 %v4497
    %v5069 = vunpack.c.l.b16 %v4498
    %v5070 = vunpack.c.h.b16 %v4498
    %v5071 = vunpack.c.l.b16 %v4499
    %v5072 = vunpack.c.h.b16 %v4499
    %v5073 = vunpack.c.l.b16 %v4500
    %v5074 = vunpack.c.h.b16 %v4500
    %v5075 = vunpack.c.l.b16 %v4501
    %v5076 = vunpack.c.h.b16 %v4501
    %v5077 = vunpack.c.l.b16 %v4502
    %v5078 = vunpack.c.h.b16 %v4502
    %v5079 = vunpack.c.l.b16 %v4503
    %v5080 = vunpack.c.h.b16 %v4503
    %v5081 = vunpack.c.l.b16 %v4504
    %v5082 = vunpack.c.h.b16 %v4504
    %v5083 = vunpack.c.l.b16 %v4505
    %v5084 = vunpack.c.h.b16 %v4505
    %v5085 = vunpack.c.l.b16 %v4506
    %v5086 = vunpack.c.h.b16 %v4506
    %v5087 = vunpack.c.l.b16 %v4507
    %v5088 = vunpack.c.h.b16 %v4507
    %v5089 = vunpack.c.l.b16 %v4508
    %v5090 = vunpack.c.h.b16 %v4508
    %v5091 = vunpack.c.l.b16 %v4509
    %v5092 = vunpack.c.h.b16 %v4509
    %v5093 = vunpack.c.l.b16 %v4510
    %v5094 = vunpack.c.h.b16 %v4510
    %v5095 = vunpack.c.l.b16 %v4511
    %v5096 = vunpack.c.h.b16 %v4511
    %v5097 = vunpack.c.l.b16 %v4512
    %v5098 = vunpack.c.h.b16 %v4512
    %v5099 = vunpack.c.l.b16 %v4513
    %v5100 = vunpack.c.h.b16 %v4513
    %v5101 = vunpack.c.l.b16 %v4514
    %v5102 = vunpack.c.h.b16 %v4514
    %v5103 = vunpack.c.l.b16 %v4515
    %v5104 = vunpack.c.h.b16 %v4515
    %v5105 = vunpack.c.l.b16 %v4516
    %v5106 = vunpack.c.h.b16 %v4516
    %v5107 = vunpack.c.l.b16 %v4517
    %v5108 = vunpack.c.h.b16 %v4517
    %v5109 = vunpack.c.l.b16 %v4518
    %v5110 = vunpack.c.h.b16 %v4518
    %v5111 = vunpack.c.l.b16 %v4519
    %v5112 = vunpack.c.h.b16 %v4519
    %v5113 = vunpack.c.l.b16 %v4520
    %v5114 = vunpack.c.h.b16 %v4520
    %v5115 = vunpack.c.l.b16 %v4521
    %v5116 = vunpack.c.h.b16 %v4521
    %v5117 = vunpack.c.l.b16 %v4522
    %v5118 = vunpack.c.h.b16 %v4522
    %v5119 = vunpack.c.l.b16 %v4523
    %v5120 = vunpack.c.h.b16 %v4523
    %v5121 = vunpack.c.l.b16 %v4524
    %v5122 = vunpack.c.h.b16 %v4524
    %v5123 = vunpack.c.l.b16 %v4525
    %v5124 = vunpack.c.h.b16 %v4525
    %v5125 = vunpack.c.l.b16 %v4526
    %v5126 = vunpack.c.h.b16 %v4526
    %v5127 = vunpack.c.l.b16 %v4527
    %v5128 = vunpack.c.h.b16 %v4527
    %v5129 = vunpack.c.l.b16 %v4528
    %v5130 = vunpack.c.h.b16 %v4528
    %v5131 = vunpack.c.l.b16 %v4529
    %v5132 = vunpack.c.h.b16 %v4529
    %v5133 = vunpack.c.l.b16 %v4530
    %v5134 = vunpack.c.h.b16 %v4530
    %v5135 = vunpack.c.l.b16 %v4531
    %v5136 = vunpack.c.h.b16 %v4531
    %v5137 = vunpack.c.l.b16 %v4532
    %v5138 = vunpack.c.h.b16 %v4532
    %v5139 = vunpack.c.l.b16 %v4533
    %v5140 = vunpack.c.h.b16 %v4533
    %v5141 = vunpack.c.l.b16 %v4534
    %v5142 = vunpack.c.h.b16 %v4534
    %v5143 = vunpack.c.l.b16 %v4535
    %v5144 = vunpack.c.h.b16 %v4535
    %v5145 = vunpack.c.l.b16 %v4536
    %v5146 = vunpack.c.h.b16 %v4536
    %v5147 = vunpack.c.l.b16 %v4537
    %v5148 = vunpack.c.h.b16 %v4537
    %v5149 = vunpack.c.l.b16 %v4538
    %v5150 = vunpack.c.h.b16 %v4538
    %v5151 = vunpack.c.l.b16 %v4539
    %v5152 = vunpack.c.h.b16 %v4539
    %v5153 = vunpack.c.l.b16 %v4540
    %v5154 = vunpack.c.h.b16 %v4540
    %v5155 = vunpack.c.l.b16 %v4541
    %v5156 = vunpack.c.h.b16 %v4541
    %v5157 = vunpack.c.l.b16 %v4542
    %v5158 = vunpack.c.h.b16 %v4542
    %v5159 = vunpack.c.l.b16 %v4543
    %v5160 = vunpack.c.h.b16 %v4543
    %v5161 = vunpack.c.l.b16 %v4544
    %v5162 = vunpack.c.h.b16 %v4544
    %v5163 = vunpack.c.l.b16 %v4545
    %v5164 = vunpack.c.h.b16 %v4545
    %v5165 = vunpack.c.l.b16 %v4546
    %v5166 = vunpack.c.h.b16 %v4546
    %v5167 = vunpack.c.l.b16 %v4547
    %v5168 = vunpack.c.h.b16 %v4547
    %v5169 = vunpack.c.l.b16 %v4548
    %v5170 = vunpack.c.h.b16 %v4548
    %v5171 = vunpack.c.l.b16 %v4549
    %v5172 = vunpack.c.h.b16 %v4549
    %v5173 = vunpack.c.l.b16 %v4550
    %v5174 = vunpack.c.h.b16 %v4550
    %v5175 = vunpack.c.l.b16 %v4551
    %v5176 = vunpack.c.h.b16 %v4551
    %v5177 = vunpack.c.l.b16 %v4552
    %v5178 = vunpack.c.h.b16 %v4552
    %v5179 = vunpack.c.l.b16 %v4553
    %v5180 = vunpack.c.h.b16 %v4553
    %v5181 = vunpack.c.l.b16 %v4554
    %v5182 = vunpack.c.h.b16 %v4554
    %v5183 = vunpack.c.l.b16 %v4555
    %v5184 = vunpack.c.h.b16 %v4555
    %v5185 = vunpack.c.l.b16 %v4556
    %v5186 = vunpack.c.h.b16 %v4556
    %v5187 = vunpack.c.l.b16 %v4557
    %v5188 = vunpack.c.h.b16 %v4557
    %v5189 = vunpack.c.l.b16 %v4558
    %v5190 = vunpack.c.h.b16 %v4558
    %v5191 = vunpack.c.l.b16 %v4559
    %v5192 = vunpack.c.h.b16 %v4559
    %v5193 = vunpack.c.l.b16 %v4560
    %v5194 = vunpack.c.h.b16 %v4560
    %v5195 = vunpack.c.l.b16 %v4561
    %v5196 = vunpack.c.h.b16 %v4561
    %v5197 = vunpack.c.l.b16 %v4562
    %v5198 = vunpack.c.h.b16 %v4562
    %v5199 = vunpack.c.l.b16 %v4563
    %v5200 = vunpack.c.h.b16 %v4563
    %v5201 = vunpack.c.l.b16 %v4564
    %v5202 = vunpack.c.h.b16 %v4564
    %v5203 = vunpack.c.l.b16 %v4565
    %v5204 = vunpack.c.h.b16 %v4565
    %v5205 = vunpack.c.l.b16 %v4566
    %v5206 = vunpack.c.h.b16 %v4566
    %v5207 = vunpack.c.l.b16 %v4567
    %v5208 = vunpack.c.h.b16 %v4567
    %v5209 = vunpack.c.l.b16 %v4568
    %v5210 = vunpack.c.h.b16 %v4568
    %v5211 = vunpack.c.l.b16 %v4569
    %v5212 = vunpack.c.h.b16 %v4569
    %v5213 = vunpack.c.l.b16 %v4570
    %v5214 = vunpack.c.h.b16 %v4570
    %v5215 = vunpack.c.l.b16 %v4571
    %v5216 = vunpack.c.h.b16 %v4571
    %v5217 = vunpack.c.l.b16 %v4572
    %v5218 = vunpack.c.h.b16 %v4572
    %v5219 = vunpack.c.l.b16 %v4573
    %v5220 = vunpack.c.h.b16 %v4573
    %v5221 = vunpack.c.l.b16 %v4574
    %v5222 = vunpack.c.h.b16 %v4574
    %v5223 = vunpack.c.l.b16 %v4575
    %v5224 = vunpack.c.h.b16 %v4575
    %v5225 = vunpack.c.l.b16 %v4576
    %v5226 = vunpack.c.h.b16 %v4576
    %v5227 = vunpack.c.l.b16 %v4577
    %v5228 = vunpack.c.h.b16 %v4577
    %v5229 = vunpack.c.l.b16 %v4578
    %v5230 = vunpack.c.h.b16 %v4578
    %v5231 = vunpack.c.l.b16 %v4579
    %v5232 = vunpack.c.h.b16 %v4579
    %v5233 = vunpack.c.l.b16 %v4580
    %v5234 = vunpack.c.h.b16 %v4580
    %v5235 = vunpack.c.l.b16 %v4581
    %v5236 = vunpack.c.h.b16 %v4581
    %v5237 = vunpack.c.l.b16 %v4582
    %v5238 = vunpack.c.h.b16 %v4582
    %v5239 = vunpack.c.l.b16 %v4583
    %v5240 = vunpack.c.h.b16 %v4583
    %v5241 = vunpack.c.l.b16 %v4584
    %v5242 = vunpack.c.h.b16 %v4584
    %v5243 = vunpack.c.l.b16 %v4585
    %v5244 = vunpack.c.h.b16 %v4585
    %v5245 = vunpack.c.l.b16 %v4586
    %v5246 = vunpack.c.h.b16 %v4586
    %v5247 = vunpack.c.l.b16 %v4587
    %v5248 = vunpack.c.h.b16 %v4587
    %v5249 = vunpack.c.l.b16 %v4588
    %v5250 = vunpack.c.h.b16 %v4588
    %v5251 = vunpack.c.l.b16 %v4589
    %v5252 = vunpack.c.h.b16 %v4589
    %v5253 = vunpack.c.l.b16 %v4590
    %v5254 = vunpack.c.h.b16 %v4590
    %v5255 = vunpack.c.l.b16 %v4591
    %v5256 = vunpack.c.h.b16 %v4591
    %v5257 = vunpack.c.l.b16 %v4592
    %v5258 = vunpack.c.h.b16 %v4592
    %v5259 = vunpack.c.l.b16 %v4593
    %v5260 = vunpack.c.h.b16 %v4593
    %v5261 = vunpack.c.l.b16 %v4594
    %v5262 = vunpack.c.h.b16 %v4594
    %v5263 = vunpack.c.l.b16 %v4595
    %v5264 = vunpack.c.h.b16 %v4595
    %v5265 = vunpack.c.l.b16 %v4596
    %v5266 = vunpack.c.h.b16 %v4596
    %v5267 = vunpack.c.l.b16 %v4597
    %v5268 = vunpack.c.h.b16 %v4597
    %v5269 = vunpack.c.l.b16 %v4598
    %v5270 = vunpack.c.h.b16 %v4598
    %v5271 = vunpack.c.l.b16 %v4599
    %v5272 = vunpack.c.h.b16 %v4599
    %v5273 = vunpack.c.l.b16 %v4600
    %v5274 = vunpack.c.h.b16 %v4600
    %v5275 = vunpack.c.l.b16 %v4601
    %v5276 = vunpack.c.h.b16 %v4601
    %v5277 = vunpack.c.l.b16 %v4602
    %v5278 = vunpack.c.h.b16 %v4602
    %v5279 = vunpack.c.l.b16 %v4603
    %v5280 = vunpack.c.h.b16 %v4603
    %v5281 = vunpack.c.l.b16 %v4604
    %v5282 = vunpack.c.h.b16 %v4604
    %v5283 = vunpack.c.l.b16 %v4605
    %v5284 = vunpack.c.h.b16 %v4605
    %v5285 = vunpack.c.l.b16 %v4606
    %v5286 = vunpack.c.h.b16 %v4606
    %v5287 = vunpack.c.l.b16 %v4607
    %v5288 = vunpack.c.h.b16 %v4607
    %v5289 = vunpack.c.l.b16 %v4608
    %v5290 = vunpack.c.h.b16 %v4608
    %v5291 = vunpack.c.l.b16 %v4609
    %v5292 = vunpack.c.h.b16 %v4609
    %v5293 = vunpack.c.l.b16 %v4610
    %v5294 = vunpack.c.h.b16 %v4610
    %v5295 = vunpack.c.l.b16 %v4611
    %v5296 = vunpack.c.h.b16 %v4611
    %v5297 = vunpack.c.l.b16 %v4612
    %v5298 = vunpack.c.h.b16 %v4612
    %v5299 = vunpack.c.l.b16 %v4613
    %v5300 = vunpack.c.h.b16 %v4613
    %v5301 = vunpack.c.l.b16 %v4614
    %v5302 = vunpack.c.h.b16 %v4614
    %v5303 = vunpack.c.l.b16 %v4615
    %v5304 = vunpack.c.h.b16 %v4615
    %v5305 = vunpack.c.l.b16 %v4616
    %v5306 = vunpack.c.h.b16 %v4616
    %v5307 = vunpack.c.l.b16 %v4617
    %v5308 = vunpack.c.h.b16 %v4617
    %v5309 = vunpack.c.l.b16 %v4618
    %v5310 = vunpack.c.h.b16 %v4618
    %v5311 = vunpack.c.l.b16 %v4619
    %v5312 = vunpack.c.h.b16 %v4619
    %v5313 = vunpack.c.l.b16 %v4620
    %v5314 = vunpack.c.h.b16 %v4620
    %v5315 = vunpack.c.l.b16 %v4621
    %v5316 = vunpack.c.h.b16 %v4621
    %v5317 = vunpack.c.l.b16 %v4622
    %v5318 = vunpack.c.h.b16 %v4622
    %v5319 = vunpack.c.l.b16 %v4623
    %v5320 = vunpack.c.h.b16 %v4623
    %v5321 = vunpack.c.l.b16 %v4624
    %v5322 = vunpack.c.h.b16 %v4624
    %v5323 = vunpack.c.l.b16 %v4625
    %v5324 = vunpack.c.h.b16 %v4625
    %v5325 = vunpack.c.l.b16 %v4626
    %v5326 = vunpack.c.h.b16 %v4626
    %v5327 = vunpack.c.l.b16 %v4627
    %v5328 = vunpack.c.h.b16 %v4627
    %v5329 = vunpack.c.l.b16 %v4628
    %v5330 = vunpack.c.h.b16 %v4628
    %v5331 = vunpack.c.l.b16 %v4629
    %v5332 = vunpack.c.h.b16 %v4629
    %v5333 = vunpack.c.l.b16 %v4630
    %v5334 = vunpack.c.h.b16 %v4630
    %v5335 = vunpack.c.l.b16 %v4631
    %v5336 = vunpack.c.h.b16 %v4631
    %v5337 = vunpack.c.l.b16 %v4632
    %v5338 = vunpack.c.h.b16 %v4632
    %v5339 = vunpack.c.l.b16 %v4633
    %v5340 = vunpack.c.h.b16 %v4633
    %v5341 = vunpack.c.l.b16 %v4634
    %v5342 = vunpack.c.h.b16 %v4634
    %v5343 = vunpack.c.l.b16 %v4635
    %v5344 = vunpack.c.h.b16 %v4635
    %v5345 = vunpack.c.l.b16 %v4636
    %v5346 = vunpack.c.h.b16 %v4636
    %v5347 = vunpack.c.l.b16 %v4637
    %v5348 = vunpack.c.h.b16 %v4637
    %v5349 = vunpack.c.l.b16 %v4638
    %v5350 = vunpack.c.h.b16 %v4638
    %v5351 = vunpack.c.l.b16 %v4639
    %v5352 = vunpack.c.h.b16 %v4639
    %v5353 = vunpack.c.l.b16 %v4640
    %v5354 = vunpack.c.h.b16 %v4640
    %v5355 = vunpack.c.l.b16 %v4641
    %v5356 = vunpack.c.h.b16 %v4641
    %v5357 = vunpack.c.l.b16 %v4642
    %v5358 = vunpack.c.h.b16 %v4642
    %v5359 = vunpack.c.l.b16 %v4643
    %v5360 = vunpack.c.h.b16 %v4643
    %v5361 = vunpack.c.l.b16 %v4644
    %v5362 = vunpack.c.h.b16 %v4644
    %v5363 = vunpack.c.l.b16 %v4645
    %v5364 = vunpack.c.h.b16 %v4645
    %v5365 = vunpack.c.l.b16 %v4646
    %v5366 = vunpack.c.h.b16 %v4646
    %v5367 = vunpack.c.l.b16 %v4647
    %v5368 = vunpack.c.h.b16 %v4647
    %v5369 = vunpack.c.l.b16 %v4648
    %v5370 = vunpack.c.h.b16 %v4648
    %v5371 = vunpack.c.l.b16 %v4649
    %v5372 = vunpack.c.h.b16 %v4649
    %v5373 = vunpack.c.l.b16 %v4650
    %v5374 = vunpack.c.h.b16 %v4650
    %v5375 = vunpack.c.l.b16 %v4651
    %v5376 = vunpack.c.h.b16 %v4651
    %v5377 = vunpack.c.l.b16 %v4652
    %v5378 = vunpack.c.h.b16 %v4652
    %v5379 = vunpack.c.l.b16 %v4653
    %v5380 = vunpack.c.h.b16 %v4653
    %v5381 = vunpack.c.l.b16 %v4654
    %v5382 = vunpack.c.h.b16 %v4654
    %v5383 = vunpack.c.l.b16 %v4655
    %v5384 = vunpack.c.h.b16 %v4655
    %v5385 = vunpack.c.l.b16 %v4656
    %v5386 = vunpack.c.h.b16 %v4656
    %v5387 = vunpack.c.l.b16 %v4657
    %v5388 = vunpack.c.h.b16 %v4657
    %v5389 = vunpack.c.l.b16 %v4658
    %v5390 = vunpack.c.h.b16 %v4658
    %v5391 = vunpack.c.l.b16 %v4659
    %v5392 = vunpack.c.h.b16 %v4659
    %v5393 = vunpack.c.l.b16 %v4660
    %v5394 = vunpack.c.h.b16 %v4660
    %v5395 = vunpack.c.l.b16 %v4661
    %v5396 = vunpack.c.h.b16 %v4661
    %v5397 = vunpack.c.l.b16 %v4662
    %v5398 = vunpack.c.h.b16 %v4662
    %v5399 = vunpack.c.l.b16 %v4663
    %v5400 = vunpack.c.h.b16 %v4663
    %v5401 = vunpack.c.l.b16 %v4664
    %v5402 = vunpack.c.h.b16 %v4664
    %v5403 = vunpack.c.l.b16 %v4665
    %v5404 = vunpack.c.h.b16 %v4665
    %v5405 = vunpack.c.l.b16 %v4666
    %v5406 = vunpack.c.h.b16 %v4666
    %v5407 = vunpack.c.l.b16 %v4667
    %v5408 = vunpack.c.h.b16 %v4667
    %v5409 = vunpack.c.l.b16 %v4668
    %v5410 = vunpack.c.h.b16 %v4668
    %v5411 = vunpack.c.l.b16 %v4669
    %v5412 = vunpack.c.h.b16 %v4669
    %v5413 = vunpack.c.l.b16 %v4670
    %v5414 = vunpack.c.h.b16 %v4670
    %v5415 = vunpack.c.l.b16 %v4671
    %v5416 = vunpack.c.h.b16 %v4671
    %v5417 = vunpack.c.l.b16 %v4672
    %v5418 = vunpack.c.h.b16 %v4672
    %v5419 = vunpack.c.l.b16 %v4673
    %v5420 = vunpack.c.h.b16 %v4673
    %v5421 = vunpack.c.l.b16 %v4674
    %v5422 = vunpack.c.h.b16 %v4674
    %v5423 = vunpack.c.l.b16 %v4675
    %v5424 = vunpack.c.h.b16 %v4675
    %v5425 = vunpack.c.l.b16 %v4676
    %v5426 = vunpack.c.h.b16 %v4676
    %v5427 = vunpack.c.l.b16 %v4677
    %v5428 = vunpack.c.h.b16 %v4677
    %v5429 = vunpack.c.l.b16 %v4678
    %v5430 = vunpack.c.h.b16 %v4678
    %v5431 = vunpack.c.l.b16 %v4679
    %v5432 = vunpack.c.h.b16 %v4679
    %v5433 = vunpack.c.l.b16 %v4680
    %v5434 = vunpack.c.h.b16 %v4680
    %v5435 = vunpack.c.l.b16 %v4681
    %v5436 = vunpack.c.h.b16 %v4681
    %v5437 = vunpack.c.l.b16 %v4682
    %v5438 = vunpack.c.h.b16 %v4682
    %v5439 = vunpack.c.l.b16 %v4683
    %v5440 = vunpack.c.h.b16 %v4683
    %v5441 = vunpack.c.l.b16 %v4684
    %v5442 = vunpack.c.h.b16 %v4684
    %v5443 = vunpack.c.l.b16 %v4685
    %v5444 = vunpack.c.h.b16 %v4685
    %v5445 = vunpack.c.l.b16 %v4686
    %v5446 = vunpack.c.h.b16 %v4686
    %v5447 = vunpack.c.l.b16 %v4687
    %v5448 = vunpack.c.h.b16 %v4687
    %v5449 = vunpack.c.l.b16 %v4688
    %v5450 = vunpack.c.h.b16 %v4688
    %v5451 = vunpack.c.l.b16 %v4689
    %v5452 = vunpack.c.h.b16 %v4689
    %v5453 = vunpack.c.l.b16 %v4690
    %v5454 = vunpack.c.h.b16 %v4690
    %v5455 = vunpack.c.l.b16 %v4691
    %v5456 = vunpack.c.h.b16 %v4691
    %v5457 = vunpack.c.l.b16 %v4692
    %v5458 = vunpack.c.h.b16 %v4692
    %v5459 = vunpack.c.l.b16 %v4693
    %v5460 = vunpack.c.h.b16 %v4693
    %v5461 = vunpack.c.l.b16 %v4694
    %v5462 = vunpack.c.h.b16 %v4694
    %v5463 = vunpack.c.l.b16 %v4695
    %v5464 = vunpack.c.h.b16 %v4695
    %v5465 = vunpack.c.l.b16 %v4696
    %v5466 = vunpack.c.h.b16 %v4696
    %v5467 = vunpack.c.l.b16 %v4697
    %v5468 = vunpack.c.h.b16 %v4697
    %v5469 = vunpack.c.l.b16 %v4698
    %v5470 = vunpack.c.h.b16 %v4698
    %v5471 = vunpack.c.l.b16 %v4699
    %v5472 = vunpack.c.h.b16 %v4699
    %v5473 = vunpack.c.l.b16 %v4700
    %v5474 = vunpack.c.h.b16 %v4700
    %v5475 = vunpack.c.l.b16 %v4701
    %v5476 = vunpack.c.h.b16 %v4701
    %v5477 = vunpack.c.l.b16 %v4702
    %v5478 = vunpack.c.h.b16 %v4702
    %v5479 = vunpack.c.l.b16 %v4703
    %v5480 = vunpack.c.h.b16 %v4703
    %v5481 = vunpack.c.l.b16 %v4704
    %v5482 = vunpack.c.h.b16 %v4704
    %v5483 = vunpack.c.l.b16 %v4705
    %v5484 = vunpack.c.h.b16 %v4705
    %v5485 = vunpack.c.l.b16 %v4706
    %v5486 = vunpack.c.h.b16 %v4706
    %v5487 = vunpack.c.l.b16 %v4707
    %v5488 = vunpack.c.h.b16 %v4707
    %v5489 = vunpack.c.l.b16 %v4708
    %v5490 = vunpack.c.h.b16 %v4708
    %v5491 = vunpack.c.l.b16 %v4709
    %v5492 = vunpack.c.h.b16 %v4709
    %v5493 = vunpack.c.l.b16 %v4710
    %v5494 = vunpack.c.h.b16 %v4710
    %v5495 = vunpack.c.l.b16 %v4711
    %v5496 = vunpack.c.h.b16 %v4711
    %v5497 = vunpack.c.l.b16 %v4712
    %v5498 = vunpack.c.h.b16 %v4712
    %v5499 = vunpack.c.l.b16 %v4713
    %v5500 = vunpack.c.h.b16 %v4713
    %v5501 = vunpack.c.l.b16 %v4714
    %v5502 = vunpack.c.h.b16 %v4714
    %v5503 = vunpack.c.l.b16 %v4715
    %v5504 = vunpack.c.h.b16 %v4715
    %v5505 = vunpack.c.l.b16 %v4716
    %v5506 = vunpack.c.h.b16 %v4716
    %v5507 = vpack.c.b16 %v4999, %v4995
    %v5508 = vpack.c.b16 %v5000, %v4996
    %v5509 = vpack.c.b16 %v5001, %v4997
    %v5510 = vpack.c.b16 %v5002, %v4998
    %v5511 = vpack.c.b16 %v5007, %v5003
    %v5512 = vpack.c.b16 %v5008, %v5004
    %v5513 = vpack.c.b16 %v5009, %v5005
    %v5514 = vpack.c.b16 %v5010, %v5006
    %v5515 = vpack.c.b16 %v5015, %v5011
    %v5516 = vpack.c.b16 %v5016, %v5012
    %v5517 = vpack.c.b16 %v5017, %v5013
    %v5518 = vpack.c.b16 %v5018, %v5014
    %v5519 = vpack.c.b16 %v5023, %v5019
    %v5520 = vpack.c.b16 %v5024, %v5020
    %v5521 = vpack.c.b16 %v5025, %v5021
    %v5522 = vpack.c.b16 %v5026, %v5022
    %v5523 = vpack.c.b16 %v5031, %v5027
    %v5524 = vpack.c.b16 %v5032, %v5028
    %v5525 = vpack.c.b16 %v5033, %v5029
    %v5526 = vpack.c.b16 %v5034, %v5030
    %v5527 = vpack.c.b16 %v5039, %v5035
    %v5528 = vpack.c.b16 %v5040, %v5036
    %v5529 = vpack.c.b16 %v5041, %v5037
    %v5530 = vpack.c.b16 %v5042, %v5038
    %v5531 = vpack.c.b16 %v5047, %v5043
    %v5532 = vpack.c.b16 %v5048, %v5044
    %v5533 = vpack.c.b16 %v5049, %v5045
    %v5534 = vpack.c.b16 %v5050, %v5046
    %v5535 = vpack.c.b16 %v5055, %v5051
    %v5536 = vpack.c.b16 %v5056, %v5052
    %v5537 = vpack.c.b16 %v5057, %v5053
    %v5538 = vpack.c.b16 %v5058, %v5054
    %v5539 = vpack.c.b16 %v5063, %v5059
    %v5540 = vpack.c.b16 %v5064, %v5060
    %v5541 = vpack.c.b16 %v5065, %v5061
    %v5542 = vpack.c.b16 %v5066, %v5062
    %v5543 = vpack.c.b16 %v5071, %v5067
    %v5544 = vpack.c.b16 %v5072, %v5068
    %v5545 = vpack.c.b16 %v5073, %v5069
    %v5546 = vpack.c.b16 %v5074, %v5070
    %v5547 = vpack.c.b16 %v5079, %v5075
    %v5548 = vpack.c.b16 %v5080, %v5076
    %v5549 = vpack.c.b16 %v5081, %v5077
    %v5550 = vpack.c.b16 %v5082, %v5078
    %v5551 = vpack.c.b16 %v5087, %v5083
    %v5552 = vpack.c.b16 %v5088, %v5084
    %v5553 = vpack.c.b16 %v5089, %v5085
    %v5554 = vpack.c.b16 %v5090, %v5086
    %v5555 = vpack.c.b16 %v5095, %v5091
    %v5556 = vpack.c.b16 %v5096, %v5092
    %v5557 = vpack.c.b16 %v5097, %v5093
    %v5558 = vpack.c.b16 %v5098, %v5094
    %v5559 = vpack.c.b16 %v5103, %v5099
    %v5560 = vpack.c.b16 %v5104, %v5100
    %v5561 = vpack.c.b16 %v5105, %v5101
    %v5562 = vpack.c.b16 %v5106, %v5102
    %v5563 = vpack.c.b16 %v5111, %v5107
    %v5564 = vpack.c.b16 %v5112, %v5108
    %v5565 = vpack.c.b16 %v5113, %v5109
    %v5566 = vpack.c.b16 %v5114, %v5110
    %v5567 = vpack.c.b16 %v5119, %v5115
    %v5568 = vpack.c.b16 %v5120, %v5116
    %v5569 = vpack.c.b16 %v5121, %v5117
    %v5570 = vpack.c.b16 %v5122, %v5118
    %v5571 = vpack.c.b16 %v5127, %v5123
    %v5572 = vpack.c.b16 %v5128, %v5124
    %v5573 = vpack.c.b16 %v5129, %v5125
    %v5574 = vpack.c.b16 %v5130, %v5126
    %v5575 = vpack.c.b16 %v5135, %v5131
    %v5576 = vpack.c.b16 %v5136, %v5132
    %v5577 = vpack.c.b16 %v5137, %v5133
    %v5578 = vpack.c.b16 %v5138, %v5134
    %v5579 = vpack.c.b16 %v5143, %v5139
    %v5580 = vpack.c.b16 %v5144, %v5140
    %v5581 = vpack.c.b16 %v5145, %v5141
    %v5582 = vpack.c.b16 %v5146, %v5142
    %v5583 = vpack.c.b16 %v5151, %v5147
    %v5584 = vpack.c.b16 %v5152, %v5148
    %v5585 = vpack.c.b16 %v5153, %v5149
    %v5586 = vpack.c.b16 %v5154, %v5150
    %v5587 = vpack.c.b16 %v5159, %v5155
    %v5588 = vpack.c.b16 %v5160, %v5156
    %v5589 = vpack.c.b16 %v5161, %v5157
    %v5590 = vpack.c.b16 %v5162, %v5158
    %v5591 = vpack.c.b16 %v5167, %v5163
    %v5592 = vpack.c.b16 %v5168, %v5164
    %v5593 = vpack.c.b16 %v5169, %v5165
    %v5594 = vpack.c.b16 %v5170, %v5166
    %v5595 = vpack.c.b16 %v5175, %v5171
    %v5596 = vpack.c.b16 %v5176, %v5172
    %v5597 = vpack.c.b16 %v5177, %v5173
    %v5598 = vpack.c.b16 %v5178, %v5174
    %v5599 = vpack.c.b16 %v5183, %v5179
    %v5600 = vpack.c.b16 %v5184, %v5180
    %v5601 = vpack.c.b16 %v5185, %v5181
    %v5602 = vpack.c.b16 %v5186, %v5182
    %v5603 = vpack.c.b16 %v5191, %v5187
    %v5604 = vpack.c.b16 %v5192, %v5188
    %v5605 = vpack.c.b16 %v5193, %v5189
    %v5606 = vpack.c.b16 %v5194, %v5190
    %v5607 = vpack.c.b16 %v5199, %v5195
    %v5608 = vpack.c.b16 %v5200, %v5196
    %v5609 = vpack.c.b16 %v5201, %v5197
    %v5610 = vpack.c.b16 %v5202, %v5198
    %v5611 = vpack.c.b16 %v5207, %v5203
    %v5612 = vpack.c.b16 %v5208, %v5204
    %v5613 = vpack.c.b16 %v5209, %v5205
    %v5614 = vpack.c.b16 %v5210, %v5206
    %v5615 = vpack.c.b16 %v5215, %v5211
    %v5616 = vpack.c.b16 %v5216, %v5212
    %v5617 = vpack.c.b16 %v5217, %v5213
    %v5618 = vpack.c.b16 %v5218, %v5214
    %v5619 = vpack.c.b16 %v5223, %v5219
    %v5620 = vpack.c.b16 %v5224, %v5220
    %v5621 = vpack.c.b16 %v5225, %v5221
    %v5622 = vpack.c.b16 %v5226, %v5222
    %v5623 = vpack.c.b16 %v5231, %v5227
    %v5624 = vpack.c.b16 %v5232, %v5228
    %v5625 = vpack.c.b16 %v5233, %v5229
    %v5626 = vpack.c.b16 %v5234, %v5230
    %v5627 = vpack.c.b16 %v5239, %v5235
    %v5628 = vpack.c.b16 %v5240, %v5236
    %v5629 = vpack.c.b16 %v5241, %v5237
    %v5630 = vpack.c.b16 %v5242, %v5238
    %v5631 = vpack.c.b16 %v5247, %v5243
    %v5632 = vpack.c.b16 %v5248, %v5244
    %v5633 = vpack.c.b16 %v5249, %v5245
    %v5634 = vpack.c.b16 %v5250, %v5246
    %v5635 = vpack.c.b16 %v5255, %v5251
    %v5636 = vpack.c.b16 %v5256, %v5252
    %v5637 = vpack.c.b16 %v5257, %v5253
    %v5638 = vpack.c.b16 %v5258, %v5254
    %v5639 = vpack.c.b16 %v5263, %v5259
    %v5640 = vpack.c.b16 %v5264, %v5260
    %v5641 = vpack.c.b16 %v5265, %v5261
    %v5642 = vpack.c.b16 %v5266, %v5262
    %v5643 = vpack.c.b16 %v5271, %v5267
    %v5644 = vpack.c.b16 %v5272, %v5268
    %v5645 = vpack.c.b16 %v5273, %v5269
    %v5646 = vpack.c.b16 %v5274, %v5270
    %v5647 = vpack.c.b16 %v5279, %v5275
    %v5648 = vpack.c.b16 %v5280, %v5276
    %v5649 = vpack.c.b16 %v5281, %v5277
    %v5650 = vpack.c.b16 %v5282, %v5278
    %v5651 = vpack.c.b16 %v5287, %v5283
    %v5652 = vpack.c.b16 %v5288, %v5284
    %v5653 = vpack.c.b16 %v5289, %v5285
    %v5654 = vpack.c.b16 %v5290, %v5286
    %v5655 = vpack.c.b16 %v5295, %v5291
    %v5656 = vpack.c.b16 %v5296, %v5292
    %v5657 = vpack.c.b16 %v5297, %v5293
    %v5658 = vpack.c.b16 %v5298, %v5294
    %v5659 = vpack.c.b16 %v5303, %v5299
    %v5660 = vpack.c.b16 %v5304, %v5300
    %v5661 = vpack.c.b16 %v5305, %v5301
    %v5662 = vpack.c.b16 %v5306, %v5302
    %v5663 = vpack.c.b16 %v5311, %v5307
    %v5664 = vpack.c.b16 %v5312, %v5308
    %v5665 = vpack.c.b16 %v5313, %v5309
    %v5666 = vpack.c.b16 %v5314, %v5310
    %v5667 = vpack.c.b16 %v5319, %v5315
    %v5668 = vpack.c.b16 %v5320, %v5316
    %v5669 = vpack.c.b16 %v5321, %v5317
    %v5670 = vpack.c.b16 %v5322, %v5318
    %v5671 = vpack.c.b16 %v5327, %v5323
    %v5672 = vpack.c.b16 %v5328, %v5324
    %v5673 = vpack.c.b16 %v5329, %v5325
    %v5674 = vpack.c.b16 %v5330, %v5326
    %v5675 = vpack.c.b16 %v5335, %v5331
    %v5676 = vpack.c.b16 %v5336, %v5332
    %v5677 = vpack.c.b16 %v5337, %v5333
    %v5678 = vpack.c.b16 %v5338, %v5334
    %v5679 = vpack.c.b16 %v5343, %v5339
    %v5680 = vpack.c.b16 %v5344, %v5340
    %v5681 = vpack.c.b16 %v5345, %v5341
    %v5682 = vpack.c.b16 %v5346, %v5342
    %v5683 = vpack.c.b16 %v5351, %v5347
    %v5684 = vpack.c.b16 %v5352, %v5348
    %v5685 = vpack.c.b16 %v5353, %v5349
    %v5686 = vpack.c.b16 %v5354, %v5350
    %v5687 = vpack.c.b16 %v5359, %v5355
    %v5688 = vpack.c.b16 %v5360, %v5356
    %v5689 = vpack.c.b16 %v5361, %v5357
    %v5690 = vpack.c.b16 %v5362, %v5358
    %v5691 = vpack.c.b16 %v5367, %v5363
    %v5692 = vpack.c.b16 %v5368, %v5364
    %v5693 = vpack.c.b16 %v5369, %v5365
    %v5694 = vpack.c.b16 %v5370, %v5366
    %v5695 = vpack.c.b16 %v5375, %v5371
    %v5696 = vpack.c.b16 %v5376, %v5372
    %v5697 = vpack.c.b16 %v5377, %v5373
    %v5698 = vpack.c.b16 %v5378, %v5374
    %v5699 = vpack.c.b16 %v5383, %v5379
    %v5700 = vpack.c.b16 %v5384, %v5380
    %v5701 = vpack.c.b16 %v5385, %v5381
    %v5702 = vpack.c.b16 %v5386, %v5382
    %v5703 = vpack.c.b16 %v5391, %v5387
    %v5704 = vpack.c.b16 %v5392, %v5388
    %v5705 = vpack.c.b16 %v5393, %v5389
    %v5706 = vpack.c.b16 %v5394, %v5390
    %v5707 = vpack.c.b16 %v5399, %v5395
    %v5708 = vpack.c.b16 %v5400, %v5396
    %v5709 = vpack.c.b16 %v5401, %v5397
    %v5710 = vpack.c.b16 %v5402, %v5398
    %v5711 = vpack.c.b16 %v5407, %v5403
    %v5712 = vpack.c.b16 %v5408, %v5404
    %v5713 = vpack.c.b16 %v5409, %v5405
    %v5714 = vpack.c.b16 %v5410, %v5406
    %v5715 = vpack.c.b16 %v5415, %v5411
    %v5716 = vpack.c.b16 %v5416, %v5412
    %v5717 = vpack.c.b16 %v5417, %v5413
    %v5718 = vpack.c.b16 %v5418, %v5414
    %v5719 = vpack.c.b16 %v5423, %v5419
    %v5720 = vpack.c.b16 %v5424, %v5420
    %v5721 = vpack.c.b16 %v5425, %v5421
    %v5722 = vpack.c.b16 %v5426, %v5422
    %v5723 = vpack.c.b16 %v5431, %v5427
    %v5724 = vpack.c.b16 %v5432, %v5428
    %v5725 = vpack.c.b16 %v5433, %v5429
    %v5726 = vpack.c.b16 %v5434, %v5430
    %v5727 = vpack.c.b16 %v5439, %v5435
    %v5728 = vpack.c.b16 %v5440, %v5436
    %v5729 = vpack.c.b16 %v5441, %v5437
    %v5730 = vpack.c.b16 %v5442, %v5438
    %v5731 = vpack.c.b16 %v5447, %v5443
    %v5732 = vpack.c.b16 %v5448, %v5444
    %v5733 = vpack.c.b16 %v5449, %v5445
    %v5734 = vpack.c.b16 %v5450, %v5446
    %v5735 = vpack.c.b16 %v5455, %v5451
    %v5736 = vpack.c.b16 %v5456, %v5452
    %v5737 = vpack.c.b16 %v5457, %v5453
    %v5738 = vpack.c.b16 %v5458, %v5454
    %v5739 = vpack.c.b16 %v5463, %v5459
    %v5740 = vpack.c.b16 %v5464, %v5460
    %v5741 = vpack.c.b16 %v5465, %v5461
    %v5742 = vpack.c.b16 %v5466, %v5462
    %v5743 = vpack.c.b16 %v5471, %v5467
    %v5744 = vpack.c.b16 %v5472, %v5468
    %v5745 = vpack.c.b16 %v5473, %v5469
    %v5746 = vpack.c.b16 %v5474, %v5470
    %v5747 = vpack.c.b16 %v5479, %v5475
    %v5748 = vpack.c.b16 %v5480, %v5476
    %v5749 = vpack.c.b16 %v5481, %v5477
    %v5750 = vpack.c.b16 %v5482, %v5478
    %v5751 = vpack.c.b16 %v5487, %v5483
    %v5752 = vpack.c.b16 %v5488, %v5484
    %v5753 = vpack.c.b16 %v5489, %v5485
    %v5754 = vpack.c.b16 %v5490, %v5486
    %v5755 = vpack.c.b16 %v5495, %v5491
    %v5756 = vpack.c.b16 %v5496, %v5492
    %v5757 = vpack.c.b16 %v5497, %v5493
    %v5758 = vpack.c.b16 %v5498, %v5494
    %v5759 = vpack.c.b16 %v5503, %v5499
    %v5760 = vpack.c.b16 %v5504, %v5500
    %v5761 = vpack.c.b16 %v5505, %v5501
    %v5762 = vpack.c.b16 %v5506, %v5502
    %6019 = vmatprep.subr.bf16.mxu0 %v5508
    %6020 = vmatpush1.bf16.msra.mxu0 %v5507
    %6021 = vmatprep.subr.bf16.mxu0 %v5512
    %6022 = vmatpush1.bf16.msra.mxu0 %v5511
    %6023 = vmatprep.subr.bf16.mxu0 %v5516
    %6024 = vmatpush1.bf16.msra.mxu0 %v5515
    %6025 = vmatprep.subr.bf16.mxu0 %v5520
    %6026 = vmatpush1.bf16.msra.mxu0 %v5519
    %6027 = vmatprep.subr.bf16.mxu0 %v5524
    %6028 = vmatpush1.bf16.msra.mxu0 %v5523
    %6029 = vmatprep.subr.bf16.mxu0 %v5528
    %6030 = vmatpush1.bf16.msra.mxu0 %v5527
    %6031 = vmatprep.subr.bf16.mxu0 %v5532
    %6032 = vmatpush1.bf16.msra.mxu0 %v5531
    %6033 = vmatprep.subr.bf16.mxu0 %v5536
    %6034 = vmatpush1.bf16.msra.mxu0 %v5535
    %6035 = vmatprep.subr.bf16.mxu0 %v5540
    %6036 = vmatpush1.bf16.msra.mxu0 %v5539
    %6037 = vmatprep.subr.bf16.mxu0 %v5544
    %6038 = vmatpush1.bf16.msra.mxu0 %v5543
    %6039 = vmatprep.subr.bf16.mxu0 %v5548
    %6040 = vmatpush1.bf16.msra.mxu0 %v5547
    %6041 = vmatprep.subr.bf16.mxu0 %v5552
    %6042 = vmatpush1.bf16.msra.mxu0 %v5551
    %6043 = vmatprep.subr.bf16.mxu0 %v5556
    %6044 = vmatpush1.bf16.msra.mxu0 %v5555
    %6045 = vmatprep.subr.bf16.mxu0 %v5560
    %6046 = vmatpush1.bf16.msra.mxu0 %v5559
    %6047 = vmatprep.subr.bf16.mxu0 %v5564
    %6048 = vmatpush1.bf16.msra.mxu0 %v5563
    %6049 = vmatprep.subr.bf16.mxu0 %v5568
    %6050 = vmatpush1.bf16.msra.mxu0 %v5567
    %6051 = vmatprep.mubr.bf16.mxu0 %v4454
    %6052 = vmatmul.mubr.bf16.gmra.mrb[0].mxu0 %v4453
    %v6053 = vpop.f32.mrb[0].mxu0
    %v6054 = vadd.f32 %v4722, %v6053
    %v6055 = vpop.f32.mrb[0].mxu0
    %v6056 = vadd.f32 %v4726, %v6055
    %v6057 = vpop.f32.mrb[0].mxu0
    %v6058 = vpop.f32.mrb[0].mxu0
    %6059 = vdwg.mxu0
    %6060 = vmatprep.subr.bf16.mxu0 %v5572
    %6061 = vmatpush1.bf16.msra.mxu0 %v5571
    %6062 = vmatprep.subr.bf16.mxu0 %v5576
    %6063 = vmatpush1.bf16.msra.mxu0 %v5575
    %6064 = vmatprep.subr.bf16.mxu0 %v5580
    %6065 = vmatpush1.bf16.msra.mxu0 %v5579
    %6066 = vmatprep.subr.bf16.mxu0 %v5584
    %6067 = vmatpush1.bf16.msra.mxu0 %v5583
    %6068 = vmatprep.subr.bf16.mxu0 %v5588
    %6069 = vmatpush1.bf16.msra.mxu0 %v5587
    %6070 = vmatprep.subr.bf16.mxu0 %v5592
    %6071 = vmatpush1.bf16.msra.mxu0 %v5591
    %6072 = vmatprep.subr.bf16.mxu0 %v5596
    %6073 = vmatpush1.bf16.msra.mxu0 %v5595
    %6074 = vmatprep.subr.bf16.mxu0 %v5600
    %6075 = vmatpush1.bf16.msra.mxu0 %v5599
    %6076 = vmatprep.subr.bf16.mxu0 %v5604
    %6077 = vmatpush1.bf16.msra.mxu0 %v5603
    %6078 = vmatprep.subr.bf16.mxu0 %v5608
    %6079 = vmatpush1.bf16.msra.mxu0 %v5607
    %6080 = vmatprep.subr.bf16.mxu0 %v5612
    %6081 = vmatpush1.bf16.msra.mxu0 %v5611
    %6082 = vmatprep.subr.bf16.mxu0 %v5616
    %6083 = vmatpush1.bf16.msra.mxu0 %v5615
    %6084 = vmatprep.subr.bf16.mxu0 %v5620
    %6085 = vmatpush1.bf16.msra.mxu0 %v5619
    %6086 = vmatprep.subr.bf16.mxu0 %v5624
    %6087 = vmatpush1.bf16.msra.mxu0 %v5623
    %6088 = vmatprep.subr.bf16.mxu0 %v5628
    %6089 = vmatpush1.bf16.msra.mxu0 %v5627
    %6090 = vmatprep.subr.bf16.mxu0 %v5632
    %6091 = vmatpush1.bf16.msra.mxu0 %v5631
    %6092 = vmatprep.mubr.bf16.mxu0 %v4456
    %6093 = vmatmul.mubr.bf16.gmra.mrb[0].mxu0 %v4455
    %v6094 = vpop.f32.mrb[0].mxu0
    %v6095 = vadd.f32 %v6054, %v6094
    %v6096 = vpop.f32.mrb[0].mxu0
    %v6097 = vadd.f32 %v6056, %v6096
    %v6098 = vpop.f32.mrb[0].mxu0
    %v6099 = vpop.f32.mrb[0].mxu0
    %6100 = vdwg.mxu0
    %6101 = vmatprep.subr.bf16.mxu0 %v5636
    %6102 = vmatpush1.bf16.msra.mxu0 %v5635
    %6103 = vmatprep.subr.bf16.mxu0 %v5640
    %6104 = vmatpush1.bf16.msra.mxu0 %v5639
    %6105 = vmatprep.subr.bf16.mxu0 %v5644
    %6106 = vmatpush1.bf16.msra.mxu0 %v5643
    %6107 = vmatprep.subr.bf16.mxu0 %v5648
    %6108 = vmatpush1.bf16.msra.mxu0 %v5647
    %6109 = vmatprep.subr.bf16.mxu0 %v5652
    %6110 = vmatpush1.bf16.msra.mxu0 %v5651
    %6111 = vmatprep.subr.bf16.mxu0 %v5656
    %6112 = vmatpush1.bf16.msra.mxu0 %v5655
    %6113 = vmatprep.subr.bf16.mxu0 %v5660
    %6114 = vmatpush1.bf16.msra.mxu0 %v5659
    %6115 = vmatprep.subr.bf16.mxu0 %v5664
    %6116 = vmatpush1.bf16.msra.mxu0 %v5663
    %6117 = vmatprep.subr.bf16.mxu0 %v5668
    %6118 = vmatpush1.bf16.msra.mxu0 %v5667
    %6119 = vmatprep.subr.bf16.mxu0 %v5672
    %6120 = vmatpush1.bf16.msra.mxu0 %v5671
    %6121 = vmatprep.subr.bf16.mxu0 %v5676
    %6122 = vmatpush1.bf16.msra.mxu0 %v5675
    %6123 = vmatprep.subr.bf16.mxu0 %v5680
    %6124 = vmatpush1.bf16.msra.mxu0 %v5679
    %6125 = vmatprep.subr.bf16.mxu0 %v5684
    %6126 = vmatpush1.bf16.msra.mxu0 %v5683
    %6127 = vmatprep.subr.bf16.mxu0 %v5688
    %6128 = vmatpush1.bf16.msra.mxu0 %v5687
    %6129 = vmatprep.subr.bf16.mxu0 %v5692
    %6130 = vmatpush1.bf16.msra.mxu0 %v5691
    %6131 = vmatprep.subr.bf16.mxu0 %v5696
    %6132 = vmatpush1.bf16.msra.mxu0 %v5695
    %6133 = vmatprep.mubr.bf16.mxu0 %v4458
    %6134 = vmatmul.mubr.bf16.gmra.mrb[0].mxu0 %v4457
    %v6135 = vpop.f32.mrb[0].mxu0
    %v6136 = vadd.f32 %v6095, %v6135
    %v6137 = vpop.f32.mrb[0].mxu0
    %v6138 = vadd.f32 %v6097, %v6137
    %v6139 = vpop.f32.mrb[0].mxu0
    %v6140 = vpop.f32.mrb[0].mxu0
    %6141 = vdwg.mxu0
    %6142 = vmatprep.subr.bf16.mxu0 %v5700
    %6143 = vmatpush1.bf16.msra.mxu0 %v5699
    %6144 = vmatprep.subr.bf16.mxu0 %v5704
    %6145 = vmatpush1.bf16.msra.mxu0 %v5703
    %6146 = vmatprep.subr.bf16.mxu0 %v5708
    %6147 = vmatpush1.bf16.msra.mxu0 %v5707
    %6148 = vmatprep.subr.bf16.mxu0 %v5712
    %6149 = vmatpush1.bf16.msra.mxu0 %v5711
    %6150 = vmatprep.subr.bf16.mxu0 %v5716
    %6151 = vmatpush1.bf16.msra.mxu0 %v5715
    %6152 = vmatprep.subr.bf16.mxu0 %v5720
    %6153 = vmatpush1.bf16.msra.mxu0 %v5719
    %6154 = vmatprep.subr.bf16.mxu0 %v5724
    %6155 = vmatpush1.bf16.msra.mxu0 %v5723
    %6156 = vmatprep.subr.bf16.mxu0 %v5728
    %6157 = vmatpush1.bf16.msra.mxu0 %v5727
    %6158 = vmatprep.subr.bf16.mxu0 %v5732
    %6159 = vmatpush1.bf16.msra.mxu0 %v5731
    %6160 = vmatprep.subr.bf16.mxu0 %v5736
    %6161 = vmatpush1.bf16.msra.mxu0 %v5735
    %6162 = vmatprep.subr.bf16.mxu0 %v5740
    %6163 = vmatpush1.bf16.msra.mxu0 %v5739
    %6164 = vmatprep.subr.bf16.mxu0 %v5744
    %6165 = vmatpush1.bf16.msra.mxu0 %v5743
    %6166 = vmatprep.subr.bf16.mxu0 %v5748
    %6167 = vmatpush1.bf16.msra.mxu0 %v5747
    %6168 = vmatprep.subr.bf16.mxu0 %v5752
    %6169 = vmatpush1.bf16.msra.mxu0 %v5751
    %6170 = vmatprep.subr.bf16.mxu0 %v5756
    %6171 = vmatpush1.bf16.msra.mxu0 %v5755
    %6172 = vmatprep.subr.bf16.mxu0 %v5760
    %6173 = vmatpush1.bf16.msra.mxu0 %v5759
    %6174 = vmatprep.mubr.bf16.mxu0 %v4460
    %6175 = vmatmul.mubr.bf16.gmra.mrb[0].mxu0 %v4459
    %v6176 = vpop.f32.mrb[0].mxu0
    %v6177 = vadd.f32 %v6136, %v6176
    %v6178 = vpop.f32.mrb[0].mxu0
    %v6179 = vadd.f32 %v6138, %v6178
    %v6180 = vpop.f32.mrb[0].mxu0
    %v6181 = vpop.f32.mrb[0].mxu0
    %6182 = vdwg.mxu0
    %6183 = vmatprep.subr.bf16.mxu0 %v5510
    %6184 = vmatpush1.bf16.msra.mxu0 %v5509
    %6185 = vmatprep.subr.bf16.mxu0 %v5514
    %6186 = vmatpush1.bf16.msra.mxu0 %v5513
    %6187 = vmatprep.subr.bf16.mxu0 %v5518
    %6188 = vmatpush1.bf16.msra.mxu0 %v5517
    %6189 = vmatprep.subr.bf16.mxu0 %v5522
    %6190 = vmatpush1.bf16.msra.mxu0 %v5521
    %6191 = vmatprep.subr.bf16.mxu0 %v5526
    %6192 = vmatpush1.bf16.msra.mxu0 %v5525
    %6193 = vmatprep.subr.bf16.mxu0 %v5530
    %6194 = vmatpush1.bf16.msra.mxu0 %v5529
    %6195 = vmatprep.subr.bf16.mxu0 %v5534
    %6196 = vmatpush1.bf16.msra.mxu0 %v5533
    %6197 = vmatprep.subr.bf16.mxu0 %v5538
    %6198 = vmatpush1.bf16.msra.mxu0 %v5537
    %6199 = vmatprep.subr.bf16.mxu0 %v5542
    %6200 = vmatpush1.bf16.msra.mxu0 %v5541
    %6201 = vmatprep.subr.bf16.mxu0 %v5546
    %6202 = vmatpush1.bf16.msra.mxu0 %v5545
    %6203 = vmatprep.subr.bf16.mxu0 %v5550
    %6204 = vmatpush1.bf16.msra.mxu0 %v5549
    %6205 = vmatprep.subr.bf16.mxu0 %v5554
    %6206 = vmatpush1.bf16.msra.mxu0 %v5553
    %6207 = vmatprep.subr.bf16.mxu0 %v5558
    %6208 = vmatpush1.bf16.msra.mxu0 %v5557
    %6209 = vmatprep.subr.bf16.mxu0 %v5562
    %6210 = vmatpush1.bf16.msra.mxu0 %v5561
    %6211 = vmatprep.subr.bf16.mxu0 %v5566
    %6212 = vmatpush1.bf16.msra.mxu0 %v5565
    %6213 = vmatprep.subr.bf16.mxu0 %v5570
    %6214 = vmatpush1.bf16.msra.mxu0 %v5569
    %6215 = vmatprep.mubr.bf16.mxu0 %v4454
    %6216 = vmatmul.mubr.bf16.gmra.mrb[0].mxu0 %v4453
    %v6217 = vpop.f32.mrb[0].mxu0
    %v6218 = vadd.f32 %v4730, %v6217
    %v6219 = vpop.f32.mrb[0].mxu0
    %v6220 = vadd.f32 %v4734, %v6219
    %v6221 = vpop.f32.mrb[0].mxu0
    %v6222 = vpop.f32.mrb[0].mxu0
    %6223 = vdwg.mxu0
    %6224 = vmatprep.subr.bf16.mxu0 %v5574
    %6225 = vmatpush1.bf16.msra.mxu0 %v5573
    %6226 = vmatprep.subr.bf16.mxu0 %v5578
    %6227 = vmatpush1.bf16.msra.mxu0 %v5577
    %6228 = vmatprep.subr.bf16.mxu0 %v5582
    %6229 = vmatpush1.bf16.msra.mxu0 %v5581
    %6230 = vmatprep.subr.bf16.mxu0 %v5586
    %6231 = vmatpush1.bf16.msra.mxu0 %v5585
    %6232 = vmatprep.subr.bf16.mxu0 %v5590
    %6233 = vmatpush1.bf16.msra.mxu0 %v5589
    %6234 = vmatprep.subr.bf16.mxu0 %v5594
    %6235 = vmatpush1.bf16.msra.mxu0 %v5593
    %6236 = vmatprep.subr.bf16.mxu0 %v5598
    %6237 = vmatpush1.bf16.msra.mxu0 %v5597
    %6238 = vmatprep.subr.bf16.mxu0 %v5602
    %6239 = vmatpush1.bf16.msra.mxu0 %v5601
    %6240 = vmatprep.subr.bf16.mxu0 %v5606
    %6241 = vmatpush1.bf16.msra.mxu0 %v5605
    %6242 = vmatprep.subr.bf16.mxu0 %v5610
    %6243 = vmatpush1.bf16.msra.mxu0 %v5609
    %6244 = vmatprep.subr.bf16.mxu0 %v5614
    %6245 = vmatpush1.bf16.msra.mxu0 %v5613
    %6246 = vmatprep.subr.bf16.mxu0 %v5618
    %6247 = vmatpush1.bf16.msra.mxu0 %v5617
    %6248 = vmatprep.subr.bf16.mxu0 %v5622
    %6249 = vmatpush1.bf16.msra.mxu0 %v5621
    %6250 = vmatprep.subr.bf16.mxu0 %v5626
    %6251 = vmatpush1.bf16.msra.mxu0 %v5625
    %6252 = vmatprep.subr.bf16.mxu0 %v5630
    %6253 = vmatpush1.bf16.msra.mxu0 %v5629
    %6254 = vmatprep.subr.bf16.mxu0 %v5634
    %6255 = vmatpush1.bf16.msra.mxu0 %v5633
    %6256 = vmatprep.mubr.bf16.mxu0 %v4456
    %6257 = vmatmul.mubr.bf16.gmra.mrb[0].mxu0 %v4455
    %v6258 = vpop.f32.mrb[0].mxu0
    %v6259 = vadd.f32 %v6218, %v6258
    %v6260 = vpop.f32.mrb[0].mxu0
    %v6261 = vadd.f32 %v6220, %v6260
    %v6262 = vpop.f32.mrb[0].mxu0
    %v6263 = vpop.f32.mrb[0].mxu0
    %6264 = vdwg.mxu0
    %6265 = vmatprep.subr.bf16.mxu0 %v5638
    %6266 = vmatpush1.bf16.msra.mxu0 %v5637
    %6267 = vmatprep.subr.bf16.mxu0 %v5642
    %6268 = vmatpush1.bf16.msra.mxu0 %v5641
    %6269 = vmatprep.subr.bf16.mxu0 %v5646
    %6270 = vmatpush1.bf16.msra.mxu0 %v5645
    %6271 = vmatprep.subr.bf16.mxu0 %v5650
    %6272 = vmatpush1.bf16.msra.mxu0 %v5649
    %6273 = vmatprep.subr.bf16.mxu0 %v5654
    %6274 = vmatpush1.bf16.msra.mxu0 %v5653
    %6275 = vmatprep.subr.bf16.mxu0 %v5658
    %6276 = vmatpush1.bf16.msra.mxu0 %v5657
    %6277 = vmatprep.subr.bf16.mxu0 %v5662
    %6278 = vmatpush1.bf16.msra.mxu0 %v5661
    %6279 = vmatprep.subr.bf16.mxu0 %v5666
    %6280 = vmatpush1.bf16.msra.mxu0 %v5665
    %6281 = vmatprep.subr.bf16.mxu0 %v5670
    %6282 = vmatpush1.bf16.msra.mxu0 %v5669
    %6283 = vmatprep.subr.bf16.mxu0 %v5674
    %6284 = vmatpush1.bf16.msra.mxu0 %v5673
    %6285 = vmatprep.subr.bf16.mxu0 %v5678
    %6286 = vmatpush1.bf16.msra.mxu0 %v5677
    %6287 = vmatprep.subr.bf16.mxu0 %v5682
    %6288 = vmatpush1.bf16.msra.mxu0 %v5681
    %6289 = vmatprep.subr.bf16.mxu0 %v5686
    %6290 = vmatpush1.bf16.msra.mxu0 %v5685
    %6291 = vmatprep.subr.bf16.mxu0 %v5690
    %6292 = vmatpush1.bf16.msra.mxu0 %v5689
    %6293 = vmatprep.subr.bf16.mxu0 %v5694
    %6294 = vmatpush1.bf16.msra.mxu0 %v5693
    %6295 = vmatprep.subr.bf16.mxu0 %v5698
    %6296 = vmatpush1.bf16.msra.mxu0 %v5697
    %6297 = vmatprep.mubr.bf16.mxu0 %v4458
    %6298 = vmatmul.mubr.bf16.gmra.mrb[0].mxu0 %v4457
    %v6299 = vpop.f32.mrb[0].mxu0
    %v6300 = vadd.f32 %v6259, %v6299
    %v6301 = vpop.f32.mrb[0].mxu0
    %v6302 = vadd.f32 %v6261, %v6301
    %v6303 = vpop.f32.mrb[0].mxu0
    %v6304 = vpop.f32.mrb[0].mxu0
    %6305 = vdwg.mxu0
    %6306 = vmatprep.subr.bf16.mxu0 %v5702
    %6307 = vmatpush1.bf16.msra.mxu0 %v5701
    %6308 = vmatprep.subr.bf16.mxu0 %v5706
    %6309 = vmatpush1.bf16.msra.mxu0 %v5705
    %6310 = vmatprep.subr.bf16.mxu0 %v5710
    %6311 = vmatpush1.bf16.msra.mxu0 %v5709
    %6312 = vmatprep.subr.bf16.mxu0 %v5714
    %6313 = vmatpush1.bf16.msra.mxu0 %v5713
    %6314 = vmatprep.subr.bf16.mxu0 %v5718
    %6315 = vmatpush1.bf16.msra.mxu0 %v5717
    %6316 = vmatprep.subr.bf16.mxu0 %v5722
    %6317 = vmatpush1.bf16.msra.mxu0 %v5721
    %6318 = vmatprep.subr.bf16.mxu0 %v5726
    %6319 = vmatpush1.bf16.msra.mxu0 %v5725
    %6320 = vmatprep.subr.bf16.mxu0 %v5730
    %6321 = vmatpush1.bf16.msra.mxu0 %v5729
    %6322 = vmatprep.subr.bf16.mxu0 %v5734
    %6323 = vmatpush1.bf16.msra.mxu0 %v5733
    %6324 = vmatprep.subr.bf16.mxu0 %v5738
    %6325 = vmatpush1.bf16.msra.mxu0 %v5737
    %6326 = vmatprep.subr.bf16.mxu0 %v5742
    %6327 = vmatpush1.bf16.msra.mxu0 %v5741
    %6328 = vmatprep.subr.bf16.mxu0 %v5746
    %6329 = vmatpush1.bf16.msra.mxu0 %v5745
    %6330 = vmatprep.subr.bf16.mxu0 %v5750
    %6331 = vmatpush1.bf16.msra.mxu0 %v5749
    %6332 = vmatprep.subr.bf16.mxu0 %v5754
    %6333 = vmatpush1.bf16.msra.mxu0 %v5753
    %6334 = vmatprep.subr.bf16.mxu0 %v5758
    %6335 = vmatpush1.bf16.msra.mxu0 %v5757
    %6336 = vmatprep.subr.bf16.mxu0 %v5762
    %6337 = vmatpush1.bf16.msra.mxu0 %v5761
    %6338 = vmatprep.mubr.bf16.mxu0 %v4460
    %6339 = vmatmul.mubr.bf16.gmra.mrb[0].mxu0 %v4459
    %v6340 = vpop.f32.mrb[0].mxu0
    %v6341 = vadd.f32 %v6300, %v6340
    %v6342 = vpop.f32.mrb[0].mxu0
    %v6343 = vadd.f32 %v6302, %v6342
    %v6344 = vpop.f32.mrb[0].mxu0
    %v6345 = vpop.f32.mrb[0].mxu0
    %6346 = vdwg.mxu0
    %v6347 = vmax.f32 %v6177, 0.0
    %v6348 = vmax.f32 %v6179, 0.0
    %v6349 = vmax.f32 %v6341, 0.0
    %v6350 = vmax.f32 %v6343, 0.0
    %v6351 = vpack.c.bf16 %v6347, %v6347
    %v6352 = vpack.c.bf16 %v6348, %v6348
    %v6353 = vpack.c.bf16 %v6349, %v6349
    %v6354 = vpack.c.bf16 %v6350, %v6350
    %v6355 = vld [vmem:[#allocation10] sm:$0xff]
    %v6356 = vld [vmem:[#allocation10 + $0x8] sm:$0xff]
    %v6357 = vld [vmem:[#allocation10 + $0x10] sm:$0xff]
    %v6358 = vld [vmem:[#allocation10 + $0x18] sm:$0xff]
    %v6359 = vld [vmem:[#allocation10 + $0x20] sm:$0xff]
    %v6360 = vld [vmem:[#allocation10 + $0x28] sm:$0xff]
    %v6361 = vld [vmem:[#allocation10 + $0x30] sm:$0xff]
    %v6362 = vld [vmem:[#allocation10 + $0x38] sm:$0xff]
    %v6363 = vld [vmem:[#allocation10 + $0x40] sm:$0xff]
    %v6364 = vld [vmem:[#allocation10 + $0x48] sm:$0xff]
    %v6365 = vld [vmem:[#allocation10 + $0x50] sm:$0xff]
    %v6366 = vld [vmem:[#allocation10 + $0x58] sm:$0xff]
    %v6367 = vld [vmem:[#allocation10 + $0x60] sm:$0xff]
    %v6368 = vld [vmem:[#allocation10 + $0x68] sm:$0xff]
    %v6369 = vld [vmem:[#allocation10 + $0x70] sm:$0xff]
    %v6370 = vld [vmem:[#allocation10 + $0x78] sm:$0xff]
    %v6371 = vld [vmem:[#allocation10 + $0x80] sm:$0xff]
    %v6372 = vld [vmem:[#allocation10 + $0x88] sm:$0xff]
    %v6373 = vld [vmem:[#allocation10 + $0x90] sm:$0xff]
    %v6374 = vld [vmem:[#allocation10 + $0x98] sm:$0xff]
    %v6375 = vld [vmem:[#allocation10 + $0xa0] sm:$0xff]
    %v6376 = vld [vmem:[#allocation10 + $0xa8] sm:$0xff]
    %v6377 = vld [vmem:[#allocation10 + $0xb0] sm:$0xff]
    %v6378 = vld [vmem:[#allocation10 + $0xb8] sm:$0xff]
    %v6379 = vld [vmem:[#allocation10 + $0xc0] sm:$0xff]
    %v6380 = vld [vmem:[#allocation10 + $0xc8] sm:$0xff]
    %v6381 = vld [vmem:[#allocation10 + $0xd0] sm:$0xff]
    %v6382 = vld [vmem:[#allocation10 + $0xd8] sm:$0xff]
    %v6383 = vld [vmem:[#allocation10 + $0xe0] sm:$0xff]
    %v6384 = vld [vmem:[#allocation10 + $0xe8] sm:$0xff]
    %v6385 = vld [vmem:[#allocation10 + $0xf0] sm:$0xff]
    %v6386 = vld [vmem:[#allocation10 + $0xf8] sm:$0xff]
    %v6387 = vld [vmem:[#allocation10 + $0x100] sm:$0xff]
    %v6388 = vld [vmem:[#allocation10 + $0x108] sm:$0xff]
    %v6389 = vld [vmem:[#allocation10 + $0x110] sm:$0xff]
    %v6390 = vld [vmem:[#allocation10 + $0x118] sm:$0xff]
    %v6391 = vld [vmem:[#allocation10 + $0x120] sm:$0xff]
    %v6392 = vld [vmem:[#allocation10 + $0x128] sm:$0xff]
    %v6393 = vld [vmem:[#allocation10 + $0x130] sm:$0xff]
    %v6394 = vld [vmem:[#allocation10 + $0x138] sm:$0xff]
    %v6395 = vld [vmem:[#allocation10 + $0x140] sm:$0xff]
    %v6396 = vld [vmem:[#allocation10 + $0x148] sm:$0xff]
    %v6397 = vld [vmem:[#allocation10 + $0x150] sm:$0xff]
    %v6398 = vld [vmem:[#allocation10 + $0x158] sm:$0xff]
    %v6399 = vld [vmem:[#allocation10 + $0x160] sm:$0xff]
    %v6400 = vld [vmem:[#allocation10 + $0x168] sm:$0xff]
    %v6401 = vld [vmem:[#allocation10 + $0x170] sm:$0xff]
    %v6402 = vld [vmem:[#allocation10 + $0x178] sm:$0xff]
    %v6403 = vld [vmem:[#allocation10 + $0x180] sm:$0xff]
    %v6404 = vld [vmem:[#allocation10 + $0x188] sm:$0xff]
    %v6405 = vld [vmem:[#allocation10 + $0x190] sm:$0xff]
    %v6406 = vld [vmem:[#allocation10 + $0x198] sm:$0xff]
    %v6407 = vld [vmem:[#allocation10 + $0x1a0] sm:$0xff]
    %v6408 = vld [vmem:[#allocation10 + $0x1a8] sm:$0xff]
    %v6409 = vld [vmem:[#allocation10 + $0x1b0] sm:$0xff]
    %v6410 = vld [vmem:[#allocation10 + $0x1b8] sm:$0xff]
    %v6411 = vld [vmem:[#allocation10 + $0x1c0] sm:$0xff]
    %v6412 = vld [vmem:[#allocation10 + $0x1c8] sm:$0xff]
    %v6413 = vld [vmem:[#allocation10 + $0x1d0] sm:$0xff]
    %v6414 = vld [vmem:[#allocation10 + $0x1d8] sm:$0xff]
    %v6415 = vld [vmem:[#allocation10 + $0x1e0] sm:$0xff]
    %v6416 = vld [vmem:[#allocation10 + $0x1e8] sm:$0xff]
    %v6417 = vld [vmem:[#allocation10 + $0x1f0] sm:$0xff]
    %v6418 = vld [vmem:[#allocation10 + $0x1f8] sm:$0xff]
    %v6419 = vld [vmem:[#allocation10 + $0x200] sm:$0xff]
    %v6420 = vld [vmem:[#allocation10 + $0x208] sm:$0xff]
    %v6421 = vld [vmem:[#allocation10 + $0x210] sm:$0xff]
    %v6422 = vld [vmem:[#allocation10 + $0x218] sm:$0xff]
    %v6423 = vld [vmem:[#allocation10 + $0x220] sm:$0xff]
    %v6424 = vld [vmem:[#allocation10 + $0x228] sm:$0xff]
    %v6425 = vld [vmem:[#allocation10 + $0x230] sm:$0xff]
    %v6426 = vld [vmem:[#allocation10 + $0x238] sm:$0xff]
    %v6427 = vld [vmem:[#allocation10 + $0x240] sm:$0xff]
    %v6428 = vld [vmem:[#allocation10 + $0x248] sm:$0xff]
    %v6429 = vld [vmem:[#allocation10 + $0x250] sm:$0xff]
    %v6430 = vld [vmem:[#allocation10 + $0x258] sm:$0xff]
    %v6431 = vld [vmem:[#allocation10 + $0x260] sm:$0xff]
    %v6432 = vld [vmem:[#allocation10 + $0x268] sm:$0xff]
    %v6433 = vld [vmem:[#allocation10 + $0x270] sm:$0xff]
    %v6434 = vld [vmem:[#allocation10 + $0x278] sm:$0xff]
    %v6435 = vld [vmem:[#allocation10 + $0x280] sm:$0xff]
    %v6436 = vld [vmem:[#allocation10 + $0x288] sm:$0xff]
    %v6437 = vld [vmem:[#allocation10 + $0x290] sm:$0xff]
    %v6438 = vld [vmem:[#allocation10 + $0x298] sm:$0xff]
    %v6439 = vld [vmem:[#allocation10 + $0x2a0] sm:$0xff]
    %v6440 = vld [vmem:[#allocation10 + $0x2a8] sm:$0xff]
    %v6441 = vld [vmem:[#allocation10 + $0x2b0] sm:$0xff]
    %v6442 = vld [vmem:[#allocation10 + $0x2b8] sm:$0xff]
    %v6443 = vld [vmem:[#allocation10 + $0x2c0] sm:$0xff]
    %v6444 = vld [vmem:[#allocation10 + $0x2c8] sm:$0xff]
    %v6445 = vld [vmem:[#allocation10 + $0x2d0] sm:$0xff]
    %v6446 = vld [vmem:[#allocation10 + $0x2d8] sm:$0xff]
    %v6447 = vld [vmem:[#allocation10 + $0x2e0] sm:$0xff]
    %v6448 = vld [vmem:[#allocation10 + $0x2e8] sm:$0xff]
    %v6449 = vld [vmem:[#allocation10 + $0x2f0] sm:$0xff]
    %v6450 = vld [vmem:[#allocation10 + $0x2f8] sm:$0xff]
    %v6451 = vld [vmem:[#allocation10 + $0x300] sm:$0xff]
    %v6452 = vld [vmem:[#allocation10 + $0x308] sm:$0xff]
    %v6453 = vld [vmem:[#allocation10 + $0x310] sm:$0xff]
    %v6454 = vld [vmem:[#allocation10 + $0x318] sm:$0xff]
    %v6455 = vld [vmem:[#allocation10 + $0x320] sm:$0xff]
    %v6456 = vld [vmem:[#allocation10 + $0x328] sm:$0xff]
    %v6457 = vld [vmem:[#allocation10 + $0x330] sm:$0xff]
    %v6458 = vld [vmem:[#allocation10 + $0x338] sm:$0xff]
    %v6459 = vld [vmem:[#allocation10 + $0x340] sm:$0xff]
    %v6460 = vld [vmem:[#allocation10 + $0x348] sm:$0xff]
    %v6461 = vld [vmem:[#allocation10 + $0x350] sm:$0xff]
    %v6462 = vld [vmem:[#allocation10 + $0x358] sm:$0xff]
    %v6463 = vld [vmem:[#allocation10 + $0x360] sm:$0xff]
    %v6464 = vld [vmem:[#allocation10 + $0x368] sm:$0xff]
    %v6465 = vld [vmem:[#allocation10 + $0x370] sm:$0xff]
    %v6466 = vld [vmem:[#allocation10 + $0x378] sm:$0xff]
    %v6467 = vld [vmem:[#allocation10 + $0x380] sm:$0xff]
    %v6468 = vld [vmem:[#allocation10 + $0x388] sm:$0xff]
    %v6469 = vld [vmem:[#allocation10 + $0x390] sm:$0xff]
    %v6470 = vld [vmem:[#allocation10 + $0x398] sm:$0xff]
    %v6471 = vld [vmem:[#allocation10 + $0x3a0] sm:$0xff]
    %v6472 = vld [vmem:[#allocation10 + $0x3a8] sm:$0xff]
    %v6473 = vld [vmem:[#allocation10 + $0x3b0] sm:$0xff]
    %v6474 = vld [vmem:[#allocation10 + $0x3b8] sm:$0xff]
    %v6475 = vld [vmem:[#allocation10 + $0x3c0] sm:$0xff]
    %v6476 = vld [vmem:[#allocation10 + $0x3c8] sm:$0xff]
    %v6477 = vld [vmem:[#allocation10 + $0x3d0] sm:$0xff]
    %v6478 = vld [vmem:[#allocation10 + $0x3d8] sm:$0xff]
    %v6479 = vld [vmem:[#allocation10 + $0x3e0] sm:$0xff]
    %v6480 = vld [vmem:[#allocation10 + $0x3e8] sm:$0xff]
    %v6481 = vld [vmem:[#allocation10 + $0x3f0] sm:$0xff]
    %v6482 = vld [vmem:[#allocation10 + $0x3f8] sm:$0xff]
    %v6483 = vld [vmem:[#allocation10 + $0x400] sm:$0xff]
    %v6484 = vld [vmem:[#allocation10 + $0x408] sm:$0xff]
    %v6485 = vld [vmem:[#allocation10 + $0x410] sm:$0xff]
    %v6486 = vld [vmem:[#allocation10 + $0x418] sm:$0xff]
    %v6487 = vld [vmem:[#allocation10 + $0x420] sm:$0xff]
    %v6488 = vld [vmem:[#allocation10 + $0x428] sm:$0xff]
    %v6489 = vld [vmem:[#allocation10 + $0x430] sm:$0xff]
    %v6490 = vld [vmem:[#allocation10 + $0x438] sm:$0xff]
    %v6491 = vld [vmem:[#allocation10 + $0x440] sm:$0xff]
    %v6492 = vld [vmem:[#allocation10 + $0x448] sm:$0xff]
    %v6493 = vld [vmem:[#allocation10 + $0x450] sm:$0xff]
    %v6494 = vld [vmem:[#allocation10 + $0x458] sm:$0xff]
    %v6495 = vld [vmem:[#allocation10 + $0x460] sm:$0xff]
    %v6496 = vld [vmem:[#allocation10 + $0x468] sm:$0xff]
    %v6497 = vld [vmem:[#allocation10 + $0x470] sm:$0xff]
    %v6498 = vld [vmem:[#allocation10 + $0x478] sm:$0xff]
    %v6499 = vld [vmem:[#allocation10 + $0x480] sm:$0xff]
    %v6500 = vld [vmem:[#allocation10 + $0x488] sm:$0xff]
    %v6501 = vld [vmem:[#allocation10 + $0x490] sm:$0xff]
    %v6502 = vld [vmem:[#allocation10 + $0x498] sm:$0xff]
    %v6503 = vld [vmem:[#allocation10 + $0x4a0] sm:$0xff]
    %v6504 = vld [vmem:[#allocation10 + $0x4a8] sm:$0xff]
    %v6505 = vld [vmem:[#allocation10 + $0x4b0] sm:$0xff]
    %v6506 = vld [vmem:[#allocation10 + $0x4b8] sm:$0xff]
    %v6507 = vld [vmem:[#allocation10 + $0x4c0] sm:$0xff]
    %v6508 = vld [vmem:[#allocation10 + $0x4c8] sm:$0xff]
    %v6509 = vld [vmem:[#allocation10 + $0x4d0] sm:$0xff]
    %v6510 = vld [vmem:[#allocation10 + $0x4d8] sm:$0xff]
    %v6511 = vld [vmem:[#allocation10 + $0x4e0] sm:$0xff]
    %v6512 = vld [vmem:[#allocation10 + $0x4e8] sm:$0xff]
    %v6513 = vld [vmem:[#allocation10 + $0x4f0] sm:$0xff]
    %v6514 = vld [vmem:[#allocation10 + $0x4f8] sm:$0xff]
    %v6515 = vld [vmem:[#allocation10 + $0x500] sm:$0xff]
    %v6516 = vld [vmem:[#allocation10 + $0x508] sm:$0xff]
    %v6517 = vld [vmem:[#allocation10 + $0x510] sm:$0xff]
    %v6518 = vld [vmem:[#allocation10 + $0x518] sm:$0xff]
    %v6519 = vld [vmem:[#allocation10 + $0x520] sm:$0xff]
    %v6520 = vld [vmem:[#allocation10 + $0x528] sm:$0xff]
    %v6521 = vld [vmem:[#allocation10 + $0x530] sm:$0xff]
    %v6522 = vld [vmem:[#allocation10 + $0x538] sm:$0xff]
    %v6523 = vld [vmem:[#allocation10 + $0x540] sm:$0xff]
    %v6524 = vld [vmem:[#allocation10 + $0x548] sm:$0xff]
    %v6525 = vld [vmem:[#allocation10 + $0x550] sm:$0xff]
    %v6526 = vld [vmem:[#allocation10 + $0x558] sm:$0xff]
    %v6527 = vld [vmem:[#allocation10 + $0x560] sm:$0xff]
    %v6528 = vld [vmem:[#allocation10 + $0x568] sm:$0xff]
    %v6529 = vld [vmem:[#allocation10 + $0x570] sm:$0xff]
    %v6530 = vld [vmem:[#allocation10 + $0x578] sm:$0xff]
    %v6531 = vld [vmem:[#allocation10 + $0x580] sm:$0xff]
    %v6532 = vld [vmem:[#allocation10 + $0x588] sm:$0xff]
    %v6533 = vld [vmem:[#allocation10 + $0x590] sm:$0xff]
    %v6534 = vld [vmem:[#allocation10 + $0x598] sm:$0xff]
    %v6535 = vld [vmem:[#allocation10 + $0x5a0] sm:$0xff]
    %v6536 = vld [vmem:[#allocation10 + $0x5a8] sm:$0xff]
    %v6537 = vld [vmem:[#allocation10 + $0x5b0] sm:$0xff]
    %v6538 = vld [vmem:[#allocation10 + $0x5b8] sm:$0xff]
    %v6539 = vld [vmem:[#allocation10 + $0x5c0] sm:$0xff]
    %v6540 = vld [vmem:[#allocation10 + $0x5c8] sm:$0xff]
    %v6541 = vld [vmem:[#allocation10 + $0x5d0] sm:$0xff]
    %v6542 = vld [vmem:[#allocation10 + $0x5d8] sm:$0xff]
    %v6543 = vld [vmem:[#allocation10 + $0x5e0] sm:$0xff]
    %v6544 = vld [vmem:[#allocation10 + $0x5e8] sm:$0xff]
    %v6545 = vld [vmem:[#allocation10 + $0x5f0] sm:$0xff]
    %v6546 = vld [vmem:[#allocation10 + $0x5f8] sm:$0xff]
    %v6547 = vld [vmem:[#allocation10 + $0x600] sm:$0xff]
    %v6548 = vld [vmem:[#allocation10 + $0x608] sm:$0xff]
    %v6549 = vld [vmem:[#allocation10 + $0x610] sm:$0xff]
    %v6550 = vld [vmem:[#allocation10 + $0x618] sm:$0xff]
    %v6551 = vld [vmem:[#allocation10 + $0x620] sm:$0xff]
    %v6552 = vld [vmem:[#allocation10 + $0x628] sm:$0xff]
    %v6553 = vld [vmem:[#allocation10 + $0x630] sm:$0xff]
    %v6554 = vld [vmem:[#allocation10 + $0x638] sm:$0xff]
    %v6555 = vld [vmem:[#allocation10 + $0x640] sm:$0xff]
    %v6556 = vld [vmem:[#allocation10 + $0x648] sm:$0xff]
    %v6557 = vld [vmem:[#allocation10 + $0x650] sm:$0xff]
    %v6558 = vld [vmem:[#allocation10 + $0x658] sm:$0xff]
    %v6559 = vld [vmem:[#allocation10 + $0x660] sm:$0xff]
    %v6560 = vld [vmem:[#allocation10 + $0x668] sm:$0xff]
    %v6561 = vld [vmem:[#allocation10 + $0x670] sm:$0xff]
    %v6562 = vld [vmem:[#allocation10 + $0x678] sm:$0xff]
    %v6563 = vld [vmem:[#allocation10 + $0x680] sm:$0xff]
    %v6564 = vld [vmem:[#allocation10 + $0x688] sm:$0xff]
    %v6565 = vld [vmem:[#allocation10 + $0x690] sm:$0xff]
    %v6566 = vld [vmem:[#allocation10 + $0x698] sm:$0xff]
    %v6567 = vld [vmem:[#allocation10 + $0x6a0] sm:$0xff]
    %v6568 = vld [vmem:[#allocation10 + $0x6a8] sm:$0xff]
    %v6569 = vld [vmem:[#allocation10 + $0x6b0] sm:$0xff]
    %v6570 = vld [vmem:[#allocation10 + $0x6b8] sm:$0xff]
    %v6571 = vld [vmem:[#allocation10 + $0x6c0] sm:$0xff]
    %v6572 = vld [vmem:[#allocation10 + $0x6c8] sm:$0xff]
    %v6573 = vld [vmem:[#allocation10 + $0x6d0] sm:$0xff]
    %v6574 = vld [vmem:[#allocation10 + $0x6d8] sm:$0xff]
    %v6575 = vld [vmem:[#allocation10 + $0x6e0] sm:$0xff]
    %v6576 = vld [vmem:[#allocation10 + $0x6e8] sm:$0xff]
    %v6577 = vld [vmem:[#allocation10 + $0x6f0] sm:$0xff]
    %v6578 = vld [vmem:[#allocation10 + $0x6f8] sm:$0xff]
    %v6579 = vld [vmem:[#allocation10 + $0x700] sm:$0xff]
    %v6580 = vld [vmem:[#allocation10 + $0x708] sm:$0xff]
    %v6581 = vld [vmem:[#allocation10 + $0x710] sm:$0xff]
    %v6582 = vld [vmem:[#allocation10 + $0x718] sm:$0xff]
    %v6583 = vld [vmem:[#allocation10 + $0x720] sm:$0xff]
    %v6584 = vld [vmem:[#allocation10 + $0x728] sm:$0xff]
    %v6585 = vld [vmem:[#allocation10 + $0x730] sm:$0xff]
    %v6586 = vld [vmem:[#allocation10 + $0x738] sm:$0xff]
    %v6587 = vld [vmem:[#allocation10 + $0x740] sm:$0xff]
    %v6588 = vld [vmem:[#allocation10 + $0x748] sm:$0xff]
    %v6589 = vld [vmem:[#allocation10 + $0x750] sm:$0xff]
    %v6590 = vld [vmem:[#allocation10 + $0x758] sm:$0xff]
    %v6591 = vld [vmem:[#allocation10 + $0x760] sm:$0xff]
    %v6592 = vld [vmem:[#allocation10 + $0x768] sm:$0xff]
    %v6593 = vld [vmem:[#allocation10 + $0x770] sm:$0xff]
    %v6594 = vld [vmem:[#allocation10 + $0x778] sm:$0xff]
    %v6595 = vld [vmem:[#allocation10 + $0x780] sm:$0xff]
    %v6596 = vld [vmem:[#allocation10 + $0x788] sm:$0xff]
    %v6597 = vld [vmem:[#allocation10 + $0x790] sm:$0xff]
    %v6598 = vld [vmem:[#allocation10 + $0x798] sm:$0xff]
    %v6599 = vld [vmem:[#allocation10 + $0x7a0] sm:$0xff]
    %v6600 = vld [vmem:[#allocation10 + $0x7a8] sm:$0xff]
    %v6601 = vld [vmem:[#allocation10 + $0x7b0] sm:$0xff]
    %v6602 = vld [vmem:[#allocation10 + $0x7b8] sm:$0xff]
    %v6603 = vld [vmem:[#allocation10 + $0x7c0] sm:$0xff]
    %v6604 = vld [vmem:[#allocation10 + $0x7c8] sm:$0xff]
    %v6605 = vld [vmem:[#allocation10 + $0x7d0] sm:$0xff]
    %v6606 = vld [vmem:[#allocation10 + $0x7d8] sm:$0xff]
    %v6607 = vld [vmem:[#allocation10 + $0x7e0] sm:$0xff]
    %v6608 = vld [vmem:[#allocation10 + $0x7e8] sm:$0xff]
    %v6609 = vld [vmem:[#allocation10 + $0x7f0] sm:$0xff]
    %v6610 = vld [vmem:[#allocation10 + $0x7f8] sm:$0xff]
    %v6611 = vld [vmem:[%s12] sm:$0xff]
    %v6613 = vlaneseq
    %v6614 = vshrl.u32 %v6613, 7
    %v6615 = vsub.s32 0, %v6614
    %v6616 = vrot.slane %v6611, %v6615
    %v6617 = vlaneseq
    %v6618 = vshrl.u32 %v6617, 7
    %v6619 = vsub.s32 1, %v6618
    %v6620 = vrot.slane %v6611, %v6619
    %v6621 = vlaneseq
    %v6622 = vshrl.u32 %v6621, 7
    %v6623 = vsub.s32 2, %v6622
    %v6624 = vrot.slane %v6611, %v6623
    %v6625 = vlaneseq
    %v6626 = vshrl.u32 %v6625, 7
    %v6627 = vsub.s32 3, %v6626
    %v6628 = vrot.slane %v6611, %v6627
    %v6629 = vlaneseq
    %v6630 = vshrl.u32 %v6629, 7
    %v6631 = vsub.s32 4, %v6630
    %v6632 = vrot.slane %v6611, %v6631
    %v6633 = vlaneseq
    %v6634 = vshrl.u32 %v6633, 7
    %v6635 = vsub.s32 5, %v6634
    %v6636 = vrot.slane %v6611, %v6635
    %v6637 = vlaneseq
    %v6638 = vshrl.u32 %v6637, 7
    %v6639 = vsub.s32 6, %v6638
    %v6640 = vrot.slane %v6611, %v6639
    %v6641 = vlaneseq
    %v6642 = vshrl.u32 %v6641, 7
    %v6643 = vsub.s32 7, %v6642
    %v6644 = vrot.slane %v6611, %v6643
    %v6909 = vunpack.c.l.b16 %v6355
    %v6910 = vunpack.c.h.b16 %v6355
    %v6911 = vunpack.c.l.b16 %v6356
    %v6912 = vunpack.c.h.b16 %v6356
    %v6913 = vunpack.c.l.b16 %v6357
    %v6914 = vunpack.c.h.b16 %v6357
    %v6915 = vunpack.c.l.b16 %v6358
    %v6916 = vunpack.c.h.b16 %v6358
    %v6917 = vunpack.c.l.b16 %v6359
    %v6918 = vunpack.c.h.b16 %v6359
    %v6919 = vunpack.c.l.b16 %v6360
    %v6920 = vunpack.c.h.b16 %v6360
    %v6921 = vunpack.c.l.b16 %v6361
    %v6922 = vunpack.c.h.b16 %v6361
    %v6923 = vunpack.c.l.b16 %v6362
    %v6924 = vunpack.c.h.b16 %v6362
    %v6925 = vunpack.c.l.b16 %v6363
    %v6926 = vunpack.c.h.b16 %v6363
    %v6927 = vunpack.c.l.b16 %v6364
    %v6928 = vunpack.c.h.b16 %v6364
    %v6929 = vunpack.c.l.b16 %v6365
    %v6930 = vunpack.c.h.b16 %v6365
    %v6931 = vunpack.c.l.b16 %v6366
    %v6932 = vunpack.c.h.b16 %v6366
    %v6933 = vunpack.c.l.b16 %v6367
    %v6934 = vunpack.c.h.b16 %v6367
    %v6935 = vunpack.c.l.b16 %v6368
    %v6936 = vunpack.c.h.b16 %v6368
    %v6937 = vunpack.c.l.b16 %v6369
    %v6938 = vunpack.c.h.b16 %v6369
    %v6939 = vunpack.c.l.b16 %v6370
    %v6940 = vunpack.c.h.b16 %v6370
    %v6941 = vunpack.c.l.b16 %v6371
    %v6942 = vunpack.c.h.b16 %v6371
    %v6943 = vunpack.c.l.b16 %v6372
    %v6944 = vunpack.c.h.b16 %v6372
    %v6945 = vunpack.c.l.b16 %v6373
    %v6946 = vunpack.c.h.b16 %v6373
    %v6947 = vunpack.c.l.b16 %v6374
    %v6948 = vunpack.c.h.b16 %v6374
    %v6949 = vunpack.c.l.b16 %v6375
    %v6950 = vunpack.c.h.b16 %v6375
    %v6951 = vunpack.c.l.b16 %v6376
    %v6952 = vunpack.c.h.b16 %v6376
    %v6953 = vunpack.c.l.b16 %v6377
    %v6954 = vunpack.c.h.b16 %v6377
    %v6955 = vunpack.c.l.b16 %v6378
    %v6956 = vunpack.c.h.b16 %v6378
    %v6957 = vunpack.c.l.b16 %v6379
    %v6958 = vunpack.c.h.b16 %v6379
    %v6959 = vunpack.c.l.b16 %v6380
    %v6960 = vunpack.c.h.b16 %v6380
    %v6961 = vunpack.c.l.b16 %v6381
    %v6962 = vunpack.c.h.b16 %v6381
    %v6963 = vunpack.c.l.b16 %v6382
    %v6964 = vunpack.c.h.b16 %v6382
    %v6965 = vunpack.c.l.b16 %v6383
    %v6966 = vunpack.c.h.b16 %v6383
    %v6967 = vunpack.c.l.b16 %v6384
    %v6968 = vunpack.c.h.b16 %v6384
    %v6969 = vunpack.c.l.b16 %v6385
    %v6970 = vunpack.c.h.b16 %v6385
    %v6971 = vunpack.c.l.b16 %v6386
    %v6972 = vunpack.c.h.b16 %v6386
    %v6973 = vunpack.c.l.b16 %v6387
    %v6974 = vunpack.c.h.b16 %v6387
    %v6975 = vunpack.c.l.b16 %v6388
    %v6976 = vunpack.c.h.b16 %v6388
    %v6977 = vunpack.c.l.b16 %v6389
    %v6978 = vunpack.c.h.b16 %v6389
    %v6979 = vunpack.c.l.b16 %v6390
    %v6980 = vunpack.c.h.b16 %v6390
    %v6981 = vunpack.c.l.b16 %v6391
    %v6982 = vunpack.c.h.b16 %v6391
    %v6983 = vunpack.c.l.b16 %v6392
    %v6984 = vunpack.c.h.b16 %v6392
    %v6985 = vunpack.c.l.b16 %v6393
    %v6986 = vunpack.c.h.b16 %v6393
    %v6987 = vunpack.c.l.b16 %v6394
    %v6988 = vunpack.c.h.b16 %v6394
    %v6989 = vunpack.c.l.b16 %v6395
    %v6990 = vunpack.c.h.b16 %v6395
    %v6991 = vunpack.c.l.b16 %v6396
    %v6992 = vunpack.c.h.b16 %v6396
    %v6993 = vunpack.c.l.b16 %v6397
    %v6994 = vunpack.c.h.b16 %v6397
    %v6995 = vunpack.c.l.b16 %v6398
    %v6996 = vunpack.c.h.b16 %v6398
    %v6997 = vunpack.c.l.b16 %v6399
    %v6998 = vunpack.c.h.b16 %v6399
    %v6999 = vunpack.c.l.b16 %v6400
    %v7000 = vunpack.c.h.b16 %v6400
    %v7001 = vunpack.c.l.b16 %v6401
    %v7002 = vunpack.c.h.b16 %v6401
    %v7003 = vunpack.c.l.b16 %v6402
    %v7004 = vunpack.c.h.b16 %v6402
    %v7005 = vunpack.c.l.b16 %v6403
    %v7006 = vunpack.c.h.b16 %v6403
    %v7007 = vunpack.c.l.b16 %v6404
    %v7008 = vunpack.c.h.b16 %v6404
    %v7009 = vunpack.c.l.b16 %v6405
    %v7010 = vunpack.c.h.b16 %v6405
    %v7011 = vunpack.c.l.b16 %v6406
    %v7012 = vunpack.c.h.b16 %v6406
    %v7013 = vunpack.c.l.b16 %v6407
    %v7014 = vunpack.c.h.b16 %v6407
    %v7015 = vunpack.c.l.b16 %v6408
    %v7016 = vunpack.c.h.b16 %v6408
    %v7017 = vunpack.c.l.b16 %v6409
    %v7018 = vunpack.c.h.b16 %v6409
    %v7019 = vunpack.c.l.b16 %v6410
    %v7020 = vunpack.c.h.b16 %v6410
    %v7021 = vunpack.c.l.b16 %v6411
    %v7022 = vunpack.c.h.b16 %v6411
    %v7023 = vunpack.c.l.b16 %v6412
    %v7024 = vunpack.c.h.b16 %v6412
    %v7025 = vunpack.c.l.b16 %v6413
    %v7026 = vunpack.c.h.b16 %v6413
    %v7027 = vunpack.c.l.b16 %v6414
    %v7028 = vunpack.c.h.b16 %v6414
    %v7029 = vunpack.c.l.b16 %v6415
    %v7030 = vunpack.c.h.b16 %v6415
    %v7031 = vunpack.c.l.b16 %v6416
    %v7032 = vunpack.c.h.b16 %v6416
    %v7033 = vunpack.c.l.b16 %v6417
    %v7034 = vunpack.c.h.b16 %v6417
    %v7035 = vunpack.c.l.b16 %v6418
    %v7036 = vunpack.c.h.b16 %v6418
    %v7037 = vunpack.c.l.b16 %v6419
    %v7038 = vunpack.c.h.b16 %v6419
    %v7039 = vunpack.c.l.b16 %v6420
    %v7040 = vunpack.c.h.b16 %v6420
    %v7041 = vunpack.c.l.b16 %v6421
    %v7042 = vunpack.c.h.b16 %v6421
    %v7043 = vunpack.c.l.b16 %v6422
    %v7044 = vunpack.c.h.b16 %v6422
    %v7045 = vunpack.c.l.b16 %v6423
    %v7046 = vunpack.c.h.b16 %v6423
    %v7047 = vunpack.c.l.b16 %v6424
    %v7048 = vunpack.c.h.b16 %v6424
    %v7049 = vunpack.c.l.b16 %v6425
    %v7050 = vunpack.c.h.b16 %v6425
    %v7051 = vunpack.c.l.b16 %v6426
    %v7052 = vunpack.c.h.b16 %v6426
    %v7053 = vunpack.c.l.b16 %v6427
    %v7054 = vunpack.c.h.b16 %v6427
    %v7055 = vunpack.c.l.b16 %v6428
    %v7056 = vunpack.c.h.b16 %v6428
    %v7057 = vunpack.c.l.b16 %v6429
    %v7058 = vunpack.c.h.b16 %v6429
    %v7059 = vunpack.c.l.b16 %v6430
    %v7060 = vunpack.c.h.b16 %v6430
    %v7061 = vunpack.c.l.b16 %v6431
    %v7062 = vunpack.c.h.b16 %v6431
    %v7063 = vunpack.c.l.b16 %v6432
    %v7064 = vunpack.c.h.b16 %v6432
    %v7065 = vunpack.c.l.b16 %v6433
    %v7066 = vunpack.c.h.b16 %v6433
    %v7067 = vunpack.c.l.b16 %v6434
    %v7068 = vunpack.c.h.b16 %v6434
    %v7069 = vunpack.c.l.b16 %v6435
    %v7070 = vunpack.c.h.b16 %v6435
    %v7071 = vunpack.c.l.b16 %v6436
    %v7072 = vunpack.c.h.b16 %v6436
    %v7073 = vunpack.c.l.b16 %v6437
    %v7074 = vunpack.c.h.b16 %v6437
    %v7075 = vunpack.c.l.b16 %v6438
    %v7076 = vunpack.c.h.b16 %v6438
    %v7077 = vunpack.c.l.b16 %v6439
    %v7078 = vunpack.c.h.b16 %v6439
    %v7079 = vunpack.c.l.b16 %v6440
    %v7080 = vunpack.c.h.b16 %v6440
    %v7081 = vunpack.c.l.b16 %v6441
    %v7082 = vunpack.c.h.b16 %v6441
    %v7083 = vunpack.c.l.b16 %v6442
    %v7084 = vunpack.c.h.b16 %v6442
    %v7085 = vunpack.c.l.b16 %v6443
    %v7086 = vunpack.c.h.b16 %v6443
    %v7087 = vunpack.c.l.b16 %v6444
    %v7088 = vunpack.c.h.b16 %v6444
    %v7089 = vunpack.c.l.b16 %v6445
    %v7090 = vunpack.c.h.b16 %v6445
    %v7091 = vunpack.c.l.b16 %v6446
    %v7092 = vunpack.c.h.b16 %v6446
    %v7093 = vunpack.c.l.b16 %v6447
    %v7094 = vunpack.c.h.b16 %v6447
    %v7095 = vunpack.c.l.b16 %v6448
    %v7096 = vunpack.c.h.b16 %v6448
    %v7097 = vunpack.c.l.b16 %v6449
    %v7098 = vunpack.c.h.b16 %v6449
    %v7099 = vunpack.c.l.b16 %v6450
    %v7100 = vunpack.c.h.b16 %v6450
    %v7101 = vunpack.c.l.b16 %v6451
    %v7102 = vunpack.c.h.b16 %v6451
    %v7103 = vunpack.c.l.b16 %v6452
    %v7104 = vunpack.c.h.b16 %v6452
    %v7105 = vunpack.c.l.b16 %v6453
    %v7106 = vunpack.c.h.b16 %v6453
    %v7107 = vunpack.c.l.b16 %v6454
    %v7108 = vunpack.c.h.b16 %v6454
    %v7109 = vunpack.c.l.b16 %v6455
    %v7110 = vunpack.c.h.b16 %v6455
    %v7111 = vunpack.c.l.b16 %v6456
    %v7112 = vunpack.c.h.b16 %v6456
    %v7113 = vunpack.c.l.b16 %v6457
    %v7114 = vunpack.c.h.b16 %v6457
    %v7115 = vunpack.c.l.b16 %v6458
    %v7116 = vunpack.c.h.b16 %v6458
    %v7117 = vunpack.c.l.b16 %v6459
    %v7118 = vunpack.c.h.b16 %v6459
    %v7119 = vunpack.c.l.b16 %v6460
    %v7120 = vunpack.c.h.b16 %v6460
    %v7121 = vunpack.c.l.b16 %v6461
    %v7122 = vunpack.c.h.b16 %v6461
    %v7123 = vunpack.c.l.b16 %v6462
    %v7124 = vunpack.c.h.b16 %v6462
    %v7125 = vunpack.c.l.b16 %v6463
    %v7126 = vunpack.c.h.b16 %v6463
    %v7127 = vunpack.c.l.b16 %v6464
    %v7128 = vunpack.c.h.b16 %v6464
    %v7129 = vunpack.c.l.b16 %v6465
    %v7130 = vunpack.c.h.b16 %v6465
    %v7131 = vunpack.c.l.b16 %v6466
    %v7132 = vunpack.c.h.b16 %v6466
    %v7133 = vunpack.c.l.b16 %v6467
    %v7134 = vunpack.c.h.b16 %v6467
    %v7135 = vunpack.c.l.b16 %v6468
    %v7136 = vunpack.c.h.b16 %v6468
    %v7137 = vunpack.c.l.b16 %v6469
    %v7138 = vunpack.c.h.b16 %v6469
    %v7139 = vunpack.c.l.b16 %v6470
    %v7140 = vunpack.c.h.b16 %v6470
    %v7141 = vunpack.c.l.b16 %v6471
    %v7142 = vunpack.c.h.b16 %v6471
    %v7143 = vunpack.c.l.b16 %v6472
    %v7144 = vunpack.c.h.b16 %v6472
    %v7145 = vunpack.c.l.b16 %v6473
    %v7146 = vunpack.c.h.b16 %v6473
    %v7147 = vunpack.c.l.b16 %v6474
    %v7148 = vunpack.c.h.b16 %v6474
    %v7149 = vunpack.c.l.b16 %v6475
    %v7150 = vunpack.c.h.b16 %v6475
    %v7151 = vunpack.c.l.b16 %v6476
    %v7152 = vunpack.c.h.b16 %v6476
    %v7153 = vunpack.c.l.b16 %v6477
    %v7154 = vunpack.c.h.b16 %v6477
    %v7155 = vunpack.c.l.b16 %v6478
    %v7156 = vunpack.c.h.b16 %v6478
    %v7157 = vunpack.c.l.b16 %v6479
    %v7158 = vunpack.c.h.b16 %v6479
    %v7159 = vunpack.c.l.b16 %v6480
    %v7160 = vunpack.c.h.b16 %v6480
    %v7161 = vunpack.c.l.b16 %v6481
    %v7162 = vunpack.c.h.b16 %v6481
    %v7163 = vunpack.c.l.b16 %v6482
    %v7164 = vunpack.c.h.b16 %v6482
    %v7165 = vunpack.c.l.b16 %v6483
    %v7166 = vunpack.c.h.b16 %v6483
    %v7167 = vunpack.c.l.b16 %v6484
    %v7168 = vunpack.c.h.b16 %v6484
    %v7169 = vunpack.c.l.b16 %v6485
    %v7170 = vunpack.c.h.b16 %v6485
    %v7171 = vunpack.c.l.b16 %v6486
    %v7172 = vunpack.c.h.b16 %v6486
    %v7173 = vunpack.c.l.b16 %v6487
    %v7174 = vunpack.c.h.b16 %v6487
    %v7175 = vunpack.c.l.b16 %v6488
    %v7176 = vunpack.c.h.b16 %v6488
    %v7177 = vunpack.c.l.b16 %v6489
    %v7178 = vunpack.c.h.b16 %v6489
    %v7179 = vunpack.c.l.b16 %v6490
    %v7180 = vunpack.c.h.b16 %v6490
    %v7181 = vunpack.c.l.b16 %v6491
    %v7182 = vunpack.c.h.b16 %v6491
    %v7183 = vunpack.c.l.b16 %v6492
    %v7184 = vunpack.c.h.b16 %v6492
    %v7185 = vunpack.c.l.b16 %v6493
    %v7186 = vunpack.c.h.b16 %v6493
    %v7187 = vunpack.c.l.b16 %v6494
    %v7188 = vunpack.c.h.b16 %v6494
    %v7189 = vunpack.c.l.b16 %v6495
    %v7190 = vunpack.c.h.b16 %v6495
    %v7191 = vunpack.c.l.b16 %v6496
    %v7192 = vunpack.c.h.b16 %v6496
    %v7193 = vunpack.c.l.b16 %v6497
    %v7194 = vunpack.c.h.b16 %v6497
    %v7195 = vunpack.c.l.b16 %v6498
    %v7196 = vunpack.c.h.b16 %v6498
    %v7197 = vunpack.c.l.b16 %v6499
    %v7198 = vunpack.c.h.b16 %v6499
    %v7199 = vunpack.c.l.b16 %v6500
    %v7200 = vunpack.c.h.b16 %v6500
    %v7201 = vunpack.c.l.b16 %v6501
    %v7202 = vunpack.c.h.b16 %v6501
    %v7203 = vunpack.c.l.b16 %v6502
    %v7204 = vunpack.c.h.b16 %v6502
    %v7205 = vunpack.c.l.b16 %v6503
    %v7206 = vunpack.c.h.b16 %v6503
    %v7207 = vunpack.c.l.b16 %v6504
    %v7208 = vunpack.c.h.b16 %v6504
    %v7209 = vunpack.c.l.b16 %v6505
    %v7210 = vunpack.c.h.b16 %v6505
    %v7211 = vunpack.c.l.b16 %v6506
    %v7212 = vunpack.c.h.b16 %v6506
    %v7213 = vunpack.c.l.b16 %v6507
    %v7214 = vunpack.c.h.b16 %v6507
    %v7215 = vunpack.c.l.b16 %v6508
    %v7216 = vunpack.c.h.b16 %v6508
    %v7217 = vunpack.c.l.b16 %v6509
    %v7218 = vunpack.c.h.b16 %v6509
    %v7219 = vunpack.c.l.b16 %v6510
    %v7220 = vunpack.c.h.b16 %v6510
    %v7221 = vunpack.c.l.b16 %v6511
    %v7222 = vunpack.c.h.b16 %v6511
    %v7223 = vunpack.c.l.b16 %v6512
    %v7224 = vunpack.c.h.b16 %v6512
    %v7225 = vunpack.c.l.b16 %v6513
    %v7226 = vunpack.c.h.b16 %v6513
    %v7227 = vunpack.c.l.b16 %v6514
    %v7228 = vunpack.c.h.b16 %v6514
    %v7229 = vunpack.c.l.b16 %v6515
    %v7230 = vunpack.c.h.b16 %v6515
    %v7231 = vunpack.c.l.b16 %v6516
    %v7232 = vunpack.c.h.b16 %v6516
    %v7233 = vunpack.c.l.b16 %v6517
    %v7234 = vunpack.c.h.b16 %v6517
    %v7235 = vunpack.c.l.b16 %v6518
    %v7236 = vunpack.c.h.b16 %v6518
    %v7237 = vunpack.c.l.b16 %v6519
    %v7238 = vunpack.c.h.b16 %v6519
    %v7239 = vunpack.c.l.b16 %v6520
    %v7240 = vunpack.c.h.b16 %v6520
    %v7241 = vunpack.c.l.b16 %v6521
    %v7242 = vunpack.c.h.b16 %v6521
    %v7243 = vunpack.c.l.b16 %v6522
    %v7244 = vunpack.c.h.b16 %v6522
    %v7245 = vunpack.c.l.b16 %v6523
    %v7246 = vunpack.c.h.b16 %v6523
    %v7247 = vunpack.c.l.b16 %v6524
    %v7248 = vunpack.c.h.b16 %v6524
    %v7249 = vunpack.c.l.b16 %v6525
    %v7250 = vunpack.c.h.b16 %v6525
    %v7251 = vunpack.c.l.b16 %v6526
    %v7252 = vunpack.c.h.b16 %v6526
    %v7253 = vunpack.c.l.b16 %v6527
    %v7254 = vunpack.c.h.b16 %v6527
    %v7255 = vunpack.c.l.b16 %v6528
    %v7256 = vunpack.c.h.b16 %v6528
    %v7257 = vunpack.c.l.b16 %v6529
    %v7258 = vunpack.c.h.b16 %v6529
    %v7259 = vunpack.c.l.b16 %v6530
    %v7260 = vunpack.c.h.b16 %v6530
    %v7261 = vunpack.c.l.b16 %v6531
    %v7262 = vunpack.c.h.b16 %v6531
    %v7263 = vunpack.c.l.b16 %v6532
    %v7264 = vunpack.c.h.b16 %v6532
    %v7265 = vunpack.c.l.b16 %v6533
    %v7266 = vunpack.c.h.b16 %v6533
    %v7267 = vunpack.c.l.b16 %v6534
    %v7268 = vunpack.c.h.b16 %v6534
    %v7269 = vunpack.c.l.b16 %v6535
    %v7270 = vunpack.c.h.b16 %v6535
    %v7271 = vunpack.c.l.b16 %v6536
    %v7272 = vunpack.c.h.b16 %v6536
    %v7273 = vunpack.c.l.b16 %v6537
    %v7274 = vunpack.c.h.b16 %v6537
    %v7275 = vunpack.c.l.b16 %v6538
    %v7276 = vunpack.c.h.b16 %v6538
    %v7277 = vunpack.c.l.b16 %v6539
    %v7278 = vunpack.c.h.b16 %v6539
    %v7279 = vunpack.c.l.b16 %v6540
    %v7280 = vunpack.c.h.b16 %v6540
    %v7281 = vunpack.c.l.b16 %v6541
    %v7282 = vunpack.c.h.b16 %v6541
    %v7283 = vunpack.c.l.b16 %v6542
    %v7284 = vunpack.c.h.b16 %v6542
    %v7285 = vunpack.c.l.b16 %v6543
    %v7286 = vunpack.c.h.b16 %v6543
    %v7287 = vunpack.c.l.b16 %v6544
    %v7288 = vunpack.c.h.b16 %v6544
    %v7289 = vunpack.c.l.b16 %v6545
    %v7290 = vunpack.c.h.b16 %v6545
    %v7291 = vunpack.c.l.b16 %v6546
    %v7292 = vunpack.c.h.b16 %v6546
    %v7293 = vunpack.c.l.b16 %v6547
    %v7294 = vunpack.c.h.b16 %v6547
    %v7295 = vunpack.c.l.b16 %v6548
    %v7296 = vunpack.c.h.b16 %v6548
    %v7297 = vunpack.c.l.b16 %v6549
    %v7298 = vunpack.c.h.b16 %v6549
    %v7299 = vunpack.c.l.b16 %v6550
    %v7300 = vunpack.c.h.b16 %v6550
    %v7301 = vunpack.c.l.b16 %v6551
    %v7302 = vunpack.c.h.b16 %v6551
    %v7303 = vunpack.c.l.b16 %v6552
    %v7304 = vunpack.c.h.b16 %v6552
    %v7305 = vunpack.c.l.b16 %v6553
    %v7306 = vunpack.c.h.b16 %v6553
    %v7307 = vunpack.c.l.b16 %v6554
    %v7308 = vunpack.c.h.b16 %v6554
    %v7309 = vunpack.c.l.b16 %v6555
    %v7310 = vunpack.c.h.b16 %v6555
    %v7311 = vunpack.c.l.b16 %v6556
    %v7312 = vunpack.c.h.b16 %v6556
    %v7313 = vunpack.c.l.b16 %v6557
    %v7314 = vunpack.c.h.b16 %v6557
    %v7315 = vunpack.c.l.b16 %v6558
    %v7316 = vunpack.c.h.b16 %v6558
    %v7317 = vunpack.c.l.b16 %v6559
    %v7318 = vunpack.c.h.b16 %v6559
    %v7319 = vunpack.c.l.b16 %v6560
    %v7320 = vunpack.c.h.b16 %v6560
    %v7321 = vunpack.c.l.b16 %v6561
    %v7322 = vunpack.c.h.b16 %v6561
    %v7323 = vunpack.c.l.b16 %v6562
    %v7324 = vunpack.c.h.b16 %v6562
    %v7325 = vunpack.c.l.b16 %v6563
    %v7326 = vunpack.c.h.b16 %v6563
    %v7327 = vunpack.c.l.b16 %v6564
    %v7328 = vunpack.c.h.b16 %v6564
    %v7329 = vunpack.c.l.b16 %v6565
    %v7330 = vunpack.c.h.b16 %v6565
    %v7331 = vunpack.c.l.b16 %v6566
    %v7332 = vunpack.c.h.b16 %v6566
    %v7333 = vunpack.c.l.b16 %v6567
    %v7334 = vunpack.c.h.b16 %v6567
    %v7335 = vunpack.c.l.b16 %v6568
    %v7336 = vunpack.c.h.b16 %v6568
    %v7337 = vunpack.c.l.b16 %v6569
    %v7338 = vunpack.c.h.b16 %v6569
    %v7339 = vunpack.c.l.b16 %v6570
    %v7340 = vunpack.c.h.b16 %v6570
    %v7341 = vunpack.c.l.b16 %v6571
    %v7342 = vunpack.c.h.b16 %v6571
    %v7343 = vunpack.c.l.b16 %v6572
    %v7344 = vunpack.c.h.b16 %v6572
    %v7345 = vunpack.c.l.b16 %v6573
    %v7346 = vunpack.c.h.b16 %v6573
    %v7347 = vunpack.c.l.b16 %v6574
    %v7348 = vunpack.c.h.b16 %v6574
    %v7349 = vunpack.c.l.b16 %v6575
    %v7350 = vunpack.c.h.b16 %v6575
    %v7351 = vunpack.c.l.b16 %v6576
    %v7352 = vunpack.c.h.b16 %v6576
    %v7353 = vunpack.c.l.b16 %v6577
    %v7354 = vunpack.c.h.b16 %v6577
    %v7355 = vunpack.c.l.b16 %v6578
    %v7356 = vunpack.c.h.b16 %v6578
    %v7357 = vunpack.c.l.b16 %v6579
    %v7358 = vunpack.c.h.b16 %v6579
    %v7359 = vunpack.c.l.b16 %v6580
    %v7360 = vunpack.c.h.b16 %v6580
    %v7361 = vunpack.c.l.b16 %v6581
    %v7362 = vunpack.c.h.b16 %v6581
    %v7363 = vunpack.c.l.b16 %v6582
    %v7364 = vunpack.c.h.b16 %v6582
    %v7365 = vunpack.c.l.b16 %v6583
    %v7366 = vunpack.c.h.b16 %v6583
    %v7367 = vunpack.c.l.b16 %v6584
    %v7368 = vunpack.c.h.b16 %v6584
    %v7369 = vunpack.c.l.b16 %v6585
    %v7370 = vunpack.c.h.b16 %v6585
    %v7371 = vunpack.c.l.b16 %v6586
    %v7372 = vunpack.c.h.b16 %v6586
    %v7373 = vunpack.c.l.b16 %v6587
    %v7374 = vunpack.c.h.b16 %v6587
    %v7375 = vunpack.c.l.b16 %v6588
    %v7376 = vunpack.c.h.b16 %v6588
    %v7377 = vunpack.c.l.b16 %v6589
    %v7378 = vunpack.c.h.b16 %v6589
    %v7379 = vunpack.c.l.b16 %v6590
    %v7380 = vunpack.c.h.b16 %v6590
    %v7381 = vunpack.c.l.b16 %v6591
    %v7382 = vunpack.c.h.b16 %v6591
    %v7383 = vunpack.c.l.b16 %v6592
    %v7384 = vunpack.c.h.b16 %v6592
    %v7385 = vunpack.c.l.b16 %v6593
    %v7386 = vunpack.c.h.b16 %v6593
    %v7387 = vunpack.c.l.b16 %v6594
    %v7388 = vunpack.c.h.b16 %v6594
    %v7389 = vunpack.c.l.b16 %v6595
    %v7390 = vunpack.c.h.b16 %v6595
    %v7391 = vunpack.c.l.b16 %v6596
    %v7392 = vunpack.c.h.b16 %v6596
    %v7393 = vunpack.c.l.b16 %v6597
    %v7394 = vunpack.c.h.b16 %v6597
    %v7395 = vunpack.c.l.b16 %v6598
    %v7396 = vunpack.c.h.b16 %v6598
    %v7397 = vunpack.c.l.b16 %v6599
    %v7398 = vunpack.c.h.b16 %v6599
    %v7399 = vunpack.c.l.b16 %v6600
    %v7400 = vunpack.c.h.b16 %v6600
    %v7401 = vunpack.c.l.b16 %v6601
    %v7402 = vunpack.c.h.b16 %v6601
    %v7403 = vunpack.c.l.b16 %v6602
    %v7404 = vunpack.c.h.b16 %v6602
    %v7405 = vunpack.c.l.b16 %v6603
    %v7406 = vunpack.c.h.b16 %v6603
    %v7407 = vunpack.c.l.b16 %v6604
    %v7408 = vunpack.c.h.b16 %v6604
    %v7409 = vunpack.c.l.b16 %v6605
    %v7410 = vunpack.c.h.b16 %v6605
    %v7411 = vunpack.c.l.b16 %v6606
    %v7412 = vunpack.c.h.b16 %v6606
    %v7413 = vunpack.c.l.b16 %v6607
    %v7414 = vunpack.c.h.b16 %v6607
    %v7415 = vunpack.c.l.b16 %v6608
    %v7416 = vunpack.c.h.b16 %v6608
    %v7417 = vunpack.c.l.b16 %v6609
    %v7418 = vunpack.c.h.b16 %v6609
    %v7419 = vunpack.c.l.b16 %v6610
    %v7420 = vunpack.c.h.b16 %v6610
    %v7421 = vpack.c.b16 %v6917, %v6909
    %v7422 = vpack.c.b16 %v6918, %v6910
    %v7423 = vpack.c.b16 %v6919, %v6911
    %v7424 = vpack.c.b16 %v6920, %v6912
    %v7425 = vpack.c.b16 %v6921, %v6913
    %v7426 = vpack.c.b16 %v6922, %v6914
    %v7427 = vpack.c.b16 %v6923, %v6915
    %v7428 = vpack.c.b16 %v6924, %v6916
    %v7429 = vpack.c.b16 %v6933, %v6925
    %v7430 = vpack.c.b16 %v6934, %v6926
    %v7431 = vpack.c.b16 %v6935, %v6927
    %v7432 = vpack.c.b16 %v6936, %v6928
    %v7433 = vpack.c.b16 %v6937, %v6929
    %v7434 = vpack.c.b16 %v6938, %v6930
    %v7435 = vpack.c.b16 %v6939, %v6931
    %v7436 = vpack.c.b16 %v6940, %v6932
    %v7437 = vpack.c.b16 %v6949, %v6941
    %v7438 = vpack.c.b16 %v6950, %v6942
    %v7439 = vpack.c.b16 %v6951, %v6943
    %v7440 = vpack.c.b16 %v6952, %v6944
    %v7441 = vpack.c.b16 %v6953, %v6945
    %v7442 = vpack.c.b16 %v6954, %v6946
    %v7443 = vpack.c.b16 %v6955, %v6947
    %v7444 = vpack.c.b16 %v6956, %v6948
    %v7445 = vpack.c.b16 %v6965, %v6957
    %v7446 = vpack.c.b16 %v6966, %v6958
    %v7447 = vpack.c.b16 %v6967, %v6959
    %v7448 = vpack.c.b16 %v6968, %v6960
    %v7449 = vpack.c.b16 %v6969, %v6961
    %v7450 = vpack.c.b16 %v6970, %v6962
    %v7451 = vpack.c.b16 %v6971, %v6963
    %v7452 = vpack.c.b16 %v6972, %v6964
    %v7453 = vpack.c.b16 %v6981, %v6973
    %v7454 = vpack.c.b16 %v6982, %v6974
    %v7455 = vpack.c.b16 %v6983, %v6975
    %v7456 = vpack.c.b16 %v6984, %v6976
    %v7457 = vpack.c.b16 %v6985, %v6977
    %v7458 = vpack.c.b16 %v6986, %v6978
    %v7459 = vpack.c.b16 %v6987, %v6979
    %v7460 = vpack.c.b16 %v6988, %v6980
    %v7461 = vpack.c.b16 %v6997, %v6989
    %v7462 = vpack.c.b16 %v6998, %v6990
    %v7463 = vpack.c.b16 %v6999, %v6991
    %v7464 = vpack.c.b16 %v7000, %v6992
    %v7465 = vpack.c.b16 %v7001, %v6993
    %v7466 = vpack.c.b16 %v7002, %v6994
    %v7467 = vpack.c.b16 %v7003, %v6995
    %v7468 = vpack.c.b16 %v7004, %v6996
    %v7469 = vpack.c.b16 %v7013, %v7005
    %v7470 = vpack.c.b16 %v7014, %v7006
    %v7471 = vpack.c.b16 %v7015, %v7007
    %v7472 = vpack.c.b16 %v7016, %v7008
    %v7473 = vpack.c.b16 %v7017, %v7009
    %v7474 = vpack.c.b16 %v7018, %v7010
    %v7475 = vpack.c.b16 %v7019, %v7011
    %v7476 = vpack.c.b16 %v7020, %v7012
    %v7477 = vpack.c.b16 %v7029, %v7021
    %v7478 = vpack.c.b16 %v7030, %v7022
    %v7479 = vpack.c.b16 %v7031, %v7023
    %v7480 = vpack.c.b16 %v7032, %v7024
    %v7481 = vpack.c.b16 %v7033, %v7025
    %v7482 = vpack.c.b16 %v7034, %v7026
    %v7483 = vpack.c.b16 %v7035, %v7027
    %v7484 = vpack.c.b16 %v7036, %v7028
    %v7485 = vpack.c.b16 %v7045, %v7037
    %v7486 = vpack.c.b16 %v7046, %v7038
    %v7487 = vpack.c.b16 %v7047, %v7039
    %v7488 = vpack.c.b16 %v7048, %v7040
    %v7489 = vpack.c.b16 %v7049, %v7041
    %v7490 = vpack.c.b16 %v7050, %v7042
    %v7491 = vpack.c.b16 %v7051, %v7043
    %v7492 = vpack.c.b16 %v7052, %v7044
    %v7493 = vpack.c.b16 %v7061, %v7053
    %v7494 = vpack.c.b16 %v7062, %v7054
    %v7495 = vpack.c.b16 %v7063, %v7055
    %v7496 = vpack.c.b16 %v7064, %v7056
    %v7497 = vpack.c.b16 %v7065, %v7057
    %v7498 = vpack.c.b16 %v7066, %v7058
    %v7499 = vpack.c.b16 %v7067, %v7059
    %v7500 = vpack.c.b16 %v7068, %v7060
    %v7501 = vpack.c.b16 %v7077, %v7069
    %v7502 = vpack.c.b16 %v7078, %v7070
    %v7503 = vpack.c.b16 %v7079, %v7071
    %v7504 = vpack.c.b16 %v7080, %v7072
    %v7505 = vpack.c.b16 %v7081, %v7073
    %v7506 = vpack.c.b16 %v7082, %v7074
    %v7507 = vpack.c.b16 %v7083, %v7075
    %v7508 = vpack.c.b16 %v7084, %v7076
    %v7509 = vpack.c.b16 %v7093, %v7085
    %v7510 = vpack.c.b16 %v7094, %v7086
    %v7511 = vpack.c.b16 %v7095, %v7087
    %v7512 = vpack.c.b16 %v7096, %v7088
    %v7513 = vpack.c.b16 %v7097, %v7089
    %v7514 = vpack.c.b16 %v7098, %v7090
    %v7515 = vpack.c.b16 %v7099, %v7091
    %v7516 = vpack.c.b16 %v7100, %v7092
    %v7517 = vpack.c.b16 %v7109, %v7101
    %v7518 = vpack.c.b16 %v7110, %v7102
    %v7519 = vpack.c.b16 %v7111, %v7103
    %v7520 = vpack.c.b16 %v7112, %v7104
    %v7521 = vpack.c.b16 %v7113, %v7105
    %v7522 = vpack.c.b16 %v7114, %v7106
    %v7523 = vpack.c.b16 %v7115, %v7107
    %v7524 = vpack.c.b16 %v7116, %v7108
    %v7525 = vpack.c.b16 %v7125, %v7117
    %v7526 = vpack.c.b16 %v7126, %v7118
    %v7527 = vpack.c.b16 %v7127, %v7119
    %v7528 = vpack.c.b16 %v7128, %v7120
    %v7529 = vpack.c.b16 %v7129, %v7121
    %v7530 = vpack.c.b16 %v7130, %v7122
    %v7531 = vpack.c.b16 %v7131, %v7123
    %v7532 = vpack.c.b16 %v7132, %v7124
    %v7533 = vpack.c.b16 %v7141, %v7133
    %v7534 = vpack.c.b16 %v7142, %v7134
    %v7535 = vpack.c.b16 %v7143, %v7135
    %v7536 = vpack.c.b16 %v7144, %v7136
    %v7537 = vpack.c.b16 %v7145, %v7137
    %v7538 = vpack.c.b16 %v7146, %v7138
    %v7539 = vpack.c.b16 %v7147, %v7139
    %v7540 = vpack.c.b16 %v7148, %v7140
    %v7541 = vpack.c.b16 %v7157, %v7149
    %v7542 = vpack.c.b16 %v7158, %v7150
    %v7543 = vpack.c.b16 %v7159, %v7151
    %v7544 = vpack.c.b16 %v7160, %v7152
    %v7545 = vpack.c.b16 %v7161, %v7153
    %v7546 = vpack.c.b16 %v7162, %v7154
    %v7547 = vpack.c.b16 %v7163, %v7155
    %v7548 = vpack.c.b16 %v7164, %v7156
    %v7549 = vpack.c.b16 %v7173, %v7165
    %v7550 = vpack.c.b16 %v7174, %v7166
    %v7551 = vpack.c.b16 %v7175, %v7167
    %v7552 = vpack.c.b16 %v7176, %v7168
    %v7553 = vpack.c.b16 %v7177, %v7169
    %v7554 = vpack.c.b16 %v7178, %v7170
    %v7555 = vpack.c.b16 %v7179, %v7171
    %v7556 = vpack.c.b16 %v7180, %v7172
    %v7557 = vpack.c.b16 %v7189, %v7181
    %v7558 = vpack.c.b16 %v7190, %v7182
    %v7559 = vpack.c.b16 %v7191, %v7183
    %v7560 = vpack.c.b16 %v7192, %v7184
    %v7561 = vpack.c.b16 %v7193, %v7185
    %v7562 = vpack.c.b16 %v7194, %v7186
    %v7563 = vpack.c.b16 %v7195, %v7187
    %v7564 = vpack.c.b16 %v7196, %v7188
    %v7565 = vpack.c.b16 %v7205, %v7197
    %v7566 = vpack.c.b16 %v7206, %v7198
    %v7567 = vpack.c.b16 %v7207, %v7199
    %v7568 = vpack.c.b16 %v7208, %v7200
    %v7569 = vpack.c.b16 %v7209, %v7201
    %v7570 = vpack.c.b16 %v7210, %v7202
    %v7571 = vpack.c.b16 %v7211, %v7203
    %v7572 = vpack.c.b16 %v7212, %v7204
    %v7573 = vpack.c.b16 %v7221, %v7213
    %v7574 = vpack.c.b16 %v7222, %v7214
    %v7575 = vpack.c.b16 %v7223, %v7215
    %v7576 = vpack.c.b16 %v7224, %v7216
    %v7577 = vpack.c.b16 %v7225, %v7217
    %v7578 = vpack.c.b16 %v7226, %v7218
    %v7579 = vpack.c.b16 %v7227, %v7219
    %v7580 = vpack.c.b16 %v7228, %v7220
    %v7581 = vpack.c.b16 %v7237, %v7229
    %v7582 = vpack.c.b16 %v7238, %v7230
    %v7583 = vpack.c.b16 %v7239, %v7231
    %v7584 = vpack.c.b16 %v7240, %v7232
    %v7585 = vpack.c.b16 %v7241, %v7233
    %v7586 = vpack.c.b16 %v7242, %v7234
    %v7587 = vpack.c.b16 %v7243, %v7235
    %v7588 = vpack.c.b16 %v7244, %v7236
    %v7589 = vpack.c.b16 %v7253, %v7245
    %v7590 = vpack.c.b16 %v7254, %v7246
    %v7591 = vpack.c.b16 %v7255, %v7247
    %v7592 = vpack.c.b16 %v7256, %v7248
    %v7593 = vpack.c.b16 %v7257, %v7249
    %v7594 = vpack.c.b16 %v7258, %v7250
    %v7595 = vpack.c.b16 %v7259, %v7251
    %v7596 = vpack.c.b16 %v7260, %v7252
    %v7597 = vpack.c.b16 %v7269, %v7261
    %v7598 = vpack.c.b16 %v7270, %v7262
    %v7599 = vpack.c.b16 %v7271, %v7263
    %v7600 = vpack.c.b16 %v7272, %v7264
    %v7601 = vpack.c.b16 %v7273, %v7265
    %v7602 = vpack.c.b16 %v7274, %v7266
    %v7603 = vpack.c.b16 %v7275, %v7267
    %v7604 = vpack.c.b16 %v7276, %v7268
    %v7605 = vpack.c.b16 %v7285, %v7277
    %v7606 = vpack.c.b16 %v7286, %v7278
    %v7607 = vpack.c.b16 %v7287, %v7279
    %v7608 = vpack.c.b16 %v7288, %v7280
    %v7609 = vpack.c.b16 %v7289, %v7281
    %v7610 = vpack.c.b16 %v7290, %v7282
    %v7611 = vpack.c.b16 %v7291, %v7283
    %v7612 = vpack.c.b16 %v7292, %v7284
    %v7613 = vpack.c.b16 %v7301, %v7293
    %v7614 = vpack.c.b16 %v7302, %v7294
    %v7615 = vpack.c.b16 %v7303, %v7295
    %v7616 = vpack.c.b16 %v7304, %v7296
    %v7617 = vpack.c.b16 %v7305, %v7297
    %v7618 = vpack.c.b16 %v7306, %v7298
    %v7619 = vpack.c.b16 %v7307, %v7299
    %v7620 = vpack.c.b16 %v7308, %v7300
    %v7621 = vpack.c.b16 %v7317, %v7309
    %v7622 = vpack.c.b16 %v7318, %v7310
    %v7623 = vpack.c.b16 %v7319, %v7311
    %v7624 = vpack.c.b16 %v7320, %v7312
    %v7625 = vpack.c.b16 %v7321, %v7313
    %v7626 = vpack.c.b16 %v7322, %v7314
    %v7627 = vpack.c.b16 %v7323, %v7315
    %v7628 = vpack.c.b16 %v7324, %v7316
    %v7629 = vpack.c.b16 %v7333, %v7325
    %v7630 = vpack.c.b16 %v7334, %v7326
    %v7631 = vpack.c.b16 %v7335, %v7327
    %v7632 = vpack.c.b16 %v7336, %v7328
    %v7633 = vpack.c.b16 %v7337, %v7329
    %v7634 = vpack.c.b16 %v7338, %v7330
    %v7635 = vpack.c.b16 %v7339, %v7331
    %v7636 = vpack.c.b16 %v7340, %v7332
    %v7637 = vpack.c.b16 %v7349, %v7341
    %v7638 = vpack.c.b16 %v7350, %v7342
    %v7639 = vpack.c.b16 %v7351, %v7343
    %v7640 = vpack.c.b16 %v7352, %v7344
    %v7641 = vpack.c.b16 %v7353, %v7345
    %v7642 = vpack.c.b16 %v7354, %v7346
    %v7643 = vpack.c.b16 %v7355, %v7347
    %v7644 = vpack.c.b16 %v7356, %v7348
    %v7645 = vpack.c.b16 %v7365, %v7357
    %v7646 = vpack.c.b16 %v7366, %v7358
    %v7647 = vpack.c.b16 %v7367, %v7359
    %v7648 = vpack.c.b16 %v7368, %v7360
    %v7649 = vpack.c.b16 %v7369, %v7361
    %v7650 = vpack.c.b16 %v7370, %v7362
    %v7651 = vpack.c.b16 %v7371, %v7363
    %v7652 = vpack.c.b16 %v7372, %v7364
    %v7653 = vpack.c.b16 %v7381, %v7373
    %v7654 = vpack.c.b16 %v7382, %v7374
    %v7655 = vpack.c.b16 %v7383, %v7375
    %v7656 = vpack.c.b16 %v7384, %v7376
    %v7657 = vpack.c.b16 %v7385, %v7377
    %v7658 = vpack.c.b16 %v7386, %v7378
    %v7659 = vpack.c.b16 %v7387, %v7379
    %v7660 = vpack.c.b16 %v7388, %v7380
    %v7661 = vpack.c.b16 %v7397, %v7389
    %v7662 = vpack.c.b16 %v7398, %v7390
    %v7663 = vpack.c.b16 %v7399, %v7391
    %v7664 = vpack.c.b16 %v7400, %v7392
    %v7665 = vpack.c.b16 %v7401, %v7393
    %v7666 = vpack.c.b16 %v7402, %v7394
    %v7667 = vpack.c.b16 %v7403, %v7395
    %v7668 = vpack.c.b16 %v7404, %v7396
    %v7669 = vpack.c.b16 %v7413, %v7405
    %v7670 = vpack.c.b16 %v7414, %v7406
    %v7671 = vpack.c.b16 %v7415, %v7407
    %v7672 = vpack.c.b16 %v7416, %v7408
    %v7673 = vpack.c.b16 %v7417, %v7409
    %v7674 = vpack.c.b16 %v7418, %v7410
    %v7675 = vpack.c.b16 %v7419, %v7411
    %v7676 = vpack.c.b16 %v7420, %v7412
    %7933 = vmatprep.subr.bf16.mxu0 %v7422
    %7934 = vmatpush1.bf16.msra.mxu0 %v7421
    %7935 = vmatprep.subr.bf16.mxu0 %v7430
    %7936 = vmatpush1.bf16.msra.mxu0 %v7429
    %7937 = vmatprep.subr.bf16.mxu0 %v7438
    %7938 = vmatpush1.bf16.msra.mxu0 %v7437
    %7939 = vmatprep.subr.bf16.mxu0 %v7446
    %7940 = vmatpush1.bf16.msra.mxu0 %v7445
    %7941 = vmatprep.subr.bf16.mxu0 %v7454
    %7942 = vmatpush1.bf16.msra.mxu0 %v7453
    %7943 = vmatprep.subr.bf16.mxu0 %v7462
    %7944 = vmatpush1.bf16.msra.mxu0 %v7461
    %7945 = vmatprep.subr.bf16.mxu0 %v7470
    %7946 = vmatpush1.bf16.msra.mxu0 %v7469
    %7947 = vmatprep.subr.bf16.mxu0 %v7478
    %7948 = vmatpush1.bf16.msra.mxu0 %v7477
    %7949 = vmatprep.subr.bf16.mxu0 %v7486
    %7950 = vmatpush1.bf16.msra.mxu0 %v7485
    %7951 = vmatprep.subr.bf16.mxu0 %v7494
    %7952 = vmatpush1.bf16.msra.mxu0 %v7493
    %7953 = vmatprep.subr.bf16.mxu0 %v7502
    %7954 = vmatpush1.bf16.msra.mxu0 %v7501
    %7955 = vmatprep.subr.bf16.mxu0 %v7510
    %7956 = vmatpush1.bf16.msra.mxu0 %v7509
    %7957 = vmatprep.subr.bf16.mxu0 %v7518
    %7958 = vmatpush1.bf16.msra.mxu0 %v7517
    %7959 = vmatprep.subr.bf16.mxu0 %v7526
    %7960 = vmatpush1.bf16.msra.mxu0 %v7525
    %7961 = vmatprep.subr.bf16.mxu0 %v7534
    %7962 = vmatpush1.bf16.msra.mxu0 %v7533
    %7963 = vmatprep.subr.bf16.mxu0 %v7542
    %7964 = vmatpush1.bf16.msra.mxu0 %v7541
    %7965 = vmatprep.mubr.bf16.mxu0 %v6352
    %7966 = vmatmul.mubr.bf16.gmra.mrb[0].mxu0 %v6351
    %v7967 = vpop.f32.mrb[0].mxu0
    %v7968 = vadd.f32 %v6616, %v7967
    %v7969 = vpop.f32.mrb[0].mxu0
    %v7970 = vadd.f32 %v6620, %v7969
    %v7971 = vpop.f32.mrb[0].mxu0
    %v7972 = vpop.f32.mrb[0].mxu0
    %7973 = vdwg.mxu0
    %7974 = vmatprep.subr.bf16.mxu0 %v7550
    %7975 = vmatpush1.bf16.msra.mxu0 %v7549
    %7976 = vmatprep.subr.bf16.mxu0 %v7558
    %7977 = vmatpush1.bf16.msra.mxu0 %v7557
    %7978 = vmatprep.subr.bf16.mxu0 %v7566
    %7979 = vmatpush1.bf16.msra.mxu0 %v7565
    %7980 = vmatprep.subr.bf16.mxu0 %v7574
    %7981 = vmatpush1.bf16.msra.mxu0 %v7573
    %7982 = vmatprep.subr.bf16.mxu0 %v7582
    %7983 = vmatpush1.bf16.msra.mxu0 %v7581
    %7984 = vmatprep.subr.bf16.mxu0 %v7590
    %7985 = vmatpush1.bf16.msra.mxu0 %v7589
    %7986 = vmatprep.subr.bf16.mxu0 %v7598
    %7987 = vmatpush1.bf16.msra.mxu0 %v7597
    %7988 = vmatprep.subr.bf16.mxu0 %v7606
    %7989 = vmatpush1.bf16.msra.mxu0 %v7605
    %7990 = vmatprep.subr.bf16.mxu0 %v7614
    %7991 = vmatpush1.bf16.msra.mxu0 %v7613
    %7992 = vmatprep.subr.bf16.mxu0 %v7622
    %7993 = vmatpush1.bf16.msra.mxu0 %v7621
    %7994 = vmatprep.subr.bf16.mxu0 %v7630
    %7995 = vmatpush1.bf16.msra.mxu0 %v7629
    %7996 = vmatprep.subr.bf16.mxu0 %v7638
    %7997 = vmatpush1.bf16.msra.mxu0 %v7637
    %7998 = vmatprep.subr.bf16.mxu0 %v7646
    %7999 = vmatpush1.bf16.msra.mxu0 %v7645
    %8000 = vmatprep.subr.bf16.mxu0 %v7654
    %8001 = vmatpush1.bf16.msra.mxu0 %v7653
    %8002 = vmatprep.subr.bf16.mxu0 %v7662
    %8003 = vmatpush1.bf16.msra.mxu0 %v7661
    %8004 = vmatprep.subr.bf16.mxu0 %v7670
    %8005 = vmatpush1.bf16.msra.mxu0 %v7669
    %8006 = vmatprep.mubr.bf16.mxu0 %v6354
    %8007 = vmatmul.mubr.bf16.gmra.mrb[0].mxu0 %v6353
    %v8008 = vpop.f32.mrb[0].mxu0
    %v8009 = vadd.f32 %v7968, %v8008
    %v8010 = vpop.f32.mrb[0].mxu0
    %v8011 = vadd.f32 %v7970, %v8010
    %v8012 = vpop.f32.mrb[0].mxu0
    %v8013 = vpop.f32.mrb[0].mxu0
    %8014 = vdwg.mxu0
    %8015 = vmatprep.subr.bf16.mxu0 %v7424
    %8016 = vmatpush1.bf16.msra.mxu0 %v7423
    %8017 = vmatprep.subr.bf16.mxu0 %v7432
    %8018 = vmatpush1.bf16.msra.mxu0 %v7431
    %8019 = vmatprep.subr.bf16.mxu0 %v7440
    %8020 = vmatpush1.bf16.msra.mxu0 %v7439
    %8021 = vmatprep.subr.bf16.mxu0 %v7448
    %8022 = vmatpush1.bf16.msra.mxu0 %v7447
    %8023 = vmatprep.subr.bf16.mxu0 %v7456
    %8024 = vmatpush1.bf16.msra.mxu0 %v7455
    %8025 = vmatprep.subr.bf16.mxu0 %v7464
    %8026 = vmatpush1.bf16.msra.mxu0 %v7463
    %8027 = vmatprep.subr.bf16.mxu0 %v7472
    %8028 = vmatpush1.bf16.msra.mxu0 %v7471
    %8029 = vmatprep.subr.bf16.mxu0 %v7480
    %8030 = vmatpush1.bf16.msra.mxu0 %v7479
    %8031 = vmatprep.subr.bf16.mxu0 %v7488
    %8032 = vmatpush1.bf16.msra.mxu0 %v7487
    %8033 = vmatprep.subr.bf16.mxu0 %v7496
    %8034 = vmatpush1.bf16.msra.mxu0 %v7495
    %8035 = vmatprep.subr.bf16.mxu0 %v7504
    %8036 = vmatpush1.bf16.msra.mxu0 %v7503
    %8037 = vmatprep.subr.bf16.mxu0 %v7512
    %8038 = vmatpush1.bf16.msra.mxu0 %v7511
    %8039 = vmatprep.subr.bf16.mxu0 %v7520
    %8040 = vmatpush1.bf16.msra.mxu0 %v7519
    %8041 = vmatprep.subr.bf16.mxu0 %v7528
    %8042 = vmatpush1.bf16.msra.mxu0 %v7527
    %8043 = vmatprep.subr.bf16.mxu0 %v7536
    %8044 = vmatpush1.bf16.msra.mxu0 %v7535
    %8045 = vmatprep.subr.bf16.mxu0 %v7544
    %8046 = vmatpush1.bf16.msra.mxu0 %v7543
    %8047 = vmatprep.mubr.bf16.mxu0 %v6352
    %8048 = vmatmul.mubr.bf16.gmra.mrb[0].mxu0 %v6351
    %v8049 = vpop.f32.mrb[0].mxu0
    %v8050 = vadd.f32 %v6624, %v8049
    %v8051 = vpop.f32.mrb[0].mxu0
    %v8052 = vadd.f32 %v6628, %v8051
    %v8053 = vpop.f32.mrb[0].mxu0
    %v8054 = vpop.f32.mrb[0].mxu0
    %8055 = vdwg.mxu0
    %8056 = vmatprep.subr.bf16.mxu0 %v7552
    %8057 = vmatpush1.bf16.msra.mxu0 %v7551
    %8058 = vmatprep.subr.bf16.mxu0 %v7560
    %8059 = vmatpush1.bf16.msra.mxu0 %v7559
    %8060 = vmatprep.subr.bf16.mxu0 %v7568
    %8061 = vmatpush1.bf16.msra.mxu0 %v7567
    %8062 = vmatprep.subr.bf16.mxu0 %v7576
    %8063 = vmatpush1.bf16.msra.mxu0 %v7575
    %8064 = vmatprep.subr.bf16.mxu0 %v7584
    %8065 = vmatpush1.bf16.msra.mxu0 %v7583
    %8066 = vmatprep.subr.bf16.mxu0 %v7592
    %8067 = vmatpush1.bf16.msra.mxu0 %v7591
    %8068 = vmatprep.subr.bf16.mxu0 %v7600
    %8069 = vmatpush1.bf16.msra.mxu0 %v7599
    %8070 = vmatprep.subr.bf16.mxu0 %v7608
    %8071 = vmatpush1.bf16.msra.mxu0 %v7607
    %8072 = vmatprep.subr.bf16.mxu0 %v7616
    %8073 = vmatpush1.bf16.msra.mxu0 %v7615
    %8074 = vmatprep.subr.bf16.mxu0 %v7624
    %8075 = vmatpush1.bf16.msra.mxu0 %v7623
    %8076 = vmatprep.subr.bf16.mxu0 %v7632
    %8077 = vmatpush1.bf16.msra.mxu0 %v7631
    %8078 = vmatprep.subr.bf16.mxu0 %v7640
    %8079 = vmatpush1.bf16.msra.mxu0 %v7639
    %8080 = vmatprep.subr.bf16.mxu0 %v7648
    %8081 = vmatpush1.bf16.msra.mxu0 %v7647
    %8082 = vmatprep.subr.bf16.mxu0 %v7656
    %8083 = vmatpush1.bf16.msra.mxu0 %v7655
    %8084 = vmatprep.subr.bf16.mxu0 %v7664
    %8085 = vmatpush1.bf16.msra.mxu0 %v7663
    %8086 = vmatprep.subr.bf16.mxu0 %v7672
    %8087 = vmatpush1.bf16.msra.mxu0 %v7671
    %8088 = vmatprep.mubr.bf16.mxu0 %v6354
    %8089 = vmatmul.mubr.bf16.gmra.mrb[0].mxu0 %v6353
    %v8090 = vpop.f32.mrb[0].mxu0
    %v8091 = vadd.f32 %v8050, %v8090
    %v8092 = vpop.f32.mrb[0].mxu0
    %v8093 = vadd.f32 %v8052, %v8092
    %v8094 = vpop.f32.mrb[0].mxu0
    %v8095 = vpop.f32.mrb[0].mxu0
    %8096 = vdwg.mxu0
    %8097 = vmatprep.subr.bf16.mxu0 %v7426
    %8098 = vmatpush1.bf16.msra.mxu0 %v7425
    %8099 = vmatprep.subr.bf16.mxu0 %v7434
    %8100 = vmatpush1.bf16.msra.mxu0 %v7433
    %8101 = vmatprep.subr.bf16.mxu0 %v7442
    %8102 = vmatpush1.bf16.msra.mxu0 %v7441
    %8103 = vmatprep.subr.bf16.mxu0 %v7450
    %8104 = vmatpush1.bf16.msra.mxu0 %v7449
    %8105 = vmatprep.subr.bf16.mxu0 %v7458
    %8106 = vmatpush1.bf16.msra.mxu0 %v7457
    %8107 = vmatprep.subr.bf16.mxu0 %v7466
    %8108 = vmatpush1.bf16.msra.mxu0 %v7465
    %8109 = vmatprep.subr.bf16.mxu0 %v7474
    %8110 = vmatpush1.bf16.msra.mxu0 %v7473
    %8111 = vmatprep.subr.bf16.mxu0 %v7482
    %8112 = vmatpush1.bf16.msra.mxu0 %v7481
    %8113 = vmatprep.subr.bf16.mxu0 %v7490
    %8114 = vmatpush1.bf16.msra.mxu0 %v7489
    %8115 = vmatprep.subr.bf16.mxu0 %v7498
    %8116 = vmatpush1.bf16.msra.mxu0 %v7497
    %8117 = vmatprep.subr.bf16.mxu0 %v7506
    %8118 = vmatpush1.bf16.msra.mxu0 %v7505
    %8119 = vmatprep.subr.bf16.mxu0 %v7514
    %8120 = vmatpush1.bf16.msra.mxu0 %v7513
    %8121 = vmatprep.subr.bf16.mxu0 %v7522
    %8122 = vmatpush1.bf16.msra.mxu0 %v7521
    %8123 = vmatprep.subr.bf16.mxu0 %v7530
    %8124 = vmatpush1.bf16.msra.mxu0 %v7529
    %8125 = vmatprep.subr.bf16.mxu0 %v7538
    %8126 = vmatpush1.bf16.msra.mxu0 %v7537
    %8127 = vmatprep.subr.bf16.mxu0 %v7546
    %8128 = vmatpush1.bf16.msra.mxu0 %v7545
    %8129 = vmatprep.mubr.bf16.mxu0 %v6352
    %8130 = vmatmul.mubr.bf16.gmra.mrb[0].mxu0 %v6351
    %v8131 = vpop.f32.mrb[0].mxu0
    %v8132 = vadd.f32 %v6632, %v8131
    %v8133 = vpop.f32.mrb[0].mxu0
    %v8134 = vadd.f32 %v6636, %v8133
    %v8135 = vpop.f32.mrb[0].mxu0
    %v8136 = vpop.f32.mrb[0].mxu0
    %8137 = vdwg.mxu0
    %8138 = vmatprep.subr.bf16.mxu0 %v7554
    %8139 = vmatpush1.bf16.msra.mxu0 %v7553
    %8140 = vmatprep.subr.bf16.mxu0 %v7562
    %8141 = vmatpush1.bf16.msra.mxu0 %v7561
    %8142 = vmatprep.subr.bf16.mxu0 %v7570
    %8143 = vmatpush1.bf16.msra.mxu0 %v7569
    %8144 = vmatprep.subr.bf16.mxu0 %v7578
    %8145 = vmatpush1.bf16.msra.mxu0 %v7577
    %8146 = vmatprep.subr.bf16.mxu0 %v7586
    %8147 = vmatpush1.bf16.msra.mxu0 %v7585
    %8148 = vmatprep.subr.bf16.mxu0 %v7594
    %8149 = vmatpush1.bf16.msra.mxu0 %v7593
    %8150 = vmatprep.subr.bf16.mxu0 %v7602
    %8151 = vmatpush1.bf16.msra.mxu0 %v7601
    %8152 = vmatprep.subr.bf16.mxu0 %v7610
    %8153 = vmatpush1.bf16.msra.mxu0 %v7609
    %8154 = vmatprep.subr.bf16.mxu0 %v7618
    %8155 = vmatpush1.bf16.msra.mxu0 %v7617
    %8156 = vmatprep.subr.bf16.mxu0 %v7626
    %8157 = vmatpush1.bf16.msra.mxu0 %v7625
    %8158 = vmatprep.subr.bf16.mxu0 %v7634
    %8159 = vmatpush1.bf16.msra.mxu0 %v7633
    %8160 = vmatprep.subr.bf16.mxu0 %v7642
    %8161 = vmatpush1.bf16.msra.mxu0 %v7641
    %8162 = vmatprep.subr.bf16.mxu0 %v7650
    %8163 = vmatpush1.bf16.msra.mxu0 %v7649
    %8164 = vmatprep.subr.bf16.mxu0 %v7658
    %8165 = vmatpush1.bf16.msra.mxu0 %v7657
    %8166 = vmatprep.subr.bf16.mxu0 %v7666
    %8167 = vmatpush1.bf16.msra.mxu0 %v7665
    %8168 = vmatprep.subr.bf16.mxu0 %v7674
    %8169 = vmatpush1.bf16.msra.mxu0 %v7673
    %8170 = vmatprep.mubr.bf16.mxu0 %v6354
    %8171 = vmatmul.mubr.bf16.gmra.mrb[0].mxu0 %v6353
    %v8172 = vpop.f32.mrb[0].mxu0
    %v8173 = vadd.f32 %v8132, %v8172
    %v8174 = vpop.f32.mrb[0].mxu0
    %v8175 = vadd.f32 %v8134, %v8174
    %v8176 = vpop.f32.mrb[0].mxu0
    %v8177 = vpop.f32.mrb[0].mxu0
    %8178 = vdwg.mxu0
    %8179 = vmatprep.subr.bf16.mxu0 %v7428
    %8180 = vmatpush1.bf16.msra.mxu0 %v7427
    %8181 = vmatprep.subr.bf16.mxu0 %v7436
    %8182 = vmatpush1.bf16.msra.mxu0 %v7435
    %8183 = vmatprep.subr.bf16.mxu0 %v7444
    %8184 = vmatpush1.bf16.msra.mxu0 %v7443
    %8185 = vmatprep.subr.bf16.mxu0 %v7452
    %8186 = vmatpush1.bf16.msra.mxu0 %v7451
    %8187 = vmatprep.subr.bf16.mxu0 %v7460
    %8188 = vmatpush1.bf16.msra.mxu0 %v7459
    %8189 = vmatprep.subr.bf16.mxu0 %v7468
    %8190 = vmatpush1.bf16.msra.mxu0 %v7467
    %8191 = vmatprep.subr.bf16.mxu0 %v7476
    %8192 = vmatpush1.bf16.msra.mxu0 %v7475
    %8193 = vmatprep.subr.bf16.mxu0 %v7484
    %8194 = vmatpush1.bf16.msra.mxu0 %v7483
    %8195 = vmatprep.subr.bf16.mxu0 %v7492
    %8196 = vmatpush1.bf16.msra.mxu0 %v7491
    %8197 = vmatprep.subr.bf16.mxu0 %v7500
    %8198 = vmatpush1.bf16.msra.mxu0 %v7499
    %8199 = vmatprep.subr.bf16.mxu0 %v7508
    %8200 = vmatpush1.bf16.msra.mxu0 %v7507
    %8201 = vmatprep.subr.bf16.mxu0 %v7516
    %8202 = vmatpush1.bf16.msra.mxu0 %v7515
    %8203 = vmatprep.subr.bf16.mxu0 %v7524
    %8204 = vmatpush1.bf16.msra.mxu0 %v7523
    %8205 = vmatprep.subr.bf16.mxu0 %v7532
    %8206 = vmatpush1.bf16.msra.mxu0 %v7531
    %8207 = vmatprep.subr.bf16.mxu0 %v7540
    %8208 = vmatpush1.bf16.msra.mxu0 %v7539
    %8209 = vmatprep.subr.bf16.mxu0 %v7548
    %8210 = vmatpush1.bf16.msra.mxu0 %v7547
    %8211 = vmatprep.mubr.bf16.mxu0 %v6352
    %8212 = vmatmul.mubr.bf16.gmra.mrb[0].mxu0 %v6351
    %v8213 = vpop.f32.mrb[0].mxu0
    %v8214 = vadd.f32 %v6640, %v8213
    %v8215 = vpop.f32.mrb[0].mxu0
    %v8216 = vadd.f32 %v6644, %v8215
    %v8217 = vpop.f32.mrb[0].mxu0
    %v8218 = vpop.f32.mrb[0].mxu0
    %8219 = vdwg.mxu0
    %8220 = vmatprep.subr.bf16.mxu0 %v7556
    %8221 = vmatpush1.bf16.msra.mxu0 %v7555
    %8222 = vmatprep.subr.bf16.mxu0 %v7564
    %8223 = vmatpush1.bf16.msra.mxu0 %v7563
    %8224 = vmatprep.subr.bf16.mxu0 %v7572
    %8225 = vmatpush1.bf16.msra.mxu0 %v7571
    %8226 = vmatprep.subr.bf16.mxu0 %v7580
    %8227 = vmatpush1.bf16.msra.mxu0 %v7579
    %8228 = vmatprep.subr.bf16.mxu0 %v7588
    %8229 = vmatpush1.bf16.msra.mxu0 %v7587
    %8230 = vmatprep.subr.bf16.mxu0 %v7596
    %8231 = vmatpush1.bf16.msra.mxu0 %v7595
    %8232 = vmatprep.subr.bf16.mxu0 %v7604
    %8233 = vmatpush1.bf16.msra.mxu0 %v7603
    %8234 = vmatprep.subr.bf16.mxu0 %v7612
    %8235 = vmatpush1.bf16.msra.mxu0 %v7611
    %8236 = vmatprep.subr.bf16.mxu0 %v7620
    %8237 = vmatpush1.bf16.msra.mxu0 %v7619
    %8238 = vmatprep.subr.bf16.mxu0 %v7628
    %8239 = vmatpush1.bf16.msra.mxu0 %v7627
    %8240 = vmatprep.subr.bf16.mxu0 %v7636
    %8241 = vmatpush1.bf16.msra.mxu0 %v7635
    %8242 = vmatprep.subr.bf16.mxu0 %v7644
    %8243 = vmatpush1.bf16.msra.mxu0 %v7643
    %8244 = vmatprep.subr.bf16.mxu0 %v7652
    %8245 = vmatpush1.bf16.msra.mxu0 %v7651
    %8246 = vmatprep.subr.bf16.mxu0 %v7660
    %8247 = vmatpush1.bf16.msra.mxu0 %v7659
    %8248 = vmatprep.subr.bf16.mxu0 %v7668
    %8249 = vmatpush1.bf16.msra.mxu0 %v7667
    %8250 = vmatprep.subr.bf16.mxu0 %v7676
    %8251 = vmatpush1.bf16.msra.mxu0 %v7675
    %8252 = vmatprep.mubr.bf16.mxu0 %v6354
    %8253 = vmatmul.mubr.bf16.gmra.mrb[0].mxu0 %v6353
    %v8254 = vpop.f32.mrb[0].mxu0
    %v8255 = vadd.f32 %v8214, %v8254
    %v8256 = vpop.f32.mrb[0].mxu0
    %v8257 = vadd.f32 %v8216, %v8256
    %v8258 = vpop.f32.mrb[0].mxu0
    %v8259 = vpop.f32.mrb[0].mxu0
    %8260 = vdwg.mxu0
    %v8261 = vmax.f32 %v8009, 0.0
    %v8262 = vmax.f32 %v8011, 0.0
    %v8263 = vmax.f32 %v8091, 0.0
    %v8264 = vmax.f32 %v8093, 0.0
    %v8265 = vmax.f32 %v8173, 0.0
    %v8266 = vmax.f32 %v8175, 0.0
    %v8267 = vmax.f32 %v8255, 0.0
    %v8268 = vmax.f32 %v8257, 0.0
    %v8269 = vpack.c.bf16 %v8261, %v8261
    %v8270 = vpack.c.bf16 %v8262, %v8262
    %v8271 = vpack.c.bf16 %v8263, %v8263
    %v8272 = vpack.c.bf16 %v8264, %v8264
    %v8273 = vpack.c.bf16 %v8265, %v8265
    %v8274 = vpack.c.bf16 %v8266, %v8266
    %v8275 = vpack.c.bf16 %v8267, %v8267
    %v8276 = vpack.c.bf16 %v8268, %v8268
    %v8277 = vld [vmem:[#allocation12] sm:$0xf]
    %v8278 = vld [vmem:[#allocation12 + $0x4] sm:$0xf]
    %v8279 = vld [vmem:[#allocation12 + $0x8] sm:$0xf]
    %v8280 = vld [vmem:[#allocation12 + $0xc] sm:$0xf]
    %v8281 = vld [vmem:[#allocation12 + $0x10] sm:$0xf]
    %v8282 = vld [vmem:[#allocation12 + $0x14] sm:$0xf]
    %v8283 = vld [vmem:[#allocation12 + $0x18] sm:$0xf]
    %v8284 = vld [vmem:[#allocation12 + $0x1c] sm:$0xf]
    %v8285 = vld [vmem:[#allocation12 + $0x20] sm:$0xf]
    %v8286 = vld [vmem:[#allocation12 + $0x24] sm:$0xf]
    %v8287 = vld [vmem:[#allocation12 + $0x28] sm:$0xf]
    %v8288 = vld [vmem:[#allocation12 + $0x2c] sm:$0xf]
    %v8289 = vld [vmem:[#allocation12 + $0x30] sm:$0xf]
    %v8290 = vld [vmem:[#allocation12 + $0x34] sm:$0xf]
    %v8291 = vld [vmem:[#allocation12 + $0x38] sm:$0xf]
    %v8292 = vld [vmem:[#allocation12 + $0x3c] sm:$0xf]
    %v8293 = vld [vmem:[#allocation12 + $0x40] sm:$0xf]
    %v8294 = vld [vmem:[#allocation12 + $0x44] sm:$0xf]
    %v8295 = vld [vmem:[#allocation12 + $0x48] sm:$0xf]
    %v8296 = vld [vmem:[#allocation12 + $0x4c] sm:$0xf]
    %v8297 = vld [vmem:[#allocation12 + $0x50] sm:$0xf]
    %v8298 = vld [vmem:[#allocation12 + $0x54] sm:$0xf]
    %v8299 = vld [vmem:[#allocation12 + $0x58] sm:$0xf]
    %v8300 = vld [vmem:[#allocation12 + $0x5c] sm:$0xf]
    %v8301 = vld [vmem:[#allocation12 + $0x60] sm:$0xf]
    %v8302 = vld [vmem:[#allocation12 + $0x64] sm:$0xf]
    %v8303 = vld [vmem:[#allocation12 + $0x68] sm:$0xf]
    %v8304 = vld [vmem:[#allocation12 + $0x6c] sm:$0xf]
    %v8305 = vld [vmem:[#allocation12 + $0x70] sm:$0xf]
    %v8306 = vld [vmem:[#allocation12 + $0x74] sm:$0xf]
    %v8307 = vld [vmem:[#allocation12 + $0x78] sm:$0xf]
    %v8308 = vld [vmem:[#allocation12 + $0x7c] sm:$0xf]
    %v8309 = vld [vmem:[#allocation12 + $0x80] sm:$0xf]
    %v8310 = vld [vmem:[#allocation12 + $0x84] sm:$0xf]
    %v8311 = vld [vmem:[#allocation12 + $0x88] sm:$0xf]
    %v8312 = vld [vmem:[#allocation12 + $0x8c] sm:$0xf]
    %v8313 = vld [vmem:[#allocation12 + $0x90] sm:$0xf]
    %v8314 = vld [vmem:[#allocation12 + $0x94] sm:$0xf]
    %v8315 = vld [vmem:[#allocation12 + $0x98] sm:$0xf]
    %v8316 = vld [vmem:[#allocation12 + $0x9c] sm:$0xf]
    %v8317 = vld [vmem:[#allocation12 + $0xa0] sm:$0xf]
    %v8318 = vld [vmem:[#allocation12 + $0xa4] sm:$0xf]
    %v8319 = vld [vmem:[#allocation12 + $0xa8] sm:$0xf]
    %v8320 = vld [vmem:[#allocation12 + $0xac] sm:$0xf]
    %v8321 = vld [vmem:[#allocation12 + $0xb0] sm:$0xf]
    %v8322 = vld [vmem:[#allocation12 + $0xb4] sm:$0xf]
    %v8323 = vld [vmem:[#allocation12 + $0xb8] sm:$0xf]
    %v8324 = vld [vmem:[#allocation12 + $0xbc] sm:$0xf]
    %v8325 = vld [vmem:[#allocation12 + $0xc0] sm:$0xf]
    %v8326 = vld [vmem:[#allocation12 + $0xc4] sm:$0xf]
    %v8327 = vld [vmem:[#allocation12 + $0xc8] sm:$0xf]
    %v8328 = vld [vmem:[#allocation12 + $0xcc] sm:$0xf]
    %v8329 = vld [vmem:[#allocation12 + $0xd0] sm:$0xf]
    %v8330 = vld [vmem:[#allocation12 + $0xd4] sm:$0xf]
    %v8331 = vld [vmem:[#allocation12 + $0xd8] sm:$0xf]
    %v8332 = vld [vmem:[#allocation12 + $0xdc] sm:$0xf]
    %v8333 = vld [vmem:[#allocation12 + $0xe0] sm:$0xf]
    %v8334 = vld [vmem:[#allocation12 + $0xe4] sm:$0xf]
    %v8335 = vld [vmem:[#allocation12 + $0xe8] sm:$0xf]
    %v8336 = vld [vmem:[#allocation12 + $0xec] sm:$0xf]
    %v8337 = vld [vmem:[#allocation12 + $0xf0] sm:$0xf]
    %v8338 = vld [vmem:[#allocation12 + $0xf4] sm:$0xf]
    %v8339 = vld [vmem:[#allocation12 + $0xf8] sm:$0xf]
    %v8340 = vld [vmem:[#allocation12 + $0xfc] sm:$0xf]
    %v8341 = vld [vmem:[#allocation12 + $0x100] sm:$0xf]
    %v8342 = vld [vmem:[#allocation12 + $0x104] sm:$0xf]
    %v8343 = vld [vmem:[#allocation12 + $0x108] sm:$0xf]
    %v8344 = vld [vmem:[#allocation12 + $0x10c] sm:$0xf]
    %v8345 = vld [vmem:[#allocation12 + $0x110] sm:$0xf]
    %v8346 = vld [vmem:[#allocation12 + $0x114] sm:$0xf]
    %v8347 = vld [vmem:[#allocation12 + $0x118] sm:$0xf]
    %v8348 = vld [vmem:[#allocation12 + $0x11c] sm:$0xf]
    %v8349 = vld [vmem:[#allocation12 + $0x120] sm:$0xf]
    %v8350 = vld [vmem:[#allocation12 + $0x124] sm:$0xf]
    %v8351 = vld [vmem:[#allocation12 + $0x128] sm:$0xf]
    %v8352 = vld [vmem:[#allocation12 + $0x12c] sm:$0xf]
    %v8353 = vld [vmem:[#allocation12 + $0x130] sm:$0xf]
    %v8354 = vld [vmem:[#allocation12 + $0x134] sm:$0xf]
    %v8355 = vld [vmem:[#allocation12 + $0x138] sm:$0xf]
    %v8356 = vld [vmem:[#allocation12 + $0x13c] sm:$0xf]
    %v8357 = vld [vmem:[#allocation12 + $0x140] sm:$0xf]
    %v8358 = vld [vmem:[#allocation12 + $0x144] sm:$0xf]
    %v8359 = vld [vmem:[#allocation12 + $0x148] sm:$0xf]
    %v8360 = vld [vmem:[#allocation12 + $0x14c] sm:$0xf]
    %v8361 = vld [vmem:[#allocation12 + $0x150] sm:$0xf]
    %v8362 = vld [vmem:[#allocation12 + $0x154] sm:$0xf]
    %v8363 = vld [vmem:[#allocation12 + $0x158] sm:$0xf]
    %v8364 = vld [vmem:[#allocation12 + $0x15c] sm:$0xf]
    %v8365 = vld [vmem:[#allocation12 + $0x160] sm:$0xf]
    %v8366 = vld [vmem:[#allocation12 + $0x164] sm:$0xf]
    %v8367 = vld [vmem:[#allocation12 + $0x168] sm:$0xf]
    %v8368 = vld [vmem:[#allocation12 + $0x16c] sm:$0xf]
    %v8369 = vld [vmem:[#allocation12 + $0x170] sm:$0xf]
    %v8370 = vld [vmem:[#allocation12 + $0x174] sm:$0xf]
    %v8371 = vld [vmem:[#allocation12 + $0x178] sm:$0xf]
    %v8372 = vld [vmem:[#allocation12 + $0x17c] sm:$0xf]
    %v8373 = vld [vmem:[#allocation12 + $0x180] sm:$0xf]
    %v8374 = vld [vmem:[#allocation12 + $0x184] sm:$0xf]
    %v8375 = vld [vmem:[#allocation12 + $0x188] sm:$0xf]
    %v8376 = vld [vmem:[#allocation12 + $0x18c] sm:$0xf]
    %v8377 = vld [vmem:[#allocation12 + $0x190] sm:$0xf]
    %v8378 = vld [vmem:[#allocation12 + $0x194] sm:$0xf]
    %v8379 = vld [vmem:[#allocation12 + $0x198] sm:$0xf]
    %v8380 = vld [vmem:[#allocation12 + $0x19c] sm:$0xf]
    %v8381 = vld [vmem:[#allocation12 + $0x1a0] sm:$0xf]
    %v8382 = vld [vmem:[#allocation12 + $0x1a4] sm:$0xf]
    %v8383 = vld [vmem:[#allocation12 + $0x1a8] sm:$0xf]
    %v8384 = vld [vmem:[#allocation12 + $0x1ac] sm:$0xf]
    %v8385 = vld [vmem:[#allocation12 + $0x1b0] sm:$0xf]
    %v8386 = vld [vmem:[#allocation12 + $0x1b4] sm:$0xf]
    %v8387 = vld [vmem:[#allocation12 + $0x1b8] sm:$0xf]
    %v8388 = vld [vmem:[#allocation12 + $0x1bc] sm:$0xf]
    %v8389 = vld [vmem:[#allocation12 + $0x1c0] sm:$0xf]
    %v8390 = vld [vmem:[#allocation12 + $0x1c4] sm:$0xf]
    %v8391 = vld [vmem:[#allocation12 + $0x1c8] sm:$0xf]
    %v8392 = vld [vmem:[#allocation12 + $0x1cc] sm:$0xf]
    %v8393 = vld [vmem:[#allocation12 + $0x1d0] sm:$0xf]
    %v8394 = vld [vmem:[#allocation12 + $0x1d4] sm:$0xf]
    %v8395 = vld [vmem:[#allocation12 + $0x1d8] sm:$0xf]
    %v8396 = vld [vmem:[#allocation12 + $0x1dc] sm:$0xf]
    %v8397 = vld [vmem:[#allocation12 + $0x1e0] sm:$0xf]
    %v8398 = vld [vmem:[#allocation12 + $0x1e4] sm:$0xf]
    %v8399 = vld [vmem:[#allocation12 + $0x1e8] sm:$0xf]
    %v8400 = vld [vmem:[#allocation12 + $0x1ec] sm:$0xf]
    %v8401 = vld [vmem:[#allocation12 + $0x1f0] sm:$0xf]
    %v8402 = vld [vmem:[#allocation12 + $0x1f4] sm:$0xf]
    %v8403 = vld [vmem:[#allocation12 + $0x1f8] sm:$0xf]
    %v8404 = vld [vmem:[#allocation12 + $0x1fc] sm:$0xf]
    %v8405 = vld [vmem:[%s14] sm:$0x1]
    %v8407 = vlaneseq
    %v8408 = vshrl.u32 %v8407, 7
    %v8409 = vsub.s32 0, %v8408
    %v8410 = vrot.slane %v8405, %v8409
    %v8540 = vunpack.c.l.b16 %v8277
    %v8541 = vunpack.c.l.b16 %v8278
    %v8542 = vunpack.c.l.b16 %v8279
    %v8543 = vunpack.c.l.b16 %v8280
    %v8544 = vunpack.c.l.b16 %v8281
    %v8545 = vunpack.c.l.b16 %v8282
    %v8546 = vunpack.c.l.b16 %v8283
    %v8547 = vunpack.c.l.b16 %v8284
    %v8548 = vunpack.c.l.b16 %v8285
    %v8549 = vunpack.c.l.b16 %v8286
    %v8550 = vunpack.c.l.b16 %v8287
    %v8551 = vunpack.c.l.b16 %v8288
    %v8552 = vunpack.c.l.b16 %v8289
    %v8553 = vunpack.c.l.b16 %v8290
    %v8554 = vunpack.c.l.b16 %v8291
    %v8555 = vunpack.c.l.b16 %v8292
    %v8556 = vunpack.c.l.b16 %v8293
    %v8557 = vunpack.c.l.b16 %v8294
    %v8558 = vunpack.c.l.b16 %v8295
    %v8559 = vunpack.c.l.b16 %v8296
    %v8560 = vunpack.c.l.b16 %v8297
    %v8561 = vunpack.c.l.b16 %v8298
    %v8562 = vunpack.c.l.b16 %v8299
    %v8563 = vunpack.c.l.b16 %v8300
    %v8564 = vunpack.c.l.b16 %v8301
    %v8565 = vunpack.c.l.b16 %v8302
    %v8566 = vunpack.c.l.b16 %v8303
    %v8567 = vunpack.c.l.b16 %v8304
    %v8568 = vunpack.c.l.b16 %v8305
    %v8569 = vunpack.c.l.b16 %v8306
    %v8570 = vunpack.c.l.b16 %v8307
    %v8571 = vunpack.c.l.b16 %v8308
    %v8572 = vunpack.c.l.b16 %v8309
    %v8573 = vunpack.c.l.b16 %v8310
    %v8574 = vunpack.c.l.b16 %v8311
    %v8575 = vunpack.c.l.b16 %v8312
    %v8576 = vunpack.c.l.b16 %v8313
    %v8577 = vunpack.c.l.b16 %v8314
    %v8578 = vunpack.c.l.b16 %v8315
    %v8579 = vunpack.c.l.b16 %v8316
    %v8580 = vunpack.c.l.b16 %v8317
    %v8581 = vunpack.c.l.b16 %v8318
    %v8582 = vunpack.c.l.b16 %v8319
    %v8583 = vunpack.c.l.b16 %v8320
    %v8584 = vunpack.c.l.b16 %v8321
    %v8585 = vunpack.c.l.b16 %v8322
    %v8586 = vunpack.c.l.b16 %v8323
    %v8587 = vunpack.c.l.b16 %v8324
    %v8588 = vunpack.c.l.b16 %v8325
    %v8589 = vunpack.c.l.b16 %v8326
    %v8590 = vunpack.c.l.b16 %v8327
    %v8591 = vunpack.c.l.b16 %v8328
    %v8592 = vunpack.c.l.b16 %v8329
    %v8593 = vunpack.c.l.b16 %v8330
    %v8594 = vunpack.c.l.b16 %v8331
    %v8595 = vunpack.c.l.b16 %v8332
    %v8596 = vunpack.c.l.b16 %v8333
    %v8597 = vunpack.c.l.b16 %v8334
    %v8598 = vunpack.c.l.b16 %v8335
    %v8599 = vunpack.c.l.b16 %v8336
    %v8600 = vunpack.c.l.b16 %v8337
    %v8601 = vunpack.c.l.b16 %v8338
    %v8602 = vunpack.c.l.b16 %v8339
    %v8603 = vunpack.c.l.b16 %v8340
    %v8604 = vunpack.c.l.b16 %v8341
    %v8605 = vunpack.c.l.b16 %v8342
    %v8606 = vunpack.c.l.b16 %v8343
    %v8607 = vunpack.c.l.b16 %v8344
    %v8608 = vunpack.c.l.b16 %v8345
    %v8609 = vunpack.c.l.b16 %v8346
    %v8610 = vunpack.c.l.b16 %v8347
    %v8611 = vunpack.c.l.b16 %v8348
    %v8612 = vunpack.c.l.b16 %v8349
    %v8613 = vunpack.c.l.b16 %v8350
    %v8614 = vunpack.c.l.b16 %v8351
    %v8615 = vunpack.c.l.b16 %v8352
    %v8616 = vunpack.c.l.b16 %v8353
    %v8617 = vunpack.c.l.b16 %v8354
    %v8618 = vunpack.c.l.b16 %v8355
    %v8619 = vunpack.c.l.b16 %v8356
    %v8620 = vunpack.c.l.b16 %v8357
    %v8621 = vunpack.c.l.b16 %v8358
    %v8622 = vunpack.c.l.b16 %v8359
    %v8623 = vunpack.c.l.b16 %v8360
    %v8624 = vunpack.c.l.b16 %v8361
    %v8625 = vunpack.c.l.b16 %v8362
    %v8626 = vunpack.c.l.b16 %v8363
    %v8627 = vunpack.c.l.b16 %v8364
    %v8628 = vunpack.c.l.b16 %v8365
    %v8629 = vunpack.c.l.b16 %v8366
    %v8630 = vunpack.c.l.b16 %v8367
    %v8631 = vunpack.c.l.b16 %v8368
    %v8632 = vunpack.c.l.b16 %v8369
    %v8633 = vunpack.c.l.b16 %v8370
    %v8634 = vunpack.c.l.b16 %v8371
    %v8635 = vunpack.c.l.b16 %v8372
    %v8636 = vunpack.c.l.b16 %v8373
    %v8637 = vunpack.c.l.b16 %v8374
    %v8638 = vunpack.c.l.b16 %v8375
    %v8639 = vunpack.c.l.b16 %v8376
    %v8640 = vunpack.c.l.b16 %v8377
    %v8641 = vunpack.c.l.b16 %v8378
    %v8642 = vunpack.c.l.b16 %v8379
    %v8643 = vunpack.c.l.b16 %v8380
    %v8644 = vunpack.c.l.b16 %v8381
    %v8645 = vunpack.c.l.b16 %v8382
    %v8646 = vunpack.c.l.b16 %v8383
    %v8647 = vunpack.c.l.b16 %v8384
    %v8648 = vunpack.c.l.b16 %v8385
    %v8649 = vunpack.c.l.b16 %v8386
    %v8650 = vunpack.c.l.b16 %v8387
    %v8651 = vunpack.c.l.b16 %v8388
    %v8652 = vunpack.c.l.b16 %v8389
    %v8653 = vunpack.c.l.b16 %v8390
    %v8654 = vunpack.c.l.b16 %v8391
    %v8655 = vunpack.c.l.b16 %v8392
    %v8656 = vunpack.c.l.b16 %v8393
    %v8657 = vunpack.c.l.b16 %v8394
    %v8658 = vunpack.c.l.b16 %v8395
    %v8659 = vunpack.c.l.b16 %v8396
    %v8660 = vunpack.c.l.b16 %v8397
    %v8661 = vunpack.c.l.b16 %v8398
    %v8662 = vunpack.c.l.b16 %v8399
    %v8663 = vunpack.c.l.b16 %v8400
    %v8664 = vunpack.c.l.b16 %v8401
    %v8665 = vunpack.c.l.b16 %v8402
    %v8666 = vunpack.c.l.b16 %v8403
    %v8667 = vunpack.c.l.b16 %v8404
    %v8668 = vpack.c.b16 %v8541, %v8540
    %v8669 = vpack.c.b16 %v8543, %v8542
    %v8670 = vpack.c.b16 %v8545, %v8544
    %v8671 = vpack.c.b16 %v8547, %v8546
    %v8672 = vpack.c.b16 %v8549, %v8548
    %v8673 = vpack.c.b16 %v8551, %v8550
    %v8674 = vpack.c.b16 %v8553, %v8552
    %v8675 = vpack.c.b16 %v8555, %v8554
    %v8676 = vpack.c.b16 %v8557, %v8556
    %v8677 = vpack.c.b16 %v8559, %v8558
    %v8678 = vpack.c.b16 %v8561, %v8560
    %v8679 = vpack.c.b16 %v8563, %v8562
    %v8680 = vpack.c.b16 %v8565, %v8564
    %v8681 = vpack.c.b16 %v8567, %v8566
    %v8682 = vpack.c.b16 %v8569, %v8568
    %v8683 = vpack.c.b16 %v8571, %v8570
    %v8684 = vpack.c.b16 %v8573, %v8572
    %v8685 = vpack.c.b16 %v8575, %v8574
    %v8686 = vpack.c.b16 %v8577, %v8576
    %v8687 = vpack.c.b16 %v8579, %v8578
    %v8688 = vpack.c.b16 %v8581, %v8580
    %v8689 = vpack.c.b16 %v8583, %v8582
    %v8690 = vpack.c.b16 %v8585, %v8584
    %v8691 = vpack.c.b16 %v8587, %v8586
    %v8692 = vpack.c.b16 %v8589, %v8588
    %v8693 = vpack.c.b16 %v8591, %v8590
    %v8694 = vpack.c.b16 %v8593, %v8592
    %v8695 = vpack.c.b16 %v8595, %v8594
    %v8696 = vpack.c.b16 %v8597, %v8596
    %v8697 = vpack.c.b16 %v8599, %v8598
    %v8698 = vpack.c.b16 %v8601, %v8600
    %v8699 = vpack.c.b16 %v8603, %v8602
    %v8700 = vpack.c.b16 %v8605, %v8604
    %v8701 = vpack.c.b16 %v8607, %v8606
    %v8702 = vpack.c.b16 %v8609, %v8608
    %v8703 = vpack.c.b16 %v8611, %v8610
    %v8704 = vpack.c.b16 %v8613, %v8612
    %v8705 = vpack.c.b16 %v8615, %v8614
    %v8706 = vpack.c.b16 %v8617, %v8616
    %v8707 = vpack.c.b16 %v8619, %v8618
    %v8708 = vpack.c.b16 %v8621, %v8620
    %v8709 = vpack.c.b16 %v8623, %v8622
    %v8710 = vpack.c.b16 %v8625, %v8624
    %v8711 = vpack.c.b16 %v8627, %v8626
    %v8712 = vpack.c.b16 %v8629, %v8628
    %v8713 = vpack.c.b16 %v8631, %v8630
    %v8714 = vpack.c.b16 %v8633, %v8632
    %v8715 = vpack.c.b16 %v8635, %v8634
    %v8716 = vpack.c.b16 %v8637, %v8636
    %v8717 = vpack.c.b16 %v8639, %v8638
    %v8718 = vpack.c.b16 %v8641, %v8640
    %v8719 = vpack.c.b16 %v8643, %v8642
    %v8720 = vpack.c.b16 %v8645, %v8644
    %v8721 = vpack.c.b16 %v8647, %v8646
    %v8722 = vpack.c.b16 %v8649, %v8648
    %v8723 = vpack.c.b16 %v8651, %v8650
    %v8724 = vpack.c.b16 %v8653, %v8652
    %v8725 = vpack.c.b16 %v8655, %v8654
    %v8726 = vpack.c.b16 %v8657, %v8656
    %v8727 = vpack.c.b16 %v8659, %v8658
    %v8728 = vpack.c.b16 %v8661, %v8660
    %v8729 = vpack.c.b16 %v8663, %v8662
    %v8730 = vpack.c.b16 %v8665, %v8664
    %v8731 = vpack.c.b16 %v8667, %v8666
    %8796 = vmatprep.subr.bf16.mxu0 0
    %8797 = vmatpush1.bf16.msra.mxu0 %v8668
    %8798 = vmatprep.subr.bf16.mxu0 0
    %8799 = vmatpush1.bf16.msra.mxu0 %v8669
    %8800 = vmatprep.subr.bf16.mxu0 0
    %8801 = vmatpush1.bf16.msra.mxu0 %v8670
    %8802 = vmatprep.subr.bf16.mxu0 0
    %8803 = vmatpush1.bf16.msra.mxu0 %v8671
    %8804 = vmatprep.subr.bf16.mxu0 0
    %8805 = vmatpush1.bf16.msra.mxu0 %v8672
    %8806 = vmatprep.subr.bf16.mxu0 0
    %8807 = vmatpush1.bf16.msra.mxu0 %v8673
    %8808 = vmatprep.subr.bf16.mxu0 0
    %8809 = vmatpush1.bf16.msra.mxu0 %v8674
    %8810 = vmatprep.subr.bf16.mxu0 0
    %8811 = vmatpush1.bf16.msra.mxu0 %v8675
    %8812 = vmatprep.subr.bf16.mxu0 0
    %8813 = vmatpush1.bf16.msra.mxu0 %v8676
    %8814 = vmatprep.subr.bf16.mxu0 0
    %8815 = vmatpush1.bf16.msra.mxu0 %v8677
    %8816 = vmatprep.subr.bf16.mxu0 0
    %8817 = vmatpush1.bf16.msra.mxu0 %v8678
    %8818 = vmatprep.subr.bf16.mxu0 0
    %8819 = vmatpush1.bf16.msra.mxu0 %v8679
    %8820 = vmatprep.subr.bf16.mxu0 0
    %8821 = vmatpush1.bf16.msra.mxu0 %v8680
    %8822 = vmatprep.subr.bf16.mxu0 0
    %8823 = vmatpush1.bf16.msra.mxu0 %v8681
    %8824 = vmatprep.subr.bf16.mxu0 0
    %8825 = vmatpush1.bf16.msra.mxu0 %v8682
    %8826 = vmatprep.subr.bf16.mxu0 0
    %8827 = vmatpush1.bf16.msra.mxu0 %v8683
    %8828 = vmatprep.mubr.bf16.mxu0 %v8270
    %8829 = vmatmul.mubr.bf16.gmra.mrb[0].mxu0 %v8269
    %v8830 = vpop.f32.mrb[0].mxu0
    %v8831 = vadd.f32 %v8410, %v8830
    %v8832 = vpop.f32.mrb[0].mxu0
    %v8833 = vpop.f32.mrb[0].mxu0
    %v8834 = vpop.f32.mrb[0].mxu0
    %8835 = vdwg.mxu0
    %8836 = vmatprep.subr.bf16.mxu0 0
    %8837 = vmatpush1.bf16.msra.mxu0 %v8684
    %8838 = vmatprep.subr.bf16.mxu0 0
    %8839 = vmatpush1.bf16.msra.mxu0 %v8685
    %8840 = vmatprep.subr.bf16.mxu0 0
    %8841 = vmatpush1.bf16.msra.mxu0 %v8686
    %8842 = vmatprep.subr.bf16.mxu0 0
    %8843 = vmatpush1.bf16.msra.mxu0 %v8687
    %8844 = vmatprep.subr.bf16.mxu0 0
    %8845 = vmatpush1.bf16.msra.mxu0 %v8688
    %8846 = vmatprep.subr.bf16.mxu0 0
    %8847 = vmatpush1.bf16.msra.mxu0 %v8689
    %8848 = vmatprep.subr.bf16.mxu0 0
    %8849 = vmatpush1.bf16.msra.mxu0 %v8690
    %8850 = vmatprep.subr.bf16.mxu0 0
    %8851 = vmatpush1.bf16.msra.mxu0 %v8691
    %8852 = vmatprep.subr.bf16.mxu0 0
    %8853 = vmatpush1.bf16.msra.mxu0 %v8692
    %8854 = vmatprep.subr.bf16.mxu0 0
    %8855 = vmatpush1.bf16.msra.mxu0 %v8693
    %8856 = vmatprep.subr.bf16.mxu0 0
    %8857 = vmatpush1.bf16.msra.mxu0 %v8694
    %8858 = vmatprep.subr.bf16.mxu0 0
    %8859 = vmatpush1.bf16.msra.mxu0 %v8695
    %8860 = vmatprep.subr.bf16.mxu0 0
    %8861 = vmatpush1.bf16.msra.mxu0 %v8696
    %8862 = vmatprep.subr.bf16.mxu0 0
    %8863 = vmatpush1.bf16.msra.mxu0 %v8697
    %8864 = vmatprep.subr.bf16.mxu0 0
    %8865 = vmatpush1.bf16.msra.mxu0 %v8698
    %8866 = vmatprep.subr.bf16.mxu0 0
    %8867 = vmatpush1.bf16.msra.mxu0 %v8699
    %8868 = vmatprep.mubr.bf16.mxu0 %v8272
    %8869 = vmatmul.mubr.bf16.gmra.mrb[0].mxu0 %v8271
    %v8870 = vpop.f32.mrb[0].mxu0
    %v8871 = vadd.f32 %v8831, %v8870
    %v8872 = vpop.f32.mrb[0].mxu0
    %v8873 = vpop.f32.mrb[0].mxu0
    %v8874 = vpop.f32.mrb[0].mxu0
    %8875 = vdwg.mxu0
    %8876 = vmatprep.subr.bf16.mxu0 0
    %8877 = vmatpush1.bf16.msra.mxu0 %v8700
    %8878 = vmatprep.subr.bf16.mxu0 0
    %8879 = vmatpush1.bf16.msra.mxu0 %v8701
    %8880 = vmatprep.subr.bf16.mxu0 0
    %8881 = vmatpush1.bf16.msra.mxu0 %v8702
    %8882 = vmatprep.subr.bf16.mxu0 0
    %8883 = vmatpush1.bf16.msra.mxu0 %v8703
    %8884 = vmatprep.subr.bf16.mxu0 0
    %8885 = vmatpush1.bf16.msra.mxu0 %v8704
    %8886 = vmatprep.subr.bf16.mxu0 0
    %8887 = vmatpush1.bf16.msra.mxu0 %v8705
    %8888 = vmatprep.subr.bf16.mxu0 0
    %8889 = vmatpush1.bf16.msra.mxu0 %v8706
    %8890 = vmatprep.subr.bf16.mxu0 0
    %8891 = vmatpush1.bf16.msra.mxu0 %v8707
    %8892 = vmatprep.subr.bf16.mxu0 0
    %8893 = vmatpush1.bf16.msra.mxu0 %v8708
    %8894 = vmatprep.subr.bf16.mxu0 0
    %8895 = vmatpush1.bf16.msra.mxu0 %v8709
    %8896 = vmatprep.subr.bf16.mxu0 0
    %8897 = vmatpush1.bf16.msra.mxu0 %v8710
    %8898 = vmatprep.subr.bf16.mxu0 0
    %8899 = vmatpush1.bf16.msra.mxu0 %v8711
    %8900 = vmatprep.subr.bf16.mxu0 0
    %8901 = vmatpush1.bf16.msra.mxu0 %v8712
    %8902 = vmatprep.subr.bf16.mxu0 0
    %8903 = vmatpush1.bf16.msra.mxu0 %v8713
    %8904 = vmatprep.subr.bf16.mxu0 0
    %8905 = vmatpush1.bf16.msra.mxu0 %v8714
    %8906 = vmatprep.subr.bf16.mxu0 0
    %8907 = vmatpush1.bf16.msra.mxu0 %v8715
    %8908 = vmatprep.mubr.bf16.mxu0 %v8274
    %8909 = vmatmul.mubr.bf16.gmra.mrb[0].mxu0 %v8273
    %v8910 = vpop.f32.mrb[0].mxu0
    %v8911 = vadd.f32 %v8871, %v8910
    %v8912 = vpop.f32.mrb[0].mxu0
    %v8913 = vpop.f32.mrb[0].mxu0
    %v8914 = vpop.f32.mrb[0].mxu0
    %8915 = vdwg.mxu0
    %8916 = vmatprep.subr.bf16.mxu0 0
    %8917 = vmatpush1.bf16.msra.mxu0 %v8716
    %8918 = vmatprep.subr.bf16.mxu0 0
    %8919 = vmatpush1.bf16.msra.mxu0 %v8717
    %8920 = vmatprep.subr.bf16.mxu0 0
    %8921 = vmatpush1.bf16.msra.mxu0 %v8718
    %8922 = vmatprep.subr.bf16.mxu0 0
    %8923 = vmatpush1.bf16.msra.mxu0 %v8719
    %8924 = vmatprep.subr.bf16.mxu0 0
    %8925 = vmatpush1.bf16.msra.mxu0 %v8720
    %8926 = vmatprep.subr.bf16.mxu0 0
    %8927 = vmatpush1.bf16.msra.mxu0 %v8721
    %8928 = vmatprep.subr.bf16.mxu0 0
    %8929 = vmatpush1.bf16.msra.mxu0 %v8722
    %8930 = vmatprep.subr.bf16.mxu0 0
    %8931 = vmatpush1.bf16.msra.mxu0 %v8723
    %8932 = vmatprep.subr.bf16.mxu0 0
    %8933 = vmatpush1.bf16.msra.mxu0 %v8724
    %8934 = vmatprep.subr.bf16.mxu0 0
    %8935 = vmatpush1.bf16.msra.mxu0 %v8725
    %8936 = vmatprep.subr.bf16.mxu0 0
    %8937 = vmatpush1.bf16.msra.mxu0 %v8726
    %8938 = vmatprep.subr.bf16.mxu0 0
    %8939 = vmatpush1.bf16.msra.mxu0 %v8727
    %8940 = vmatprep.subr.bf16.mxu0 0
    %8941 = vmatpush1.bf16.msra.mxu0 %v8728
    %8942 = vmatprep.subr.bf16.mxu0 0
    %8943 = vmatpush1.bf16.msra.mxu0 %v8729
    %8944 = vmatprep.subr.bf16.mxu0 0
    %8945 = vmatpush1.bf16.msra.mxu0 %v8730
    %8946 = vmatprep.subr.bf16.mxu0 0
    %8947 = vmatpush1.bf16.msra.mxu0 %v8731
    %8948 = vmatprep.mubr.bf16.mxu0 %v8276
    %8949 = vmatmul.mubr.bf16.gmra.mrb[0].mxu0 %v8275
    %v8950 = vpop.f32.mrb[0].mxu0
    %v8951 = vadd.f32 %v8911, %v8950
    %v8952 = vpop.f32.mrb[0].mxu0
    %v8953 = vpop.f32.mrb[0].mxu0
    %v8954 = vpop.f32.mrb[0].mxu0
    %8955 = vdwg.mxu0
    %v8956 = vmax.f32 %v8951, 0.0
    %8957 = vst [vmem:[%s15] sm:$0xff] %v8956
    // Predicated region
    $region90: #{response_forward.1} parent=1 // pred_check
      _
    $region91: #{response_forward.1} parent=1 // pred_check_branch
      %8959 = sbr.rel (0) target = $region93
    $region92: #{response_forward.1} parent=1 // pred_region
      _
    $region93: #{response_forward.1} parent=1 // pred_fallthru
      _
    // Predicated region
    $region94: #{response_forward.1} parent=1 // pred_check
      _
    $region95: #{response_forward.1} parent=1 // pred_check_branch
      %8961 = sbr.rel (0) target = $region97
    $region96: #{response_forward.1} parent=1 // pred_region
      _
    $region97: #{response_forward.1} parent=1 // pred_fallthru
      _
    %8962 = vsyncpa [#allocation3], 1
    %8963 = vsyncpa [#allocation5], 1
    %8964 = vsyncpa [#allocation8], 1
    %8965 = vsyncpa [#allocation11], 1

</llo_original>
